<compile_context>
chip_gen: v7x
topology: tpu7x:2x2x1
jax: 0.10.0
libtpu: 0.0.40
codegen_flags: <defaults>
</compile_context>

<pallas_src>
import jax
import jax.numpy as jnp
from jax import lax
from jax.experimental import pallas as pl
from jax.experimental.pallas import tpu as pltpu

EPS = 1e-5
H = W = 14
PW = H + 2                    # 16: padded frame extent
NROWS = PW * PW               # 256 flattened frame rows (channels-last)
N_VALID = float(H * W)        # 196 pixels contribute to BN statistics
C_IN, C_MID, F_OUT = 576, 192, 48
F_HALF = 64                   # each 3x3 tap padded 48 -> 64 output lanes

# Row shift of tap (kh, kw) in the flattened 16x16 frame.
SHIFTS = tuple(16 * (kh - 1) + (kw - 1) for kh in range(3) for kw in range(3))
# 4 tap pairs (low lane half, high lane half) + 1 leftover tap.
# Pair 0's low tap is the centre tap (shift 0) -> used to initialise o_ref.
PAIRS = ((4, 0), (1, 2), (3, 5), (6, 7))
LAST_TAP = 8


def _shifted_add(o_ref, v, s):
    """o[p] += v[p + s] for every row p where p + s stays inside the frame.
    Rows whose source would fall outside the frame get a zero contribution
    (a2 is zero there), so clipping the range is exact."""
    lo = max(0, -s)
    hi = min(NROWS, NROWS - s)
    o_ref[lo:hi, :] = o_ref[lo:hi, :] + v[lo + s:hi + s, :]


def _fused_kernel(x_ref, g1_ref, b1_ref, w1t_ref, g2_ref, b2_ref,
                  w2p_hbm, w2l_hbm, o_ref, w2p_vmem, w2l_vmem, dma_sem):
    # x_ref:   (256, C_IN) f32 frame rows. INVARIANT: frame-border rows are
    #          exactly zero (wrapper zero-pads), so summing all 256 rows equals
    #          summing the 196 valid pixels for the BN statistics.
    # w1t_ref: (C_IN, C_MID)    bf16 transposed 1x1 weight.
    # w2p_hbm: (4, C_MID, 128)  bf16 paired 3x3 taps, left in HBM (manual DMA).
    # w2l_hbm: (C_MID, 64)      bf16 leftover tap, left in HBM (manual DMA).
    # o_ref:   (256, 64) f32 conv output in frame coords (lanes >= 48 are pad).

    # Kick off the 3x3-weight DMAs; they complete under the stage-1 compute.
    cp_p = pltpu.make_async_copy(w2p_hbm, w2p_vmem, dma_sem.at[0])
    cp_l = pltpu.make_async_copy(w2l_hbm, w2l_vmem, dma_sem.at[1])
    cp_p.start()
    cp_l.start()

    inv_n = 1.0 / N_VALID

    # Interior-pixel mask from the row index (cheap VPU, no HBM mask array).
    ridx = lax.broadcasted_iota(jnp.int32, (NROWS, 1), 0)
    hh = jnp.right_shift(ridx, 4)
    ww = jnp.bitwise_and(ridx, 15)
    mask = ((hh >= 1) & (hh <= H) & (ww >= 1) & (ww <= W)).astype(jnp.float32)

    # ---- BN1 (training-mode biased batch stats, single pass) + ReLU ----
    x = x_ref[...]
    mean1 = jnp.sum(x, axis=0, keepdims=True) * inv_n
    var1 = jnp.maximum(
        jnp.sum(x * x, axis=0, keepdims=True) * inv_n - mean1 * mean1, 0.0)
    scale1 = g1_ref[...] * lax.rsqrt(var1 + EPS)
    shift1 = b1_ref[...] - mean1 * scale1
    a1 = jnp.maximum(x * scale1 + shift1, 0.0) * mask           # (256, C_IN) f32

    # ---- 1x1 conv == matmul (bf16 operands, f32 accumulation) ----
    y = jnp.dot(a1.astype(jnp.bfloat16), w1t_ref[...],
                preferred_element_type=jnp.float32)             # (256, C_MID)

    # ---- BN2 + ReLU (border rows of y are zero because a1 was masked) ----
    mean2 = jnp.sum(y, axis=0, keepdims=True) * inv_n
    var2 = jnp.maximum(
        jnp.sum(y * y, axis=0, keepdims=True) * inv_n - mean2 * mean2, 0.0)
    scale2 = g2_ref[...] * lax.rsqrt(var2 + EPS)
    shift2 = b2_ref[...] - mean2 * scale2
    a2 = (jnp.maximum(y * scale2 + shift2, 0.0) * mask).astype(jnp.bfloat16)

    # ---- 3x3 conv (pad=1): paired-tap matmuls + static output row shifts ----
    cp_p.wait()
    cp_l.wait()
    for i, (lo_t, hi_t) in enumerate(PAIRS):
        c = jnp.dot(a2, w2p_vmem[i], preferred_element_type=jnp.float32)  # (256,128)
        c_lo = c[:, :F_HALF]
        c_hi = c[:, F_HALF:]
        if i == 0:
            o_ref[...] = c_lo           # centre tap (shift 0) initialises output
        else:
            _shifted_add(o_ref, c_lo, SHIFTS[lo_t])
        _shifted_add(o_ref, c_hi, SHIFTS[hi_t])
    c = jnp.dot(a2, w2l_vmem[...], preferred_element_type=jnp.float32)     # (256,64)
    _shifted_add(o_ref, c, SHIFTS[LAST_TAP])


def prepare_params(params):
    """One-time weight layout + bf16 cast (hoisted out of the per-call path)."""
    g1, b1, w1, g2, b2, w2 = (params[k] for k in ("g1", "b1", "w1", "g2", "b2", "w2"))
    w1t = jnp.transpose(w1.reshape(C_MID, C_IN), (1, 0)).astype(jnp.bfloat16)
    w2t = jnp.transpose(w2, (2, 3, 1, 0)).reshape(9, C_MID, F_OUT)   # (9,192,48)
    blocks = []
    for lo_t, hi_t in PAIRS:
        blk = jnp.zeros((C_MID, 2 * F_HALF), jnp.float32)
        blk = blk.at[:, :F_OUT].set(w2t[lo_t])
        blk = blk.at[:, F_HALF:F_HALF + F_OUT].set(w2t[hi_t])
        blocks.append(blk)
    w2p = jnp.stack(blocks).astype(jnp.bfloat16)                     # (4,192,128)
    w2l = (jnp.zeros((C_MID, F_HALF), jnp.float32)
           .at[:, :F_OUT].set(w2t[LAST_TAP]).astype(jnp.bfloat16))   # (192,64)
    return {
        "g1": g1.reshape(1, C_IN).astype(jnp.float32),
        "b1": b1.reshape(1, C_IN).astype(jnp.float32),
        "w1t": w1t,
        "g2": g2.reshape(1, C_MID).astype(jnp.float32),
        "b2": b2.reshape(1, C_MID).astype(jnp.float32),
        "w2p": w2p,
        "w2l": w2l,
    }


@jax.jit
def model_forward(x_nchw, prepped):
    N, C, Hx, Wx = x_nchw.shape
    assert N == 1 and C == C_IN and Hx == H and Wx == W, "specialized to (1,576,14,14)"
    # channels-last frame rows; jnp.pad guarantees zero frame-border rows
    x_hwc = jnp.transpose(x_nchw[0], (1, 2, 0))                      # (14,14,C_IN)
    x_rows = jnp.pad(x_hwc, ((1, 1), (1, 1), (0, 0))).reshape(NROWS, C_IN)

    vmem = pl.BlockSpec(memory_space=pltpu.MemorySpace.VMEM)
    hbm = pl.BlockSpec(memory_space=pl.ANY)
    out_flat = pl.pallas_call(
        _fused_kernel,
        out_shape=jax.ShapeDtypeStruct((NROWS, F_HALF), jnp.float32),
        in_specs=[vmem, vmem, vmem, vmem, vmem, vmem, hbm, hbm],
        out_specs=vmem,
        scratch_shapes=[
            pltpu.VMEM((len(PAIRS), C_MID, 2 * F_HALF), jnp.bfloat16),
            pltpu.VMEM((C_MID, F_HALF), jnp.bfloat16),
            pltpu.SemaphoreType.DMA((2,)),
        ],
    )(x_rows, prepped["g1"], prepped["b1"], prepped["w1t"],
      prepped["g2"], prepped["b2"], prepped["w2p"], prepped["w2l"])

    out = out_flat[:, :F_OUT].reshape(PW, PW, F_OUT)[1:H + 1, 1:W + 1, :]  # (14,14,F)
    return jnp.transpose(out, (2, 0, 1))[None]                             # (1,F,14,14)


def reference_forward(x, params):
    """Pure-JAX f32 reference matching PyTorch training-mode BN semantics."""
    g1, b1, w1, g2, b2, w2 = (params[k] for k in ("g1", "b1", "w1", "g2", "b2", "w2"))

    def bn_relu(x, g, b):
        m = jnp.mean(x, axis=(0, 2, 3), keepdims=True)
        v = jnp.mean((x - m) ** 2, axis=(0, 2, 3), keepdims=True)
        y = (x - m) / jnp.sqrt(v + EPS) * g.reshape(1, -1, 1, 1) + b.reshape(1, -1, 1, 1)
        return jnp.maximum(y, 0.0)

    x = bn_relu(x, g1, b1)
    x = lax.conv_general_dilated(x, w1, (1, 1), 'VALID',
                                 dimension_numbers=('NCHW', 'OIHW', 'NCHW'))
    x = bn_relu(x, g2, b2)
    x = lax.conv_general_dilated(x, w2, (1, 1), ((1, 1), (1, 1)),
                                 dimension_numbers=('NCHW', 'OIHW', 'NCHW'))
    return x


def make_params(key):
    k1, k2, k3, k4, k5, k6 = jax.random.split(key, 6)
    return {
        "g1": 1.0 + 0.1 * jax.random.normal(k1, (C_IN,), jnp.float32),
        "b1": 0.1 * jax.random.normal(k2, (C_IN,), jnp.float32),
        "w1": jax.random.normal(k3, (C_MID, C_IN, 1, 1), jnp.float32) / jnp.sqrt(C_IN),
        "g2": 1.0 + 0.1 * jax.random.normal(k4, (C_MID,), jnp.float32),
        "b2": 0.1 * jax.random.normal(k5, (C_MID,), jnp.float32),
        "w2": jax.random.normal(k6, (F_OUT, C_MID, 3, 3), jnp.float32) / jnp.sqrt(C_MID * 9),
    }


if __name__ == "__main__":
    key = jax.random.PRNGKey(0)
    kx, kp = jax.random.split(key)
    x = jax.random.normal(kx, (1, C_IN, H, W), jnp.float32)    # matches module input
    params = make_params(kp)
    prepped = prepare_params(params)                            # one-time weight prep

    out = jax.block_until_ready(model_forward(x, prepped))
    ref = jax.block_until_ready(reference_forward(x, params))

    assert out.shape == (1, F_OUT, H, W), out.shape
    max_err = float(jnp.max(jnp.abs(out - ref)))
    # bf16 MXU operands (f32 accumulation) -> bf16-level comparison tolerance.
    assert jnp.allclose(out, ref, rtol=2e-2, atol=2e-2), max_err
    print("KERNEL_OK")
</pallas_src>

<mosaic_0001>
module attributes {stable_mosaic.version = 11 : i64} {
  func.func @_fused_kernel(%arg0: memref<256x576xf32, #tpu.memory_space<vmem>>, %arg1: memref<1x576xf32, #tpu.memory_space<vmem>>, %arg2: memref<1x576xf32, #tpu.memory_space<vmem>>, %arg3: memref<576x192xbf16, #tpu.memory_space<vmem>>, %arg4: memref<1x192xf32, #tpu.memory_space<vmem>>, %arg5: memref<1x192xf32, #tpu.memory_space<vmem>>, %arg6: memref<4x192x128xbf16, #tpu.memory_space<any>>, %arg7: memref<192x64xbf16, #tpu.memory_space<any>>, %arg8: memref<256x64xf32, #tpu.memory_space<vmem>>, %arg9: memref<4x192x128xbf16, #tpu.memory_space<vmem>>, %arg10: memref<192x64xbf16, #tpu.memory_space<vmem>>, %arg11: memref<2x!tpu.dma_semaphore, #tpu.memory_space<semaphore_mem>>) attributes {dimension_semantics = [], scalar_prefetch = 0 : i64, scratch_operands = 3 : i64, tpu.core_type = #tpu.core_type<tc>} {
    %c0_i32 = arith.constant 0 : i32
    %0 = tpu.memref_slice %arg11[%c0_i32] : memref<2x!tpu.dma_semaphore, #tpu.memory_space<semaphore_mem>> -> memref<1x!tpu.dma_semaphore, #tpu.memory_space<semaphore_mem>>
    %1 = tpu.memref_squeeze %0 : memref<1x!tpu.dma_semaphore, #tpu.memory_space<semaphore_mem>> -> memref<!tpu.dma_semaphore, #tpu.memory_space<semaphore_mem>>
    tpu.enqueue_dma source(%arg6 : memref<4x192x128xbf16, #tpu.memory_space<any>>) target(%arg9 : memref<4x192x128xbf16, #tpu.memory_space<vmem>>) target_semaphore(%1 : memref<!tpu.dma_semaphore, #tpu.memory_space<semaphore_mem>>)
    %c1_i32 = arith.constant 1 : i32
    %2 = tpu.memref_slice %arg11[%c1_i32] : memref<2x!tpu.dma_semaphore, #tpu.memory_space<semaphore_mem>> -> memref<1x!tpu.dma_semaphore, #tpu.memory_space<semaphore_mem>>
    %3 = tpu.memref_squeeze %2 : memref<1x!tpu.dma_semaphore, #tpu.memory_space<semaphore_mem>> -> memref<!tpu.dma_semaphore, #tpu.memory_space<semaphore_mem>>
    tpu.enqueue_dma source(%arg7 : memref<192x64xbf16, #tpu.memory_space<any>>) target(%arg10 : memref<192x64xbf16, #tpu.memory_space<vmem>>) target_semaphore(%3 : memref<!tpu.dma_semaphore, #tpu.memory_space<semaphore_mem>>)
    %4 = tpu.iota {dimensions = array<i32: 0>} : vector<256x1xi32>
    %c4_i32 = arith.constant 4 : i32
    %5 = vector.broadcast %c4_i32 : i32 to vector<256x1xi32>
    %6 = arith.shrsi %4, %5 : vector<256x1xi32>
    %c15_i32 = arith.constant 15 : i32
    %7 = vector.broadcast %c15_i32 : i32 to vector<256x1xi32>
    %8 = arith.andi %4, %7 : vector<256x1xi32>
    %c1_i32_0 = arith.constant 1 : i32
    %9 = vector.broadcast %c1_i32_0 : i32 to vector<256x1xi32>
    %10 = arith.cmpi sge, %6, %9 : vector<256x1xi32>
    %c14_i32 = arith.constant 14 : i32
    %11 = vector.broadcast %c14_i32 : i32 to vector<256x1xi32>
    %12 = arith.cmpi sle, %6, %11 : vector<256x1xi32>
    %13 = arith.andi %10, %12 : vector<256x1xi1>
    %c1_i32_1 = arith.constant 1 : i32
    %14 = vector.broadcast %c1_i32_1 : i32 to vector<256x1xi32>
    %15 = arith.cmpi sge, %8, %14 : vector<256x1xi32>
    %16 = arith.andi %13, %15 : vector<256x1xi1>
    %c14_i32_2 = arith.constant 14 : i32
    %17 = vector.broadcast %c14_i32_2 : i32 to vector<256x1xi32>
    %18 = arith.cmpi sle, %8, %17 : vector<256x1xi32>
    %19 = arith.andi %16, %18 : vector<256x1xi1>
    %20 = arith.extui %19 : vector<256x1xi1> to vector<256x1xi32>
    %21 = arith.sitofp %20 : vector<256x1xi32> to vector<256x1xf32>
    %c0 = arith.constant 0 : index
    %c0_3 = arith.constant 0 : index
    %22 = vector.load %arg0[%c0, %c0_3] : memref<256x576xf32, #tpu.memory_space<vmem>>, vector<256x576xf32>
    %cst = arith.constant dense<0.000000e+00> : vector<576xf32>
    %23 = vector.multi_reduction <add>, %22, %cst [0] : vector<256x576xf32> to vector<576xf32>
    %24 = vector.shape_cast %23 : vector<576xf32> to vector<1x576xf32>
    %cst_4 = arith.constant 0.00510204071 : f32
    %25 = vector.broadcast %cst_4 : f32 to vector<1x576xf32>
    %26 = arith.mulf %24, %25 : vector<1x576xf32>
    %27 = arith.mulf %22, %22 : vector<256x576xf32>
    %cst_5 = arith.constant dense<0.000000e+00> : vector<576xf32>
    %28 = vector.multi_reduction <add>, %27, %cst_5 [0] : vector<256x576xf32> to vector<576xf32>
    %29 = vector.shape_cast %28 : vector<576xf32> to vector<1x576xf32>
    %cst_6 = arith.constant 0.00510204071 : f32
    %30 = vector.broadcast %cst_6 : f32 to vector<1x576xf32>
    %31 = arith.mulf %29, %30 : vector<1x576xf32>
    %32 = arith.mulf %26, %26 : vector<1x576xf32>
    %33 = arith.subf %31, %32 : vector<1x576xf32>
    %cst_7 = arith.constant 0.000000e+00 : f32
    %34 = vector.broadcast %cst_7 : f32 to vector<1x576xf32>
    %35 = arith.maximumf %33, %34 : vector<1x576xf32>
    %c0_8 = arith.constant 0 : index
    %c0_9 = arith.constant 0 : index
    %36 = vector.load %arg1[%c0_8, %c0_9] : memref<1x576xf32, #tpu.memory_space<vmem>>, vector<1x576xf32>
    %cst_10 = arith.constant 9.99999974E-6 : f32
    %37 = vector.broadcast %cst_10 : f32 to vector<1x576xf32>
    %38 = arith.addf %35, %37 : vector<1x576xf32>
    %39 = math.rsqrt %38 : vector<1x576xf32>
    %40 = arith.mulf %36, %39 : vector<1x576xf32>
    %c0_11 = arith.constant 0 : index
    %c0_12 = arith.constant 0 : index
    %41 = vector.load %arg2[%c0_11, %c0_12] : memref<1x576xf32, #tpu.memory_space<vmem>>, vector<1x576xf32>
    %42 = arith.mulf %26, %40 : vector<1x576xf32>
    %43 = arith.subf %41, %42 : vector<1x576xf32>
    %44 = vector.broadcast %40 : vector<1x576xf32> to vector<256x576xf32>
    %45 = arith.mulf %22, %44 : vector<256x576xf32>
    %46 = vector.broadcast %43 : vector<1x576xf32> to vector<256x576xf32>
    %47 = arith.addf %45, %46 : vector<256x576xf32>
    %cst_13 = arith.constant 0.000000e+00 : f32
    %48 = vector.broadcast %cst_13 : f32 to vector<256x576xf32>
    %49 = arith.maximumf %47, %48 : vector<256x576xf32>
    %50 = vector.broadcast %21 : vector<256x1xf32> to vector<256x576xf32>
    %51 = arith.mulf %49, %50 : vector<256x576xf32>
    %52 = arith.truncf %51 : vector<256x576xf32> to vector<256x576xbf16>
    %c0_14 = arith.constant 0 : index
    %c0_15 = arith.constant 0 : index
    %53 = vector.load %arg3[%c0_14, %c0_15] : memref<576x192xbf16, #tpu.memory_space<vmem>>, vector<576x192xbf16>
    %cst_16 = arith.constant dense<0.000000e+00> : vector<256x192xf32>
    %54 = tpu.matmul %52, %53, %cst_16 {dimension_numbers = #tpu.dot_dimension_numbers<[1], [0], [0], [1], [0, 0, 1, 1], [], []>} : vector<256x576xbf16>, vector<576x192xbf16>, vector<256x192xf32> -> vector<256x192xf32>
    %cst_17 = arith.constant dense<0.000000e+00> : vector<192xf32>
    %55 = vector.multi_reduction <add>, %54, %cst_17 [0] : vector<256x192xf32> to vector<192xf32>
    %56 = vector.shape_cast %55 : vector<192xf32> to vector<1x192xf32>
    %cst_18 = arith.constant 0.00510204071 : f32
    %57 = vector.broadcast %cst_18 : f32 to vector<1x192xf32>
    %58 = arith.mulf %56, %57 : vector<1x192xf32>
    %59 = arith.mulf %54, %54 : vector<256x192xf32>
    %cst_19 = arith.constant dense<0.000000e+00> : vector<192xf32>
    %60 = vector.multi_reduction <add>, %59, %cst_19 [0] : vector<256x192xf32> to vector<192xf32>
    %61 = vector.shape_cast %60 : vector<192xf32> to vector<1x192xf32>
    %cst_20 = arith.constant 0.00510204071 : f32
    %62 = vector.broadcast %cst_20 : f32 to vector<1x192xf32>
    %63 = arith.mulf %61, %62 : vector<1x192xf32>
    %64 = arith.mulf %58, %58 : vector<1x192xf32>
    %65 = arith.subf %63, %64 : vector<1x192xf32>
    %cst_21 = arith.constant 0.000000e+00 : f32
    %66 = vector.broadcast %cst_21 : f32 to vector<1x192xf32>
    %67 = arith.maximumf %65, %66 : vector<1x192xf32>
    %c0_22 = arith.constant 0 : index
    %c0_23 = arith.constant 0 : index
    %68 = vector.load %arg4[%c0_22, %c0_23] : memref<1x192xf32, #tpu.memory_space<vmem>>, vector<1x192xf32>
    %cst_24 = arith.constant 9.99999974E-6 : f32
    %69 = vector.broadcast %cst_24 : f32 to vector<1x192xf32>
    %70 = arith.addf %67, %69 : vector<1x192xf32>
    %71 = math.rsqrt %70 : vector<1x192xf32>
    %72 = arith.mulf %68, %71 : vector<1x192xf32>
    %c0_25 = arith.constant 0 : index
    %c0_26 = arith.constant 0 : index
    %73 = vector.load %arg5[%c0_25, %c0_26] : memref<1x192xf32, #tpu.memory_space<vmem>>, vector<1x192xf32>
    %74 = arith.mulf %58, %72 : vector<1x192xf32>
    %75 = arith.subf %73, %74 : vector<1x192xf32>
    %76 = vector.broadcast %72 : vector<1x192xf32> to vector<256x192xf32>
    %77 = arith.mulf %54, %76 : vector<256x192xf32>
    %78 = vector.broadcast %75 : vector<1x192xf32> to vector<256x192xf32>
    %79 = arith.addf %77, %78 : vector<256x192xf32>
    %cst_27 = arith.constant 0.000000e+00 : f32
    %80 = vector.broadcast %cst_27 : f32 to vector<256x192xf32>
    %81 = arith.maximumf %79, %80 : vector<256x192xf32>
    %82 = vector.broadcast %21 : vector<256x1xf32> to vector<256x192xf32>
    %83 = arith.mulf %81, %82 : vector<256x192xf32>
    %84 = arith.truncf %83 : vector<256x192xf32> to vector<256x192xbf16>
    %c0_i32_28 = arith.constant 0 : i32
    %85 = tpu.memref_slice %arg11[%c0_i32_28] : memref<2x!tpu.dma_semaphore, #tpu.memory_space<semaphore_mem>> -> memref<1x!tpu.dma_semaphore, #tpu.memory_space<semaphore_mem>>
    %86 = tpu.memref_squeeze %85 : memref<1x!tpu.dma_semaphore, #tpu.memory_space<semaphore_mem>> -> memref<!tpu.dma_semaphore, #tpu.memory_space<semaphore_mem>>
    tpu.wait_dma2 semaphore(%86 : memref<!tpu.dma_semaphore, #tpu.memory_space<semaphore_mem>>) src(%arg6 : memref<4x192x128xbf16, #tpu.memory_space<any>>) dst(%arg9 : memref<4x192x128xbf16, #tpu.memory_space<vmem>>)
    %c1_i32_29 = arith.constant 1 : i32
    %87 = tpu.memref_slice %arg11[%c1_i32_29] : memref<2x!tpu.dma_semaphore, #tpu.memory_space<semaphore_mem>> -> memref<1x!tpu.dma_semaphore, #tpu.memory_space<semaphore_mem>>
    %88 = tpu.memref_squeeze %87 : memref<1x!tpu.dma_semaphore, #tpu.memory_space<semaphore_mem>> -> memref<!tpu.dma_semaphore, #tpu.memory_space<semaphore_mem>>
    tpu.wait_dma2 semaphore(%88 : memref<!tpu.dma_semaphore, #tpu.memory_space<semaphore_mem>>) src(%arg7 : memref<192x64xbf16, #tpu.memory_space<any>>) dst(%arg10 : memref<192x64xbf16, #tpu.memory_space<vmem>>)
    %c0_30 = arith.constant 0 : index
    %c0_31 = arith.constant 0 : index
    %c0_32 = arith.constant 0 : index
    %89 = vector.load %arg9[%c0_30, %c0_31, %c0_32] : memref<4x192x128xbf16, #tpu.memory_space<vmem>>, vector<1x192x128xbf16>
    %90 = vector.shape_cast %89 : vector<1x192x128xbf16> to vector<192x128xbf16>
    %cst_33 = arith.constant dense<0.000000e+00> : vector<256x128xf32>
    %91 = tpu.matmul %84, %90, %cst_33 {dimension_numbers = #tpu.dot_dimension_numbers<[1], [0], [0], [1], [0, 0, 1, 1], [], []>} : vector<256x192xbf16>, vector<192x128xbf16>, vector<256x128xf32> -> vector<256x128xf32>
    %92 = vector.extract_strided_slice %91 {offsets = [0, 0], sizes = [256, 64], strides = [1, 1]} : vector<256x128xf32> to vector<256x64xf32>
    %93 = vector.extract_strided_slice %91 {offsets = [0, 64], sizes = [256, 64], strides = [1, 1]} : vector<256x128xf32> to vector<256x64xf32>
    %c0_34 = arith.constant 0 : index
    %c0_35 = arith.constant 0 : index
    %94 = vector.load %arg8[%c0_34, %c0_35] : memref<256x64xf32, #tpu.memory_space<vmem>>, vector<256x64xf32>
    tpu.vector_store %arg8[%c0_34, %c0_35], %92 {strides = array<i32>} : memref<256x64xf32, #tpu.memory_space<vmem>>, vector<256x64xf32>,
    %c17 = arith.constant 17 : index
    %c0_36 = arith.constant 0 : index
    %95 = vector.load %arg8[%c17, %c0_36] : memref<256x64xf32, #tpu.memory_space<vmem>>, vector<239x64xf32>
    %96 = vector.extract_strided_slice %93 {offsets = [0, 0], sizes = [239, 64], strides = [1, 1]} : vector<256x64xf32> to vector<239x64xf32>
    %97 = arith.addf %95, %96 : vector<239x64xf32>
    %c17_37 = arith.constant 17 : index
    %c0_38 = arith.constant 0 : index
    %98 = vector.load %arg8[%c17_37, %c0_38] : memref<256x64xf32, #tpu.memory_space<vmem>>, vector<239x64xf32>
    tpu.vector_store %arg8[%c17_37, %c0_38], %97 {strides = array<i32>} : memref<256x64xf32, #tpu.memory_space<vmem>>, vector<239x64xf32>,
    %c1 = arith.constant 1 : index
    %c0_39 = arith.constant 0 : index
    %c0_40 = arith.constant 0 : index
    %99 = vector.load %arg9[%c1, %c0_39, %c0_40] : memref<4x192x128xbf16, #tpu.memory_space<vmem>>, vector<1x192x128xbf16>
    %100 = vector.shape_cast %99 : vector<1x192x128xbf16> to vector<192x128xbf16>
    %cst_41 = arith.constant dense<0.000000e+00> : vector<256x128xf32>
    %101 = tpu.matmul %84, %100, %cst_41 {dimension_numbers = #tpu.dot_dimension_numbers<[1], [0], [0], [1], [0, 0, 1, 1], [], []>} : vector<256x192xbf16>, vector<192x128xbf16>, vector<256x128xf32> -> vector<256x128xf32>
    %102 = vector.extract_strided_slice %101 {offsets = [0, 0], sizes = [256, 64], strides = [1, 1]} : vector<256x128xf32> to vector<256x64xf32>
    %103 = vector.extract_strided_slice %101 {offsets = [0, 64], sizes = [256, 64], strides = [1, 1]} : vector<256x128xf32> to vector<256x64xf32>
    %c16 = arith.constant 16 : index
    %c0_42 = arith.constant 0 : index
    %104 = vector.load %arg8[%c16, %c0_42] : memref<256x64xf32, #tpu.memory_space<vmem>>, vector<240x64xf32>
    %105 = vector.extract_strided_slice %102 {offsets = [0, 0], sizes = [240, 64], strides = [1, 1]} : vector<256x64xf32> to vector<240x64xf32>
    %106 = arith.addf %104, %105 : vector<240x64xf32>
    %c16_43 = arith.constant 16 : index
    %c0_44 = arith.constant 0 : index
    %107 = vector.load %arg8[%c16_43, %c0_44] : memref<256x64xf32, #tpu.memory_space<vmem>>, vector<240x64xf32>
    tpu.vector_store %arg8[%c16_43, %c0_44], %106 {strides = array<i32>} : memref<256x64xf32, #tpu.memory_space<vmem>>, vector<240x64xf32>,
    %c15 = arith.constant 15 : index
    %c0_45 = arith.constant 0 : index
    %108 = vector.load %arg8[%c15, %c0_45] : memref<256x64xf32, #tpu.memory_space<vmem>>, vector<241x64xf32>
    %109 = vector.extract_strided_slice %103 {offsets = [0, 0], sizes = [241, 64], strides = [1, 1]} : vector<256x64xf32> to vector<241x64xf32>
    %110 = arith.addf %108, %109 : vector<241x64xf32>
    %c15_46 = arith.constant 15 : index
    %c0_47 = arith.constant 0 : index
    %111 = vector.load %arg8[%c15_46, %c0_47] : memref<256x64xf32, #tpu.memory_space<vmem>>, vector<241x64xf32>
    tpu.vector_store %arg8[%c15_46, %c0_47], %110 {strides = array<i32>} : memref<256x64xf32, #tpu.memory_space<vmem>>, vector<241x64xf32>,
    %c2 = arith.constant 2 : index
    %c0_48 = arith.constant 0 : index
    %c0_49 = arith.constant 0 : index
    %112 = vector.load %arg9[%c2, %c0_48, %c0_49] : memref<4x192x128xbf16, #tpu.memory_space<vmem>>, vector<1x192x128xbf16>
    %113 = vector.shape_cast %112 : vector<1x192x128xbf16> to vector<192x128xbf16>
    %cst_50 = arith.constant dense<0.000000e+00> : vector<256x128xf32>
    %114 = tpu.matmul %84, %113, %cst_50 {dimension_numbers = #tpu.dot_dimension_numbers<[1], [0], [0], [1], [0, 0, 1, 1], [], []>} : vector<256x192xbf16>, vector<192x128xbf16>, vector<256x128xf32> -> vector<256x128xf32>
    %115 = vector.extract_strided_slice %114 {offsets = [0, 0], sizes = [256, 64], strides = [1, 1]} : vector<256x128xf32> to vector<256x64xf32>
    %116 = vector.extract_strided_slice %114 {offsets = [0, 64], sizes = [256, 64], strides = [1, 1]} : vector<256x128xf32> to vector<256x64xf32>
    %c1_51 = arith.constant 1 : index
    %c0_52 = arith.constant 0 : index
    %117 = vector.load %arg8[%c1_51, %c0_52] : memref<256x64xf32, #tpu.memory_space<vmem>>, vector<255x64xf32>
    %118 = vector.extract_strided_slice %115 {offsets = [0, 0], sizes = [255, 64], strides = [1, 1]} : vector<256x64xf32> to vector<255x64xf32>
    %119 = arith.addf %117, %118 : vector<255x64xf32>
    %c1_53 = arith.constant 1 : index
    %c0_54 = arith.constant 0 : index
    %120 = vector.load %arg8[%c1_53, %c0_54] : memref<256x64xf32, #tpu.memory_space<vmem>>, vector<255x64xf32>
    tpu.vector_store %arg8[%c1_53, %c0_54], %119 {strides = array<i32>} : memref<256x64xf32, #tpu.memory_space<vmem>>, vector<255x64xf32>,
    %c0_55 = arith.constant 0 : index
    %c0_56 = arith.constant 0 : index
    %121 = vector.load %arg8[%c0_55, %c0_56] : memref<256x64xf32, #tpu.memory_space<vmem>>, vector<255x64xf32>
    %122 = vector.extract_strided_slice %116 {offsets = [1, 0], sizes = [255, 64], strides = [1, 1]} : vector<256x64xf32> to vector<255x64xf32>
    %123 = arith.addf %121, %122 : vector<255x64xf32>
    %c0_57 = arith.constant 0 : index
    %c0_58 = arith.constant 0 : index
    %124 = vector.load %arg8[%c0_57, %c0_58] : memref<256x64xf32, #tpu.memory_space<vmem>>, vector<255x64xf32>
    tpu.vector_store %arg8[%c0_57, %c0_58], %123 {strides = array<i32>} : memref<256x64xf32, #tpu.memory_space<vmem>>, vector<255x64xf32>,
    %c3 = arith.constant 3 : index
    %c0_59 = arith.constant 0 : index
    %c0_60 = arith.constant 0 : index
    %125 = vector.load %arg9[%c3, %c0_59, %c0_60] : memref<4x192x128xbf16, #tpu.memory_space<vmem>>, vector<1x192x128xbf16>
    %126 = vector.shape_cast %125 : vector<1x192x128xbf16> to vector<192x128xbf16>
    %cst_61 = arith.constant dense<0.000000e+00> : vector<256x128xf32>
    %127 = tpu.matmul %84, %126, %cst_61 {dimension_numbers = #tpu.dot_dimension_numbers<[1], [0], [0], [1], [0, 0, 1, 1], [], []>} : vector<256x192xbf16>, vector<192x128xbf16>, vector<256x128xf32> -> vector<256x128xf32>
    %128 = vector.extract_strided_slice %127 {offsets = [0, 0], sizes = [256, 64], strides = [1, 1]} : vector<256x128xf32> to vector<256x64xf32>
    %129 = vector.extract_strided_slice %127 {offsets = [0, 64], sizes = [256, 64], strides = [1, 1]} : vector<256x128xf32> to vector<256x64xf32>
    %c0_62 = arith.constant 0 : index
    %c0_63 = arith.constant 0 : index
    %130 = vector.load %arg8[%c0_62, %c0_63] : memref<256x64xf32, #tpu.memory_space<vmem>>, vector<241x64xf32>
    %131 = vector.extract_strided_slice %128 {offsets = [15, 0], sizes = [241, 64], strides = [1, 1]} : vector<256x64xf32> to vector<241x64xf32>
    %132 = arith.addf %130, %131 : vector<241x64xf32>
    %c0_64 = arith.constant 0 : index
    %c0_65 = arith.constant 0 : index
    %133 = vector.load %arg8[%c0_64, %c0_65] : memref<256x64xf32, #tpu.memory_space<vmem>>, vector<241x64xf32>
    tpu.vector_store %arg8[%c0_64, %c0_65], %132 {strides = array<i32>} : memref<256x64xf32, #tpu.memory_space<vmem>>, vector<241x64xf32>,
    %c0_66 = arith.constant 0 : index
    %c0_67 = arith.constant 0 : index
    %134 = vector.load %arg8[%c0_66, %c0_67] : memref<256x64xf32, #tpu.memory_space<vmem>>, vector<240x64xf32>
    %135 = vector.extract_strided_slice %129 {offsets = [16, 0], sizes = [240, 64], strides = [1, 1]} : vector<256x64xf32> to vector<240x64xf32>
    %136 = arith.addf %134, %135 : vector<240x64xf32>
    %c0_68 = arith.constant 0 : index
    %c0_69 = arith.constant 0 : index
    %137 = vector.load %arg8[%c0_68, %c0_69] : memref<256x64xf32, #tpu.memory_space<vmem>>, vector<240x64xf32>
    tpu.vector_store %arg8[%c0_68, %c0_69], %136 {strides = array<i32>} : memref<256x64xf32, #tpu.memory_space<vmem>>, vector<240x64xf32>,
    %c0_70 = arith.constant 0 : index
    %c0_71 = arith.constant 0 : index
    %138 = vector.load %arg10[%c0_70, %c0_71] : memref<192x64xbf16, #tpu.memory_space<vmem>>, vector<192x64xbf16>
    %cst_72 = arith.constant dense<0.000000e+00> : vector<256x64xf32>
    %139 = tpu.matmul %84, %138, %cst_72 {dimension_numbers = #tpu.dot_dimension_numbers<[1], [0], [0], [1], [0, 0, 1, 1], [], []>} : vector<256x192xbf16>, vector<192x64xbf16>, vector<256x64xf32> -> vector<256x64xf32>
    %c0_73 = arith.constant 0 : index
    %c0_74 = arith.constant 0 : index
    %140 = vector.load %arg8[%c0_73, %c0_74] : memref<256x64xf32, #tpu.memory_space<vmem>>, vector<239x64xf32>
    %141 = vector.extract_strided_slice %139 {offsets = [17, 0], sizes = [239, 64], strides = [1, 1]} : vector<256x64xf32> to vector<239x64xf32>
    %142 = arith.addf %140, %141 : vector<239x64xf32>
    %c0_75 = arith.constant 0 : index
    %c0_76 = arith.constant 0 : index
    %143 = vector.load %arg8[%c0_75, %c0_76] : memref<256x64xf32, #tpu.memory_space<vmem>>, vector<239x64xf32>
    tpu.vector_store %arg8[%c0_75, %c0_76], %142 {strides = array<i32>} : memref<256x64xf32, #tpu.memory_space<vmem>>, vector<239x64xf32>,
    return
  }
}

</mosaic_0001>

<llo_original>
// kernel: model_forward.1
$region0: #{model_forward.1}
  #allocation0 [shape = 'u32[]', space=smem, size = 0x4, offset = 0x4, fixed_abs, tag = 'smem constant byte address 0x4 - core index']
  #allocation1 [shape = 'u32[144,128]{1,0:T(1,128)}', space=vmem, size = 0x12000, scoped, tag = 'internal scratch']
  #allocation2 [shape = 'bf16[4,192,128]{2,1,0:T(16,128)(2,1)}', space=vmem, size = 0x30000, scoped, tag = 'scratch operand']
  #allocation3 [shape = 'bf16[192,64]{1,0:T(16,128)(2,1)}', space=vmem, size = 0xc000, scoped, tag = 'scratch operand']
  #allocation4 [shape = 's32[2]{0}', space=sflag, size = 0x8, scoped, tag = 'scratch operand']
  #allocation5 [shape = 's32[]', space=sflag, size = 0x4, offset = 0, fixed_abs, tag = 'sflag constant byte address 0x0 - dummy sync flag']
  #allocation6 [shape = 's32[]', space=sflag, size = 0x4, offset = 0, fixed_abs, tag = 'sflag constant byte address 0x0 - dummy sync flag']
  %s0 = inlined_call_operand.vmem [shape: f32[256,576], index: 0, kind: input, shape index: {}]
  %s1 = inlined_call_operand.vmem [shape: f32[1,576], index: 1, kind: input, shape index: {}]
  %s2 = inlined_call_operand.vmem [shape: f32[1,576], index: 2, kind: input, shape index: {}]
  %s3 = inlined_call_operand.vmem [shape: bf16[576,192], index: 3, kind: input, shape index: {}]
  %s4 = inlined_call_operand.vmem [shape: f32[1,192], index: 4, kind: input, shape index: {}]
  %s5 = inlined_call_operand.vmem [shape: f32[1,192], index: 5, kind: input, shape index: {}]
  %s6 = inlined_call_operand.vmem [shape: bf16[4,192,128], index: 6, kind: input, shape index: {}]
  %s7 = inlined_call_operand.vmem [shape: bf16[192,64], index: 7, kind: input, shape index: {}]
  %s8 = inlined_call_operand.vmem [shape: f32[256,64], index: 8, kind: output, shape index: {}]
  %s9 = sld [smem:[#allocation0]]
  $region102: #{model_forward.1} parent=0
    _
  %s11 = ssub.s32 1, %s9
  %s12 = scalar_select 0, %s11, %s9
  // Predicated region
  $region2: #{model_forward.1} parent=0 // pred_check
    _
  $region3: #{model_forward.1} parent=0 // pred_check_branch
    %14 = sbr.rel (0) target = $region5
  $region4: #{model_forward.1} parent=0 // pred_region
    _
  $region5: #{model_forward.1} parent=0 // pred_fallthru
    _
  // Predicated region
  $region6: #{model_forward.1} parent=0 // pred_check
    _
  $region7: #{model_forward.1} parent=0 // pred_check_branch
    %16 = sbr.rel (0) target = $region9
  $region8: #{model_forward.1} parent=0 // pred_region
    _
  $region9: #{model_forward.1} parent=0 // pred_fallthru
    _
  // Predicated region
  $region10: #{model_forward.1} parent=0 // pred_check
    _
  $region11: #{model_forward.1} parent=0 // pred_check_branch
    %18 = sbr.rel (0) target = $region13
  $region12: #{model_forward.1} parent=0 // pred_region
    _
  $region13: #{model_forward.1} parent=0 // pred_fallthru
    _
  // Predicated region
  $region14: #{model_forward.1} parent=0 // pred_check
    _
  $region15: #{model_forward.1} parent=0 // pred_check_branch
    %20 = sbr.rel (0) target = $region17
  $region16: #{model_forward.1} parent=0 // pred_region
    _
  $region17: #{model_forward.1} parent=0 // pred_fallthru
    _
  // Predicated region
  $region18: #{model_forward.1} parent=0 // pred_check
    _
  $region19: #{model_forward.1} parent=0 // pred_check_branch
    %22 = sbr.rel (0) target = $region21
  $region20: #{model_forward.1} parent=0 // pred_region
    _
  $region21: #{model_forward.1} parent=0 // pred_fallthru
    _
  // Predicated region
  $region22: #{model_forward.1} parent=0 // pred_check
    _
  $region23: #{model_forward.1} parent=0 // pred_check_branch
    %24 = sbr.rel (0) target = $region25
  $region24: #{model_forward.1} parent=0 // pred_region
    _
  $region25: #{model_forward.1} parent=0 // pred_fallthru
    _
  %p27 = scmp.lt.u32.totalorder 384, 8
  %p28 = pneg %p27
  // Predicated region
  $region26: #{model_forward.1} parent=0 // pred_check
    _
  $region27: #{model_forward.1} parent=0 // pred_check_branch
    %30 = sbr.rel (%p27) target = $region29
  $region28: #{model_forward.1} parent=0 // pred_region
    %s45 = sand.u32 384, 7
    %p46 = scmp.eq.s32.totalorder %s45, 0
    // Predicated region
    $region41: #{model_forward.1} parent=28 // pred_check
      %p47 = pneg %p46
    $region42: #{model_forward.1} parent=28 // pred_check_branch
      %49 = sbr.rel (%p47) target = $region44
    $region43: #{model_forward.1} parent=28 // pred_region
      loop: start=0, step=1, limit=1
      $region45: #{model_forward.1} parent=43 // loop_pre_header
        _
      $region46: #{model_forward.1} parent=43 // loop_header
        %s51 = sphi 0, %s55
        %p52 = scmp.ge.s32.totalorder %s51, 1
        %s56 = sphi %s6, %s6
        %s57 = sphi [#allocation2], [#allocation2]
      $region47: #{model_forward.1} parent=43 // loop_header_branch
        %54 = sbr.rel (%p52) target = $region51
      $region48: #{model_forward.1} parent=43 // loop_body
        %v58 = vld [vmem:[%s56] sm:$0xff]
        %59 = vst [vmem:[%s57] sm:$0xff] %v58
        %v60 = vld [vmem:[%s56 + $0x8] sm:$0xff]
        %61 = vst [vmem:[%s57 + $0x8] sm:$0xff] %v60
        %v62 = vld [vmem:[%s56 + $0x10] sm:$0xff]
        %63 = vst [vmem:[%s57 + $0x10] sm:$0xff] %v62
        %v64 = vld [vmem:[%s56 + $0x18] sm:$0xff]
        %65 = vst [vmem:[%s57 + $0x18] sm:$0xff] %v64
        %v66 = vld [vmem:[%s56 + $0x20] sm:$0xff]
        %67 = vst [vmem:[%s57 + $0x20] sm:$0xff] %v66
        %v68 = vld [vmem:[%s56 + $0x28] sm:$0xff]
        %69 = vst [vmem:[%s57 + $0x28] sm:$0xff] %v68
        %v70 = vld [vmem:[%s56 + $0x30] sm:$0xff]
        %71 = vst [vmem:[%s57 + $0x30] sm:$0xff] %v70
        %v72 = vld [vmem:[%s56 + $0x38] sm:$0xff]
        %73 = vst [vmem:[%s57 + $0x38] sm:$0xff] %v72
        %v74 = vld [vmem:[%s56 + $0x40] sm:$0xff]
        %75 = vst [vmem:[%s57 + $0x40] sm:$0xff] %v74
        %v76 = vld [vmem:[%s56 + $0x48] sm:$0xff]
        %77 = vst [vmem:[%s57 + $0x48] sm:$0xff] %v76
        %v78 = vld [vmem:[%s56 + $0x50] sm:$0xff]
        %79 = vst [vmem:[%s57 + $0x50] sm:$0xff] %v78
        %v80 = vld [vmem:[%s56 + $0x58] sm:$0xff]
        %81 = vst [vmem:[%s57 + $0x58] sm:$0xff] %v80
        %v82 = vld [vmem:[%s56 + $0x60] sm:$0xff]
        %83 = vst [vmem:[%s57 + $0x60] sm:$0xff] %v82
        %v84 = vld [vmem:[%s56 + $0x68] sm:$0xff]
        %85 = vst [vmem:[%s57 + $0x68] sm:$0xff] %v84
        %v86 = vld [vmem:[%s56 + $0x70] sm:$0xff]
        %87 = vst [vmem:[%s57 + $0x70] sm:$0xff] %v86
        %v88 = vld [vmem:[%s56 + $0x78] sm:$0xff]
        %89 = vst [vmem:[%s57 + $0x78] sm:$0xff] %v88
        %v90 = vld [vmem:[%s56 + $0x80] sm:$0xff]
        %91 = vst [vmem:[%s57 + $0x80] sm:$0xff] %v90
        %v92 = vld [vmem:[%s56 + $0x88] sm:$0xff]
        %93 = vst [vmem:[%s57 + $0x88] sm:$0xff] %v92
        %v94 = vld [vmem:[%s56 + $0x90] sm:$0xff]
        %95 = vst [vmem:[%s57 + $0x90] sm:$0xff] %v94
        %v96 = vld [vmem:[%s56 + $0x98] sm:$0xff]
        %97 = vst [vmem:[%s57 + $0x98] sm:$0xff] %v96
        %v98 = vld [vmem:[%s56 + $0xa0] sm:$0xff]
        %99 = vst [vmem:[%s57 + $0xa0] sm:$0xff] %v98
        %v100 = vld [vmem:[%s56 + $0xa8] sm:$0xff]
        %101 = vst [vmem:[%s57 + $0xa8] sm:$0xff] %v100
        %v102 = vld [vmem:[%s56 + $0xb0] sm:$0xff]
        %103 = vst [vmem:[%s57 + $0xb0] sm:$0xff] %v102
        %v104 = vld [vmem:[%s56 + $0xb8] sm:$0xff]
        %105 = vst [vmem:[%s57 + $0xb8] sm:$0xff] %v104
        %v106 = vld [vmem:[%s56 + $0xc0] sm:$0xff]
        %107 = vst [vmem:[%s57 + $0xc0] sm:$0xff] %v106
        %v108 = vld [vmem:[%s56 + $0xc8] sm:$0xff]
        %109 = vst [vmem:[%s57 + $0xc8] sm:$0xff] %v108
        %v110 = vld [vmem:[%s56 + $0xd0] sm:$0xff]
        %111 = vst [vmem:[%s57 + $0xd0] sm:$0xff] %v110
        %v112 = vld [vmem:[%s56 + $0xd8] sm:$0xff]
        %113 = vst [vmem:[%s57 + $0xd8] sm:$0xff] %v112
        %v114 = vld [vmem:[%s56 + $0xe0] sm:$0xff]
        %115 = vst [vmem:[%s57 + $0xe0] sm:$0xff] %v114
        %v116 = vld [vmem:[%s56 + $0xe8] sm:$0xff]
        %117 = vst [vmem:[%s57 + $0xe8] sm:$0xff] %v116
        %v118 = vld [vmem:[%s56 + $0xf0] sm:$0xff]
        %119 = vst [vmem:[%s57 + $0xf0] sm:$0xff] %v118
        %v120 = vld [vmem:[%s56 + $0xf8] sm:$0xff]
        %121 = vst [vmem:[%s57 + $0xf8] sm:$0xff] %v120
        %v122 = vld [vmem:[%s56 + $0x100] sm:$0xff]
        %123 = vst [vmem:[%s57 + $0x100] sm:$0xff] %v122
        %v124 = vld [vmem:[%s56 + $0x108] sm:$0xff]
        %125 = vst [vmem:[%s57 + $0x108] sm:$0xff] %v124
        %v126 = vld [vmem:[%s56 + $0x110] sm:$0xff]
        %127 = vst [vmem:[%s57 + $0x110] sm:$0xff] %v126
        %v128 = vld [vmem:[%s56 + $0x118] sm:$0xff]
        %129 = vst [vmem:[%s57 + $0x118] sm:$0xff] %v128
        %v130 = vld [vmem:[%s56 + $0x120] sm:$0xff]
        %131 = vst [vmem:[%s57 + $0x120] sm:$0xff] %v130
        %v132 = vld [vmem:[%s56 + $0x128] sm:$0xff]
        %133 = vst [vmem:[%s57 + $0x128] sm:$0xff] %v132
        %v134 = vld [vmem:[%s56 + $0x130] sm:$0xff]
        %135 = vst [vmem:[%s57 + $0x130] sm:$0xff] %v134
        %v136 = vld [vmem:[%s56 + $0x138] sm:$0xff]
        %137 = vst [vmem:[%s57 + $0x138] sm:$0xff] %v136
        %v138 = vld [vmem:[%s56 + $0x140] sm:$0xff]
        %139 = vst [vmem:[%s57 + $0x140] sm:$0xff] %v138
        %v140 = vld [vmem:[%s56 + $0x148] sm:$0xff]
        %141 = vst [vmem:[%s57 + $0x148] sm:$0xff] %v140
        %v142 = vld [vmem:[%s56 + $0x150] sm:$0xff]
        %143 = vst [vmem:[%s57 + $0x150] sm:$0xff] %v142
        %v144 = vld [vmem:[%s56 + $0x158] sm:$0xff]
        %145 = vst [vmem:[%s57 + $0x158] sm:$0xff] %v144
        %v146 = vld [vmem:[%s56 + $0x160] sm:$0xff]
        %147 = vst [vmem:[%s57 + $0x160] sm:$0xff] %v146
        %v148 = vld [vmem:[%s56 + $0x168] sm:$0xff]
        %149 = vst [vmem:[%s57 + $0x168] sm:$0xff] %v148
        %v150 = vld [vmem:[%s56 + $0x170] sm:$0xff]
        %151 = vst [vmem:[%s57 + $0x170] sm:$0xff] %v150
        %v152 = vld [vmem:[%s56 + $0x178] sm:$0xff]
        %153 = vst [vmem:[%s57 + $0x178] sm:$0xff] %v152
      $region49: #{model_forward.1} parent=43 // loop_footer
        %s55 = sadd.s32 1, %s51
      $region50: #{model_forward.1} parent=43 // loop_footer_branch
        %50 = sbr.rel target = $region46
      $region51: #{model_forward.1} parent=43 // loop_exit
        _
    $region44: #{model_forward.1} parent=28 // pred_fallthru
      _
    %p154 = pneg %p46
    // Predicated region
    $region52: #{model_forward.1} parent=28 // pred_check
      _
    $region53: #{model_forward.1} parent=28 // pred_check_branch
      %156 = sbr.rel (%p46) target = $region55
    $region54: #{model_forward.1} parent=28 // pred_region
      %s157 = sand.u32 384, 7
    $region55: #{model_forward.1} parent=28 // pred_fallthru
      _
  $region29: #{model_forward.1} parent=0 // pred_fallthru
    _
  // Predicated region
  $region30: #{model_forward.1} parent=0 // pred_check
    %p31 = pneg %p27
  $region31: #{model_forward.1} parent=0 // pred_check_branch
    %33 = sbr.rel (%p31) target = $region33
  $region32: #{model_forward.1} parent=0 // pred_region
    %s34 = sshllo.u32 0, 384
    loop: start=0, step=1, limit=1
    $region34: #{model_forward.1} parent=32 // loop_pre_header
      _
    $region35: #{model_forward.1} parent=32 // loop_header
      %s36 = sphi 0, %s40
      %p37 = scmp.ge.s32.totalorder %s36, 1
      %s41 = sphi %s6, %s6
      %s42 = sphi [#allocation2], [#allocation2]
    $region36: #{model_forward.1} parent=32 // loop_header_branch
      %39 = sbr.rel (%p37) target = $region40
    $region37: #{model_forward.1} parent=32 // loop_body
      %v43 = vld [vmem:[%s41] sm:%s34]
      %44 = vst [vmem:[%s42] sm:%s34] %v43
    $region38: #{model_forward.1} parent=32 // loop_footer
      %s40 = sadd.s32 1, %s36
    $region39: #{model_forward.1} parent=32 // loop_footer_branch
      %35 = sbr.rel target = $region35
    $region40: #{model_forward.1} parent=32 // loop_exit
      _
  $region33: #{model_forward.1} parent=0 // pred_fallthru
    _
  // Predicated region
  $region56: #{model_forward.1} parent=0 // pred_check
    _
  $region57: #{model_forward.1} parent=0 // pred_check_branch
    %160 = sbr.rel (0) target = $region59
  $region58: #{model_forward.1} parent=0 // pred_region
    %161 = vsyncadd [#allocation4], 6144
  $region59: #{model_forward.1} parent=0 // pred_fallthru
    _
  %s162 = scalar_lea.sflag [#allocation4], 1
  %p164 = scmp.lt.u32.totalorder 96, 8
  %p165 = pneg %p164
  // Predicated region
  $region60: #{model_forward.1} parent=0 // pred_check
    _
  $region61: #{model_forward.1} parent=0 // pred_check_branch
    %167 = sbr.rel (%p164) target = $region63
  $region62: #{model_forward.1} parent=0 // pred_region
    %s182 = sand.u32 96, 7
    %p183 = scmp.eq.s32.totalorder %s182, 0
    // Predicated region
    $region75: #{model_forward.1} parent=62 // pred_check
      %p184 = pneg %p183
    $region76: #{model_forward.1} parent=62 // pred_check_branch
      %186 = sbr.rel (%p184) target = $region78
    $region77: #{model_forward.1} parent=62 // pred_region
      loop: start=0, step=1, limit=1
      $region79: #{model_forward.1} parent=77 // loop_pre_header
        _
      $region80: #{model_forward.1} parent=77 // loop_header
        %s188 = sphi 0, %s192
        %p189 = scmp.ge.s32.totalorder %s188, 1
        %s193 = sphi %s7, %s7
        %s194 = sphi [#allocation3], [#allocation3]
      $region81: #{model_forward.1} parent=77 // loop_header_branch
        %191 = sbr.rel (%p189) target = $region85
      $region82: #{model_forward.1} parent=77 // loop_body
        %v195 = vld [vmem:[%s193] sm:$0xff]
        %196 = vst [vmem:[%s194] sm:$0xff] %v195
        %v197 = vld [vmem:[%s193 + $0x8] sm:$0xff]
        %198 = vst [vmem:[%s194 + $0x8] sm:$0xff] %v197
        %v199 = vld [vmem:[%s193 + $0x10] sm:$0xff]
        %200 = vst [vmem:[%s194 + $0x10] sm:$0xff] %v199
        %v201 = vld [vmem:[%s193 + $0x18] sm:$0xff]
        %202 = vst [vmem:[%s194 + $0x18] sm:$0xff] %v201
        %v203 = vld [vmem:[%s193 + $0x20] sm:$0xff]
        %204 = vst [vmem:[%s194 + $0x20] sm:$0xff] %v203
        %v205 = vld [vmem:[%s193 + $0x28] sm:$0xff]
        %206 = vst [vmem:[%s194 + $0x28] sm:$0xff] %v205
        %v207 = vld [vmem:[%s193 + $0x30] sm:$0xff]
        %208 = vst [vmem:[%s194 + $0x30] sm:$0xff] %v207
        %v209 = vld [vmem:[%s193 + $0x38] sm:$0xff]
        %210 = vst [vmem:[%s194 + $0x38] sm:$0xff] %v209
        %v211 = vld [vmem:[%s193 + $0x40] sm:$0xff]
        %212 = vst [vmem:[%s194 + $0x40] sm:$0xff] %v211
        %v213 = vld [vmem:[%s193 + $0x48] sm:$0xff]
        %214 = vst [vmem:[%s194 + $0x48] sm:$0xff] %v213
        %v215 = vld [vmem:[%s193 + $0x50] sm:$0xff]
        %216 = vst [vmem:[%s194 + $0x50] sm:$0xff] %v215
        %v217 = vld [vmem:[%s193 + $0x58] sm:$0xff]
        %218 = vst [vmem:[%s194 + $0x58] sm:$0xff] %v217
      $region83: #{model_forward.1} parent=77 // loop_footer
        %s192 = sadd.s32 1, %s188
      $region84: #{model_forward.1} parent=77 // loop_footer_branch
        %187 = sbr.rel target = $region80
      $region85: #{model_forward.1} parent=77 // loop_exit
        _
    $region78: #{model_forward.1} parent=62 // pred_fallthru
      _
    %p219 = pneg %p183
    // Predicated region
    $region86: #{model_forward.1} parent=62 // pred_check
      _
    $region87: #{model_forward.1} parent=62 // pred_check_branch
      %221 = sbr.rel (%p183) target = $region89
    $region88: #{model_forward.1} parent=62 // pred_region
      %s222 = sand.u32 96, 7
    $region89: #{model_forward.1} parent=62 // pred_fallthru
      _
  $region63: #{model_forward.1} parent=0 // pred_fallthru
    _
  // Predicated region
  $region64: #{model_forward.1} parent=0 // pred_check
    %p168 = pneg %p164
  $region65: #{model_forward.1} parent=0 // pred_check_branch
    %170 = sbr.rel (%p168) target = $region67
  $region66: #{model_forward.1} parent=0 // pred_region
    %s171 = sshllo.u32 0, 96
    loop: start=0, step=1, limit=1
    $region68: #{model_forward.1} parent=66 // loop_pre_header
      _
    $region69: #{model_forward.1} parent=66 // loop_header
      %s173 = sphi 0, %s177
      %p174 = scmp.ge.s32.totalorder %s173, 1
      %s178 = sphi %s7, %s7
      %s179 = sphi [#allocation3], [#allocation3]
    $region70: #{model_forward.1} parent=66 // loop_header_branch
      %176 = sbr.rel (%p174) target = $region74
    $region71: #{model_forward.1} parent=66 // loop_body
      %v180 = vld [vmem:[%s178] sm:%s171]
      %181 = vst [vmem:[%s179] sm:%s171] %v180
    $region72: #{model_forward.1} parent=66 // loop_footer
      %s177 = sadd.s32 1, %s173
    $region73: #{model_forward.1} parent=66 // loop_footer_branch
      %172 = sbr.rel target = $region69
    $region74: #{model_forward.1} parent=66 // loop_exit
      _
  $region67: #{model_forward.1} parent=0 // pred_fallthru
    _
  // Predicated region
  $region90: #{model_forward.1} parent=0 // pred_check
    _
  $region91: #{model_forward.1} parent=0 // pred_check_branch
    %225 = sbr.rel (0) target = $region93
  $region92: #{model_forward.1} parent=0 // pred_region
    %226 = vsyncadd %s162, 1536
  $region93: #{model_forward.1} parent=0 // pred_fallthru
    _
  %v227 = vlaneseq
  %v228 = vshrl.u32 %v227, 7
  %v229 = vadd.s32 %v228, 8
  %v230 = vadd.s32 %v228, 16
  %v231 = vadd.s32 %v228, 24
  %v232 = vadd.s32 %v228, 32
  %v233 = vadd.s32 %v228, 40
  %v234 = vadd.s32 %v228, 48
  %v235 = vadd.s32 %v228, 56
  %v236 = vadd.s32 %v228, 64
  %v237 = vadd.s32 %v228, 72
  %v238 = vadd.s32 %v228, 80
  %v239 = vadd.s32 %v228, 88
  %v240 = vadd.s32 %v228, 96
  %v241 = vadd.s32 %v228, 104
  %v242 = vadd.s32 %v228, 112
  %v243 = vadd.s32 %v228, 120
  %v244 = vadd.s32 %v228, 128
  %v245 = vadd.s32 %v228, 136
  %v246 = vadd.s32 %v228, 144
  %v247 = vadd.s32 %v228, 152
  %v248 = vadd.s32 %v228, 160
  %v249 = vadd.s32 %v228, 168
  %v250 = vadd.s32 %v228, 176
  %v251 = vadd.s32 %v228, 184
  %v252 = vadd.s32 %v228, 192
  %v253 = vadd.s32 %v228, 200
  %v254 = vadd.s32 %v228, 208
  %v255 = vadd.s32 %v228, 216
  %v256 = vadd.s32 %v228, 224
  %v257 = vadd.s32 %v228, 232
  %v258 = vadd.s32 %v228, 240
  %v259 = vadd.s32 %v228, 248
  %v260 = vshra.s32 %v228, 4
  %v261 = vshra.s32 %v229, 4
  %v262 = vshra.s32 %v230, 4
  %v263 = vshra.s32 %v231, 4
  %v264 = vshra.s32 %v232, 4
  %v265 = vshra.s32 %v233, 4
  %v266 = vshra.s32 %v234, 4
  %v267 = vshra.s32 %v235, 4
  %v268 = vshra.s32 %v236, 4
  %v269 = vshra.s32 %v237, 4
  %v270 = vshra.s32 %v238, 4
  %v271 = vshra.s32 %v239, 4
  %v272 = vshra.s32 %v240, 4
  %v273 = vshra.s32 %v241, 4
  %v274 = vshra.s32 %v242, 4
  %v275 = vshra.s32 %v243, 4
  %v276 = vshra.s32 %v244, 4
  %v277 = vshra.s32 %v245, 4
  %v278 = vshra.s32 %v246, 4
  %v279 = vshra.s32 %v247, 4
  %v280 = vshra.s32 %v248, 4
  %v281 = vshra.s32 %v249, 4
  %v282 = vshra.s32 %v250, 4
  %v283 = vshra.s32 %v251, 4
  %v284 = vshra.s32 %v252, 4
  %v285 = vshra.s32 %v253, 4
  %v286 = vshra.s32 %v254, 4
  %v287 = vshra.s32 %v255, 4
  %v288 = vshra.s32 %v256, 4
  %v289 = vshra.s32 %v257, 4
  %v290 = vshra.s32 %v258, 4
  %v291 = vshra.s32 %v259, 4
  %v292 = vand.u32 %v228, 15
  %v293 = vand.u32 %v229, 15
  %v294 = vand.u32 %v230, 15
  %v295 = vand.u32 %v231, 15
  %v296 = vand.u32 %v232, 15
  %v297 = vand.u32 %v233, 15
  %v298 = vand.u32 %v234, 15
  %v299 = vand.u32 %v235, 15
  %v300 = vand.u32 %v236, 15
  %v301 = vand.u32 %v237, 15
  %v302 = vand.u32 %v238, 15
  %v303 = vand.u32 %v239, 15
  %v304 = vand.u32 %v240, 15
  %v305 = vand.u32 %v241, 15
  %v306 = vand.u32 %v242, 15
  %v307 = vand.u32 %v243, 15
  %v308 = vand.u32 %v244, 15
  %v309 = vand.u32 %v245, 15
  %v310 = vand.u32 %v246, 15
  %v311 = vand.u32 %v247, 15
  %v312 = vand.u32 %v248, 15
  %v313 = vand.u32 %v249, 15
  %v314 = vand.u32 %v250, 15
  %v315 = vand.u32 %v251, 15
  %v316 = vand.u32 %v252, 15
  %v317 = vand.u32 %v253, 15
  %v318 = vand.u32 %v254, 15
  %v319 = vand.u32 %v255, 15
  %v320 = vand.u32 %v256, 15
  %v321 = vand.u32 %v257, 15
  %v322 = vand.u32 %v258, 15
  %v323 = vand.u32 %v259, 15
  %vm324 = vcmp.ge.s32.totalorder %v260, 1
  %vm325 = vcmp.ge.s32.totalorder %v261, 1
  %vm326 = vcmp.ge.s32.totalorder %v262, 1
  %vm327 = vcmp.ge.s32.totalorder %v263, 1
  %vm328 = vcmp.ge.s32.totalorder %v264, 1
  %vm329 = vcmp.ge.s32.totalorder %v265, 1
  %vm330 = vcmp.ge.s32.totalorder %v266, 1
  %vm331 = vcmp.ge.s32.totalorder %v267, 1
  %vm332 = vcmp.ge.s32.totalorder %v268, 1
  %vm333 = vcmp.ge.s32.totalorder %v269, 1
  %vm334 = vcmp.ge.s32.totalorder %v270, 1
  %vm335 = vcmp.ge.s32.totalorder %v271, 1
  %vm336 = vcmp.ge.s32.totalorder %v272, 1
  %vm337 = vcmp.ge.s32.totalorder %v273, 1
  %vm338 = vcmp.ge.s32.totalorder %v274, 1
  %vm339 = vcmp.ge.s32.totalorder %v275, 1
  %vm340 = vcmp.ge.s32.totalorder %v276, 1
  %vm341 = vcmp.ge.s32.totalorder %v277, 1
  %vm342 = vcmp.ge.s32.totalorder %v278, 1
  %vm343 = vcmp.ge.s32.totalorder %v279, 1
  %vm344 = vcmp.ge.s32.totalorder %v280, 1
  %vm345 = vcmp.ge.s32.totalorder %v281, 1
  %vm346 = vcmp.ge.s32.totalorder %v282, 1
  %vm347 = vcmp.ge.s32.totalorder %v283, 1
  %vm348 = vcmp.ge.s32.totalorder %v284, 1
  %vm349 = vcmp.ge.s32.totalorder %v285, 1
  %vm350 = vcmp.ge.s32.totalorder %v286, 1
  %vm351 = vcmp.ge.s32.totalorder %v287, 1
  %vm352 = vcmp.ge.s32.totalorder %v288, 1
  %vm353 = vcmp.ge.s32.totalorder %v289, 1
  %vm354 = vcmp.ge.s32.totalorder %v290, 1
  %vm355 = vcmp.ge.s32.totalorder %v291, 1
  %vm356 = vcmp.le.s32.totalorder %v260, 14
  %vm357 = vcmp.le.s32.totalorder %v261, 14
  %vm358 = vcmp.le.s32.totalorder %v262, 14
  %vm359 = vcmp.le.s32.totalorder %v263, 14
  %vm360 = vcmp.le.s32.totalorder %v264, 14
  %vm361 = vcmp.le.s32.totalorder %v265, 14
  %vm362 = vcmp.le.s32.totalorder %v266, 14
  %vm363 = vcmp.le.s32.totalorder %v267, 14
  %vm364 = vcmp.le.s32.totalorder %v268, 14
  %vm365 = vcmp.le.s32.totalorder %v269, 14
  %vm366 = vcmp.le.s32.totalorder %v270, 14
  %vm367 = vcmp.le.s32.totalorder %v271, 14
  %vm368 = vcmp.le.s32.totalorder %v272, 14
  %vm369 = vcmp.le.s32.totalorder %v273, 14
  %vm370 = vcmp.le.s32.totalorder %v274, 14
  %vm371 = vcmp.le.s32.totalorder %v275, 14
  %vm372 = vcmp.le.s32.totalorder %v276, 14
  %vm373 = vcmp.le.s32.totalorder %v277, 14
  %vm374 = vcmp.le.s32.totalorder %v278, 14
  %vm375 = vcmp.le.s32.totalorder %v279, 14
  %vm376 = vcmp.le.s32.totalorder %v280, 14
  %vm377 = vcmp.le.s32.totalorder %v281, 14
  %vm378 = vcmp.le.s32.totalorder %v282, 14
  %vm379 = vcmp.le.s32.totalorder %v283, 14
  %vm380 = vcmp.le.s32.totalorder %v284, 14
  %vm381 = vcmp.le.s32.totalorder %v285, 14
  %vm382 = vcmp.le.s32.totalorder %v286, 14
  %vm383 = vcmp.le.s32.totalorder %v287, 14
  %vm384 = vcmp.le.s32.totalorder %v288, 14
  %vm385 = vcmp.le.s32.totalorder %v289, 14
  %vm386 = vcmp.le.s32.totalorder %v290, 14
  %vm387 = vcmp.le.s32.totalorder %v291, 14
  %vm388 = vmand %vm324, %vm356
  %vm389 = vmand %vm325, %vm357
  %vm390 = vmand %vm326, %vm358
  %vm391 = vmand %vm327, %vm359
  %vm392 = vmand %vm328, %vm360
  %vm393 = vmand %vm329, %vm361
  %vm394 = vmand %vm330, %vm362
  %vm395 = vmand %vm331, %vm363
  %vm396 = vmand %vm332, %vm364
  %vm397 = vmand %vm333, %vm365
  %vm398 = vmand %vm334, %vm366
  %vm399 = vmand %vm335, %vm367
  %vm400 = vmand %vm336, %vm368
  %vm401 = vmand %vm337, %vm369
  %vm402 = vmand %vm338, %vm370
  %vm403 = vmand %vm339, %vm371
  %vm404 = vmand %vm340, %vm372
  %vm405 = vmand %vm341, %vm373
  %vm406 = vmand %vm342, %vm374
  %vm407 = vmand %vm343, %vm375
  %vm408 = vmand %vm344, %vm376
  %vm409 = vmand %vm345, %vm377
  %vm410 = vmand %vm346, %vm378
  %vm411 = vmand %vm347, %vm379
  %vm412 = vmand %vm348, %vm380
  %vm413 = vmand %vm349, %vm381
  %vm414 = vmand %vm350, %vm382
  %vm415 = vmand %vm351, %vm383
  %vm416 = vmand %vm352, %vm384
  %vm417 = vmand %vm353, %vm385
  %vm418 = vmand %vm354, %vm386
  %vm419 = vmand %vm355, %vm387
  %vm420 = vcmp.ge.s32.totalorder %v292, 1
  %vm421 = vcmp.ge.s32.totalorder %v293, 1
  %vm422 = vcmp.ge.s32.totalorder %v294, 1
  %vm423 = vcmp.ge.s32.totalorder %v295, 1
  %vm424 = vcmp.ge.s32.totalorder %v296, 1
  %vm425 = vcmp.ge.s32.totalorder %v297, 1
  %vm426 = vcmp.ge.s32.totalorder %v298, 1
  %vm427 = vcmp.ge.s32.totalorder %v299, 1
  %vm428 = vcmp.ge.s32.totalorder %v300, 1
  %vm429 = vcmp.ge.s32.totalorder %v301, 1
  %vm430 = vcmp.ge.s32.totalorder %v302, 1
  %vm431 = vcmp.ge.s32.totalorder %v303, 1
  %vm432 = vcmp.ge.s32.totalorder %v304, 1
  %vm433 = vcmp.ge.s32.totalorder %v305, 1
  %vm434 = vcmp.ge.s32.totalorder %v306, 1
  %vm435 = vcmp.ge.s32.totalorder %v307, 1
  %vm436 = vcmp.ge.s32.totalorder %v308, 1
  %vm437 = vcmp.ge.s32.totalorder %v309, 1
  %vm438 = vcmp.ge.s32.totalorder %v310, 1
  %vm439 = vcmp.ge.s32.totalorder %v311, 1
  %vm440 = vcmp.ge.s32.totalorder %v312, 1
  %vm441 = vcmp.ge.s32.totalorder %v313, 1
  %vm442 = vcmp.ge.s32.totalorder %v314, 1
  %vm443 = vcmp.ge.s32.totalorder %v315, 1
  %vm444 = vcmp.ge.s32.totalorder %v316, 1
  %vm445 = vcmp.ge.s32.totalorder %v317, 1
  %vm446 = vcmp.ge.s32.totalorder %v318, 1
  %vm447 = vcmp.ge.s32.totalorder %v319, 1
  %vm448 = vcmp.ge.s32.totalorder %v320, 1
  %vm449 = vcmp.ge.s32.totalorder %v321, 1
  %vm450 = vcmp.ge.s32.totalorder %v322, 1
  %vm451 = vcmp.ge.s32.totalorder %v323, 1
  %vm452 = vmand %vm388, %vm420
  %vm453 = vmand %vm389, %vm421
  %vm454 = vmand %vm390, %vm422
  %vm455 = vmand %vm391, %vm423
  %vm456 = vmand %vm392, %vm424
  %vm457 = vmand %vm393, %vm425
  %vm458 = vmand %vm394, %vm426
  %vm459 = vmand %vm395, %vm427
  %vm460 = vmand %vm396, %vm428
  %vm461 = vmand %vm397, %vm429
  %vm462 = vmand %vm398, %vm430
  %vm463 = vmand %vm399, %vm431
  %vm464 = vmand %vm400, %vm432
  %vm465 = vmand %vm401, %vm433
  %vm466 = vmand %vm402, %vm434
  %vm467 = vmand %vm403, %vm435
  %vm468 = vmand %vm404, %vm436
  %vm469 = vmand %vm405, %vm437
  %vm470 = vmand %vm406, %vm438
  %vm471 = vmand %vm407, %vm439
  %vm472 = vmand %vm408, %vm440
  %vm473 = vmand %vm409, %vm441
  %vm474 = vmand %vm410, %vm442
  %vm475 = vmand %vm411, %vm443
  %vm476 = vmand %vm412, %vm444
  %vm477 = vmand %vm413, %vm445
  %vm478 = vmand %vm414, %vm446
  %vm479 = vmand %vm415, %vm447
  %vm480 = vmand %vm416, %vm448
  %vm481 = vmand %vm417, %vm449
  %vm482 = vmand %vm418, %vm450
  %vm483 = vmand %vm419, %vm451
  %vm484 = vcmp.le.s32.totalorder %v292, 14
  %vm485 = vcmp.le.s32.totalorder %v293, 14
  %vm486 = vcmp.le.s32.totalorder %v294, 14
  %vm487 = vcmp.le.s32.totalorder %v295, 14
  %vm488 = vcmp.le.s32.totalorder %v296, 14
  %vm489 = vcmp.le.s32.totalorder %v297, 14
  %vm490 = vcmp.le.s32.totalorder %v298, 14
  %vm491 = vcmp.le.s32.totalorder %v299, 14
  %vm492 = vcmp.le.s32.totalorder %v300, 14
  %vm493 = vcmp.le.s32.totalorder %v301, 14
  %vm494 = vcmp.le.s32.totalorder %v302, 14
  %vm495 = vcmp.le.s32.totalorder %v303, 14
  %vm496 = vcmp.le.s32.totalorder %v304, 14
  %vm497 = vcmp.le.s32.totalorder %v305, 14
  %vm498 = vcmp.le.s32.totalorder %v306, 14
  %vm499 = vcmp.le.s32.totalorder %v307, 14
  %vm500 = vcmp.le.s32.totalorder %v308, 14
  %vm501 = vcmp.le.s32.totalorder %v309, 14
  %vm502 = vcmp.le.s32.totalorder %v310, 14
  %vm503 = vcmp.le.s32.totalorder %v311, 14
  %vm504 = vcmp.le.s32.totalorder %v312, 14
  %vm505 = vcmp.le.s32.totalorder %v313, 14
  %vm506 = vcmp.le.s32.totalorder %v314, 14
  %vm507 = vcmp.le.s32.totalorder %v315, 14
  %vm508 = vcmp.le.s32.totalorder %v316, 14
  %vm509 = vcmp.le.s32.totalorder %v317, 14
  %vm510 = vcmp.le.s32.totalorder %v318, 14
  %vm511 = vcmp.le.s32.totalorder %v319, 14
  %vm512 = vcmp.le.s32.totalorder %v320, 14
  %vm513 = vcmp.le.s32.totalorder %v321, 14
  %vm514 = vcmp.le.s32.totalorder %v322, 14
  %vm515 = vcmp.le.s32.totalorder %v323, 14
  %vm516 = vmand %vm452, %vm484
  %vm517 = vmand %vm453, %vm485
  %vm518 = vmand %vm454, %vm486
  %vm519 = vmand %vm455, %vm487
  %vm520 = vmand %vm456, %vm488
  %vm521 = vmand %vm457, %vm489
  %vm522 = vmand %vm458, %vm490
  %vm523 = vmand %vm459, %vm491
  %vm524 = vmand %vm460, %vm492
  %vm525 = vmand %vm461, %vm493
  %vm526 = vmand %vm462, %vm494
  %vm527 = vmand %vm463, %vm495
  %vm528 = vmand %vm464, %vm496
  %vm529 = vmand %vm465, %vm497
  %vm530 = vmand %vm466, %vm498
  %vm531 = vmand %vm467, %vm499
  %vm532 = vmand %vm468, %vm500
  %vm533 = vmand %vm469, %vm501
  %vm534 = vmand %vm470, %vm502
  %vm535 = vmand %vm471, %vm503
  %vm536 = vmand %vm472, %vm504
  %vm537 = vmand %vm473, %vm505
  %vm538 = vmand %vm474, %vm506
  %vm539 = vmand %vm475, %vm507
  %vm540 = vmand %vm476, %vm508
  %vm541 = vmand %vm477, %vm509
  %vm542 = vmand %vm478, %vm510
  %vm543 = vmand %vm479, %vm511
  %vm544 = vmand %vm480, %vm512
  %vm545 = vmand %vm481, %vm513
  %vm546 = vmand %vm482, %vm514
  %vm547 = vmand %vm483, %vm515
  %v548 = vsel %vm516, 1, 0
  %v549 = vsel %vm517, 1, 0
  %v550 = vsel %vm518, 1, 0
  %v551 = vsel %vm519, 1, 0
  %v552 = vsel %vm520, 1, 0
  %v553 = vsel %vm521, 1, 0
  %v554 = vsel %vm522, 1, 0
  %v555 = vsel %vm523, 1, 0
  %v556 = vsel %vm524, 1, 0
  %v557 = vsel %vm525, 1, 0
  %v558 = vsel %vm526, 1, 0
  %v559 = vsel %vm527, 1, 0
  %v560 = vsel %vm528, 1, 0
  %v561 = vsel %vm529, 1, 0
  %v562 = vsel %vm530, 1, 0
  %v563 = vsel %vm531, 1, 0
  %v564 = vsel %vm532, 1, 0
  %v565 = vsel %vm533, 1, 0
  %v566 = vsel %vm534, 1, 0
  %v567 = vsel %vm535, 1, 0
  %v568 = vsel %vm536, 1, 0
  %v569 = vsel %vm537, 1, 0
  %v570 = vsel %vm538, 1, 0
  %v571 = vsel %vm539, 1, 0
  %v572 = vsel %vm540, 1, 0
  %v573 = vsel %vm541, 1, 0
  %v574 = vsel %vm542, 1, 0
  %v575 = vsel %vm543, 1, 0
  %v576 = vsel %vm544, 1, 0
  %v577 = vsel %vm545, 1, 0
  %v578 = vsel %vm546, 1, 0
  %v579 = vsel %vm547, 1, 0
  %v580 = vcvt.s32.f32 %v548
  %v581 = vcvt.s32.f32 %v549
  %v582 = vcvt.s32.f32 %v550
  %v583 = vcvt.s32.f32 %v551
  %v584 = vcvt.s32.f32 %v552
  %v585 = vcvt.s32.f32 %v553
  %v586 = vcvt.s32.f32 %v554
  %v587 = vcvt.s32.f32 %v555
  %v588 = vcvt.s32.f32 %v556
  %v589 = vcvt.s32.f32 %v557
  %v590 = vcvt.s32.f32 %v558
  %v591 = vcvt.s32.f32 %v559
  %v592 = vcvt.s32.f32 %v560
  %v593 = vcvt.s32.f32 %v561
  %v594 = vcvt.s32.f32 %v562
  %v595 = vcvt.s32.f32 %v563
  %v596 = vcvt.s32.f32 %v564
  %v597 = vcvt.s32.f32 %v565
  %v598 = vcvt.s32.f32 %v566
  %v599 = vcvt.s32.f32 %v567
  %v600 = vcvt.s32.f32 %v568
  %v601 = vcvt.s32.f32 %v569
  %v602 = vcvt.s32.f32 %v570
  %v603 = vcvt.s32.f32 %v571
  %v604 = vcvt.s32.f32 %v572
  %v605 = vcvt.s32.f32 %v573
  %v606 = vcvt.s32.f32 %v574
  %v607 = vcvt.s32.f32 %v575
  %v608 = vcvt.s32.f32 %v576
  %v609 = vcvt.s32.f32 %v577
  %v610 = vcvt.s32.f32 %v578
  %v611 = vcvt.s32.f32 %v579
  %v612 = vld [vmem:[%s0] sm:$0xff]
  %v613 = vld [vmem:[%s0 + $0x8] sm:$0xff]
  %v614 = vld [vmem:[%s0 + $0x10] sm:$0xff]
  %v615 = vld [vmem:[%s0 + $0x18] sm:$0xff]
  %v616 = vld [vmem:[%s0 + $0x20] sm:$0xff]
  %v617 = vld [vmem:[%s0 + $0x28] sm:$0xff]
  %v618 = vld [vmem:[%s0 + $0x30] sm:$0xff]
  %v619 = vld [vmem:[%s0 + $0x38] sm:$0xff]
  %v620 = vld [vmem:[%s0 + $0x40] sm:$0xff]
  %v621 = vld [vmem:[%s0 + $0x48] sm:$0xff]
  %v622 = vld [vmem:[%s0 + $0x50] sm:$0xff]
  %v623 = vld [vmem:[%s0 + $0x58] sm:$0xff]
  %v624 = vld [vmem:[%s0 + $0x60] sm:$0xff]
  %v625 = vld [vmem:[%s0 + $0x68] sm:$0xff]
  %v626 = vld [vmem:[%s0 + $0x70] sm:$0xff]
  %v627 = vld [vmem:[%s0 + $0x78] sm:$0xff]
  %v628 = vld [vmem:[%s0 + $0x80] sm:$0xff]
  %v629 = vld [vmem:[%s0 + $0x88] sm:$0xff]
  %v630 = vld [vmem:[%s0 + $0x90] sm:$0xff]
  %v631 = vld [vmem:[%s0 + $0x98] sm:$0xff]
  %v632 = vld [vmem:[%s0 + $0xa0] sm:$0xff]
  %v633 = vld [vmem:[%s0 + $0xa8] sm:$0xff]
  %v634 = vld [vmem:[%s0 + $0xb0] sm:$0xff]
  %v635 = vld [vmem:[%s0 + $0xb8] sm:$0xff]
  %v636 = vld [vmem:[%s0 + $0xc0] sm:$0xff]
  %v637 = vld [vmem:[%s0 + $0xc8] sm:$0xff]
  %v638 = vld [vmem:[%s0 + $0xd0] sm:$0xff]
  %v639 = vld [vmem:[%s0 + $0xd8] sm:$0xff]
  %v640 = vld [vmem:[%s0 + $0xe0] sm:$0xff]
  %v641 = vld [vmem:[%s0 + $0xe8] sm:$0xff]
  %v642 = vld [vmem:[%s0 + $0xf0] sm:$0xff]
  %v643 = vld [vmem:[%s0 + $0xf8] sm:$0xff]
  %v644 = vld [vmem:[%s0 + $0x100] sm:$0xff]
  %v645 = vld [vmem:[%s0 + $0x108] sm:$0xff]
  %v646 = vld [vmem:[%s0 + $0x110] sm:$0xff]
  %v647 = vld [vmem:[%s0 + $0x118] sm:$0xff]
  %v648 = vld [vmem:[%s0 + $0x120] sm:$0xff]
  %v649 = vld [vmem:[%s0 + $0x128] sm:$0xff]
  %v650 = vld [vmem:[%s0 + $0x130] sm:$0xff]
  %v651 = vld [vmem:[%s0 + $0x138] sm:$0xff]
  %v652 = vld [vmem:[%s0 + $0x140] sm:$0xff]
  %v653 = vld [vmem:[%s0 + $0x148] sm:$0xff]
  %v654 = vld [vmem:[%s0 + $0x150] sm:$0xff]
  %v655 = vld [vmem:[%s0 + $0x158] sm:$0xff]
  %v656 = vld [vmem:[%s0 + $0x160] sm:$0xff]
  %v657 = vld [vmem:[%s0 + $0x168] sm:$0xff]
  %v658 = vld [vmem:[%s0 + $0x170] sm:$0xff]
  %v659 = vld [vmem:[%s0 + $0x178] sm:$0xff]
  %v660 = vld [vmem:[%s0 + $0x180] sm:$0xff]
  %v661 = vld [vmem:[%s0 + $0x188] sm:$0xff]
  %v662 = vld [vmem:[%s0 + $0x190] sm:$0xff]
  %v663 = vld [vmem:[%s0 + $0x198] sm:$0xff]
  %v664 = vld [vmem:[%s0 + $0x1a0] sm:$0xff]
  %v665 = vld [vmem:[%s0 + $0x1a8] sm:$0xff]
  %v666 = vld [vmem:[%s0 + $0x1b0] sm:$0xff]
  %v667 = vld [vmem:[%s0 + $0x1b8] sm:$0xff]
  %v668 = vld [vmem:[%s0 + $0x1c0] sm:$0xff]
  %v669 = vld [vmem:[%s0 + $0x1c8] sm:$0xff]
  %v670 = vld [vmem:[%s0 + $0x1d0] sm:$0xff]
  %v671 = vld [vmem:[%s0 + $0x1d8] sm:$0xff]
  %v672 = vld [vmem:[%s0 + $0x1e0] sm:$0xff]
  %v673 = vld [vmem:[%s0 + $0x1e8] sm:$0xff]
  %v674 = vld [vmem:[%s0 + $0x1f0] sm:$0xff]
  %v675 = vld [vmem:[%s0 + $0x1f8] sm:$0xff]
  %v676 = vld [vmem:[%s0 + $0x200] sm:$0xff]
  %v677 = vld [vmem:[%s0 + $0x208] sm:$0xff]
  %v678 = vld [vmem:[%s0 + $0x210] sm:$0xff]
  %v679 = vld [vmem:[%s0 + $0x218] sm:$0xff]
  %v680 = vld [vmem:[%s0 + $0x220] sm:$0xff]
  %v681 = vld [vmem:[%s0 + $0x228] sm:$0xff]
  %v682 = vld [vmem:[%s0 + $0x230] sm:$0xff]
  %v683 = vld [vmem:[%s0 + $0x238] sm:$0xff]
  %v684 = vld [vmem:[%s0 + $0x240] sm:$0xff]
  %v685 = vld [vmem:[%s0 + $0x248] sm:$0xff]
  %v686 = vld [vmem:[%s0 + $0x250] sm:$0xff]
  %v687 = vld [vmem:[%s0 + $0x258] sm:$0xff]
  %v688 = vld [vmem:[%s0 + $0x260] sm:$0xff]
  %v689 = vld [vmem:[%s0 + $0x268] sm:$0xff]
  %v690 = vld [vmem:[%s0 + $0x270] sm:$0xff]
  %v691 = vld [vmem:[%s0 + $0x278] sm:$0xff]
  %v692 = vld [vmem:[%s0 + $0x280] sm:$0xff]
  %v693 = vld [vmem:[%s0 + $0x288] sm:$0xff]
  %v694 = vld [vmem:[%s0 + $0x290] sm:$0xff]
  %v695 = vld [vmem:[%s0 + $0x298] sm:$0xff]
  %v696 = vld [vmem:[%s0 + $0x2a0] sm:$0xff]
  %v697 = vld [vmem:[%s0 + $0x2a8] sm:$0xff]
  %v698 = vld [vmem:[%s0 + $0x2b0] sm:$0xff]
  %v699 = vld [vmem:[%s0 + $0x2b8] sm:$0xff]
  %v700 = vld [vmem:[%s0 + $0x2c0] sm:$0xff]
  %v701 = vld [vmem:[%s0 + $0x2c8] sm:$0xff]
  %v702 = vld [vmem:[%s0 + $0x2d0] sm:$0xff]
  %v703 = vld [vmem:[%s0 + $0x2d8] sm:$0xff]
  %v704 = vld [vmem:[%s0 + $0x2e0] sm:$0xff]
  %v705 = vld [vmem:[%s0 + $0x2e8] sm:$0xff]
  %v706 = vld [vmem:[%s0 + $0x2f0] sm:$0xff]
  %v707 = vld [vmem:[%s0 + $0x2f8] sm:$0xff]
  %v708 = vld [vmem:[%s0 + $0x300] sm:$0xff]
  %v709 = vld [vmem:[%s0 + $0x308] sm:$0xff]
  %v710 = vld [vmem:[%s0 + $0x310] sm:$0xff]
  %v711 = vld [vmem:[%s0 + $0x318] sm:$0xff]
  %v712 = vld [vmem:[%s0 + $0x320] sm:$0xff]
  %v713 = vld [vmem:[%s0 + $0x328] sm:$0xff]
  %v714 = vld [vmem:[%s0 + $0x330] sm:$0xff]
  %v715 = vld [vmem:[%s0 + $0x338] sm:$0xff]
  %v716 = vld [vmem:[%s0 + $0x340] sm:$0xff]
  %v717 = vld [vmem:[%s0 + $0x348] sm:$0xff]
  %v718 = vld [vmem:[%s0 + $0x350] sm:$0xff]
  %v719 = vld [vmem:[%s0 + $0x358] sm:$0xff]
  %v720 = vld [vmem:[%s0 + $0x360] sm:$0xff]
  %v721 = vld [vmem:[%s0 + $0x368] sm:$0xff]
  %v722 = vld [vmem:[%s0 + $0x370] sm:$0xff]
  %v723 = vld [vmem:[%s0 + $0x378] sm:$0xff]
  %v724 = vld [vmem:[%s0 + $0x380] sm:$0xff]
  %v725 = vld [vmem:[%s0 + $0x388] sm:$0xff]
  %v726 = vld [vmem:[%s0 + $0x390] sm:$0xff]
  %v727 = vld [vmem:[%s0 + $0x398] sm:$0xff]
  %v728 = vld [vmem:[%s0 + $0x3a0] sm:$0xff]
  %v729 = vld [vmem:[%s0 + $0x3a8] sm:$0xff]
  %v730 = vld [vmem:[%s0 + $0x3b0] sm:$0xff]
  %v731 = vld [vmem:[%s0 + $0x3b8] sm:$0xff]
  %v732 = vld [vmem:[%s0 + $0x3c0] sm:$0xff]
  %v733 = vld [vmem:[%s0 + $0x3c8] sm:$0xff]
  %v734 = vld [vmem:[%s0 + $0x3d0] sm:$0xff]
  %v735 = vld [vmem:[%s0 + $0x3d8] sm:$0xff]
  %v736 = vld [vmem:[%s0 + $0x3e0] sm:$0xff]
  %v737 = vld [vmem:[%s0 + $0x3e8] sm:$0xff]
  %v738 = vld [vmem:[%s0 + $0x3f0] sm:$0xff]
  %v739 = vld [vmem:[%s0 + $0x3f8] sm:$0xff]
  %v740 = vld [vmem:[%s0 + $0x400] sm:$0xff]
  %v741 = vld [vmem:[%s0 + $0x408] sm:$0xff]
  %v742 = vld [vmem:[%s0 + $0x410] sm:$0xff]
  %v743 = vld [vmem:[%s0 + $0x418] sm:$0xff]
  %v744 = vld [vmem:[%s0 + $0x420] sm:$0xff]
  %v745 = vld [vmem:[%s0 + $0x428] sm:$0xff]
  %v746 = vld [vmem:[%s0 + $0x430] sm:$0xff]
  %v747 = vld [vmem:[%s0 + $0x438] sm:$0xff]
  %v748 = vld [vmem:[%s0 + $0x440] sm:$0xff]
  %v749 = vld [vmem:[%s0 + $0x448] sm:$0xff]
  %v750 = vld [vmem:[%s0 + $0x450] sm:$0xff]
  %v751 = vld [vmem:[%s0 + $0x458] sm:$0xff]
  %v752 = vld [vmem:[%s0 + $0x460] sm:$0xff]
  %v753 = vld [vmem:[%s0 + $0x468] sm:$0xff]
  %v754 = vld [vmem:[%s0 + $0x470] sm:$0xff]
  %v755 = vld [vmem:[%s0 + $0x478] sm:$0xff]
  %v756 = vld [vmem:[%s0 + $0x480] sm:$0xff]
  %v757 = vld [vmem:[%s0 + $0x488] sm:$0xff]
  %v758 = vld [vmem:[%s0 + $0x490] sm:$0xff]
  %v759 = vld [vmem:[%s0 + $0x498] sm:$0xff]
  %v760 = vld [vmem:[%s0 + $0x4a0] sm:$0xff]
  %v761 = vld [vmem:[%s0 + $0x4a8] sm:$0xff]
  %v762 = vld [vmem:[%s0 + $0x4b0] sm:$0xff]
  %v763 = vld [vmem:[%s0 + $0x4b8] sm:$0xff]
  %v764 = vld [vmem:[%s0 + $0x4c0] sm:$0xff]
  %v765 = vld [vmem:[%s0 + $0x4c8] sm:$0xff]
  %v766 = vld [vmem:[%s0 + $0x4d0] sm:$0xff]
  %v767 = vld [vmem:[%s0 + $0x4d8] sm:$0xff]
  %v768 = vld [vmem:[%s0 + $0x4e0] sm:$0xff]
  %v769 = vld [vmem:[%s0 + $0x4e8] sm:$0xff]
  %v770 = vld [vmem:[%s0 + $0x4f0] sm:$0xff]
  %v771 = vld [vmem:[%s0 + $0x4f8] sm:$0xff]
  %v772 = vadd.f32 %v612, %v617
  %v773 = vadd.f32 %v772, %v622
  %v774 = vadd.f32 %v773, %v627
  %v775 = vadd.f32 %v774, %v632
  %v776 = vadd.f32 %v775, %v637
  %v777 = vadd.f32 %v776, %v642
  %v778 = vadd.f32 %v777, %v647
  %v779 = vadd.f32 %v778, %v652
  %v780 = vadd.f32 %v779, %v657
  %v781 = vadd.f32 %v780, %v662
  %v782 = vadd.f32 %v781, %v667
  %v783 = vadd.f32 %v782, %v672
  %v784 = vadd.f32 %v783, %v677
  %v785 = vadd.f32 %v784, %v682
  %v786 = vadd.f32 %v785, %v687
  %v787 = vadd.f32 %v786, %v692
  %v788 = vadd.f32 %v787, %v697
  %v789 = vadd.f32 %v788, %v702
  %v790 = vadd.f32 %v789, %v707
  %v791 = vadd.f32 %v790, %v712
  %v792 = vadd.f32 %v791, %v717
  %v793 = vadd.f32 %v792, %v722
  %v794 = vadd.f32 %v793, %v727
  %v795 = vadd.f32 %v794, %v732
  %v796 = vadd.f32 %v795, %v737
  %v797 = vadd.f32 %v796, %v742
  %v798 = vadd.f32 %v797, %v747
  %v799 = vadd.f32 %v798, %v752
  %v800 = vadd.f32 %v799, %v757
  %v801 = vadd.f32 %v800, %v762
  %v802 = vadd.f32 %v801, %v767
  %v803 = vrot.slane %v802, 4
  %v804 = vadd.f32 %v802, %v803
  %v805 = vrot.slane %v804, 2
  %v806 = vadd.f32 %v804, %v805
  %v807 = vrot.slane %v806, 1
  %v808 = vadd.f32 %v806, %v807
  %v809 = vadd.f32 %v613, %v618
  %v810 = vadd.f32 %v809, %v623
  %v811 = vadd.f32 %v810, %v628
  %v812 = vadd.f32 %v811, %v633
  %v813 = vadd.f32 %v812, %v638
  %v814 = vadd.f32 %v813, %v643
  %v815 = vadd.f32 %v814, %v648
  %v816 = vadd.f32 %v815, %v653
  %v817 = vadd.f32 %v816, %v658
  %v818 = vadd.f32 %v817, %v663
  %v819 = vadd.f32 %v818, %v668
  %v820 = vadd.f32 %v819, %v673
  %v821 = vadd.f32 %v820, %v678
  %v822 = vadd.f32 %v821, %v683
  %v823 = vadd.f32 %v822, %v688
  %v824 = vadd.f32 %v823, %v693
  %v825 = vadd.f32 %v824, %v698
  %v826 = vadd.f32 %v825, %v703
  %v827 = vadd.f32 %v826, %v708
  %v828 = vadd.f32 %v827, %v713
  %v829 = vadd.f32 %v828, %v718
  %v830 = vadd.f32 %v829, %v723
  %v831 = vadd.f32 %v830, %v728
  %v832 = vadd.f32 %v831, %v733
  %v833 = vadd.f32 %v832, %v738
  %v834 = vadd.f32 %v833, %v743
  %v835 = vadd.f32 %v834, %v748
  %v836 = vadd.f32 %v835, %v753
  %v837 = vadd.f32 %v836, %v758
  %v838 = vadd.f32 %v837, %v763
  %v839 = vadd.f32 %v838, %v768
  %v840 = vrot.slane %v839, 4
  %v841 = vadd.f32 %v839, %v840
  %v842 = vrot.slane %v841, 2
  %v843 = vadd.f32 %v841, %v842
  %v844 = vrot.slane %v843, 1
  %v845 = vadd.f32 %v843, %v844
  %v846 = vadd.f32 %v614, %v619
  %v847 = vadd.f32 %v846, %v624
  %v848 = vadd.f32 %v847, %v629
  %v849 = vadd.f32 %v848, %v634
  %v850 = vadd.f32 %v849, %v639
  %v851 = vadd.f32 %v850, %v644
  %v852 = vadd.f32 %v851, %v649
  %v853 = vadd.f32 %v852, %v654
  %v854 = vadd.f32 %v853, %v659
  %v855 = vadd.f32 %v854, %v664
  %v856 = vadd.f32 %v855, %v669
  %v857 = vadd.f32 %v856, %v674
  %v858 = vadd.f32 %v857, %v679
  %v859 = vadd.f32 %v858, %v684
  %v860 = vadd.f32 %v859, %v689
  %v861 = vadd.f32 %v860, %v694
  %v862 = vadd.f32 %v861, %v699
  %v863 = vadd.f32 %v862, %v704
  %v864 = vadd.f32 %v863, %v709
  %v865 = vadd.f32 %v864, %v714
  %v866 = vadd.f32 %v865, %v719
  %v867 = vadd.f32 %v866, %v724
  %v868 = vadd.f32 %v867, %v729
  %v869 = vadd.f32 %v868, %v734
  %v870 = vadd.f32 %v869, %v739
  %v871 = vadd.f32 %v870, %v744
  %v872 = vadd.f32 %v871, %v749
  %v873 = vadd.f32 %v872, %v754
  %v874 = vadd.f32 %v873, %v759
  %v875 = vadd.f32 %v874, %v764
  %v876 = vadd.f32 %v875, %v769
  %v877 = vrot.slane %v876, 4
  %v878 = vadd.f32 %v876, %v877
  %v879 = vrot.slane %v878, 2
  %v880 = vadd.f32 %v878, %v879
  %v881 = vrot.slane %v880, 1
  %v882 = vadd.f32 %v880, %v881
  %v883 = vadd.f32 %v615, %v620
  %v884 = vadd.f32 %v883, %v625
  %v885 = vadd.f32 %v884, %v630
  %v886 = vadd.f32 %v885, %v635
  %v887 = vadd.f32 %v886, %v640
  %v888 = vadd.f32 %v887, %v645
  %v889 = vadd.f32 %v888, %v650
  %v890 = vadd.f32 %v889, %v655
  %v891 = vadd.f32 %v890, %v660
  %v892 = vadd.f32 %v891, %v665
  %v893 = vadd.f32 %v892, %v670
  %v894 = vadd.f32 %v893, %v675
  %v895 = vadd.f32 %v894, %v680
  %v896 = vadd.f32 %v895, %v685
  %v897 = vadd.f32 %v896, %v690
  %v898 = vadd.f32 %v897, %v695
  %v899 = vadd.f32 %v898, %v700
  %v900 = vadd.f32 %v899, %v705
  %v901 = vadd.f32 %v900, %v710
  %v902 = vadd.f32 %v901, %v715
  %v903 = vadd.f32 %v902, %v720
  %v904 = vadd.f32 %v903, %v725
  %v905 = vadd.f32 %v904, %v730
  %v906 = vadd.f32 %v905, %v735
  %v907 = vadd.f32 %v906, %v740
  %v908 = vadd.f32 %v907, %v745
  %v909 = vadd.f32 %v908, %v750
  %v910 = vadd.f32 %v909, %v755
  %v911 = vadd.f32 %v910, %v760
  %v912 = vadd.f32 %v911, %v765
  %v913 = vadd.f32 %v912, %v770
  %v914 = vrot.slane %v913, 4
  %v915 = vadd.f32 %v913, %v914
  %v916 = vrot.slane %v915, 2
  %v917 = vadd.f32 %v915, %v916
  %v918 = vrot.slane %v917, 1
  %v919 = vadd.f32 %v917, %v918
  %vm920 = vcmask 523264
  %v921 = vsel %vm920, %v616, 0.0
  %v922 = vsel %vm920, %v621, 0.0
  %v923 = vadd.f32 %v921, %v922
  %v924 = vsel %vm920, %v626, 0.0
  %v925 = vadd.f32 %v923, %v924
  %v926 = vsel %vm920, %v631, 0.0
  %v927 = vadd.f32 %v925, %v926
  %v928 = vsel %vm920, %v636, 0.0
  %v929 = vadd.f32 %v927, %v928
  %v930 = vsel %vm920, %v641, 0.0
  %v931 = vadd.f32 %v929, %v930
  %v932 = vsel %vm920, %v646, 0.0
  %v933 = vadd.f32 %v931, %v932
  %v934 = vsel %vm920, %v651, 0.0
  %v935 = vadd.f32 %v933, %v934
  %v936 = vsel %vm920, %v656, 0.0
  %v937 = vadd.f32 %v935, %v936
  %v938 = vsel %vm920, %v661, 0.0
  %v939 = vadd.f32 %v937, %v938
  %v940 = vsel %vm920, %v666, 0.0
  %v941 = vadd.f32 %v939, %v940
  %v942 = vsel %vm920, %v671, 0.0
  %v943 = vadd.f32 %v941, %v942
  %v944 = vsel %vm920, %v676, 0.0
  %v945 = vadd.f32 %v943, %v944
  %v946 = vsel %vm920, %v681, 0.0
  %v947 = vadd.f32 %v945, %v946
  %v948 = vsel %vm920, %v686, 0.0
  %v949 = vadd.f32 %v947, %v948
  %v950 = vsel %vm920, %v691, 0.0
  %v951 = vadd.f32 %v949, %v950
  %v952 = vsel %vm920, %v696, 0.0
  %v953 = vadd.f32 %v951, %v952
  %v954 = vsel %vm920, %v701, 0.0
  %v955 = vadd.f32 %v953, %v954
  %v956 = vsel %vm920, %v706, 0.0
  %v957 = vadd.f32 %v955, %v956
  %v958 = vsel %vm920, %v711, 0.0
  %v959 = vadd.f32 %v957, %v958
  %v960 = vsel %vm920, %v716, 0.0
  %v961 = vadd.f32 %v959, %v960
  %v962 = vsel %vm920, %v721, 0.0
  %v963 = vadd.f32 %v961, %v962
  %v964 = vsel %vm920, %v726, 0.0
  %v965 = vadd.f32 %v963, %v964
  %v966 = vsel %vm920, %v731, 0.0
  %v967 = vadd.f32 %v965, %v966
  %v968 = vsel %vm920, %v736, 0.0
  %v969 = vadd.f32 %v967, %v968
  %v970 = vsel %vm920, %v741, 0.0
  %v971 = vadd.f32 %v969, %v970
  %v972 = vsel %vm920, %v746, 0.0
  %v973 = vadd.f32 %v971, %v972
  %v974 = vsel %vm920, %v751, 0.0
  %v975 = vadd.f32 %v973, %v974
  %v976 = vsel %vm920, %v756, 0.0
  %v977 = vadd.f32 %v975, %v976
  %v978 = vsel %vm920, %v761, 0.0
  %v979 = vadd.f32 %v977, %v978
  %v980 = vsel %vm920, %v766, 0.0
  %v981 = vadd.f32 %v979, %v980
  %v982 = vsel %vm920, %v771, 0.0
  %v983 = vadd.f32 %v981, %v982
  %v984 = vrot.slane %v983, 4
  %v985 = vadd.f32 %v983, %v984
  %v986 = vrot.slane %v985, 2
  %v987 = vadd.f32 %v985, %v986
  %v988 = vrot.slane %v987, 1
  %v989 = vadd.f32 %v987, %v988
  %v990 = vmul.f32 %v808, 0.0051020407
  %v991 = vmul.f32 %v845, 0.0051020407
  %v992 = vmul.f32 %v882, 0.0051020407
  %v993 = vmul.f32 %v919, 0.0051020407
  %v994 = vmul.f32 %v989, 0.0051020407
  %v995 = vmul.f32 %v612, %v612
  %v996 = vmul.f32 %v613, %v613
  %v997 = vmul.f32 %v614, %v614
  %v998 = vmul.f32 %v615, %v615
  %v999 = vmul.f32 %v616, %v616
  %v1000 = vmul.f32 %v617, %v617
  %v1001 = vmul.f32 %v618, %v618
  %v1002 = vmul.f32 %v619, %v619
  %v1003 = vmul.f32 %v620, %v620
  %v1004 = vmul.f32 %v621, %v621
  %v1005 = vmul.f32 %v622, %v622
  %v1006 = vmul.f32 %v623, %v623
  %v1007 = vmul.f32 %v624, %v624
  %v1008 = vmul.f32 %v625, %v625
  %v1009 = vmul.f32 %v626, %v626
  %v1010 = vmul.f32 %v627, %v627
  %v1011 = vmul.f32 %v628, %v628
  %v1012 = vmul.f32 %v629, %v629
  %v1013 = vmul.f32 %v630, %v630
  %v1014 = vmul.f32 %v631, %v631
  %v1015 = vmul.f32 %v632, %v632
  %v1016 = vmul.f32 %v633, %v633
  %v1017 = vmul.f32 %v634, %v634
  %v1018 = vmul.f32 %v635, %v635
  %v1019 = vmul.f32 %v636, %v636
  %v1020 = vmul.f32 %v637, %v637
  %v1021 = vmul.f32 %v638, %v638
  %v1022 = vmul.f32 %v639, %v639
  %v1023 = vmul.f32 %v640, %v640
  %v1024 = vmul.f32 %v641, %v641
  %v1025 = vmul.f32 %v642, %v642
  %v1026 = vmul.f32 %v643, %v643
  %v1027 = vmul.f32 %v644, %v644
  %v1028 = vmul.f32 %v645, %v645
  %v1029 = vmul.f32 %v646, %v646
  %v1030 = vmul.f32 %v647, %v647
  %v1031 = vmul.f32 %v648, %v648
  %v1032 = vmul.f32 %v649, %v649
  %v1033 = vmul.f32 %v650, %v650
  %v1034 = vmul.f32 %v651, %v651
  %v1035 = vmul.f32 %v652, %v652
  %v1036 = vmul.f32 %v653, %v653
  %v1037 = vmul.f32 %v654, %v654
  %v1038 = vmul.f32 %v655, %v655
  %v1039 = vmul.f32 %v656, %v656
  %v1040 = vmul.f32 %v657, %v657
  %v1041 = vmul.f32 %v658, %v658
  %v1042 = vmul.f32 %v659, %v659
  %v1043 = vmul.f32 %v660, %v660
  %v1044 = vmul.f32 %v661, %v661
  %v1045 = vmul.f32 %v662, %v662
  %v1046 = vmul.f32 %v663, %v663
  %v1047 = vmul.f32 %v664, %v664
  %v1048 = vmul.f32 %v665, %v665
  %v1049 = vmul.f32 %v666, %v666
  %v1050 = vmul.f32 %v667, %v667
  %v1051 = vmul.f32 %v668, %v668
  %v1052 = vmul.f32 %v669, %v669
  %v1053 = vmul.f32 %v670, %v670
  %v1054 = vmul.f32 %v671, %v671
  %v1055 = vmul.f32 %v672, %v672
  %v1056 = vmul.f32 %v673, %v673
  %v1057 = vmul.f32 %v674, %v674
  %v1058 = vmul.f32 %v675, %v675
  %v1059 = vmul.f32 %v676, %v676
  %v1060 = vmul.f32 %v677, %v677
  %v1061 = vmul.f32 %v678, %v678
  %v1062 = vmul.f32 %v679, %v679
  %v1063 = vmul.f32 %v680, %v680
  %v1064 = vmul.f32 %v681, %v681
  %v1065 = vmul.f32 %v682, %v682
  %v1066 = vmul.f32 %v683, %v683
  %v1067 = vmul.f32 %v684, %v684
  %v1068 = vmul.f32 %v685, %v685
  %v1069 = vmul.f32 %v686, %v686
  %v1070 = vmul.f32 %v687, %v687
  %v1071 = vmul.f32 %v688, %v688
  %v1072 = vmul.f32 %v689, %v689
  %v1073 = vmul.f32 %v690, %v690
  %v1074 = vmul.f32 %v691, %v691
  %v1075 = vmul.f32 %v692, %v692
  %v1076 = vmul.f32 %v693, %v693
  %v1077 = vmul.f32 %v694, %v694
  %v1078 = vmul.f32 %v695, %v695
  %v1079 = vmul.f32 %v696, %v696
  %v1080 = vmul.f32 %v697, %v697
  %v1081 = vmul.f32 %v698, %v698
  %v1082 = vmul.f32 %v699, %v699
  %v1083 = vmul.f32 %v700, %v700
  %v1084 = vmul.f32 %v701, %v701
  %v1085 = vmul.f32 %v702, %v702
  %v1086 = vmul.f32 %v703, %v703
  %v1087 = vmul.f32 %v704, %v704
  %v1088 = vmul.f32 %v705, %v705
  %v1089 = vmul.f32 %v706, %v706
  %v1090 = vmul.f32 %v707, %v707
  %v1091 = vmul.f32 %v708, %v708
  %v1092 = vmul.f32 %v709, %v709
  %v1093 = vmul.f32 %v710, %v710
  %v1094 = vmul.f32 %v711, %v711
  %v1095 = vmul.f32 %v712, %v712
  %v1096 = vmul.f32 %v713, %v713
  %v1097 = vmul.f32 %v714, %v714
  %v1098 = vmul.f32 %v715, %v715
  %v1099 = vmul.f32 %v716, %v716
  %v1100 = vmul.f32 %v717, %v717
  %v1101 = vmul.f32 %v718, %v718
  %v1102 = vmul.f32 %v719, %v719
  %v1103 = vmul.f32 %v720, %v720
  %v1104 = vmul.f32 %v721, %v721
  %v1105 = vmul.f32 %v722, %v722
  %v1106 = vmul.f32 %v723, %v723
  %v1107 = vmul.f32 %v724, %v724
  %v1108 = vmul.f32 %v725, %v725
  %v1109 = vmul.f32 %v726, %v726
  %v1110 = vmul.f32 %v727, %v727
  %v1111 = vmul.f32 %v728, %v728
  %v1112 = vmul.f32 %v729, %v729
  %v1113 = vmul.f32 %v730, %v730
  %v1114 = vmul.f32 %v731, %v731
  %v1115 = vmul.f32 %v732, %v732
  %v1116 = vmul.f32 %v733, %v733
  %v1117 = vmul.f32 %v734, %v734
  %v1118 = vmul.f32 %v735, %v735
  %v1119 = vmul.f32 %v736, %v736
  %v1120 = vmul.f32 %v737, %v737
  %v1121 = vmul.f32 %v738, %v738
  %v1122 = vmul.f32 %v739, %v739
  %v1123 = vmul.f32 %v740, %v740
  %v1124 = vmul.f32 %v741, %v741
  %v1125 = vmul.f32 %v742, %v742
  %v1126 = vmul.f32 %v743, %v743
  %v1127 = vmul.f32 %v744, %v744
  %v1128 = vmul.f32 %v745, %v745
  %v1129 = vmul.f32 %v746, %v746
  %v1130 = vmul.f32 %v747, %v747
  %v1131 = vmul.f32 %v748, %v748
  %v1132 = vmul.f32 %v749, %v749
  %v1133 = vmul.f32 %v750, %v750
  %v1134 = vmul.f32 %v751, %v751
  %v1135 = vmul.f32 %v752, %v752
  %v1136 = vmul.f32 %v753, %v753
  %v1137 = vmul.f32 %v754, %v754
  %v1138 = vmul.f32 %v755, %v755
  %v1139 = vmul.f32 %v756, %v756
  %v1140 = vmul.f32 %v757, %v757
  %v1141 = vmul.f32 %v758, %v758
  %v1142 = vmul.f32 %v759, %v759
  %v1143 = vmul.f32 %v760, %v760
  %v1144 = vmul.f32 %v761, %v761
  %v1145 = vmul.f32 %v762, %v762
  %v1146 = vmul.f32 %v763, %v763
  %v1147 = vmul.f32 %v764, %v764
  %v1148 = vmul.f32 %v765, %v765
  %v1149 = vmul.f32 %v766, %v766
  %v1150 = vmul.f32 %v767, %v767
  %v1151 = vmul.f32 %v768, %v768
  %v1152 = vmul.f32 %v769, %v769
  %v1153 = vmul.f32 %v770, %v770
  %v1154 = vmul.f32 %v771, %v771
  %v1155 = vadd.f32 %v995, %v1000
  %v1156 = vadd.f32 %v1155, %v1005
  %v1157 = vadd.f32 %v1156, %v1010
  %v1158 = vadd.f32 %v1157, %v1015
  %v1159 = vadd.f32 %v1158, %v1020
  %v1160 = vadd.f32 %v1159, %v1025
  %v1161 = vadd.f32 %v1160, %v1030
  %v1162 = vadd.f32 %v1161, %v1035
  %v1163 = vadd.f32 %v1162, %v1040
  %v1164 = vadd.f32 %v1163, %v1045
  %v1165 = vadd.f32 %v1164, %v1050
  %v1166 = vadd.f32 %v1165, %v1055
  %v1167 = vadd.f32 %v1166, %v1060
  %v1168 = vadd.f32 %v1167, %v1065
  %v1169 = vadd.f32 %v1168, %v1070
  %v1170 = vadd.f32 %v1169, %v1075
  %v1171 = vadd.f32 %v1170, %v1080
  %v1172 = vadd.f32 %v1171, %v1085
  %v1173 = vadd.f32 %v1172, %v1090
  %v1174 = vadd.f32 %v1173, %v1095
  %v1175 = vadd.f32 %v1174, %v1100
  %v1176 = vadd.f32 %v1175, %v1105
  %v1177 = vadd.f32 %v1176, %v1110
  %v1178 = vadd.f32 %v1177, %v1115
  %v1179 = vadd.f32 %v1178, %v1120
  %v1180 = vadd.f32 %v1179, %v1125
  %v1181 = vadd.f32 %v1180, %v1130
  %v1182 = vadd.f32 %v1181, %v1135
  %v1183 = vadd.f32 %v1182, %v1140
  %v1184 = vadd.f32 %v1183, %v1145
  %v1185 = vadd.f32 %v1184, %v1150
  %v1186 = vrot.slane %v1185, 4
  %v1187 = vadd.f32 %v1185, %v1186
  %v1188 = vrot.slane %v1187, 2
  %v1189 = vadd.f32 %v1187, %v1188
  %v1190 = vrot.slane %v1189, 1
  %v1191 = vadd.f32 %v1189, %v1190
  %v1192 = vadd.f32 %v996, %v1001
  %v1193 = vadd.f32 %v1192, %v1006
  %v1194 = vadd.f32 %v1193, %v1011
  %v1195 = vadd.f32 %v1194, %v1016
  %v1196 = vadd.f32 %v1195, %v1021
  %v1197 = vadd.f32 %v1196, %v1026
  %v1198 = vadd.f32 %v1197, %v1031
  %v1199 = vadd.f32 %v1198, %v1036
  %v1200 = vadd.f32 %v1199, %v1041
  %v1201 = vadd.f32 %v1200, %v1046
  %v1202 = vadd.f32 %v1201, %v1051
  %v1203 = vadd.f32 %v1202, %v1056
  %v1204 = vadd.f32 %v1203, %v1061
  %v1205 = vadd.f32 %v1204, %v1066
  %v1206 = vadd.f32 %v1205, %v1071
  %v1207 = vadd.f32 %v1206, %v1076
  %v1208 = vadd.f32 %v1207, %v1081
  %v1209 = vadd.f32 %v1208, %v1086
  %v1210 = vadd.f32 %v1209, %v1091
  %v1211 = vadd.f32 %v1210, %v1096
  %v1212 = vadd.f32 %v1211, %v1101
  %v1213 = vadd.f32 %v1212, %v1106
  %v1214 = vadd.f32 %v1213, %v1111
  %v1215 = vadd.f32 %v1214, %v1116
  %v1216 = vadd.f32 %v1215, %v1121
  %v1217 = vadd.f32 %v1216, %v1126
  %v1218 = vadd.f32 %v1217, %v1131
  %v1219 = vadd.f32 %v1218, %v1136
  %v1220 = vadd.f32 %v1219, %v1141
  %v1221 = vadd.f32 %v1220, %v1146
  %v1222 = vadd.f32 %v1221, %v1151
  %v1223 = vrot.slane %v1222, 4
  %v1224 = vadd.f32 %v1222, %v1223
  %v1225 = vrot.slane %v1224, 2
  %v1226 = vadd.f32 %v1224, %v1225
  %v1227 = vrot.slane %v1226, 1
  %v1228 = vadd.f32 %v1226, %v1227
  %v1229 = vadd.f32 %v997, %v1002
  %v1230 = vadd.f32 %v1229, %v1007
  %v1231 = vadd.f32 %v1230, %v1012
  %v1232 = vadd.f32 %v1231, %v1017
  %v1233 = vadd.f32 %v1232, %v1022
  %v1234 = vadd.f32 %v1233, %v1027
  %v1235 = vadd.f32 %v1234, %v1032
  %v1236 = vadd.f32 %v1235, %v1037
  %v1237 = vadd.f32 %v1236, %v1042
  %v1238 = vadd.f32 %v1237, %v1047
  %v1239 = vadd.f32 %v1238, %v1052
  %v1240 = vadd.f32 %v1239, %v1057
  %v1241 = vadd.f32 %v1240, %v1062
  %v1242 = vadd.f32 %v1241, %v1067
  %v1243 = vadd.f32 %v1242, %v1072
  %v1244 = vadd.f32 %v1243, %v1077
  %v1245 = vadd.f32 %v1244, %v1082
  %v1246 = vadd.f32 %v1245, %v1087
  %v1247 = vadd.f32 %v1246, %v1092
  %v1248 = vadd.f32 %v1247, %v1097
  %v1249 = vadd.f32 %v1248, %v1102
  %v1250 = vadd.f32 %v1249, %v1107
  %v1251 = vadd.f32 %v1250, %v1112
  %v1252 = vadd.f32 %v1251, %v1117
  %v1253 = vadd.f32 %v1252, %v1122
  %v1254 = vadd.f32 %v1253, %v1127
  %v1255 = vadd.f32 %v1254, %v1132
  %v1256 = vadd.f32 %v1255, %v1137
  %v1257 = vadd.f32 %v1256, %v1142
  %v1258 = vadd.f32 %v1257, %v1147
  %v1259 = vadd.f32 %v1258, %v1152
  %v1260 = vrot.slane %v1259, 4
  %v1261 = vadd.f32 %v1259, %v1260
  %v1262 = vrot.slane %v1261, 2
  %v1263 = vadd.f32 %v1261, %v1262
  %v1264 = vrot.slane %v1263, 1
  %v1265 = vadd.f32 %v1263, %v1264
  %v1266 = vadd.f32 %v998, %v1003
  %v1267 = vadd.f32 %v1266, %v1008
  %v1268 = vadd.f32 %v1267, %v1013
  %v1269 = vadd.f32 %v1268, %v1018
  %v1270 = vadd.f32 %v1269, %v1023
  %v1271 = vadd.f32 %v1270, %v1028
  %v1272 = vadd.f32 %v1271, %v1033
  %v1273 = vadd.f32 %v1272, %v1038
  %v1274 = vadd.f32 %v1273, %v1043
  %v1275 = vadd.f32 %v1274, %v1048
  %v1276 = vadd.f32 %v1275, %v1053
  %v1277 = vadd.f32 %v1276, %v1058
  %v1278 = vadd.f32 %v1277, %v1063
  %v1279 = vadd.f32 %v1278, %v1068
  %v1280 = vadd.f32 %v1279, %v1073
  %v1281 = vadd.f32 %v1280, %v1078
  %v1282 = vadd.f32 %v1281, %v1083
  %v1283 = vadd.f32 %v1282, %v1088
  %v1284 = vadd.f32 %v1283, %v1093
  %v1285 = vadd.f32 %v1284, %v1098
  %v1286 = vadd.f32 %v1285, %v1103
  %v1287 = vadd.f32 %v1286, %v1108
  %v1288 = vadd.f32 %v1287, %v1113
  %v1289 = vadd.f32 %v1288, %v1118
  %v1290 = vadd.f32 %v1289, %v1123
  %v1291 = vadd.f32 %v1290, %v1128
  %v1292 = vadd.f32 %v1291, %v1133
  %v1293 = vadd.f32 %v1292, %v1138
  %v1294 = vadd.f32 %v1293, %v1143
  %v1295 = vadd.f32 %v1294, %v1148
  %v1296 = vadd.f32 %v1295, %v1153
  %v1297 = vrot.slane %v1296, 4
  %v1298 = vadd.f32 %v1296, %v1297
  %v1299 = vrot.slane %v1298, 2
  %v1300 = vadd.f32 %v1298, %v1299
  %v1301 = vrot.slane %v1300, 1
  %v1302 = vadd.f32 %v1300, %v1301
  %v1303 = vsel %vm920, %v999, 0.0
  %v1304 = vsel %vm920, %v1004, 0.0
  %v1305 = vadd.f32 %v1303, %v1304
  %v1306 = vsel %vm920, %v1009, 0.0
  %v1307 = vadd.f32 %v1305, %v1306
  %v1308 = vsel %vm920, %v1014, 0.0
  %v1309 = vadd.f32 %v1307, %v1308
  %v1310 = vsel %vm920, %v1019, 0.0
  %v1311 = vadd.f32 %v1309, %v1310
  %v1312 = vsel %vm920, %v1024, 0.0
  %v1313 = vadd.f32 %v1311, %v1312
  %v1314 = vsel %vm920, %v1029, 0.0
  %v1315 = vadd.f32 %v1313, %v1314
  %v1316 = vsel %vm920, %v1034, 0.0
  %v1317 = vadd.f32 %v1315, %v1316
  %v1318 = vsel %vm920, %v1039, 0.0
  %v1319 = vadd.f32 %v1317, %v1318
  %v1320 = vsel %vm920, %v1044, 0.0
  %v1321 = vadd.f32 %v1319, %v1320
  %v1322 = vsel %vm920, %v1049, 0.0
  %v1323 = vadd.f32 %v1321, %v1322
  %v1324 = vsel %vm920, %v1054, 0.0
  %v1325 = vadd.f32 %v1323, %v1324
  %v1326 = vsel %vm920, %v1059, 0.0
  %v1327 = vadd.f32 %v1325, %v1326
  %v1328 = vsel %vm920, %v1064, 0.0
  %v1329 = vadd.f32 %v1327, %v1328
  %v1330 = vsel %vm920, %v1069, 0.0
  %v1331 = vadd.f32 %v1329, %v1330
  %v1332 = vsel %vm920, %v1074, 0.0
  %v1333 = vadd.f32 %v1331, %v1332
  %v1334 = vsel %vm920, %v1079, 0.0
  %v1335 = vadd.f32 %v1333, %v1334
  %v1336 = vsel %vm920, %v1084, 0.0
  %v1337 = vadd.f32 %v1335, %v1336
  %v1338 = vsel %vm920, %v1089, 0.0
  %v1339 = vadd.f32 %v1337, %v1338
  %v1340 = vsel %vm920, %v1094, 0.0
  %v1341 = vadd.f32 %v1339, %v1340
  %v1342 = vsel %vm920, %v1099, 0.0
  %v1343 = vadd.f32 %v1341, %v1342
  %v1344 = vsel %vm920, %v1104, 0.0
  %v1345 = vadd.f32 %v1343, %v1344
  %v1346 = vsel %vm920, %v1109, 0.0
  %v1347 = vadd.f32 %v1345, %v1346
  %v1348 = vsel %vm920, %v1114, 0.0
  %v1349 = vadd.f32 %v1347, %v1348
  %v1350 = vsel %vm920, %v1119, 0.0
  %v1351 = vadd.f32 %v1349, %v1350
  %v1352 = vsel %vm920, %v1124, 0.0
  %v1353 = vadd.f32 %v1351, %v1352
  %v1354 = vsel %vm920, %v1129, 0.0
  %v1355 = vadd.f32 %v1353, %v1354
  %v1356 = vsel %vm920, %v1134, 0.0
  %v1357 = vadd.f32 %v1355, %v1356
  %v1358 = vsel %vm920, %v1139, 0.0
  %v1359 = vadd.f32 %v1357, %v1358
  %v1360 = vsel %vm920, %v1144, 0.0
  %v1361 = vadd.f32 %v1359, %v1360
  %v1362 = vsel %vm920, %v1149, 0.0
  %v1363 = vadd.f32 %v1361, %v1362
  %v1364 = vsel %vm920, %v1154, 0.0
  %v1365 = vadd.f32 %v1363, %v1364
  %v1366 = vrot.slane %v1365, 4
  %v1367 = vadd.f32 %v1365, %v1366
  %v1368 = vrot.slane %v1367, 2
  %v1369 = vadd.f32 %v1367, %v1368
  %v1370 = vrot.slane %v1369, 1
  %v1371 = vadd.f32 %v1369, %v1370
  %v1372 = vmul.f32 %v1191, 0.0051020407
  %v1373 = vmul.f32 %v1228, 0.0051020407
  %v1374 = vmul.f32 %v1265, 0.0051020407
  %v1375 = vmul.f32 %v1302, 0.0051020407
  %v1376 = vmul.f32 %v1371, 0.0051020407
  %v1377 = vmul.f32 %v990, %v990
  %v1378 = vmul.f32 %v991, %v991
  %v1379 = vmul.f32 %v992, %v992
  %v1380 = vmul.f32 %v993, %v993
  %v1381 = vmul.f32 %v994, %v994
  %v1382 = vsub.f32 %v1372, %v1377
  %v1383 = vsub.f32 %v1373, %v1378
  %v1384 = vsub.f32 %v1374, %v1379
  %v1385 = vsub.f32 %v1375, %v1380
  %v1386 = vsub.f32 %v1376, %v1381
  %v1387 = vmax.f32 %v1382, 0.0
  %v1388 = vmax.f32 %v1383, 0.0
  %v1389 = vmax.f32 %v1384, 0.0
  %v1390 = vmax.f32 %v1385, 0.0
  %v1391 = vmax.f32 %v1386, 0.0
  %v1392 = vld [vmem:[%s1] sm:$0x1f]
  %v1393 = vadd.f32 %v1387, 1e-05
  %v1394 = vadd.f32 %v1388, 1e-05
  %v1395 = vadd.f32 %v1389, 1e-05
  %v1396 = vadd.f32 %v1390, 1e-05
  %v1397 = vadd.f32 %v1391, 1e-05
  %v1398 = vrsqrt.pop %v1393
  %v1399 = vrsqrt.pop %v1394
  %v1400 = vrsqrt.pop %v1395
  %v1401 = vrsqrt.pop %v1396
  %v1402 = vrsqrt.pop %v1397
  %v1408 = vcombine.low %v1398, %v1399
  %v1409 = vcombine.low %v1400, %v1401
  %v1411 = vunpack.c.l.s4 1966171168
  %v1412 = vunpack.c.0.s8 %v1411
  %v1413 = vlaneseq
  %v1414 = vshrl.u32 %v1413, 7
  %v1415 = vsub.s32 %v1412, %v1414
  %v1416 = vrot.slane %v1408, %v1415
  %v1418 = vunpack.c.l.s4 1966171168
  %v1419 = vunpack.c.0.s8 %v1418
  %v1420 = vlaneseq
  %v1421 = vshrl.u32 %v1420, 7
  %v1422 = vsub.s32 %v1419, %v1421
  %v1423 = vrot.slane %v1409, %v1422
  %v1425 = vunpack.c.l.s4 1966171168
  %v1426 = vunpack.c.0.s8 %v1425
  %v1427 = vlaneseq
  %v1428 = vshrl.u32 %v1427, 7
  %v1429 = vsub.s32 %v1426, %v1428
  %v1430 = vrot.slane %v1402, %v1429
  %v1431 = vcombine.low %v1416, %v1423
  %v1433 = vunpack.c.l.s4 1966171168
  %v1434 = vunpack.c.0.s8 %v1433
  %v1435 = vlaneseq
  %v1436 = vshrl.u32 %v1435, 7
  %v1437 = vsub.s32 %v1434, %v1436
  %v1438 = vrot.slane %v1431, %v1437
  %v1440 = vunpack.c.l.s4 1966171168
  %v1441 = vunpack.c.0.s8 %v1440
  %v1442 = vlaneseq
  %v1443 = vshrl.u32 %v1442, 7
  %v1444 = vsub.s32 %v1441, %v1443
  %v1445 = vrot.slane %v1430, %v1444
  %v1446 = vcombine.low %v1438, %v1445
  %v1448 = vmul.f32 %v1392, %v1446
  %v1449 = vld [vmem:[%s2] sm:$0x1f]
  %v1451 = vlaneseq
  %v1452 = vshrl.u32 %v1451, 7
  %v1453 = vsub.s32 0, %v1452
  %v1454 = vrot.slane %v1448, %v1453
  %v1455 = vlaneseq
  %v1456 = vshrl.u32 %v1455, 7
  %v1457 = vsub.s32 1, %v1456
  %v1458 = vrot.slane %v1448, %v1457
  %v1459 = vlaneseq
  %v1460 = vshrl.u32 %v1459, 7
  %v1461 = vsub.s32 2, %v1460
  %v1462 = vrot.slane %v1448, %v1461
  %v1463 = vlaneseq
  %v1464 = vshrl.u32 %v1463, 7
  %v1465 = vsub.s32 3, %v1464
  %v1466 = vrot.slane %v1448, %v1465
  %v1467 = vlaneseq
  %v1468 = vshrl.u32 %v1467, 7
  %v1469 = vsub.s32 4, %v1468
  %v1470 = vrot.slane %v1448, %v1469
  %v1476 = vmul.f32 %v990, %v1454
  %v1477 = vmul.f32 %v991, %v1458
  %v1478 = vmul.f32 %v992, %v1462
  %v1479 = vmul.f32 %v993, %v1466
  %v1480 = vmul.f32 %v994, %v1470
  %v1486 = vcombine.low %v1476, %v1477
  %v1487 = vcombine.low %v1478, %v1479
  %v1489 = vunpack.c.l.s4 1966171168
  %v1490 = vunpack.c.0.s8 %v1489
  %v1491 = vlaneseq
  %v1492 = vshrl.u32 %v1491, 7
  %v1493 = vsub.s32 %v1490, %v1492
  %v1494 = vrot.slane %v1486, %v1493
  %v1496 = vunpack.c.l.s4 1966171168
  %v1497 = vunpack.c.0.s8 %v1496
  %v1498 = vlaneseq
  %v1499 = vshrl.u32 %v1498, 7
  %v1500 = vsub.s32 %v1497, %v1499
  %v1501 = vrot.slane %v1487, %v1500
  %v1503 = vunpack.c.l.s4 1966171168
  %v1504 = vunpack.c.0.s8 %v1503
  %v1505 = vlaneseq
  %v1506 = vshrl.u32 %v1505, 7
  %v1507 = vsub.s32 %v1504, %v1506
  %v1508 = vrot.slane %v1480, %v1507
  %v1509 = vcombine.low %v1494, %v1501
  %v1511 = vunpack.c.l.s4 1966171168
  %v1512 = vunpack.c.0.s8 %v1511
  %v1513 = vlaneseq
  %v1514 = vshrl.u32 %v1513, 7
  %v1515 = vsub.s32 %v1512, %v1514
  %v1516 = vrot.slane %v1509, %v1515
  %v1518 = vunpack.c.l.s4 1966171168
  %v1519 = vunpack.c.0.s8 %v1518
  %v1520 = vlaneseq
  %v1521 = vshrl.u32 %v1520, 7
  %v1522 = vsub.s32 %v1519, %v1521
  %v1523 = vrot.slane %v1508, %v1522
  %v1524 = vcombine.low %v1516, %v1523
  %v1526 = vsub.f32 %v1449, %v1524
  %v1527 = vmul.f32 %v612, %v1454
  %v1528 = vmul.f32 %v613, %v1458
  %v1529 = vmul.f32 %v614, %v1462
  %v1530 = vmul.f32 %v615, %v1466
  %v1531 = vmul.f32 %v616, %v1470
  %v1532 = vmul.f32 %v617, %v1454
  %v1533 = vmul.f32 %v618, %v1458
  %v1534 = vmul.f32 %v619, %v1462
  %v1535 = vmul.f32 %v620, %v1466
  %v1536 = vmul.f32 %v621, %v1470
  %v1537 = vmul.f32 %v622, %v1454
  %v1538 = vmul.f32 %v623, %v1458
  %v1539 = vmul.f32 %v624, %v1462
  %v1540 = vmul.f32 %v625, %v1466
  %v1541 = vmul.f32 %v626, %v1470
  %v1542 = vmul.f32 %v627, %v1454
  %v1543 = vmul.f32 %v628, %v1458
  %v1544 = vmul.f32 %v629, %v1462
  %v1545 = vmul.f32 %v630, %v1466
  %v1546 = vmul.f32 %v631, %v1470
  %v1547 = vmul.f32 %v632, %v1454
  %v1548 = vmul.f32 %v633, %v1458
  %v1549 = vmul.f32 %v634, %v1462
  %v1550 = vmul.f32 %v635, %v1466
  %v1551 = vmul.f32 %v636, %v1470
  %v1552 = vmul.f32 %v637, %v1454
  %v1553 = vmul.f32 %v638, %v1458
  %v1554 = vmul.f32 %v639, %v1462
  %v1555 = vmul.f32 %v640, %v1466
  %v1556 = vmul.f32 %v641, %v1470
  %v1557 = vmul.f32 %v642, %v1454
  %v1558 = vmul.f32 %v643, %v1458
  %v1559 = vmul.f32 %v644, %v1462
  %v1560 = vmul.f32 %v645, %v1466
  %v1561 = vmul.f32 %v646, %v1470
  %v1562 = vmul.f32 %v647, %v1454
  %v1563 = vmul.f32 %v648, %v1458
  %v1564 = vmul.f32 %v649, %v1462
  %v1565 = vmul.f32 %v650, %v1466
  %v1566 = vmul.f32 %v651, %v1470
  %v1567 = vmul.f32 %v652, %v1454
  %v1568 = vmul.f32 %v653, %v1458
  %v1569 = vmul.f32 %v654, %v1462
  %v1570 = vmul.f32 %v655, %v1466
  %v1571 = vmul.f32 %v656, %v1470
  %v1572 = vmul.f32 %v657, %v1454
  %v1573 = vmul.f32 %v658, %v1458
  %v1574 = vmul.f32 %v659, %v1462
  %v1575 = vmul.f32 %v660, %v1466
  %v1576 = vmul.f32 %v661, %v1470
  %v1577 = vmul.f32 %v662, %v1454
  %v1578 = vmul.f32 %v663, %v1458
  %v1579 = vmul.f32 %v664, %v1462
  %v1580 = vmul.f32 %v665, %v1466
  %v1581 = vmul.f32 %v666, %v1470
  %v1582 = vmul.f32 %v667, %v1454
  %v1583 = vmul.f32 %v668, %v1458
  %v1584 = vmul.f32 %v669, %v1462
  %v1585 = vmul.f32 %v670, %v1466
  %v1586 = vmul.f32 %v671, %v1470
  %v1587 = vmul.f32 %v672, %v1454
  %v1588 = vmul.f32 %v673, %v1458
  %v1589 = vmul.f32 %v674, %v1462
  %v1590 = vmul.f32 %v675, %v1466
  %v1591 = vmul.f32 %v676, %v1470
  %v1592 = vmul.f32 %v677, %v1454
  %v1593 = vmul.f32 %v678, %v1458
  %v1594 = vmul.f32 %v679, %v1462
  %v1595 = vmul.f32 %v680, %v1466
  %v1596 = vmul.f32 %v681, %v1470
  %v1597 = vmul.f32 %v682, %v1454
  %v1598 = vmul.f32 %v683, %v1458
  %v1599 = vmul.f32 %v684, %v1462
  %v1600 = vmul.f32 %v685, %v1466
  %v1601 = vmul.f32 %v686, %v1470
  %v1602 = vmul.f32 %v687, %v1454
  %v1603 = vmul.f32 %v688, %v1458
  %v1604 = vmul.f32 %v689, %v1462
  %v1605 = vmul.f32 %v690, %v1466
  %v1606 = vmul.f32 %v691, %v1470
  %v1607 = vmul.f32 %v692, %v1454
  %v1608 = vmul.f32 %v693, %v1458
  %v1609 = vmul.f32 %v694, %v1462
  %v1610 = vmul.f32 %v695, %v1466
  %v1611 = vmul.f32 %v696, %v1470
  %v1612 = vmul.f32 %v697, %v1454
  %v1613 = vmul.f32 %v698, %v1458
  %v1614 = vmul.f32 %v699, %v1462
  %v1615 = vmul.f32 %v700, %v1466
  %v1616 = vmul.f32 %v701, %v1470
  %v1617 = vmul.f32 %v702, %v1454
  %v1618 = vmul.f32 %v703, %v1458
  %v1619 = vmul.f32 %v704, %v1462
  %v1620 = vmul.f32 %v705, %v1466
  %v1621 = vmul.f32 %v706, %v1470
  %v1622 = vmul.f32 %v707, %v1454
  %v1623 = vmul.f32 %v708, %v1458
  %v1624 = vmul.f32 %v709, %v1462
  %v1625 = vmul.f32 %v710, %v1466
  %v1626 = vmul.f32 %v711, %v1470
  %v1627 = vmul.f32 %v712, %v1454
  %v1628 = vmul.f32 %v713, %v1458
  %v1629 = vmul.f32 %v714, %v1462
  %v1630 = vmul.f32 %v715, %v1466
  %v1631 = vmul.f32 %v716, %v1470
  %v1632 = vmul.f32 %v717, %v1454
  %v1633 = vmul.f32 %v718, %v1458
  %v1634 = vmul.f32 %v719, %v1462
  %v1635 = vmul.f32 %v720, %v1466
  %v1636 = vmul.f32 %v721, %v1470
  %v1637 = vmul.f32 %v722, %v1454
  %v1638 = vmul.f32 %v723, %v1458
  %v1639 = vmul.f32 %v724, %v1462
  %v1640 = vmul.f32 %v725, %v1466
  %v1641 = vmul.f32 %v726, %v1470
  %v1642 = vmul.f32 %v727, %v1454
  %v1643 = vmul.f32 %v728, %v1458
  %v1644 = vmul.f32 %v729, %v1462
  %v1645 = vmul.f32 %v730, %v1466
  %v1646 = vmul.f32 %v731, %v1470
  %v1647 = vmul.f32 %v732, %v1454
  %v1648 = vmul.f32 %v733, %v1458
  %v1649 = vmul.f32 %v734, %v1462
  %v1650 = vmul.f32 %v735, %v1466
  %v1651 = vmul.f32 %v736, %v1470
  %v1652 = vmul.f32 %v737, %v1454
  %v1653 = vmul.f32 %v738, %v1458
  %v1654 = vmul.f32 %v739, %v1462
  %v1655 = vmul.f32 %v740, %v1466
  %v1656 = vmul.f32 %v741, %v1470
  %v1657 = vmul.f32 %v742, %v1454
  %v1658 = vmul.f32 %v743, %v1458
  %v1659 = vmul.f32 %v744, %v1462
  %v1660 = vmul.f32 %v745, %v1466
  %v1661 = vmul.f32 %v746, %v1470
  %v1662 = vmul.f32 %v747, %v1454
  %v1663 = vmul.f32 %v748, %v1458
  %v1664 = vmul.f32 %v749, %v1462
  %v1665 = vmul.f32 %v750, %v1466
  %v1666 = vmul.f32 %v751, %v1470
  %v1667 = vmul.f32 %v752, %v1454
  %v1668 = vmul.f32 %v753, %v1458
  %v1669 = vmul.f32 %v754, %v1462
  %v1670 = vmul.f32 %v755, %v1466
  %v1671 = vmul.f32 %v756, %v1470
  %v1672 = vmul.f32 %v757, %v1454
  %v1673 = vmul.f32 %v758, %v1458
  %v1674 = vmul.f32 %v759, %v1462
  %v1675 = vmul.f32 %v760, %v1466
  %v1676 = vmul.f32 %v761, %v1470
  %v1677 = vmul.f32 %v762, %v1454
  %v1678 = vmul.f32 %v763, %v1458
  %v1679 = vmul.f32 %v764, %v1462
  %v1680 = vmul.f32 %v765, %v1466
  %v1681 = vmul.f32 %v766, %v1470
  %v1682 = vmul.f32 %v767, %v1454
  %v1683 = vmul.f32 %v768, %v1458
  %v1684 = vmul.f32 %v769, %v1462
  %v1685 = vmul.f32 %v770, %v1466
  %v1686 = vmul.f32 %v771, %v1470
  %v1688 = vlaneseq
  %v1689 = vshrl.u32 %v1688, 7
  %v1690 = vsub.s32 0, %v1689
  %v1691 = vrot.slane %v1526, %v1690
  %v1692 = vlaneseq
  %v1693 = vshrl.u32 %v1692, 7
  %v1694 = vsub.s32 1, %v1693
  %v1695 = vrot.slane %v1526, %v1694
  %v1696 = vlaneseq
  %v1697 = vshrl.u32 %v1696, 7
  %v1698 = vsub.s32 2, %v1697
  %v1699 = vrot.slane %v1526, %v1698
  %v1700 = vlaneseq
  %v1701 = vshrl.u32 %v1700, 7
  %v1702 = vsub.s32 3, %v1701
  %v1703 = vrot.slane %v1526, %v1702
  %v1704 = vlaneseq
  %v1705 = vshrl.u32 %v1704, 7
  %v1706 = vsub.s32 4, %v1705
  %v1707 = vrot.slane %v1526, %v1706
  %v1713 = vadd.f32 %v1527, %v1691
  %v1714 = vadd.f32 %v1528, %v1695
  %v1715 = vadd.f32 %v1529, %v1699
  %v1716 = vadd.f32 %v1530, %v1703
  %v1717 = vadd.f32 %v1531, %v1707
  %v1718 = vadd.f32 %v1532, %v1691
  %v1719 = vadd.f32 %v1533, %v1695
  %v1720 = vadd.f32 %v1534, %v1699
  %v1721 = vadd.f32 %v1535, %v1703
  %v1722 = vadd.f32 %v1536, %v1707
  %v1723 = vadd.f32 %v1537, %v1691
  %v1724 = vadd.f32 %v1538, %v1695
  %v1725 = vadd.f32 %v1539, %v1699
  %v1726 = vadd.f32 %v1540, %v1703
  %v1727 = vadd.f32 %v1541, %v1707
  %v1728 = vadd.f32 %v1542, %v1691
  %v1729 = vadd.f32 %v1543, %v1695
  %v1730 = vadd.f32 %v1544, %v1699
  %v1731 = vadd.f32 %v1545, %v1703
  %v1732 = vadd.f32 %v1546, %v1707
  %v1733 = vadd.f32 %v1547, %v1691
  %v1734 = vadd.f32 %v1548, %v1695
  %v1735 = vadd.f32 %v1549, %v1699
  %v1736 = vadd.f32 %v1550, %v1703
  %v1737 = vadd.f32 %v1551, %v1707
  %v1738 = vadd.f32 %v1552, %v1691
  %v1739 = vadd.f32 %v1553, %v1695
  %v1740 = vadd.f32 %v1554, %v1699
  %v1741 = vadd.f32 %v1555, %v1703
  %v1742 = vadd.f32 %v1556, %v1707
  %v1743 = vadd.f32 %v1557, %v1691
  %v1744 = vadd.f32 %v1558, %v1695
  %v1745 = vadd.f32 %v1559, %v1699
  %v1746 = vadd.f32 %v1560, %v1703
  %v1747 = vadd.f32 %v1561, %v1707
  %v1748 = vadd.f32 %v1562, %v1691
  %v1749 = vadd.f32 %v1563, %v1695
  %v1750 = vadd.f32 %v1564, %v1699
  %v1751 = vadd.f32 %v1565, %v1703
  %v1752 = vadd.f32 %v1566, %v1707
  %v1753 = vadd.f32 %v1567, %v1691
  %v1754 = vadd.f32 %v1568, %v1695
  %v1755 = vadd.f32 %v1569, %v1699
  %v1756 = vadd.f32 %v1570, %v1703
  %v1757 = vadd.f32 %v1571, %v1707
  %v1758 = vadd.f32 %v1572, %v1691
  %v1759 = vadd.f32 %v1573, %v1695
  %v1760 = vadd.f32 %v1574, %v1699
  %v1761 = vadd.f32 %v1575, %v1703
  %v1762 = vadd.f32 %v1576, %v1707
  %v1763 = vadd.f32 %v1577, %v1691
  %v1764 = vadd.f32 %v1578, %v1695
  %v1765 = vadd.f32 %v1579, %v1699
  %v1766 = vadd.f32 %v1580, %v1703
  %v1767 = vadd.f32 %v1581, %v1707
  %v1768 = vadd.f32 %v1582, %v1691
  %v1769 = vadd.f32 %v1583, %v1695
  %v1770 = vadd.f32 %v1584, %v1699
  %v1771 = vadd.f32 %v1585, %v1703
  %v1772 = vadd.f32 %v1586, %v1707
  %v1773 = vadd.f32 %v1587, %v1691
  %v1774 = vadd.f32 %v1588, %v1695
  %v1775 = vadd.f32 %v1589, %v1699
  %v1776 = vadd.f32 %v1590, %v1703
  %v1777 = vadd.f32 %v1591, %v1707
  %v1778 = vadd.f32 %v1592, %v1691
  %v1779 = vadd.f32 %v1593, %v1695
  %v1780 = vadd.f32 %v1594, %v1699
  %v1781 = vadd.f32 %v1595, %v1703
  %v1782 = vadd.f32 %v1596, %v1707
  %v1783 = vadd.f32 %v1597, %v1691
  %v1784 = vadd.f32 %v1598, %v1695
  %v1785 = vadd.f32 %v1599, %v1699
  %v1786 = vadd.f32 %v1600, %v1703
  %v1787 = vadd.f32 %v1601, %v1707
  %v1788 = vadd.f32 %v1602, %v1691
  %v1789 = vadd.f32 %v1603, %v1695
  %v1790 = vadd.f32 %v1604, %v1699
  %v1791 = vadd.f32 %v1605, %v1703
  %v1792 = vadd.f32 %v1606, %v1707
  %v1793 = vadd.f32 %v1607, %v1691
  %v1794 = vadd.f32 %v1608, %v1695
  %v1795 = vadd.f32 %v1609, %v1699
  %v1796 = vadd.f32 %v1610, %v1703
  %v1797 = vadd.f32 %v1611, %v1707
  %v1798 = vadd.f32 %v1612, %v1691
  %v1799 = vadd.f32 %v1613, %v1695
  %v1800 = vadd.f32 %v1614, %v1699
  %v1801 = vadd.f32 %v1615, %v1703
  %v1802 = vadd.f32 %v1616, %v1707
  %v1803 = vadd.f32 %v1617, %v1691
  %v1804 = vadd.f32 %v1618, %v1695
  %v1805 = vadd.f32 %v1619, %v1699
  %v1806 = vadd.f32 %v1620, %v1703
  %v1807 = vadd.f32 %v1621, %v1707
  %v1808 = vadd.f32 %v1622, %v1691
  %v1809 = vadd.f32 %v1623, %v1695
  %v1810 = vadd.f32 %v1624, %v1699
  %v1811 = vadd.f32 %v1625, %v1703
  %v1812 = vadd.f32 %v1626, %v1707
  %v1813 = vadd.f32 %v1627, %v1691
  %v1814 = vadd.f32 %v1628, %v1695
  %v1815 = vadd.f32 %v1629, %v1699
  %v1816 = vadd.f32 %v1630, %v1703
  %v1817 = vadd.f32 %v1631, %v1707
  %v1818 = vadd.f32 %v1632, %v1691
  %v1819 = vadd.f32 %v1633, %v1695
  %v1820 = vadd.f32 %v1634, %v1699
  %v1821 = vadd.f32 %v1635, %v1703
  %v1822 = vadd.f32 %v1636, %v1707
  %v1823 = vadd.f32 %v1637, %v1691
  %v1824 = vadd.f32 %v1638, %v1695
  %v1825 = vadd.f32 %v1639, %v1699
  %v1826 = vadd.f32 %v1640, %v1703
  %v1827 = vadd.f32 %v1641, %v1707
  %v1828 = vadd.f32 %v1642, %v1691
  %v1829 = vadd.f32 %v1643, %v1695
  %v1830 = vadd.f32 %v1644, %v1699
  %v1831 = vadd.f32 %v1645, %v1703
  %v1832 = vadd.f32 %v1646, %v1707
  %v1833 = vadd.f32 %v1647, %v1691
  %v1834 = vadd.f32 %v1648, %v1695
  %v1835 = vadd.f32 %v1649, %v1699
  %v1836 = vadd.f32 %v1650, %v1703
  %v1837 = vadd.f32 %v1651, %v1707
  %v1838 = vadd.f32 %v1652, %v1691
  %v1839 = vadd.f32 %v1653, %v1695
  %v1840 = vadd.f32 %v1654, %v1699
  %v1841 = vadd.f32 %v1655, %v1703
  %v1842 = vadd.f32 %v1656, %v1707
  %v1843 = vadd.f32 %v1657, %v1691
  %v1844 = vadd.f32 %v1658, %v1695
  %v1845 = vadd.f32 %v1659, %v1699
  %v1846 = vadd.f32 %v1660, %v1703
  %v1847 = vadd.f32 %v1661, %v1707
  %v1848 = vadd.f32 %v1662, %v1691
  %v1849 = vadd.f32 %v1663, %v1695
  %v1850 = vadd.f32 %v1664, %v1699
  %v1851 = vadd.f32 %v1665, %v1703
  %v1852 = vadd.f32 %v1666, %v1707
  %v1853 = vadd.f32 %v1667, %v1691
  %v1854 = vadd.f32 %v1668, %v1695
  %v1855 = vadd.f32 %v1669, %v1699
  %v1856 = vadd.f32 %v1670, %v1703
  %v1857 = vadd.f32 %v1671, %v1707
  %v1858 = vadd.f32 %v1672, %v1691
  %v1859 = vadd.f32 %v1673, %v1695
  %v1860 = vadd.f32 %v1674, %v1699
  %v1861 = vadd.f32 %v1675, %v1703
  %v1862 = vadd.f32 %v1676, %v1707
  %v1863 = vadd.f32 %v1677, %v1691
  %v1864 = vadd.f32 %v1678, %v1695
  %v1865 = vadd.f32 %v1679, %v1699
  %v1866 = vadd.f32 %v1680, %v1703
  %v1867 = vadd.f32 %v1681, %v1707
  %v1868 = vadd.f32 %v1682, %v1691
  %v1869 = vadd.f32 %v1683, %v1695
  %v1870 = vadd.f32 %v1684, %v1699
  %v1871 = vadd.f32 %v1685, %v1703
  %v1872 = vadd.f32 %v1686, %v1707
  %v1873 = vmax.f32 %v1713, 0.0
  %v1874 = vmax.f32 %v1714, 0.0
  %v1875 = vmax.f32 %v1715, 0.0
  %v1876 = vmax.f32 %v1716, 0.0
  %v1877 = vmax.f32 %v1717, 0.0
  %v1878 = vmax.f32 %v1718, 0.0
  %v1879 = vmax.f32 %v1719, 0.0
  %v1880 = vmax.f32 %v1720, 0.0
  %v1881 = vmax.f32 %v1721, 0.0
  %v1882 = vmax.f32 %v1722, 0.0
  %v1883 = vmax.f32 %v1723, 0.0
  %v1884 = vmax.f32 %v1724, 0.0
  %v1885 = vmax.f32 %v1725, 0.0
  %v1886 = vmax.f32 %v1726, 0.0
  %v1887 = vmax.f32 %v1727, 0.0
  %v1888 = vmax.f32 %v1728, 0.0
  %v1889 = vmax.f32 %v1729, 0.0
  %v1890 = vmax.f32 %v1730, 0.0
  %v1891 = vmax.f32 %v1731, 0.0
  %v1892 = vmax.f32 %v1732, 0.0
  %v1893 = vmax.f32 %v1733, 0.0
  %v1894 = vmax.f32 %v1734, 0.0
  %v1895 = vmax.f32 %v1735, 0.0
  %v1896 = vmax.f32 %v1736, 0.0
  %v1897 = vmax.f32 %v1737, 0.0
  %v1898 = vmax.f32 %v1738, 0.0
  %v1899 = vmax.f32 %v1739, 0.0
  %v1900 = vmax.f32 %v1740, 0.0
  %v1901 = vmax.f32 %v1741, 0.0
  %v1902 = vmax.f32 %v1742, 0.0
  %v1903 = vmax.f32 %v1743, 0.0
  %v1904 = vmax.f32 %v1744, 0.0
  %v1905 = vmax.f32 %v1745, 0.0
  %v1906 = vmax.f32 %v1746, 0.0
  %v1907 = vmax.f32 %v1747, 0.0
  %v1908 = vmax.f32 %v1748, 0.0
  %v1909 = vmax.f32 %v1749, 0.0
  %v1910 = vmax.f32 %v1750, 0.0
  %v1911 = vmax.f32 %v1751, 0.0
  %v1912 = vmax.f32 %v1752, 0.0
  %v1913 = vmax.f32 %v1753, 0.0
  %v1914 = vmax.f32 %v1754, 0.0
  %v1915 = vmax.f32 %v1755, 0.0
  %v1916 = vmax.f32 %v1756, 0.0
  %v1917 = vmax.f32 %v1757, 0.0
  %v1918 = vmax.f32 %v1758, 0.0
  %v1919 = vmax.f32 %v1759, 0.0
  %v1920 = vmax.f32 %v1760, 0.0
  %v1921 = vmax.f32 %v1761, 0.0
  %v1922 = vmax.f32 %v1762, 0.0
  %v1923 = vmax.f32 %v1763, 0.0
  %v1924 = vmax.f32 %v1764, 0.0
  %v1925 = vmax.f32 %v1765, 0.0
  %v1926 = vmax.f32 %v1766, 0.0
  %v1927 = vmax.f32 %v1767, 0.0
  %v1928 = vmax.f32 %v1768, 0.0
  %v1929 = vmax.f32 %v1769, 0.0
  %v1930 = vmax.f32 %v1770, 0.0
  %v1931 = vmax.f32 %v1771, 0.0
  %v1932 = vmax.f32 %v1772, 0.0
  %v1933 = vmax.f32 %v1773, 0.0
  %v1934 = vmax.f32 %v1774, 0.0
  %v1935 = vmax.f32 %v1775, 0.0
  %v1936 = vmax.f32 %v1776, 0.0
  %v1937 = vmax.f32 %v1777, 0.0
  %v1938 = vmax.f32 %v1778, 0.0
  %v1939 = vmax.f32 %v1779, 0.0
  %v1940 = vmax.f32 %v1780, 0.0
  %v1941 = vmax.f32 %v1781, 0.0
  %v1942 = vmax.f32 %v1782, 0.0
  %v1943 = vmax.f32 %v1783, 0.0
  %v1944 = vmax.f32 %v1784, 0.0
  %v1945 = vmax.f32 %v1785, 0.0
  %v1946 = vmax.f32 %v1786, 0.0
  %v1947 = vmax.f32 %v1787, 0.0
  %v1948 = vmax.f32 %v1788, 0.0
  %v1949 = vmax.f32 %v1789, 0.0
  %v1950 = vmax.f32 %v1790, 0.0
  %v1951 = vmax.f32 %v1791, 0.0
  %v1952 = vmax.f32 %v1792, 0.0
  %v1953 = vmax.f32 %v1793, 0.0
  %v1954 = vmax.f32 %v1794, 0.0
  %v1955 = vmax.f32 %v1795, 0.0
  %v1956 = vmax.f32 %v1796, 0.0
  %v1957 = vmax.f32 %v1797, 0.0
  %v1958 = vmax.f32 %v1798, 0.0
  %v1959 = vmax.f32 %v1799, 0.0
  %v1960 = vmax.f32 %v1800, 0.0
  %v1961 = vmax.f32 %v1801, 0.0
  %v1962 = vmax.f32 %v1802, 0.0
  %v1963 = vmax.f32 %v1803, 0.0
  %v1964 = vmax.f32 %v1804, 0.0
  %v1965 = vmax.f32 %v1805, 0.0
  %v1966 = vmax.f32 %v1806, 0.0
  %v1967 = vmax.f32 %v1807, 0.0
  %v1968 = vmax.f32 %v1808, 0.0
  %v1969 = vmax.f32 %v1809, 0.0
  %v1970 = vmax.f32 %v1810, 0.0
  %v1971 = vmax.f32 %v1811, 0.0
  %v1972 = vmax.f32 %v1812, 0.0
  %v1973 = vmax.f32 %v1813, 0.0
  %v1974 = vmax.f32 %v1814, 0.0
  %v1975 = vmax.f32 %v1815, 0.0
  %v1976 = vmax.f32 %v1816, 0.0
  %v1977 = vmax.f32 %v1817, 0.0
  %v1978 = vmax.f32 %v1818, 0.0
  %v1979 = vmax.f32 %v1819, 0.0
  %v1980 = vmax.f32 %v1820, 0.0
  %v1981 = vmax.f32 %v1821, 0.0
  %v1982 = vmax.f32 %v1822, 0.0
  %v1983 = vmax.f32 %v1823, 0.0
  %v1984 = vmax.f32 %v1824, 0.0
  %v1985 = vmax.f32 %v1825, 0.0
  %v1986 = vmax.f32 %v1826, 0.0
  %v1987 = vmax.f32 %v1827, 0.0
  %v1988 = vmax.f32 %v1828, 0.0
  %v1989 = vmax.f32 %v1829, 0.0
  %v1990 = vmax.f32 %v1830, 0.0
  %v1991 = vmax.f32 %v1831, 0.0
  %v1992 = vmax.f32 %v1832, 0.0
  %v1993 = vmax.f32 %v1833, 0.0
  %v1994 = vmax.f32 %v1834, 0.0
  %v1995 = vmax.f32 %v1835, 0.0
  %v1996 = vmax.f32 %v1836, 0.0
  %v1997 = vmax.f32 %v1837, 0.0
  %v1998 = vmax.f32 %v1838, 0.0
  %v1999 = vmax.f32 %v1839, 0.0
  %v2000 = vmax.f32 %v1840, 0.0
  %v2001 = vmax.f32 %v1841, 0.0
  %v2002 = vmax.f32 %v1842, 0.0
  %v2003 = vmax.f32 %v1843, 0.0
  %v2004 = vmax.f32 %v1844, 0.0
  %v2005 = vmax.f32 %v1845, 0.0
  %v2006 = vmax.f32 %v1846, 0.0
  %v2007 = vmax.f32 %v1847, 0.0
  %v2008 = vmax.f32 %v1848, 0.0
  %v2009 = vmax.f32 %v1849, 0.0
  %v2010 = vmax.f32 %v1850, 0.0
  %v2011 = vmax.f32 %v1851, 0.0
  %v2012 = vmax.f32 %v1852, 0.0
  %v2013 = vmax.f32 %v1853, 0.0
  %v2014 = vmax.f32 %v1854, 0.0
  %v2015 = vmax.f32 %v1855, 0.0
  %v2016 = vmax.f32 %v1856, 0.0
  %v2017 = vmax.f32 %v1857, 0.0
  %v2018 = vmax.f32 %v1858, 0.0
  %v2019 = vmax.f32 %v1859, 0.0
  %v2020 = vmax.f32 %v1860, 0.0
  %v2021 = vmax.f32 %v1861, 0.0
  %v2022 = vmax.f32 %v1862, 0.0
  %v2023 = vmax.f32 %v1863, 0.0
  %v2024 = vmax.f32 %v1864, 0.0
  %v2025 = vmax.f32 %v1865, 0.0
  %v2026 = vmax.f32 %v1866, 0.0
  %v2027 = vmax.f32 %v1867, 0.0
  %v2028 = vmax.f32 %v1868, 0.0
  %v2029 = vmax.f32 %v1869, 0.0
  %v2030 = vmax.f32 %v1870, 0.0
  %v2031 = vmax.f32 %v1871, 0.0
  %v2032 = vmax.f32 %v1872, 0.0
  %v2033 = vmul.f32 %v1873, %v580
  %v2034 = vmul.f32 %v1874, %v580
  %v2035 = vmul.f32 %v1875, %v580
  %v2036 = vmul.f32 %v1876, %v580
  %v2037 = vmul.f32 %v1877, %v580
  %v2038 = vmul.f32 %v1878, %v581
  %v2039 = vmul.f32 %v1879, %v581
  %v2040 = vmul.f32 %v1880, %v581
  %v2041 = vmul.f32 %v1881, %v581
  %v2042 = vmul.f32 %v1882, %v581
  %v2043 = vmul.f32 %v1883, %v582
  %v2044 = vmul.f32 %v1884, %v582
  %v2045 = vmul.f32 %v1885, %v582
  %v2046 = vmul.f32 %v1886, %v582
  %v2047 = vmul.f32 %v1887, %v582
  %v2048 = vmul.f32 %v1888, %v583
  %v2049 = vmul.f32 %v1889, %v583
  %v2050 = vmul.f32 %v1890, %v583
  %v2051 = vmul.f32 %v1891, %v583
  %v2052 = vmul.f32 %v1892, %v583
  %v2053 = vmul.f32 %v1893, %v584
  %v2054 = vmul.f32 %v1894, %v584
  %v2055 = vmul.f32 %v1895, %v584
  %v2056 = vmul.f32 %v1896, %v584
  %v2057 = vmul.f32 %v1897, %v584
  %v2058 = vmul.f32 %v1898, %v585
  %v2059 = vmul.f32 %v1899, %v585
  %v2060 = vmul.f32 %v1900, %v585
  %v2061 = vmul.f32 %v1901, %v585
  %v2062 = vmul.f32 %v1902, %v585
  %v2063 = vmul.f32 %v1903, %v586
  %v2064 = vmul.f32 %v1904, %v586
  %v2065 = vmul.f32 %v1905, %v586
  %v2066 = vmul.f32 %v1906, %v586
  %v2067 = vmul.f32 %v1907, %v586
  %v2068 = vmul.f32 %v1908, %v587
  %v2069 = vmul.f32 %v1909, %v587
  %v2070 = vmul.f32 %v1910, %v587
  %v2071 = vmul.f32 %v1911, %v587
  %v2072 = vmul.f32 %v1912, %v587
  %v2073 = vmul.f32 %v1913, %v588
  %v2074 = vmul.f32 %v1914, %v588
  %v2075 = vmul.f32 %v1915, %v588
  %v2076 = vmul.f32 %v1916, %v588
  %v2077 = vmul.f32 %v1917, %v588
  %v2078 = vmul.f32 %v1918, %v589
  %v2079 = vmul.f32 %v1919, %v589
  %v2080 = vmul.f32 %v1920, %v589
  %v2081 = vmul.f32 %v1921, %v589
  %v2082 = vmul.f32 %v1922, %v589
  %v2083 = vmul.f32 %v1923, %v590
  %v2084 = vmul.f32 %v1924, %v590
  %v2085 = vmul.f32 %v1925, %v590
  %v2086 = vmul.f32 %v1926, %v590
  %v2087 = vmul.f32 %v1927, %v590
  %v2088 = vmul.f32 %v1928, %v591
  %v2089 = vmul.f32 %v1929, %v591
  %v2090 = vmul.f32 %v1930, %v591
  %v2091 = vmul.f32 %v1931, %v591
  %v2092 = vmul.f32 %v1932, %v591
  %v2093 = vmul.f32 %v1933, %v592
  %v2094 = vmul.f32 %v1934, %v592
  %v2095 = vmul.f32 %v1935, %v592
  %v2096 = vmul.f32 %v1936, %v592
  %v2097 = vmul.f32 %v1937, %v592
  %v2098 = vmul.f32 %v1938, %v593
  %v2099 = vmul.f32 %v1939, %v593
  %v2100 = vmul.f32 %v1940, %v593
  %v2101 = vmul.f32 %v1941, %v593
  %v2102 = vmul.f32 %v1942, %v593
  %v2103 = vmul.f32 %v1943, %v594
  %v2104 = vmul.f32 %v1944, %v594
  %v2105 = vmul.f32 %v1945, %v594
  %v2106 = vmul.f32 %v1946, %v594
  %v2107 = vmul.f32 %v1947, %v594
  %v2108 = vmul.f32 %v1948, %v595
  %v2109 = vmul.f32 %v1949, %v595
  %v2110 = vmul.f32 %v1950, %v595
  %v2111 = vmul.f32 %v1951, %v595
  %v2112 = vmul.f32 %v1952, %v595
  %v2113 = vmul.f32 %v1953, %v596
  %v2114 = vmul.f32 %v1954, %v596
  %v2115 = vmul.f32 %v1955, %v596
  %v2116 = vmul.f32 %v1956, %v596
  %v2117 = vmul.f32 %v1957, %v596
  %v2118 = vmul.f32 %v1958, %v597
  %v2119 = vmul.f32 %v1959, %v597
  %v2120 = vmul.f32 %v1960, %v597
  %v2121 = vmul.f32 %v1961, %v597
  %v2122 = vmul.f32 %v1962, %v597
  %v2123 = vmul.f32 %v1963, %v598
  %v2124 = vmul.f32 %v1964, %v598
  %v2125 = vmul.f32 %v1965, %v598
  %v2126 = vmul.f32 %v1966, %v598
  %v2127 = vmul.f32 %v1967, %v598
  %v2128 = vmul.f32 %v1968, %v599
  %v2129 = vmul.f32 %v1969, %v599
  %v2130 = vmul.f32 %v1970, %v599
  %v2131 = vmul.f32 %v1971, %v599
  %v2132 = vmul.f32 %v1972, %v599
  %v2133 = vmul.f32 %v1973, %v600
  %v2134 = vmul.f32 %v1974, %v600
  %v2135 = vmul.f32 %v1975, %v600
  %v2136 = vmul.f32 %v1976, %v600
  %v2137 = vmul.f32 %v1977, %v600
  %v2138 = vmul.f32 %v1978, %v601
  %v2139 = vmul.f32 %v1979, %v601
  %v2140 = vmul.f32 %v1980, %v601
  %v2141 = vmul.f32 %v1981, %v601
  %v2142 = vmul.f32 %v1982, %v601
  %v2143 = vmul.f32 %v1983, %v602
  %v2144 = vmul.f32 %v1984, %v602
  %v2145 = vmul.f32 %v1985, %v602
  %v2146 = vmul.f32 %v1986, %v602
  %v2147 = vmul.f32 %v1987, %v602
  %v2148 = vmul.f32 %v1988, %v603
  %v2149 = vmul.f32 %v1989, %v603
  %v2150 = vmul.f32 %v1990, %v603
  %v2151 = vmul.f32 %v1991, %v603
  %v2152 = vmul.f32 %v1992, %v603
  %v2153 = vmul.f32 %v1993, %v604
  %v2154 = vmul.f32 %v1994, %v604
  %v2155 = vmul.f32 %v1995, %v604
  %v2156 = vmul.f32 %v1996, %v604
  %v2157 = vmul.f32 %v1997, %v604
  %v2158 = vmul.f32 %v1998, %v605
  %v2159 = vmul.f32 %v1999, %v605
  %v2160 = vmul.f32 %v2000, %v605
  %v2161 = vmul.f32 %v2001, %v605
  %v2162 = vmul.f32 %v2002, %v605
  %v2163 = vmul.f32 %v2003, %v606
  %v2164 = vmul.f32 %v2004, %v606
  %v2165 = vmul.f32 %v2005, %v606
  %v2166 = vmul.f32 %v2006, %v606
  %v2167 = vmul.f32 %v2007, %v606
  %v2168 = vmul.f32 %v2008, %v607
  %v2169 = vmul.f32 %v2009, %v607
  %v2170 = vmul.f32 %v2010, %v607
  %v2171 = vmul.f32 %v2011, %v607
  %v2172 = vmul.f32 %v2012, %v607
  %v2173 = vmul.f32 %v2013, %v608
  %v2174 = vmul.f32 %v2014, %v608
  %v2175 = vmul.f32 %v2015, %v608
  %v2176 = vmul.f32 %v2016, %v608
  %v2177 = vmul.f32 %v2017, %v608
  %v2178 = vmul.f32 %v2018, %v609
  %v2179 = vmul.f32 %v2019, %v609
  %v2180 = vmul.f32 %v2020, %v609
  %v2181 = vmul.f32 %v2021, %v609
  %v2182 = vmul.f32 %v2022, %v609
  %v2183 = vmul.f32 %v2023, %v610
  %v2184 = vmul.f32 %v2024, %v610
  %v2185 = vmul.f32 %v2025, %v610
  %v2186 = vmul.f32 %v2026, %v610
  %v2187 = vmul.f32 %v2027, %v610
  %v2188 = vmul.f32 %v2028, %v611
  %v2189 = vmul.f32 %v2029, %v611
  %v2190 = vmul.f32 %v2030, %v611
  %v2191 = vmul.f32 %v2031, %v611
  %v2192 = vmul.f32 %v2032, %v611
  %v2193 = vpack.c.bf16 %v2038, %v2033
  %v2194 = vpack.c.bf16 %v2039, %v2034
  %v2195 = vpack.c.bf16 %v2040, %v2035
  %v2196 = vpack.c.bf16 %v2041, %v2036
  %v2197 = vpack.c.bf16 %v2042, %v2037
  %v2198 = vpack.c.bf16 %v2048, %v2043
  %v2199 = vpack.c.bf16 %v2049, %v2044
  %v2200 = vpack.c.bf16 %v2050, %v2045
  %v2201 = vpack.c.bf16 %v2051, %v2046
  %v2202 = vpack.c.bf16 %v2052, %v2047
  %v2203 = vpack.c.bf16 %v2058, %v2053
  %v2204 = vpack.c.bf16 %v2059, %v2054
  %v2205 = vpack.c.bf16 %v2060, %v2055
  %v2206 = vpack.c.bf16 %v2061, %v2056
  %v2207 = vpack.c.bf16 %v2062, %v2057
  %v2208 = vpack.c.bf16 %v2068, %v2063
  %v2209 = vpack.c.bf16 %v2069, %v2064
  %v2210 = vpack.c.bf16 %v2070, %v2065
  %v2211 = vpack.c.bf16 %v2071, %v2066
  %v2212 = vpack.c.bf16 %v2072, %v2067
  %v2213 = vpack.c.bf16 %v2078, %v2073
  %v2214 = vpack.c.bf16 %v2079, %v2074
  %v2215 = vpack.c.bf16 %v2080, %v2075
  %v2216 = vpack.c.bf16 %v2081, %v2076
  %v2217 = vpack.c.bf16 %v2082, %v2077
  %v2218 = vpack.c.bf16 %v2088, %v2083
  %v2219 = vpack.c.bf16 %v2089, %v2084
  %v2220 = vpack.c.bf16 %v2090, %v2085
  %v2221 = vpack.c.bf16 %v2091, %v2086
  %v2222 = vpack.c.bf16 %v2092, %v2087
  %v2223 = vpack.c.bf16 %v2098, %v2093
  %v2224 = vpack.c.bf16 %v2099, %v2094
  %v2225 = vpack.c.bf16 %v2100, %v2095
  %v2226 = vpack.c.bf16 %v2101, %v2096
  %v2227 = vpack.c.bf16 %v2102, %v2097
  %v2228 = vpack.c.bf16 %v2108, %v2103
  %v2229 = vpack.c.bf16 %v2109, %v2104
  %v2230 = vpack.c.bf16 %v2110, %v2105
  %v2231 = vpack.c.bf16 %v2111, %v2106
  %v2232 = vpack.c.bf16 %v2112, %v2107
  %v2233 = vpack.c.bf16 %v2118, %v2113
  %v2234 = vpack.c.bf16 %v2119, %v2114
  %v2235 = vpack.c.bf16 %v2120, %v2115
  %v2236 = vpack.c.bf16 %v2121, %v2116
  %v2237 = vpack.c.bf16 %v2122, %v2117
  %v2238 = vpack.c.bf16 %v2128, %v2123
  %v2239 = vpack.c.bf16 %v2129, %v2124
  %v2240 = vpack.c.bf16 %v2130, %v2125
  %v2241 = vpack.c.bf16 %v2131, %v2126
  %v2242 = vpack.c.bf16 %v2132, %v2127
  %v2243 = vpack.c.bf16 %v2138, %v2133
  %v2244 = vpack.c.bf16 %v2139, %v2134
  %v2245 = vpack.c.bf16 %v2140, %v2135
  %v2246 = vpack.c.bf16 %v2141, %v2136
  %v2247 = vpack.c.bf16 %v2142, %v2137
  %v2248 = vpack.c.bf16 %v2148, %v2143
  %v2249 = vpack.c.bf16 %v2149, %v2144
  %v2250 = vpack.c.bf16 %v2150, %v2145
  %v2251 = vpack.c.bf16 %v2151, %v2146
  %v2252 = vpack.c.bf16 %v2152, %v2147
  %v2253 = vpack.c.bf16 %v2158, %v2153
  %v2254 = vpack.c.bf16 %v2159, %v2154
  %v2255 = vpack.c.bf16 %v2160, %v2155
  %v2256 = vpack.c.bf16 %v2161, %v2156
  %v2257 = vpack.c.bf16 %v2162, %v2157
  %v2258 = vpack.c.bf16 %v2168, %v2163
  %v2259 = vpack.c.bf16 %v2169, %v2164
  %v2260 = vpack.c.bf16 %v2170, %v2165
  %v2261 = vpack.c.bf16 %v2171, %v2166
  %v2262 = vpack.c.bf16 %v2172, %v2167
  %v2263 = vpack.c.bf16 %v2178, %v2173
  %v2264 = vpack.c.bf16 %v2179, %v2174
  %v2265 = vpack.c.bf16 %v2180, %v2175
  %v2266 = vpack.c.bf16 %v2181, %v2176
  %v2267 = vpack.c.bf16 %v2182, %v2177
  %v2268 = vpack.c.bf16 %v2188, %v2183
  %v2269 = vpack.c.bf16 %v2189, %v2184
  %v2270 = vpack.c.bf16 %v2190, %v2185
  %v2271 = vpack.c.bf16 %v2191, %v2186
  %v2272 = vpack.c.bf16 %v2192, %v2187
  %v2273 = vld [vmem:[%s3] sm:$0xff]
  %v2274 = vld [vmem:[%s3 + $0x8] sm:$0xff]
  %v2275 = vld [vmem:[%s3 + $0x10] sm:$0xff]
  %v2276 = vld [vmem:[%s3 + $0x18] sm:$0xff]
  %v2277 = vld [vmem:[%s3 + $0x20] sm:$0xff]
  %v2278 = vld [vmem:[%s3 + $0x28] sm:$0xff]
  %v2279 = vld [vmem:[%s3 + $0x30] sm:$0xff]
  %v2280 = vld [vmem:[%s3 + $0x38] sm:$0xff]
  %v2281 = vld [vmem:[%s3 + $0x40] sm:$0xff]
  %v2282 = vld [vmem:[%s3 + $0x48] sm:$0xff]
  %v2283 = vld [vmem:[%s3 + $0x50] sm:$0xff]
  %v2284 = vld [vmem:[%s3 + $0x58] sm:$0xff]
  %v2285 = vld [vmem:[%s3 + $0x60] sm:$0xff]
  %v2286 = vld [vmem:[%s3 + $0x68] sm:$0xff]
  %v2287 = vld [vmem:[%s3 + $0x70] sm:$0xff]
  %v2288 = vld [vmem:[%s3 + $0x78] sm:$0xff]
  %v2289 = vld [vmem:[%s3 + $0x80] sm:$0xff]
  %v2290 = vld [vmem:[%s3 + $0x88] sm:$0xff]
  %v2291 = vld [vmem:[%s3 + $0x90] sm:$0xff]
  %v2292 = vld [vmem:[%s3 + $0x98] sm:$0xff]
  %v2293 = vld [vmem:[%s3 + $0xa0] sm:$0xff]
  %v2294 = vld [vmem:[%s3 + $0xa8] sm:$0xff]
  %v2295 = vld [vmem:[%s3 + $0xb0] sm:$0xff]
  %v2296 = vld [vmem:[%s3 + $0xb8] sm:$0xff]
  %v2297 = vld [vmem:[%s3 + $0xc0] sm:$0xff]
  %v2298 = vld [vmem:[%s3 + $0xc8] sm:$0xff]
  %v2299 = vld [vmem:[%s3 + $0xd0] sm:$0xff]
  %v2300 = vld [vmem:[%s3 + $0xd8] sm:$0xff]
  %v2301 = vld [vmem:[%s3 + $0xe0] sm:$0xff]
  %v2302 = vld [vmem:[%s3 + $0xe8] sm:$0xff]
  %v2303 = vld [vmem:[%s3 + $0xf0] sm:$0xff]
  %v2304 = vld [vmem:[%s3 + $0xf8] sm:$0xff]
  %v2305 = vld [vmem:[%s3 + $0x100] sm:$0xff]
  %v2306 = vld [vmem:[%s3 + $0x108] sm:$0xff]
  %v2307 = vld [vmem:[%s3 + $0x110] sm:$0xff]
  %v2308 = vld [vmem:[%s3 + $0x118] sm:$0xff]
  %v2309 = vld [vmem:[%s3 + $0x120] sm:$0xff]
  %v2310 = vld [vmem:[%s3 + $0x128] sm:$0xff]
  %v2311 = vld [vmem:[%s3 + $0x130] sm:$0xff]
  %v2312 = vld [vmem:[%s3 + $0x138] sm:$0xff]
  %v2313 = vld [vmem:[%s3 + $0x140] sm:$0xff]
  %v2314 = vld [vmem:[%s3 + $0x148] sm:$0xff]
  %v2315 = vld [vmem:[%s3 + $0x150] sm:$0xff]
  %v2316 = vld [vmem:[%s3 + $0x158] sm:$0xff]
  %v2317 = vld [vmem:[%s3 + $0x160] sm:$0xff]
  %v2318 = vld [vmem:[%s3 + $0x168] sm:$0xff]
  %v2319 = vld [vmem:[%s3 + $0x170] sm:$0xff]
  %v2320 = vld [vmem:[%s3 + $0x178] sm:$0xff]
  %v2321 = vld [vmem:[%s3 + $0x180] sm:$0xff]
  %v2322 = vld [vmem:[%s3 + $0x188] sm:$0xff]
  %v2323 = vld [vmem:[%s3 + $0x190] sm:$0xff]
  %v2324 = vld [vmem:[%s3 + $0x198] sm:$0xff]
  %v2325 = vld [vmem:[%s3 + $0x1a0] sm:$0xff]
  %v2326 = vld [vmem:[%s3 + $0x1a8] sm:$0xff]
  %v2327 = vld [vmem:[%s3 + $0x1b0] sm:$0xff]
  %v2328 = vld [vmem:[%s3 + $0x1b8] sm:$0xff]
  %v2329 = vld [vmem:[%s3 + $0x1c0] sm:$0xff]
  %v2330 = vld [vmem:[%s3 + $0x1c8] sm:$0xff]
  %v2331 = vld [vmem:[%s3 + $0x1d0] sm:$0xff]
  %v2332 = vld [vmem:[%s3 + $0x1d8] sm:$0xff]
  %v2333 = vld [vmem:[%s3 + $0x1e0] sm:$0xff]
  %v2334 = vld [vmem:[%s3 + $0x1e8] sm:$0xff]
  %v2335 = vld [vmem:[%s3 + $0x1f0] sm:$0xff]
  %v2336 = vld [vmem:[%s3 + $0x1f8] sm:$0xff]
  %v2337 = vld [vmem:[%s3 + $0x200] sm:$0xff]
  %v2338 = vld [vmem:[%s3 + $0x208] sm:$0xff]
  %v2339 = vld [vmem:[%s3 + $0x210] sm:$0xff]
  %v2340 = vld [vmem:[%s3 + $0x218] sm:$0xff]
  %v2341 = vld [vmem:[%s3 + $0x220] sm:$0xff]
  %v2342 = vld [vmem:[%s3 + $0x228] sm:$0xff]
  %v2343 = vld [vmem:[%s3 + $0x230] sm:$0xff]
  %v2344 = vld [vmem:[%s3 + $0x238] sm:$0xff]
  %v2417 = vunpack.c.l.b16 %v2273
  %v2418 = vunpack.c.h.b16 %v2273
  %v2419 = vunpack.c.l.b16 %v2274
  %v2420 = vunpack.c.h.b16 %v2274
  %v2421 = vunpack.c.l.b16 %v2275
  %v2422 = vunpack.c.h.b16 %v2275
  %v2423 = vunpack.c.l.b16 %v2276
  %v2424 = vunpack.c.h.b16 %v2276
  %v2425 = vunpack.c.l.b16 %v2277
  %v2426 = vunpack.c.h.b16 %v2277
  %v2427 = vunpack.c.l.b16 %v2278
  %v2428 = vunpack.c.h.b16 %v2278
  %v2429 = vunpack.c.l.b16 %v2279
  %v2430 = vunpack.c.h.b16 %v2279
  %v2431 = vunpack.c.l.b16 %v2280
  %v2432 = vunpack.c.h.b16 %v2280
  %v2433 = vunpack.c.l.b16 %v2281
  %v2434 = vunpack.c.h.b16 %v2281
  %v2435 = vunpack.c.l.b16 %v2282
  %v2436 = vunpack.c.h.b16 %v2282
  %v2437 = vunpack.c.l.b16 %v2283
  %v2438 = vunpack.c.h.b16 %v2283
  %v2439 = vunpack.c.l.b16 %v2284
  %v2440 = vunpack.c.h.b16 %v2284
  %v2441 = vunpack.c.l.b16 %v2285
  %v2442 = vunpack.c.h.b16 %v2285
  %v2443 = vunpack.c.l.b16 %v2286
  %v2444 = vunpack.c.h.b16 %v2286
  %v2445 = vunpack.c.l.b16 %v2287
  %v2446 = vunpack.c.h.b16 %v2287
  %v2447 = vunpack.c.l.b16 %v2288
  %v2448 = vunpack.c.h.b16 %v2288
  %v2449 = vunpack.c.l.b16 %v2289
  %v2450 = vunpack.c.h.b16 %v2289
  %v2451 = vunpack.c.l.b16 %v2290
  %v2452 = vunpack.c.h.b16 %v2290
  %v2453 = vunpack.c.l.b16 %v2291
  %v2454 = vunpack.c.h.b16 %v2291
  %v2455 = vunpack.c.l.b16 %v2292
  %v2456 = vunpack.c.h.b16 %v2292
  %v2457 = vunpack.c.l.b16 %v2293
  %v2458 = vunpack.c.h.b16 %v2293
  %v2459 = vunpack.c.l.b16 %v2294
  %v2460 = vunpack.c.h.b16 %v2294
  %v2461 = vunpack.c.l.b16 %v2295
  %v2462 = vunpack.c.h.b16 %v2295
  %v2463 = vunpack.c.l.b16 %v2296
  %v2464 = vunpack.c.h.b16 %v2296
  %v2465 = vunpack.c.l.b16 %v2297
  %v2466 = vunpack.c.h.b16 %v2297
  %v2467 = vunpack.c.l.b16 %v2298
  %v2468 = vunpack.c.h.b16 %v2298
  %v2469 = vunpack.c.l.b16 %v2299
  %v2470 = vunpack.c.h.b16 %v2299
  %v2471 = vunpack.c.l.b16 %v2300
  %v2472 = vunpack.c.h.b16 %v2300
  %v2473 = vunpack.c.l.b16 %v2301
  %v2474 = vunpack.c.h.b16 %v2301
  %v2475 = vunpack.c.l.b16 %v2302
  %v2476 = vunpack.c.h.b16 %v2302
  %v2477 = vunpack.c.l.b16 %v2303
  %v2478 = vunpack.c.h.b16 %v2303
  %v2479 = vunpack.c.l.b16 %v2304
  %v2480 = vunpack.c.h.b16 %v2304
  %v2481 = vunpack.c.l.b16 %v2305
  %v2482 = vunpack.c.h.b16 %v2305
  %v2483 = vunpack.c.l.b16 %v2306
  %v2484 = vunpack.c.h.b16 %v2306
  %v2485 = vunpack.c.l.b16 %v2307
  %v2486 = vunpack.c.h.b16 %v2307
  %v2487 = vunpack.c.l.b16 %v2308
  %v2488 = vunpack.c.h.b16 %v2308
  %v2489 = vunpack.c.l.b16 %v2309
  %v2490 = vunpack.c.h.b16 %v2309
  %v2491 = vunpack.c.l.b16 %v2310
  %v2492 = vunpack.c.h.b16 %v2310
  %v2493 = vunpack.c.l.b16 %v2311
  %v2494 = vunpack.c.h.b16 %v2311
  %v2495 = vunpack.c.l.b16 %v2312
  %v2496 = vunpack.c.h.b16 %v2312
  %v2497 = vunpack.c.l.b16 %v2313
  %v2498 = vunpack.c.h.b16 %v2313
  %v2499 = vunpack.c.l.b16 %v2314
  %v2500 = vunpack.c.h.b16 %v2314
  %v2501 = vunpack.c.l.b16 %v2315
  %v2502 = vunpack.c.h.b16 %v2315
  %v2503 = vunpack.c.l.b16 %v2316
  %v2504 = vunpack.c.h.b16 %v2316
  %v2505 = vunpack.c.l.b16 %v2317
  %v2506 = vunpack.c.h.b16 %v2317
  %v2507 = vunpack.c.l.b16 %v2318
  %v2508 = vunpack.c.h.b16 %v2318
  %v2509 = vunpack.c.l.b16 %v2319
  %v2510 = vunpack.c.h.b16 %v2319
  %v2511 = vunpack.c.l.b16 %v2320
  %v2512 = vunpack.c.h.b16 %v2320
  %v2513 = vunpack.c.l.b16 %v2321
  %v2514 = vunpack.c.h.b16 %v2321
  %v2515 = vunpack.c.l.b16 %v2322
  %v2516 = vunpack.c.h.b16 %v2322
  %v2517 = vunpack.c.l.b16 %v2323
  %v2518 = vunpack.c.h.b16 %v2323
  %v2519 = vunpack.c.l.b16 %v2324
  %v2520 = vunpack.c.h.b16 %v2324
  %v2521 = vunpack.c.l.b16 %v2325
  %v2522 = vunpack.c.h.b16 %v2325
  %v2523 = vunpack.c.l.b16 %v2326
  %v2524 = vunpack.c.h.b16 %v2326
  %v2525 = vunpack.c.l.b16 %v2327
  %v2526 = vunpack.c.h.b16 %v2327
  %v2527 = vunpack.c.l.b16 %v2328
  %v2528 = vunpack.c.h.b16 %v2328
  %v2529 = vunpack.c.l.b16 %v2329
  %v2530 = vunpack.c.h.b16 %v2329
  %v2531 = vunpack.c.l.b16 %v2330
  %v2532 = vunpack.c.h.b16 %v2330
  %v2533 = vunpack.c.l.b16 %v2331
  %v2534 = vunpack.c.h.b16 %v2331
  %v2535 = vunpack.c.l.b16 %v2332
  %v2536 = vunpack.c.h.b16 %v2332
  %v2537 = vunpack.c.l.b16 %v2333
  %v2538 = vunpack.c.h.b16 %v2333
  %v2539 = vunpack.c.l.b16 %v2334
  %v2540 = vunpack.c.h.b16 %v2334
  %v2541 = vunpack.c.l.b16 %v2335
  %v2542 = vunpack.c.h.b16 %v2335
  %v2543 = vunpack.c.l.b16 %v2336
  %v2544 = vunpack.c.h.b16 %v2336
  %v2545 = vunpack.c.l.b16 %v2337
  %v2546 = vunpack.c.h.b16 %v2337
  %v2547 = vunpack.c.l.b16 %v2338
  %v2548 = vunpack.c.h.b16 %v2338
  %v2549 = vunpack.c.l.b16 %v2339
  %v2550 = vunpack.c.h.b16 %v2339
  %v2551 = vunpack.c.l.b16 %v2340
  %v2552 = vunpack.c.h.b16 %v2340
  %v2553 = vunpack.c.l.b16 %v2341
  %v2554 = vunpack.c.h.b16 %v2341
  %v2555 = vunpack.c.l.b16 %v2342
  %v2556 = vunpack.c.h.b16 %v2342
  %v2557 = vunpack.c.l.b16 %v2343
  %v2558 = vunpack.c.h.b16 %v2343
  %v2559 = vunpack.c.l.b16 %v2344
  %v2560 = vunpack.c.h.b16 %v2344
  %v2561 = vpack.c.b16 %v2419, %v2417
  %v2562 = vpack.c.b16 %v2420, %v2418
  %v2563 = vpack.c.b16 %v2423, %v2421
  %v2564 = vpack.c.b16 %v2424, %v2422
  %v2565 = vpack.c.b16 %v2427, %v2425
  %v2566 = vpack.c.b16 %v2428, %v2426
  %v2567 = vpack.c.b16 %v2431, %v2429
  %v2568 = vpack.c.b16 %v2432, %v2430
  %v2569 = vpack.c.b16 %v2435, %v2433
  %v2570 = vpack.c.b16 %v2436, %v2434
  %v2571 = vpack.c.b16 %v2439, %v2437
  %v2572 = vpack.c.b16 %v2440, %v2438
  %v2573 = vpack.c.b16 %v2443, %v2441
  %v2574 = vpack.c.b16 %v2444, %v2442
  %v2575 = vpack.c.b16 %v2447, %v2445
  %v2576 = vpack.c.b16 %v2448, %v2446
  %v2577 = vpack.c.b16 %v2451, %v2449
  %v2578 = vpack.c.b16 %v2452, %v2450
  %v2579 = vpack.c.b16 %v2455, %v2453
  %v2580 = vpack.c.b16 %v2456, %v2454
  %v2581 = vpack.c.b16 %v2459, %v2457
  %v2582 = vpack.c.b16 %v2460, %v2458
  %v2583 = vpack.c.b16 %v2463, %v2461
  %v2584 = vpack.c.b16 %v2464, %v2462
  %v2585 = vpack.c.b16 %v2467, %v2465
  %v2586 = vpack.c.b16 %v2468, %v2466
  %v2587 = vpack.c.b16 %v2471, %v2469
  %v2588 = vpack.c.b16 %v2472, %v2470
  %v2589 = vpack.c.b16 %v2475, %v2473
  %v2590 = vpack.c.b16 %v2476, %v2474
  %v2591 = vpack.c.b16 %v2479, %v2477
  %v2592 = vpack.c.b16 %v2480, %v2478
  %v2593 = vpack.c.b16 %v2483, %v2481
  %v2594 = vpack.c.b16 %v2484, %v2482
  %v2595 = vpack.c.b16 %v2487, %v2485
  %v2596 = vpack.c.b16 %v2488, %v2486
  %v2597 = vpack.c.b16 %v2491, %v2489
  %v2598 = vpack.c.b16 %v2492, %v2490
  %v2599 = vpack.c.b16 %v2495, %v2493
  %v2600 = vpack.c.b16 %v2496, %v2494
  %v2601 = vpack.c.b16 %v2499, %v2497
  %v2602 = vpack.c.b16 %v2500, %v2498
  %v2603 = vpack.c.b16 %v2503, %v2501
  %v2604 = vpack.c.b16 %v2504, %v2502
  %v2605 = vpack.c.b16 %v2507, %v2505
  %v2606 = vpack.c.b16 %v2508, %v2506
  %v2607 = vpack.c.b16 %v2511, %v2509
  %v2608 = vpack.c.b16 %v2512, %v2510
  %v2609 = vpack.c.b16 %v2515, %v2513
  %v2610 = vpack.c.b16 %v2516, %v2514
  %v2611 = vpack.c.b16 %v2519, %v2517
  %v2612 = vpack.c.b16 %v2520, %v2518
  %v2613 = vpack.c.b16 %v2523, %v2521
  %v2614 = vpack.c.b16 %v2524, %v2522
  %v2615 = vpack.c.b16 %v2527, %v2525
  %v2616 = vpack.c.b16 %v2528, %v2526
  %v2617 = vpack.c.b16 %v2531, %v2529
  %v2618 = vpack.c.b16 %v2532, %v2530
  %v2619 = vpack.c.b16 %v2535, %v2533
  %v2620 = vpack.c.b16 %v2536, %v2534
  %v2621 = vpack.c.b16 %v2539, %v2537
  %v2622 = vpack.c.b16 %v2540, %v2538
  %v2623 = vpack.c.b16 %v2543, %v2541
  %v2624 = vpack.c.b16 %v2544, %v2542
  %v2625 = vpack.c.b16 %v2547, %v2545
  %v2626 = vpack.c.b16 %v2548, %v2546
  %v2627 = vpack.c.b16 %v2551, %v2549
  %v2628 = vpack.c.b16 %v2552, %v2550
  %v2629 = vpack.c.b16 %v2555, %v2553
  %v2630 = vpack.c.b16 %v2556, %v2554
  %v2631 = vpack.c.b16 %v2559, %v2557
  %v2632 = vpack.c.b16 %v2560, %v2558
  %v2706 = vsel %vm920, %v2197, 0
  %v2709 = vsel %vm920, %v2202, 0
  %v2712 = vsel %vm920, %v2207, 0
  %v2715 = vsel %vm920, %v2212, 0
  %v2718 = vsel %vm920, %v2217, 0
  %v2721 = vsel %vm920, %v2222, 0
  %v2724 = vsel %vm920, %v2227, 0
  %v2727 = vsel %vm920, %v2232, 0
  %v2730 = vsel %vm920, %v2237, 0
  %v2733 = vsel %vm920, %v2242, 0
  %v2736 = vsel %vm920, %v2247, 0
  %v2739 = vsel %vm920, %v2252, 0
  %v2742 = vsel %vm920, %v2257, 0
  %v2745 = vsel %vm920, %v2262, 0
  %v2748 = vsel %vm920, %v2267, 0
  %v2751 = vsel %vm920, %v2272, 0
  %2753 = vmatprep.subr.bf16.mxu0 %v2562
  %2754 = vmatpush1.bf16.msra.mxu0 %v2561
  %2755 = vmatprep.subr.bf16.mxu0 %v2564
  %2756 = vmatpush1.bf16.msra.mxu0 %v2563
  %2757 = vmatprep.subr.bf16.mxu0 %v2566
  %2758 = vmatpush1.bf16.msra.mxu0 %v2565
  %2759 = vmatprep.subr.bf16.mxu0 %v2568
  %2760 = vmatpush1.bf16.msra.mxu0 %v2567
  %2761 = vmatprep.subr.bf16.mxu0 %v2570
  %2762 = vmatpush1.bf16.msra.mxu0 %v2569
  %2763 = vmatprep.subr.bf16.mxu0 %v2572
  %2764 = vmatpush1.bf16.msra.mxu0 %v2571
  %2765 = vmatprep.subr.bf16.mxu0 %v2574
  %2766 = vmatpush1.bf16.msra.mxu0 %v2573
  %2767 = vmatprep.subr.bf16.mxu0 %v2576
  %2768 = vmatpush1.bf16.msra.mxu0 %v2575
  %2769 = vmatprep.subr.bf16.mxu0 %v2578
  %2770 = vmatpush1.bf16.msra.mxu0 %v2577
  %2771 = vmatprep.subr.bf16.mxu0 %v2580
  %2772 = vmatpush1.bf16.msra.mxu0 %v2579
  %2773 = vmatprep.subr.bf16.mxu0 %v2582
  %2774 = vmatpush1.bf16.msra.mxu0 %v2581
  %2775 = vmatprep.subr.bf16.mxu0 %v2584
  %2776 = vmatpush1.bf16.msra.mxu0 %v2583
  %2777 = vmatprep.subr.bf16.mxu0 %v2586
  %2778 = vmatpush1.bf16.msra.mxu0 %v2585
  %2779 = vmatprep.subr.bf16.mxu0 %v2588
  %2780 = vmatpush1.bf16.msra.mxu0 %v2587
  %2781 = vmatprep.subr.bf16.mxu0 %v2590
  %2782 = vmatpush1.bf16.msra.mxu0 %v2589
  %2783 = vmatprep.subr.bf16.mxu0 %v2592
  %2784 = vmatpush1.bf16.msra.mxu0 %v2591
  %2785 = vmatprep.mubr.bf16.mxu0 %v2194
  %2786 = vmatmul.mubr.bf16.gmra.mrb[0].mxu0 %v2193
  %v2787 = vpop.f32.mrb[0].mxu0
  %v2788 = vadd.f32 0.0, %v2787
  %v2789 = vpop.f32.mrb[0].mxu0
  %v2790 = vadd.f32 0.0, %v2789
  %v2791 = vpop.f32.mrb[0].mxu0
  %v2792 = vadd.f32 0.0, %v2791
  %v2793 = vpop.f32.mrb[0].mxu0
  %v2794 = vadd.f32 0.0, %v2793
  %2795 = vmatprep.mubr.bf16.mxu0 %v2199
  %2796 = vmatmul.mubr.bf16.gmra.mrb[0].mxu0 %v2198
  %v2797 = vpop.f32.mrb[0].mxu0
  %v2798 = vadd.f32 0.0, %v2797
  %v2799 = vpop.f32.mrb[0].mxu0
  %v2800 = vadd.f32 0.0, %v2799
  %v2801 = vpop.f32.mrb[0].mxu0
  %v2802 = vadd.f32 0.0, %v2801
  %v2803 = vpop.f32.mrb[0].mxu0
  %v2804 = vadd.f32 0.0, %v2803
  %2805 = vmatprep.mubr.bf16.mxu0 %v2204
  %2806 = vmatmul.mubr.bf16.gmra.mrb[0].mxu0 %v2203
  %v2807 = vpop.f32.mrb[0].mxu0
  %v2808 = vadd.f32 0.0, %v2807
  %v2809 = vpop.f32.mrb[0].mxu0
  %v2810 = vadd.f32 0.0, %v2809
  %v2811 = vpop.f32.mrb[0].mxu0
  %v2812 = vadd.f32 0.0, %v2811
  %v2813 = vpop.f32.mrb[0].mxu0
  %v2814 = vadd.f32 0.0, %v2813
  %2815 = vmatprep.mubr.bf16.mxu0 %v2209
  %2816 = vmatmul.mubr.bf16.gmra.mrb[0].mxu0 %v2208
  %v2817 = vpop.f32.mrb[0].mxu0
  %v2818 = vadd.f32 0.0, %v2817
  %v2819 = vpop.f32.mrb[0].mxu0
  %v2820 = vadd.f32 0.0, %v2819
  %v2821 = vpop.f32.mrb[0].mxu0
  %v2822 = vadd.f32 0.0, %v2821
  %v2823 = vpop.f32.mrb[0].mxu0
  %v2824 = vadd.f32 0.0, %v2823
  %2825 = vmatprep.mubr.bf16.mxu0 %v2214
  %2826 = vmatmul.mubr.bf16.gmra.mrb[0].mxu0 %v2213
  %v2827 = vpop.f32.mrb[0].mxu0
  %v2828 = vadd.f32 0.0, %v2827
  %v2829 = vpop.f32.mrb[0].mxu0
  %v2830 = vadd.f32 0.0, %v2829
  %v2831 = vpop.f32.mrb[0].mxu0
  %v2832 = vadd.f32 0.0, %v2831
  %v2833 = vpop.f32.mrb[0].mxu0
  %v2834 = vadd.f32 0.0, %v2833
  %2835 = vmatprep.mubr.bf16.mxu0 %v2219
  %2836 = vmatmul.mubr.bf16.gmra.mrb[0].mxu0 %v2218
  %v2837 = vpop.f32.mrb[0].mxu0
  %v2838 = vadd.f32 0.0, %v2837
  %v2839 = vpop.f32.mrb[0].mxu0
  %v2840 = vadd.f32 0.0, %v2839
  %v2841 = vpop.f32.mrb[0].mxu0
  %v2842 = vadd.f32 0.0, %v2841
  %v2843 = vpop.f32.mrb[0].mxu0
  %v2844 = vadd.f32 0.0, %v2843
  %2845 = vmatprep.mubr.bf16.mxu0 %v2224
  %2846 = vmatmul.mubr.bf16.gmra.mrb[0].mxu0 %v2223
  %v2847 = vpop.f32.mrb[0].mxu0
  %v2848 = vadd.f32 0.0, %v2847
  %v2849 = vpop.f32.mrb[0].mxu0
  %v2850 = vadd.f32 0.0, %v2849
  %v2851 = vpop.f32.mrb[0].mxu0
  %v2852 = vadd.f32 0.0, %v2851
  %v2853 = vpop.f32.mrb[0].mxu0
  %v2854 = vadd.f32 0.0, %v2853
  %2855 = vmatprep.mubr.bf16.mxu0 %v2229
  %2856 = vmatmul.mubr.bf16.gmra.mrb[0].mxu0 %v2228
  %v2857 = vpop.f32.mrb[0].mxu0
  %v2858 = vadd.f32 0.0, %v2857
  %v2859 = vpop.f32.mrb[0].mxu0
  %v2860 = vadd.f32 0.0, %v2859
  %v2861 = vpop.f32.mrb[0].mxu0
  %v2862 = vadd.f32 0.0, %v2861
  %v2863 = vpop.f32.mrb[0].mxu0
  %v2864 = vadd.f32 0.0, %v2863
  %2865 = vmatprep.mubr.bf16.mxu0 %v2234
  %2866 = vmatmul.mubr.bf16.gmra.mrb[0].mxu0 %v2233
  %v2867 = vpop.f32.mrb[0].mxu0
  %v2868 = vadd.f32 0.0, %v2867
  %v2869 = vpop.f32.mrb[0].mxu0
  %v2870 = vadd.f32 0.0, %v2869
  %v2871 = vpop.f32.mrb[0].mxu0
  %v2872 = vadd.f32 0.0, %v2871
  %v2873 = vpop.f32.mrb[0].mxu0
  %v2874 = vadd.f32 0.0, %v2873
  %2875 = vmatprep.mubr.bf16.mxu0 %v2239
  %2876 = vmatmul.mubr.bf16.gmra.mrb[0].mxu0 %v2238
  %v2877 = vpop.f32.mrb[0].mxu0
  %v2878 = vadd.f32 0.0, %v2877
  %v2879 = vpop.f32.mrb[0].mxu0
  %v2880 = vadd.f32 0.0, %v2879
  %v2881 = vpop.f32.mrb[0].mxu0
  %v2882 = vadd.f32 0.0, %v2881
  %v2883 = vpop.f32.mrb[0].mxu0
  %v2884 = vadd.f32 0.0, %v2883
  %2885 = vmatprep.mubr.bf16.mxu0 %v2244
  %2886 = vmatmul.mubr.bf16.gmra.mrb[0].mxu0 %v2243
  %v2887 = vpop.f32.mrb[0].mxu0
  %v2888 = vadd.f32 0.0, %v2887
  %v2889 = vpop.f32.mrb[0].mxu0
  %v2890 = vadd.f32 0.0, %v2889
  %v2891 = vpop.f32.mrb[0].mxu0
  %v2892 = vadd.f32 0.0, %v2891
  %v2893 = vpop.f32.mrb[0].mxu0
  %v2894 = vadd.f32 0.0, %v2893
  %2895 = vmatprep.mubr.bf16.mxu0 %v2249
  %2896 = vmatmul.mubr.bf16.gmra.mrb[0].mxu0 %v2248
  %v2897 = vpop.f32.mrb[0].mxu0
  %v2898 = vadd.f32 0.0, %v2897
  %v2899 = vpop.f32.mrb[0].mxu0
  %v2900 = vadd.f32 0.0, %v2899
  %v2901 = vpop.f32.mrb[0].mxu0
  %v2902 = vadd.f32 0.0, %v2901
  %v2903 = vpop.f32.mrb[0].mxu0
  %v2904 = vadd.f32 0.0, %v2903
  %2905 = vmatprep.mubr.bf16.mxu0 %v2254
  %2906 = vmatmul.mubr.bf16.gmra.mrb[0].mxu0 %v2253
  %v2907 = vpop.f32.mrb[0].mxu0
  %v2908 = vadd.f32 0.0, %v2907
  %v2909 = vpop.f32.mrb[0].mxu0
  %v2910 = vadd.f32 0.0, %v2909
  %v2911 = vpop.f32.mrb[0].mxu0
  %v2912 = vadd.f32 0.0, %v2911
  %v2913 = vpop.f32.mrb[0].mxu0
  %v2914 = vadd.f32 0.0, %v2913
  %2915 = vmatprep.mubr.bf16.mxu0 %v2259
  %2916 = vmatmul.mubr.bf16.gmra.mrb[0].mxu0 %v2258
  %v2917 = vpop.f32.mrb[0].mxu0
  %v2918 = vadd.f32 0.0, %v2917
  %v2919 = vpop.f32.mrb[0].mxu0
  %v2920 = vadd.f32 0.0, %v2919
  %v2921 = vpop.f32.mrb[0].mxu0
  %v2922 = vadd.f32 0.0, %v2921
  %v2923 = vpop.f32.mrb[0].mxu0
  %v2924 = vadd.f32 0.0, %v2923
  %2925 = vmatprep.mubr.bf16.mxu0 %v2264
  %2926 = vmatmul.mubr.bf16.gmra.mrb[0].mxu0 %v2263
  %v2927 = vpop.f32.mrb[0].mxu0
  %v2928 = vadd.f32 0.0, %v2927
  %v2929 = vpop.f32.mrb[0].mxu0
  %v2930 = vadd.f32 0.0, %v2929
  %v2931 = vpop.f32.mrb[0].mxu0
  %v2932 = vadd.f32 0.0, %v2931
  %v2933 = vpop.f32.mrb[0].mxu0
  %v2934 = vadd.f32 0.0, %v2933
  %2935 = vmatprep.mubr.bf16.mxu0 %v2269
  %2936 = vmatmul.mubr.bf16.gmra.mrb[0].mxu0 %v2268
  %v2937 = vpop.f32.mrb[0].mxu0
  %v2938 = vadd.f32 0.0, %v2937
  %v2939 = vpop.f32.mrb[0].mxu0
  %v2940 = vadd.f32 0.0, %v2939
  %v2941 = vpop.f32.mrb[0].mxu0
  %v2942 = vadd.f32 0.0, %v2941
  %v2943 = vpop.f32.mrb[0].mxu0
  %v2944 = vadd.f32 0.0, %v2943
  %2945 = vdwg.mxu0
  %2946 = vmatprep.subr.bf16.mxu0 %v2594
  %2947 = vmatpush1.bf16.msra.mxu0 %v2593
  %2948 = vmatprep.subr.bf16.mxu0 %v2596
  %2949 = vmatpush1.bf16.msra.mxu0 %v2595
  %2950 = vmatprep.subr.bf16.mxu0 %v2598
  %2951 = vmatpush1.bf16.msra.mxu0 %v2597
  %2952 = vmatprep.subr.bf16.mxu0 %v2600
  %2953 = vmatpush1.bf16.msra.mxu0 %v2599
  %2954 = vmatprep.subr.bf16.mxu0 %v2602
  %2955 = vmatpush1.bf16.msra.mxu0 %v2601
  %2956 = vmatprep.subr.bf16.mxu0 %v2604
  %2957 = vmatpush1.bf16.msra.mxu0 %v2603
  %2958 = vmatprep.subr.bf16.mxu0 %v2606
  %2959 = vmatpush1.bf16.msra.mxu0 %v2605
  %2960 = vmatprep.subr.bf16.mxu0 %v2608
  %2961 = vmatpush1.bf16.msra.mxu0 %v2607
  %2962 = vmatprep.subr.bf16.mxu0 %v2610
  %2963 = vmatpush1.bf16.msra.mxu0 %v2609
  %2964 = vmatprep.subr.bf16.mxu0 %v2612
  %2965 = vmatpush1.bf16.msra.mxu0 %v2611
  %2966 = vmatprep.subr.bf16.mxu0 %v2614
  %2967 = vmatpush1.bf16.msra.mxu0 %v2613
  %2968 = vmatprep.subr.bf16.mxu0 %v2616
  %2969 = vmatpush1.bf16.msra.mxu0 %v2615
  %2970 = vmatprep.subr.bf16.mxu0 %v2618
  %2971 = vmatpush1.bf16.msra.mxu0 %v2617
  %2972 = vmatprep.subr.bf16.mxu0 %v2620
  %2973 = vmatpush1.bf16.msra.mxu0 %v2619
  %2974 = vmatprep.subr.bf16.mxu0 %v2622
  %2975 = vmatpush1.bf16.msra.mxu0 %v2621
  %2976 = vmatprep.subr.bf16.mxu0 %v2624
  %2977 = vmatpush1.bf16.msra.mxu0 %v2623
  %2978 = vmatprep.mubr.bf16.mxu0 %v2196
  %2979 = vmatmul.mubr.bf16.gmra.mrb[0].mxu0 %v2195
  %v2980 = vpop.f32.mrb[0].mxu0
  %v2981 = vadd.f32 %v2788, %v2980
  %v2982 = vpop.f32.mrb[0].mxu0
  %v2983 = vadd.f32 %v2790, %v2982
  %v2984 = vpop.f32.mrb[0].mxu0
  %v2985 = vadd.f32 %v2792, %v2984
  %v2986 = vpop.f32.mrb[0].mxu0
  %v2987 = vadd.f32 %v2794, %v2986
  %2988 = vmatprep.mubr.bf16.mxu0 %v2201
  %2989 = vmatmul.mubr.bf16.gmra.mrb[0].mxu0 %v2200
  %v2990 = vpop.f32.mrb[0].mxu0
  %v2991 = vadd.f32 %v2798, %v2990
  %v2992 = vpop.f32.mrb[0].mxu0
  %v2993 = vadd.f32 %v2800, %v2992
  %v2994 = vpop.f32.mrb[0].mxu0
  %v2995 = vadd.f32 %v2802, %v2994
  %v2996 = vpop.f32.mrb[0].mxu0
  %v2997 = vadd.f32 %v2804, %v2996
  %2998 = vmatprep.mubr.bf16.mxu0 %v2206
  %2999 = vmatmul.mubr.bf16.gmra.mrb[0].mxu0 %v2205
  %v3000 = vpop.f32.mrb[0].mxu0
  %v3001 = vadd.f32 %v2808, %v3000
  %v3002 = vpop.f32.mrb[0].mxu0
  %v3003 = vadd.f32 %v2810, %v3002
  %v3004 = vpop.f32.mrb[0].mxu0
  %v3005 = vadd.f32 %v2812, %v3004
  %v3006 = vpop.f32.mrb[0].mxu0
  %v3007 = vadd.f32 %v2814, %v3006
  %3008 = vmatprep.mubr.bf16.mxu0 %v2211
  %3009 = vmatmul.mubr.bf16.gmra.mrb[0].mxu0 %v2210
  %v3010 = vpop.f32.mrb[0].mxu0
  %v3011 = vadd.f32 %v2818, %v3010
  %v3012 = vpop.f32.mrb[0].mxu0
  %v3013 = vadd.f32 %v2820, %v3012
  %v3014 = vpop.f32.mrb[0].mxu0
  %v3015 = vadd.f32 %v2822, %v3014
  %v3016 = vpop.f32.mrb[0].mxu0
  %v3017 = vadd.f32 %v2824, %v3016
  %3018 = vmatprep.mubr.bf16.mxu0 %v2216
  %3019 = vmatmul.mubr.bf16.gmra.mrb[0].mxu0 %v2215
  %v3020 = vpop.f32.mrb[0].mxu0
  %v3021 = vadd.f32 %v2828, %v3020
  %v3022 = vpop.f32.mrb[0].mxu0
  %v3023 = vadd.f32 %v2830, %v3022
  %v3024 = vpop.f32.mrb[0].mxu0
  %v3025 = vadd.f32 %v2832, %v3024
  %v3026 = vpop.f32.mrb[0].mxu0
  %v3027 = vadd.f32 %v2834, %v3026
  %3028 = vmatprep.mubr.bf16.mxu0 %v2221
  %3029 = vmatmul.mubr.bf16.gmra.mrb[0].mxu0 %v2220
  %v3030 = vpop.f32.mrb[0].mxu0
  %v3031 = vadd.f32 %v2838, %v3030
  %v3032 = vpop.f32.mrb[0].mxu0
  %v3033 = vadd.f32 %v2840, %v3032
  %v3034 = vpop.f32.mrb[0].mxu0
  %v3035 = vadd.f32 %v2842, %v3034
  %v3036 = vpop.f32.mrb[0].mxu0
  %v3037 = vadd.f32 %v2844, %v3036
  %3038 = vmatprep.mubr.bf16.mxu0 %v2226
  %3039 = vmatmul.mubr.bf16.gmra.mrb[0].mxu0 %v2225
  %v3040 = vpop.f32.mrb[0].mxu0
  %v3041 = vadd.f32 %v2848, %v3040
  %v3042 = vpop.f32.mrb[0].mxu0
  %v3043 = vadd.f32 %v2850, %v3042
  %v3044 = vpop.f32.mrb[0].mxu0
  %v3045 = vadd.f32 %v2852, %v3044
  %v3046 = vpop.f32.mrb[0].mxu0
  %v3047 = vadd.f32 %v2854, %v3046
  %3048 = vmatprep.mubr.bf16.mxu0 %v2231
  %3049 = vmatmul.mubr.bf16.gmra.mrb[0].mxu0 %v2230
  %v3050 = vpop.f32.mrb[0].mxu0
  %v3051 = vadd.f32 %v2858, %v3050
  %v3052 = vpop.f32.mrb[0].mxu0
  %v3053 = vadd.f32 %v2860, %v3052
  %v3054 = vpop.f32.mrb[0].mxu0
  %v3055 = vadd.f32 %v2862, %v3054
  %v3056 = vpop.f32.mrb[0].mxu0
  %v3057 = vadd.f32 %v2864, %v3056
  %3058 = vmatprep.mubr.bf16.mxu0 %v2236
  %3059 = vmatmul.mubr.bf16.gmra.mrb[0].mxu0 %v2235
  %v3060 = vpop.f32.mrb[0].mxu0
  %v3061 = vadd.f32 %v2868, %v3060
  %v3062 = vpop.f32.mrb[0].mxu0
  %v3063 = vadd.f32 %v2870, %v3062
  %v3064 = vpop.f32.mrb[0].mxu0
  %v3065 = vadd.f32 %v2872, %v3064
  %v3066 = vpop.f32.mrb[0].mxu0
  %v3067 = vadd.f32 %v2874, %v3066
  %3068 = vmatprep.mubr.bf16.mxu0 %v2241
  %3069 = vmatmul.mubr.bf16.gmra.mrb[0].mxu0 %v2240
  %v3070 = vpop.f32.mrb[0].mxu0
  %v3071 = vadd.f32 %v2878, %v3070
  %v3072 = vpop.f32.mrb[0].mxu0
  %v3073 = vadd.f32 %v2880, %v3072
  %v3074 = vpop.f32.mrb[0].mxu0
  %v3075 = vadd.f32 %v2882, %v3074
  %v3076 = vpop.f32.mrb[0].mxu0
  %v3077 = vadd.f32 %v2884, %v3076
  %3078 = vmatprep.mubr.bf16.mxu0 %v2246
  %3079 = vmatmul.mubr.bf16.gmra.mrb[0].mxu0 %v2245
  %v3080 = vpop.f32.mrb[0].mxu0
  %v3081 = vadd.f32 %v2888, %v3080
  %v3082 = vpop.f32.mrb[0].mxu0
  %v3083 = vadd.f32 %v2890, %v3082
  %v3084 = vpop.f32.mrb[0].mxu0
  %v3085 = vadd.f32 %v2892, %v3084
  %v3086 = vpop.f32.mrb[0].mxu0
  %v3087 = vadd.f32 %v2894, %v3086
  %3088 = vmatprep.mubr.bf16.mxu0 %v2251
  %3089 = vmatmul.mubr.bf16.gmra.mrb[0].mxu0 %v2250
  %v3090 = vpop.f32.mrb[0].mxu0
  %v3091 = vadd.f32 %v2898, %v3090
  %v3092 = vpop.f32.mrb[0].mxu0
  %v3093 = vadd.f32 %v2900, %v3092
  %v3094 = vpop.f32.mrb[0].mxu0
  %v3095 = vadd.f32 %v2902, %v3094
  %v3096 = vpop.f32.mrb[0].mxu0
  %v3097 = vadd.f32 %v2904, %v3096
  %3098 = vmatprep.mubr.bf16.mxu0 %v2256
  %3099 = vmatmul.mubr.bf16.gmra.mrb[0].mxu0 %v2255
  %v3100 = vpop.f32.mrb[0].mxu0
  %v3101 = vadd.f32 %v2908, %v3100
  %v3102 = vpop.f32.mrb[0].mxu0
  %v3103 = vadd.f32 %v2910, %v3102
  %v3104 = vpop.f32.mrb[0].mxu0
  %v3105 = vadd.f32 %v2912, %v3104
  %v3106 = vpop.f32.mrb[0].mxu0
  %v3107 = vadd.f32 %v2914, %v3106
  %3108 = vmatprep.mubr.bf16.mxu0 %v2261
  %3109 = vmatmul.mubr.bf16.gmra.mrb[0].mxu0 %v2260
  %v3110 = vpop.f32.mrb[0].mxu0
  %v3111 = vadd.f32 %v2918, %v3110
  %v3112 = vpop.f32.mrb[0].mxu0
  %v3113 = vadd.f32 %v2920, %v3112
  %v3114 = vpop.f32.mrb[0].mxu0
  %v3115 = vadd.f32 %v2922, %v3114
  %v3116 = vpop.f32.mrb[0].mxu0
  %v3117 = vadd.f32 %v2924, %v3116
  %3118 = vmatprep.mubr.bf16.mxu0 %v2266
  %3119 = vmatmul.mubr.bf16.gmra.mrb[0].mxu0 %v2265
  %v3120 = vpop.f32.mrb[0].mxu0
  %v3121 = vadd.f32 %v2928, %v3120
  %v3122 = vpop.f32.mrb[0].mxu0
  %v3123 = vadd.f32 %v2930, %v3122
  %v3124 = vpop.f32.mrb[0].mxu0
  %v3125 = vadd.f32 %v2932, %v3124
  %v3126 = vpop.f32.mrb[0].mxu0
  %v3127 = vadd.f32 %v2934, %v3126
  %3128 = vmatprep.mubr.bf16.mxu0 %v2271
  %3129 = vmatmul.mubr.bf16.gmra.mrb[0].mxu0 %v2270
  %v3130 = vpop.f32.mrb[0].mxu0
  %v3131 = vadd.f32 %v2938, %v3130
  %v3132 = vpop.f32.mrb[0].mxu0
  %v3133 = vadd.f32 %v2940, %v3132
  %v3134 = vpop.f32.mrb[0].mxu0
  %v3135 = vadd.f32 %v2942, %v3134
  %v3136 = vpop.f32.mrb[0].mxu0
  %v3137 = vadd.f32 %v2944, %v3136
  %3138 = vdwg.mxu0
  %3139 = vmatprep.subr.bf16.mxu0 %v2626
  %3140 = vmatpush1.bf16.msra.mxu0 %v2625
  %3141 = vmatprep.subr.bf16.mxu0 %v2628
  %3142 = vmatpush1.bf16.msra.mxu0 %v2627
  %3143 = vmatprep.subr.bf16.mxu0 %v2630
  %3144 = vmatpush1.bf16.msra.mxu0 %v2629
  %3145 = vmatprep.subr.bf16.mxu0 %v2632
  %3146 = vmatpush1.bf16.msra.mxu0 %v2631
  %3147 = vmatprep.subr.bf16.mxu0 0
  %3148 = vmatpush1.bf16.msra.mxu0 0
  %3149 = vmatprep.subr.bf16.mxu0 0
  %3150 = vmatpush1.bf16.msra.mxu0 0
  %3151 = vmatprep.subr.bf16.mxu0 0
  %3152 = vmatpush1.bf16.msra.mxu0 0
  %3153 = vmatprep.subr.bf16.mxu0 0
  %3154 = vmatpush1.bf16.msra.mxu0 0
  %3155 = vmatprep.subr.bf16.mxu0 0
  %3156 = vmatpush1.bf16.msra.mxu0 0
  %3157 = vmatprep.subr.bf16.mxu0 0
  %3158 = vmatpush1.bf16.msra.mxu0 0
  %3159 = vmatprep.subr.bf16.mxu0 0
  %3160 = vmatpush1.bf16.msra.mxu0 0
  %3161 = vmatprep.subr.bf16.mxu0 0
  %3162 = vmatpush1.bf16.msra.mxu0 0
  %3163 = vmatprep.subr.bf16.mxu0 0
  %3164 = vmatpush1.bf16.msra.mxu0 0
  %3165 = vmatprep.subr.bf16.mxu0 0
  %3166 = vmatpush1.bf16.msra.mxu0 0
  %3167 = vmatprep.subr.bf16.mxu0 0
  %3168 = vmatpush1.bf16.msra.mxu0 0
  %3169 = vmatprep.subr.bf16.mxu0 0
  %3170 = vmatpush1.bf16.msra.mxu0 0
  %3171 = vmatprep.mubr.bf16.mxu0 0
  %3172 = vmatmul.mubr.bf16.gmra.mrb[0].mxu0 %v2706
  %v3173 = vpop.f32.mrb[0].mxu0
  %v3174 = vadd.f32 %v2981, %v3173
  %v3175 = vpop.f32.mrb[0].mxu0
  %v3176 = vadd.f32 %v2983, %v3175
  %v3177 = vpop.f32.mrb[0].mxu0
  %v3178 = vadd.f32 %v2985, %v3177
  %v3179 = vpop.f32.mrb[0].mxu0
  %v3180 = vadd.f32 %v2987, %v3179
  %3181 = vmatprep.mubr.bf16.mxu0 0
  %3182 = vmatmul.mubr.bf16.gmra.mrb[0].mxu0 %v2709
  %v3183 = vpop.f32.mrb[0].mxu0
  %v3184 = vadd.f32 %v2991, %v3183
  %v3185 = vpop.f32.mrb[0].mxu0
  %v3186 = vadd.f32 %v2993, %v3185
  %v3187 = vpop.f32.mrb[0].mxu0
  %v3188 = vadd.f32 %v2995, %v3187
  %v3189 = vpop.f32.mrb[0].mxu0
  %v3190 = vadd.f32 %v2997, %v3189
  %3191 = vmatprep.mubr.bf16.mxu0 0
  %3192 = vmatmul.mubr.bf16.gmra.mrb[0].mxu0 %v2712
  %v3193 = vpop.f32.mrb[0].mxu0
  %v3194 = vadd.f32 %v3001, %v3193
  %v3195 = vpop.f32.mrb[0].mxu0
  %v3196 = vadd.f32 %v3003, %v3195
  %v3197 = vpop.f32.mrb[0].mxu0
  %v3198 = vadd.f32 %v3005, %v3197
  %v3199 = vpop.f32.mrb[0].mxu0
  %v3200 = vadd.f32 %v3007, %v3199
  %3201 = vmatprep.mubr.bf16.mxu0 0
  %3202 = vmatmul.mubr.bf16.gmra.mrb[0].mxu0 %v2715
  %v3203 = vpop.f32.mrb[0].mxu0
  %v3204 = vadd.f32 %v3011, %v3203
  %v3205 = vpop.f32.mrb[0].mxu0
  %v3206 = vadd.f32 %v3013, %v3205
  %v3207 = vpop.f32.mrb[0].mxu0
  %v3208 = vadd.f32 %v3015, %v3207
  %v3209 = vpop.f32.mrb[0].mxu0
  %v3210 = vadd.f32 %v3017, %v3209
  %3211 = vmatprep.mubr.bf16.mxu0 0
  %3212 = vmatmul.mubr.bf16.gmra.mrb[0].mxu0 %v2718
  %v3213 = vpop.f32.mrb[0].mxu0
  %v3214 = vadd.f32 %v3021, %v3213
  %v3215 = vpop.f32.mrb[0].mxu0
  %v3216 = vadd.f32 %v3023, %v3215
  %v3217 = vpop.f32.mrb[0].mxu0
  %v3218 = vadd.f32 %v3025, %v3217
  %v3219 = vpop.f32.mrb[0].mxu0
  %v3220 = vadd.f32 %v3027, %v3219
  %3221 = vmatprep.mubr.bf16.mxu0 0
  %3222 = vmatmul.mubr.bf16.gmra.mrb[0].mxu0 %v2721
  %v3223 = vpop.f32.mrb[0].mxu0
  %v3224 = vadd.f32 %v3031, %v3223
  %v3225 = vpop.f32.mrb[0].mxu0
  %v3226 = vadd.f32 %v3033, %v3225
  %v3227 = vpop.f32.mrb[0].mxu0
  %v3228 = vadd.f32 %v3035, %v3227
  %v3229 = vpop.f32.mrb[0].mxu0
  %v3230 = vadd.f32 %v3037, %v3229
  %3231 = vmatprep.mubr.bf16.mxu0 0
  %3232 = vmatmul.mubr.bf16.gmra.mrb[0].mxu0 %v2724
  %v3233 = vpop.f32.mrb[0].mxu0
  %v3234 = vadd.f32 %v3041, %v3233
  %v3235 = vpop.f32.mrb[0].mxu0
  %v3236 = vadd.f32 %v3043, %v3235
  %v3237 = vpop.f32.mrb[0].mxu0
  %v3238 = vadd.f32 %v3045, %v3237
  %v3239 = vpop.f32.mrb[0].mxu0
  %v3240 = vadd.f32 %v3047, %v3239
  %3241 = vmatprep.mubr.bf16.mxu0 0
  %3242 = vmatmul.mubr.bf16.gmra.mrb[0].mxu0 %v2727
  %v3243 = vpop.f32.mrb[0].mxu0
  %v3244 = vadd.f32 %v3051, %v3243
  %v3245 = vpop.f32.mrb[0].mxu0
  %v3246 = vadd.f32 %v3053, %v3245
  %v3247 = vpop.f32.mrb[0].mxu0
  %v3248 = vadd.f32 %v3055, %v3247
  %v3249 = vpop.f32.mrb[0].mxu0
  %v3250 = vadd.f32 %v3057, %v3249
  %3251 = vmatprep.mubr.bf16.mxu0 0
  %3252 = vmatmul.mubr.bf16.gmra.mrb[0].mxu0 %v2730
  %v3253 = vpop.f32.mrb[0].mxu0
  %v3254 = vadd.f32 %v3061, %v3253
  %v3255 = vpop.f32.mrb[0].mxu0
  %v3256 = vadd.f32 %v3063, %v3255
  %v3257 = vpop.f32.mrb[0].mxu0
  %v3258 = vadd.f32 %v3065, %v3257
  %v3259 = vpop.f32.mrb[0].mxu0
  %v3260 = vadd.f32 %v3067, %v3259
  %3261 = vmatprep.mubr.bf16.mxu0 0
  %3262 = vmatmul.mubr.bf16.gmra.mrb[0].mxu0 %v2733
  %v3263 = vpop.f32.mrb[0].mxu0
  %v3264 = vadd.f32 %v3071, %v3263
  %v3265 = vpop.f32.mrb[0].mxu0
  %v3266 = vadd.f32 %v3073, %v3265
  %v3267 = vpop.f32.mrb[0].mxu0
  %v3268 = vadd.f32 %v3075, %v3267
  %v3269 = vpop.f32.mrb[0].mxu0
  %v3270 = vadd.f32 %v3077, %v3269
  %3271 = vmatprep.mubr.bf16.mxu0 0
  %3272 = vmatmul.mubr.bf16.gmra.mrb[0].mxu0 %v2736
  %v3273 = vpop.f32.mrb[0].mxu0
  %v3274 = vadd.f32 %v3081, %v3273
  %v3275 = vpop.f32.mrb[0].mxu0
  %v3276 = vadd.f32 %v3083, %v3275
  %v3277 = vpop.f32.mrb[0].mxu0
  %v3278 = vadd.f32 %v3085, %v3277
  %v3279 = vpop.f32.mrb[0].mxu0
  %v3280 = vadd.f32 %v3087, %v3279
  %3281 = vmatprep.mubr.bf16.mxu0 0
  %3282 = vmatmul.mubr.bf16.gmra.mrb[0].mxu0 %v2739
  %v3283 = vpop.f32.mrb[0].mxu0
  %v3284 = vadd.f32 %v3091, %v3283
  %v3285 = vpop.f32.mrb[0].mxu0
  %v3286 = vadd.f32 %v3093, %v3285
  %v3287 = vpop.f32.mrb[0].mxu0
  %v3288 = vadd.f32 %v3095, %v3287
  %v3289 = vpop.f32.mrb[0].mxu0
  %v3290 = vadd.f32 %v3097, %v3289
  %3291 = vmatprep.mubr.bf16.mxu0 0
  %3292 = vmatmul.mubr.bf16.gmra.mrb[0].mxu0 %v2742
  %v3293 = vpop.f32.mrb[0].mxu0
  %v3294 = vadd.f32 %v3101, %v3293
  %v3295 = vpop.f32.mrb[0].mxu0
  %v3296 = vadd.f32 %v3103, %v3295
  %v3297 = vpop.f32.mrb[0].mxu0
  %v3298 = vadd.f32 %v3105, %v3297
  %v3299 = vpop.f32.mrb[0].mxu0
  %v3300 = vadd.f32 %v3107, %v3299
  %3301 = vmatprep.mubr.bf16.mxu0 0
  %3302 = vmatmul.mubr.bf16.gmra.mrb[0].mxu0 %v2745
  %v3303 = vpop.f32.mrb[0].mxu0
  %v3304 = vadd.f32 %v3111, %v3303
  %v3305 = vpop.f32.mrb[0].mxu0
  %v3306 = vadd.f32 %v3113, %v3305
  %v3307 = vpop.f32.mrb[0].mxu0
  %v3308 = vadd.f32 %v3115, %v3307
  %v3309 = vpop.f32.mrb[0].mxu0
  %v3310 = vadd.f32 %v3117, %v3309
  %3311 = vmatprep.mubr.bf16.mxu0 0
  %3312 = vmatmul.mubr.bf16.gmra.mrb[0].mxu0 %v2748
  %v3313 = vpop.f32.mrb[0].mxu0
  %v3314 = vadd.f32 %v3121, %v3313
  %v3315 = vpop.f32.mrb[0].mxu0
  %v3316 = vadd.f32 %v3123, %v3315
  %v3317 = vpop.f32.mrb[0].mxu0
  %v3318 = vadd.f32 %v3125, %v3317
  %v3319 = vpop.f32.mrb[0].mxu0
  %v3320 = vadd.f32 %v3127, %v3319
  %3321 = vmatprep.mubr.bf16.mxu0 0
  %3322 = vmatmul.mubr.bf16.gmra.mrb[0].mxu0 %v2751
  %v3323 = vpop.f32.mrb[0].mxu0
  %v3324 = vadd.f32 %v3131, %v3323
  %v3325 = vpop.f32.mrb[0].mxu0
  %v3326 = vadd.f32 %v3133, %v3325
  %v3327 = vpop.f32.mrb[0].mxu0
  %v3328 = vadd.f32 %v3135, %v3327
  %v3329 = vpop.f32.mrb[0].mxu0
  %v3330 = vadd.f32 %v3137, %v3329
  %3331 = vdwg.mxu0
  %v3332 = vadd.f32 %v3174, %v3178
  %v3333 = vadd.f32 %v3332, %v3184
  %v3334 = vadd.f32 %v3333, %v3188
  %v3335 = vadd.f32 %v3334, %v3194
  %v3336 = vadd.f32 %v3335, %v3198
  %v3337 = vadd.f32 %v3336, %v3204
  %v3338 = vadd.f32 %v3337, %v3208
  %v3339 = vadd.f32 %v3338, %v3214
  %v3340 = vadd.f32 %v3339, %v3218
  %v3341 = vadd.f32 %v3340, %v3224
  %v3342 = vadd.f32 %v3341, %v3228
  %v3343 = vadd.f32 %v3342, %v3234
  %v3344 = vadd.f32 %v3343, %v3238
  %v3345 = vadd.f32 %v3344, %v3244
  %v3346 = vadd.f32 %v3345, %v3248
  %v3347 = vadd.f32 %v3346, %v3254
  %v3348 = vadd.f32 %v3347, %v3258
  %v3349 = vadd.f32 %v3348, %v3264
  %v3350 = vadd.f32 %v3349, %v3268
  %v3351 = vadd.f32 %v3350, %v3274
  %v3352 = vadd.f32 %v3351, %v3278
  %v3353 = vadd.f32 %v3352, %v3284
  %v3354 = vadd.f32 %v3353, %v3288
  %v3355 = vadd.f32 %v3354, %v3294
  %v3356 = vadd.f32 %v3355, %v3298
  %v3357 = vadd.f32 %v3356, %v3304
  %v3358 = vadd.f32 %v3357, %v3308
  %v3359 = vadd.f32 %v3358, %v3314
  %v3360 = vadd.f32 %v3359, %v3318
  %v3361 = vadd.f32 %v3360, %v3324
  %v3362 = vadd.f32 %v3361, %v3328
  %v3363 = vrot.slane %v3362, 4
  %v3364 = vadd.f32 %v3362, %v3363
  %v3365 = vrot.slane %v3364, 2
  %v3366 = vadd.f32 %v3364, %v3365
  %v3367 = vrot.slane %v3366, 1
  %v3368 = vadd.f32 %v3366, %v3367
  %v3369 = vsel %vm920, %v3176, 0.0
  %v3370 = vsel %vm920, %v3180, 0.0
  %v3371 = vadd.f32 %v3369, %v3370
  %v3372 = vsel %vm920, %v3186, 0.0
  %v3373 = vadd.f32 %v3371, %v3372
  %v3374 = vsel %vm920, %v3190, 0.0
  %v3375 = vadd.f32 %v3373, %v3374
  %v3376 = vsel %vm920, %v3196, 0.0
  %v3377 = vadd.f32 %v3375, %v3376
  %v3378 = vsel %vm920, %v3200, 0.0
  %v3379 = vadd.f32 %v3377, %v3378
  %v3380 = vsel %vm920, %v3206, 0.0
  %v3381 = vadd.f32 %v3379, %v3380
  %v3382 = vsel %vm920, %v3210, 0.0
  %v3383 = vadd.f32 %v3381, %v3382
  %v3384 = vsel %vm920, %v3216, 0.0
  %v3385 = vadd.f32 %v3383, %v3384
  %v3386 = vsel %vm920, %v3220, 0.0
  %v3387 = vadd.f32 %v3385, %v3386
  %v3388 = vsel %vm920, %v3226, 0.0
  %v3389 = vadd.f32 %v3387, %v3388
  %v3390 = vsel %vm920, %v3230, 0.0
  %v3391 = vadd.f32 %v3389, %v3390
  %v3392 = vsel %vm920, %v3236, 0.0
  %v3393 = vadd.f32 %v3391, %v3392
  %v3394 = vsel %vm920, %v3240, 0.0
  %v3395 = vadd.f32 %v3393, %v3394
  %v3396 = vsel %vm920, %v3246, 0.0
  %v3397 = vadd.f32 %v3395, %v3396
  %v3398 = vsel %vm920, %v3250, 0.0
  %v3399 = vadd.f32 %v3397, %v3398
  %v3400 = vsel %vm920, %v3256, 0.0
  %v3401 = vadd.f32 %v3399, %v3400
  %v3402 = vsel %vm920, %v3260, 0.0
  %v3403 = vadd.f32 %v3401, %v3402
  %v3404 = vsel %vm920, %v3266, 0.0
  %v3405 = vadd.f32 %v3403, %v3404
  %v3406 = vsel %vm920, %v3270, 0.0
  %v3407 = vadd.f32 %v3405, %v3406
  %v3408 = vsel %vm920, %v3276, 0.0
  %v3409 = vadd.f32 %v3407, %v3408
  %v3410 = vsel %vm920, %v3280, 0.0
  %v3411 = vadd.f32 %v3409, %v3410
  %v3412 = vsel %vm920, %v3286, 0.0
  %v3413 = vadd.f32 %v3411, %v3412
  %v3414 = vsel %vm920, %v3290, 0.0
  %v3415 = vadd.f32 %v3413, %v3414
  %v3416 = vsel %vm920, %v3296, 0.0
  %v3417 = vadd.f32 %v3415, %v3416
  %v3418 = vsel %vm920, %v3300, 0.0
  %v3419 = vadd.f32 %v3417, %v3418
  %v3420 = vsel %vm920, %v3306, 0.0
  %v3421 = vadd.f32 %v3419, %v3420
  %v3422 = vsel %vm920, %v3310, 0.0
  %v3423 = vadd.f32 %v3421, %v3422
  %v3424 = vsel %vm920, %v3316, 0.0
  %v3425 = vadd.f32 %v3423, %v3424
  %v3426 = vsel %vm920, %v3320, 0.0
  %v3427 = vadd.f32 %v3425, %v3426
  %v3428 = vsel %vm920, %v3326, 0.0
  %v3429 = vadd.f32 %v3427, %v3428
  %v3430 = vsel %vm920, %v3330, 0.0
  %v3431 = vadd.f32 %v3429, %v3430
  %v3432 = vrot.slane %v3431, 4
  %v3433 = vadd.f32 %v3431, %v3432
  %v3434 = vrot.slane %v3433, 2
  %v3435 = vadd.f32 %v3433, %v3434
  %v3436 = vrot.slane %v3435, 1
  %v3437 = vadd.f32 %v3435, %v3436
  %v3438 = vmul.f32 %v3368, 0.0051020407
  %v3439 = vmul.f32 %v3437, 0.0051020407
  %v3440 = vmul.f32 %v3174, %v3174
  %v3441 = vmul.f32 %v3176, %v3176
  %v3442 = vmul.f32 %v3178, %v3178
  %v3443 = vmul.f32 %v3180, %v3180
  %v3444 = vmul.f32 %v3184, %v3184
  %v3445 = vmul.f32 %v3186, %v3186
  %v3446 = vmul.f32 %v3188, %v3188
  %v3447 = vmul.f32 %v3190, %v3190
  %v3448 = vmul.f32 %v3194, %v3194
  %v3449 = vmul.f32 %v3196, %v3196
  %v3450 = vmul.f32 %v3198, %v3198
  %v3451 = vmul.f32 %v3200, %v3200
  %v3452 = vmul.f32 %v3204, %v3204
  %v3453 = vmul.f32 %v3206, %v3206
  %v3454 = vmul.f32 %v3208, %v3208
  %v3455 = vmul.f32 %v3210, %v3210
  %v3456 = vmul.f32 %v3214, %v3214
  %v3457 = vmul.f32 %v3216, %v3216
  %v3458 = vmul.f32 %v3218, %v3218
  %v3459 = vmul.f32 %v3220, %v3220
  %v3460 = vmul.f32 %v3224, %v3224
  %v3461 = vmul.f32 %v3226, %v3226
  %v3462 = vmul.f32 %v3228, %v3228
  %v3463 = vmul.f32 %v3230, %v3230
  %v3464 = vmul.f32 %v3234, %v3234
  %v3465 = vmul.f32 %v3236, %v3236
  %v3466 = vmul.f32 %v3238, %v3238
  %v3467 = vmul.f32 %v3240, %v3240
  %v3468 = vmul.f32 %v3244, %v3244
  %v3469 = vmul.f32 %v3246, %v3246
  %v3470 = vmul.f32 %v3248, %v3248
  %v3471 = vmul.f32 %v3250, %v3250
  %v3472 = vmul.f32 %v3254, %v3254
  %v3473 = vmul.f32 %v3256, %v3256
  %v3474 = vmul.f32 %v3258, %v3258
  %v3475 = vmul.f32 %v3260, %v3260
  %v3476 = vmul.f32 %v3264, %v3264
  %v3477 = vmul.f32 %v3266, %v3266
  %v3478 = vmul.f32 %v3268, %v3268
  %v3479 = vmul.f32 %v3270, %v3270
  %v3480 = vmul.f32 %v3274, %v3274
  %v3481 = vmul.f32 %v3276, %v3276
  %v3482 = vmul.f32 %v3278, %v3278
  %v3483 = vmul.f32 %v3280, %v3280
  %v3484 = vmul.f32 %v3284, %v3284
  %v3485 = vmul.f32 %v3286, %v3286
  %v3486 = vmul.f32 %v3288, %v3288
  %v3487 = vmul.f32 %v3290, %v3290
  %v3488 = vmul.f32 %v3294, %v3294
  %v3489 = vmul.f32 %v3296, %v3296
  %v3490 = vmul.f32 %v3298, %v3298
  %v3491 = vmul.f32 %v3300, %v3300
  %v3492 = vmul.f32 %v3304, %v3304
  %v3493 = vmul.f32 %v3306, %v3306
  %v3494 = vmul.f32 %v3308, %v3308
  %v3495 = vmul.f32 %v3310, %v3310
  %v3496 = vmul.f32 %v3314, %v3314
  %v3497 = vmul.f32 %v3316, %v3316
  %v3498 = vmul.f32 %v3318, %v3318
  %v3499 = vmul.f32 %v3320, %v3320
  %v3500 = vmul.f32 %v3324, %v3324
  %v3501 = vmul.f32 %v3326, %v3326
  %v3502 = vmul.f32 %v3328, %v3328
  %v3503 = vmul.f32 %v3330, %v3330
  %v3504 = vadd.f32 %v3440, %v3442
  %v3505 = vadd.f32 %v3504, %v3444
  %v3506 = vadd.f32 %v3505, %v3446
  %v3507 = vadd.f32 %v3506, %v3448
  %v3508 = vadd.f32 %v3507, %v3450
  %v3509 = vadd.f32 %v3508, %v3452
  %v3510 = vadd.f32 %v3509, %v3454
  %v3511 = vadd.f32 %v3510, %v3456
  %v3512 = vadd.f32 %v3511, %v3458
  %v3513 = vadd.f32 %v3512, %v3460
  %v3514 = vadd.f32 %v3513, %v3462
  %v3515 = vadd.f32 %v3514, %v3464
  %v3516 = vadd.f32 %v3515, %v3466
  %v3517 = vadd.f32 %v3516, %v3468
  %v3518 = vadd.f32 %v3517, %v3470
  %v3519 = vadd.f32 %v3518, %v3472
  %v3520 = vadd.f32 %v3519, %v3474
  %v3521 = vadd.f32 %v3520, %v3476
  %v3522 = vadd.f32 %v3521, %v3478
  %v3523 = vadd.f32 %v3522, %v3480
  %v3524 = vadd.f32 %v3523, %v3482
  %v3525 = vadd.f32 %v3524, %v3484
  %v3526 = vadd.f32 %v3525, %v3486
  %v3527 = vadd.f32 %v3526, %v3488
  %v3528 = vadd.f32 %v3527, %v3490
  %v3529 = vadd.f32 %v3528, %v3492
  %v3530 = vadd.f32 %v3529, %v3494
  %v3531 = vadd.f32 %v3530, %v3496
  %v3532 = vadd.f32 %v3531, %v3498
  %v3533 = vadd.f32 %v3532, %v3500
  %v3534 = vadd.f32 %v3533, %v3502
  %v3535 = vrot.slane %v3534, 4
  %v3536 = vadd.f32 %v3534, %v3535
  %v3537 = vrot.slane %v3536, 2
  %v3538 = vadd.f32 %v3536, %v3537
  %v3539 = vrot.slane %v3538, 1
  %v3540 = vadd.f32 %v3538, %v3539
  %v3541 = vsel %vm920, %v3441, 0.0
  %v3542 = vsel %vm920, %v3443, 0.0
  %v3543 = vadd.f32 %v3541, %v3542
  %v3544 = vsel %vm920, %v3445, 0.0
  %v3545 = vadd.f32 %v3543, %v3544
  %v3546 = vsel %vm920, %v3447, 0.0
  %v3547 = vadd.f32 %v3545, %v3546
  %v3548 = vsel %vm920, %v3449, 0.0
  %v3549 = vadd.f32 %v3547, %v3548
  %v3550 = vsel %vm920, %v3451, 0.0
  %v3551 = vadd.f32 %v3549, %v3550
  %v3552 = vsel %vm920, %v3453, 0.0
  %v3553 = vadd.f32 %v3551, %v3552
  %v3554 = vsel %vm920, %v3455, 0.0
  %v3555 = vadd.f32 %v3553, %v3554
  %v3556 = vsel %vm920, %v3457, 0.0
  %v3557 = vadd.f32 %v3555, %v3556
  %v3558 = vsel %vm920, %v3459, 0.0
  %v3559 = vadd.f32 %v3557, %v3558
  %v3560 = vsel %vm920, %v3461, 0.0
  %v3561 = vadd.f32 %v3559, %v3560
  %v3562 = vsel %vm920, %v3463, 0.0
  %v3563 = vadd.f32 %v3561, %v3562
  %v3564 = vsel %vm920, %v3465, 0.0
  %v3565 = vadd.f32 %v3563, %v3564
  %v3566 = vsel %vm920, %v3467, 0.0
  %v3567 = vadd.f32 %v3565, %v3566
  %v3568 = vsel %vm920, %v3469, 0.0
  %v3569 = vadd.f32 %v3567, %v3568
  %v3570 = vsel %vm920, %v3471, 0.0
  %v3571 = vadd.f32 %v3569, %v3570
  %v3572 = vsel %vm920, %v3473, 0.0
  %v3573 = vadd.f32 %v3571, %v3572
  %v3574 = vsel %vm920, %v3475, 0.0
  %v3575 = vadd.f32 %v3573, %v3574
  %v3576 = vsel %vm920, %v3477, 0.0
  %v3577 = vadd.f32 %v3575, %v3576
  %v3578 = vsel %vm920, %v3479, 0.0
  %v3579 = vadd.f32 %v3577, %v3578
  %v3580 = vsel %vm920, %v3481, 0.0
  %v3581 = vadd.f32 %v3579, %v3580
  %v3582 = vsel %vm920, %v3483, 0.0
  %v3583 = vadd.f32 %v3581, %v3582
  %v3584 = vsel %vm920, %v3485, 0.0
  %v3585 = vadd.f32 %v3583, %v3584
  %v3586 = vsel %vm920, %v3487, 0.0
  %v3587 = vadd.f32 %v3585, %v3586
  %v3588 = vsel %vm920, %v3489, 0.0
  %v3589 = vadd.f32 %v3587, %v3588
  %v3590 = vsel %vm920, %v3491, 0.0
  %v3591 = vadd.f32 %v3589, %v3590
  %v3592 = vsel %vm920, %v3493, 0.0
  %v3593 = vadd.f32 %v3591, %v3592
  %v3594 = vsel %vm920, %v3495, 0.0
  %v3595 = vadd.f32 %v3593, %v3594
  %v3596 = vsel %vm920, %v3497, 0.0
  %v3597 = vadd.f32 %v3595, %v3596
  %v3598 = vsel %vm920, %v3499, 0.0
  %v3599 = vadd.f32 %v3597, %v3598
  %v3600 = vsel %vm920, %v3501, 0.0
  %v3601 = vadd.f32 %v3599, %v3600
  %v3602 = vsel %vm920, %v3503, 0.0
  %v3603 = vadd.f32 %v3601, %v3602
  %v3604 = vrot.slane %v3603, 4
  %v3605 = vadd.f32 %v3603, %v3604
  %v3606 = vrot.slane %v3605, 2
  %v3607 = vadd.f32 %v3605, %v3606
  %v3608 = vrot.slane %v3607, 1
  %v3609 = vadd.f32 %v3607, %v3608
  %v3610 = vmul.f32 %v3540, 0.0051020407
  %v3611 = vmul.f32 %v3609, 0.0051020407
  %v3612 = vmul.f32 %v3438, %v3438
  %v3613 = vmul.f32 %v3439, %v3439
  %v3614 = vsub.f32 %v3610, %v3612
  %v3615 = vsub.f32 %v3611, %v3613
  %v3616 = vmax.f32 %v3614, 0.0
  %v3617 = vmax.f32 %v3615, 0.0
  %v3618 = vld [vmem:[%s4] sm:$0x3]
  %v3619 = vadd.f32 %v3616, 1e-05
  %v3620 = vadd.f32 %v3617, 1e-05
  %v3621 = vrsqrt.pop %v3619
  %v3622 = vrsqrt.pop %v3620
  %v3625 = vcombine.low %v3621, %v3622
  %v3627 = vunpack.c.l.s4 1966171168
  %v3628 = vunpack.c.0.s8 %v3627
  %v3629 = vlaneseq
  %v3630 = vshrl.u32 %v3629, 7
  %v3631 = vsub.s32 %v3628, %v3630
  %v3632 = vrot.slane %v3625, %v3631
  %v3634 = vunpack.c.l.s4 1966171168
  %v3635 = vunpack.c.0.s8 %v3634
  %v3636 = vlaneseq
  %v3637 = vshrl.u32 %v3636, 7
  %v3638 = vsub.s32 %v3635, %v3637
  %v3639 = vrot.slane %v3632, %v3638
  %v3641 = vmul.f32 %v3618, %v3639
  %v3642 = vld [vmem:[%s5] sm:$0x3]
  %v3644 = vlaneseq
  %v3645 = vshrl.u32 %v3644, 7
  %v3646 = vsub.s32 0, %v3645
  %v3647 = vrot.slane %v3641, %v3646
  %v3648 = vlaneseq
  %v3649 = vshrl.u32 %v3648, 7
  %v3650 = vsub.s32 1, %v3649
  %v3651 = vrot.slane %v3641, %v3650
  %v3654 = vmul.f32 %v3438, %v3647
  %v3655 = vmul.f32 %v3439, %v3651
  %v3658 = vcombine.low %v3654, %v3655
  %v3660 = vunpack.c.l.s4 1966171168
  %v3661 = vunpack.c.0.s8 %v3660
  %v3662 = vlaneseq
  %v3663 = vshrl.u32 %v3662, 7
  %v3664 = vsub.s32 %v3661, %v3663
  %v3665 = vrot.slane %v3658, %v3664
  %v3667 = vunpack.c.l.s4 1966171168
  %v3668 = vunpack.c.0.s8 %v3667
  %v3669 = vlaneseq
  %v3670 = vshrl.u32 %v3669, 7
  %v3671 = vsub.s32 %v3668, %v3670
  %v3672 = vrot.slane %v3665, %v3671
  %v3674 = vsub.f32 %v3642, %v3672
  %v3675 = vmul.f32 %v3174, %v3647
  %v3676 = vmul.f32 %v3176, %v3651
  %v3677 = vmul.f32 %v3178, %v3647
  %v3678 = vmul.f32 %v3180, %v3651
  %v3679 = vmul.f32 %v3184, %v3647
  %v3680 = vmul.f32 %v3186, %v3651
  %v3681 = vmul.f32 %v3188, %v3647
  %v3682 = vmul.f32 %v3190, %v3651
  %v3683 = vmul.f32 %v3194, %v3647
  %v3684 = vmul.f32 %v3196, %v3651
  %v3685 = vmul.f32 %v3198, %v3647
  %v3686 = vmul.f32 %v3200, %v3651
  %v3687 = vmul.f32 %v3204, %v3647
  %v3688 = vmul.f32 %v3206, %v3651
  %v3689 = vmul.f32 %v3208, %v3647
  %v3690 = vmul.f32 %v3210, %v3651
  %v3691 = vmul.f32 %v3214, %v3647
  %v3692 = vmul.f32 %v3216, %v3651
  %v3693 = vmul.f32 %v3218, %v3647
  %v3694 = vmul.f32 %v3220, %v3651
  %v3695 = vmul.f32 %v3224, %v3647
  %v3696 = vmul.f32 %v3226, %v3651
  %v3697 = vmul.f32 %v3228, %v3647
  %v3698 = vmul.f32 %v3230, %v3651
  %v3699 = vmul.f32 %v3234, %v3647
  %v3700 = vmul.f32 %v3236, %v3651
  %v3701 = vmul.f32 %v3238, %v3647
  %v3702 = vmul.f32 %v3240, %v3651
  %v3703 = vmul.f32 %v3244, %v3647
  %v3704 = vmul.f32 %v3246, %v3651
  %v3705 = vmul.f32 %v3248, %v3647
  %v3706 = vmul.f32 %v3250, %v3651
  %v3707 = vmul.f32 %v3254, %v3647
  %v3708 = vmul.f32 %v3256, %v3651
  %v3709 = vmul.f32 %v3258, %v3647
  %v3710 = vmul.f32 %v3260, %v3651
  %v3711 = vmul.f32 %v3264, %v3647
  %v3712 = vmul.f32 %v3266, %v3651
  %v3713 = vmul.f32 %v3268, %v3647
  %v3714 = vmul.f32 %v3270, %v3651
  %v3715 = vmul.f32 %v3274, %v3647
  %v3716 = vmul.f32 %v3276, %v3651
  %v3717 = vmul.f32 %v3278, %v3647
  %v3718 = vmul.f32 %v3280, %v3651
  %v3719 = vmul.f32 %v3284, %v3647
  %v3720 = vmul.f32 %v3286, %v3651
  %v3721 = vmul.f32 %v3288, %v3647
  %v3722 = vmul.f32 %v3290, %v3651
  %v3723 = vmul.f32 %v3294, %v3647
  %v3724 = vmul.f32 %v3296, %v3651
  %v3725 = vmul.f32 %v3298, %v3647
  %v3726 = vmul.f32 %v3300, %v3651
  %v3727 = vmul.f32 %v3304, %v3647
  %v3728 = vmul.f32 %v3306, %v3651
  %v3729 = vmul.f32 %v3308, %v3647
  %v3730 = vmul.f32 %v3310, %v3651
  %v3731 = vmul.f32 %v3314, %v3647
  %v3732 = vmul.f32 %v3316, %v3651
  %v3733 = vmul.f32 %v3318, %v3647
  %v3734 = vmul.f32 %v3320, %v3651
  %v3735 = vmul.f32 %v3324, %v3647
  %v3736 = vmul.f32 %v3326, %v3651
  %v3737 = vmul.f32 %v3328, %v3647
  %v3738 = vmul.f32 %v3330, %v3651
  %v3740 = vlaneseq
  %v3741 = vshrl.u32 %v3740, 7
  %v3742 = vsub.s32 0, %v3741
  %v3743 = vrot.slane %v3674, %v3742
  %v3744 = vlaneseq
  %v3745 = vshrl.u32 %v3744, 7
  %v3746 = vsub.s32 1, %v3745
  %v3747 = vrot.slane %v3674, %v3746
  %v3750 = vadd.f32 %v3675, %v3743
  %v3751 = vadd.f32 %v3676, %v3747
  %v3752 = vadd.f32 %v3677, %v3743
  %v3753 = vadd.f32 %v3678, %v3747
  %v3754 = vadd.f32 %v3679, %v3743
  %v3755 = vadd.f32 %v3680, %v3747
  %v3756 = vadd.f32 %v3681, %v3743
  %v3757 = vadd.f32 %v3682, %v3747
  %v3758 = vadd.f32 %v3683, %v3743
  %v3759 = vadd.f32 %v3684, %v3747
  %v3760 = vadd.f32 %v3685, %v3743
  %v3761 = vadd.f32 %v3686, %v3747
  %v3762 = vadd.f32 %v3687, %v3743
  %v3763 = vadd.f32 %v3688, %v3747
  %v3764 = vadd.f32 %v3689, %v3743
  %v3765 = vadd.f32 %v3690, %v3747
  %v3766 = vadd.f32 %v3691, %v3743
  %v3767 = vadd.f32 %v3692, %v3747
  %v3768 = vadd.f32 %v3693, %v3743
  %v3769 = vadd.f32 %v3694, %v3747
  %v3770 = vadd.f32 %v3695, %v3743
  %v3771 = vadd.f32 %v3696, %v3747
  %v3772 = vadd.f32 %v3697, %v3743
  %v3773 = vadd.f32 %v3698, %v3747
  %v3774 = vadd.f32 %v3699, %v3743
  %v3775 = vadd.f32 %v3700, %v3747
  %v3776 = vadd.f32 %v3701, %v3743
  %v3777 = vadd.f32 %v3702, %v3747
  %v3778 = vadd.f32 %v3703, %v3743
  %v3779 = vadd.f32 %v3704, %v3747
  %v3780 = vadd.f32 %v3705, %v3743
  %v3781 = vadd.f32 %v3706, %v3747
  %v3782 = vadd.f32 %v3707, %v3743
  %v3783 = vadd.f32 %v3708, %v3747
  %v3784 = vadd.f32 %v3709, %v3743
  %v3785 = vadd.f32 %v3710, %v3747
  %v3786 = vadd.f32 %v3711, %v3743
  %v3787 = vadd.f32 %v3712, %v3747
  %v3788 = vadd.f32 %v3713, %v3743
  %v3789 = vadd.f32 %v3714, %v3747
  %v3790 = vadd.f32 %v3715, %v3743
  %v3791 = vadd.f32 %v3716, %v3747
  %v3792 = vadd.f32 %v3717, %v3743
  %v3793 = vadd.f32 %v3718, %v3747
  %v3794 = vadd.f32 %v3719, %v3743
  %v3795 = vadd.f32 %v3720, %v3747
  %v3796 = vadd.f32 %v3721, %v3743
  %v3797 = vadd.f32 %v3722, %v3747
  %v3798 = vadd.f32 %v3723, %v3743
  %v3799 = vadd.f32 %v3724, %v3747
  %v3800 = vadd.f32 %v3725, %v3743
  %v3801 = vadd.f32 %v3726, %v3747
  %v3802 = vadd.f32 %v3727, %v3743
  %v3803 = vadd.f32 %v3728, %v3747
  %v3804 = vadd.f32 %v3729, %v3743
  %v3805 = vadd.f32 %v3730, %v3747
  %v3806 = vadd.f32 %v3731, %v3743
  %v3807 = vadd.f32 %v3732, %v3747
  %v3808 = vadd.f32 %v3733, %v3743
  %v3809 = vadd.f32 %v3734, %v3747
  %v3810 = vadd.f32 %v3735, %v3743
  %v3811 = vadd.f32 %v3736, %v3747
  %v3812 = vadd.f32 %v3737, %v3743
  %v3813 = vadd.f32 %v3738, %v3747
  %v3814 = vmax.f32 %v3750, 0.0
  %v3815 = vmax.f32 %v3751, 0.0
  %v3816 = vmax.f32 %v3752, 0.0
  %v3817 = vmax.f32 %v3753, 0.0
  %v3818 = vmax.f32 %v3754, 0.0
  %v3819 = vmax.f32 %v3755, 0.0
  %v3820 = vmax.f32 %v3756, 0.0
  %v3821 = vmax.f32 %v3757, 0.0
  %v3822 = vmax.f32 %v3758, 0.0
  %v3823 = vmax.f32 %v3759, 0.0
  %v3824 = vmax.f32 %v3760, 0.0
  %v3825 = vmax.f32 %v3761, 0.0
  %v3826 = vmax.f32 %v3762, 0.0
  %v3827 = vmax.f32 %v3763, 0.0
  %v3828 = vmax.f32 %v3764, 0.0
  %v3829 = vmax.f32 %v3765, 0.0
  %v3830 = vmax.f32 %v3766, 0.0
  %v3831 = vmax.f32 %v3767, 0.0
  %v3832 = vmax.f32 %v3768, 0.0
  %v3833 = vmax.f32 %v3769, 0.0
  %v3834 = vmax.f32 %v3770, 0.0
  %v3835 = vmax.f32 %v3771, 0.0
  %v3836 = vmax.f32 %v3772, 0.0
  %v3837 = vmax.f32 %v3773, 0.0
  %v3838 = vmax.f32 %v3774, 0.0
  %v3839 = vmax.f32 %v3775, 0.0
  %v3840 = vmax.f32 %v3776, 0.0
  %v3841 = vmax.f32 %v3777, 0.0
  %v3842 = vmax.f32 %v3778, 0.0
  %v3843 = vmax.f32 %v3779, 0.0
  %v3844 = vmax.f32 %v3780, 0.0
  %v3845 = vmax.f32 %v3781, 0.0
  %v3846 = vmax.f32 %v3782, 0.0
  %v3847 = vmax.f32 %v3783, 0.0
  %v3848 = vmax.f32 %v3784, 0.0
  %v3849 = vmax.f32 %v3785, 0.0
  %v3850 = vmax.f32 %v3786, 0.0
  %v3851 = vmax.f32 %v3787, 0.0
  %v3852 = vmax.f32 %v3788, 0.0
  %v3853 = vmax.f32 %v3789, 0.0
  %v3854 = vmax.f32 %v3790, 0.0
  %v3855 = vmax.f32 %v3791, 0.0
  %v3856 = vmax.f32 %v3792, 0.0
  %v3857 = vmax.f32 %v3793, 0.0
  %v3858 = vmax.f32 %v3794, 0.0
  %v3859 = vmax.f32 %v3795, 0.0
  %v3860 = vmax.f32 %v3796, 0.0
  %v3861 = vmax.f32 %v3797, 0.0
  %v3862 = vmax.f32 %v3798, 0.0
  %v3863 = vmax.f32 %v3799, 0.0
  %v3864 = vmax.f32 %v3800, 0.0
  %v3865 = vmax.f32 %v3801, 0.0
  %v3866 = vmax.f32 %v3802, 0.0
  %v3867 = vmax.f32 %v3803, 0.0
  %v3868 = vmax.f32 %v3804, 0.0
  %v3869 = vmax.f32 %v3805, 0.0
  %v3870 = vmax.f32 %v3806, 0.0
  %v3871 = vmax.f32 %v3807, 0.0
  %v3872 = vmax.f32 %v3808, 0.0
  %v3873 = vmax.f32 %v3809, 0.0
  %v3874 = vmax.f32 %v3810, 0.0
  %v3875 = vmax.f32 %v3811, 0.0
  %v3876 = vmax.f32 %v3812, 0.0
  %v3877 = vmax.f32 %v3813, 0.0
  %v3878 = vmul.f32 %v3814, %v580
  %v3879 = vmul.f32 %v3815, %v580
  %v3880 = vmul.f32 %v3816, %v581
  %v3881 = vmul.f32 %v3817, %v581
  %v3882 = vmul.f32 %v3818, %v582
  %v3883 = vmul.f32 %v3819, %v582
  %v3884 = vmul.f32 %v3820, %v583
  %v3885 = vmul.f32 %v3821, %v583
  %v3886 = vmul.f32 %v3822, %v584
  %v3887 = vmul.f32 %v3823, %v584
  %v3888 = vmul.f32 %v3824, %v585
  %v3889 = vmul.f32 %v3825, %v585
  %v3890 = vmul.f32 %v3826, %v586
  %v3891 = vmul.f32 %v3827, %v586
  %v3892 = vmul.f32 %v3828, %v587
  %v3893 = vmul.f32 %v3829, %v587
  %v3894 = vmul.f32 %v3830, %v588
  %v3895 = vmul.f32 %v3831, %v588
  %v3896 = vmul.f32 %v3832, %v589
  %v3897 = vmul.f32 %v3833, %v589
  %v3898 = vmul.f32 %v3834, %v590
  %v3899 = vmul.f32 %v3835, %v590
  %v3900 = vmul.f32 %v3836, %v591
  %v3901 = vmul.f32 %v3837, %v591
  %v3902 = vmul.f32 %v3838, %v592
  %v3903 = vmul.f32 %v3839, %v592
  %v3904 = vmul.f32 %v3840, %v593
  %v3905 = vmul.f32 %v3841, %v593
  %v3906 = vmul.f32 %v3842, %v594
  %v3907 = vmul.f32 %v3843, %v594
  %v3908 = vmul.f32 %v3844, %v595
  %v3909 = vmul.f32 %v3845, %v595
  %v3910 = vmul.f32 %v3846, %v596
  %v3911 = vmul.f32 %v3847, %v596
  %v3912 = vmul.f32 %v3848, %v597
  %v3913 = vmul.f32 %v3849, %v597
  %v3914 = vmul.f32 %v3850, %v598
  %v3915 = vmul.f32 %v3851, %v598
  %v3916 = vmul.f32 %v3852, %v599
  %v3917 = vmul.f32 %v3853, %v599
  %v3918 = vmul.f32 %v3854, %v600
  %v3919 = vmul.f32 %v3855, %v600
  %v3920 = vmul.f32 %v3856, %v601
  %v3921 = vmul.f32 %v3857, %v601
  %v3922 = vmul.f32 %v3858, %v602
  %v3923 = vmul.f32 %v3859, %v602
  %v3924 = vmul.f32 %v3860, %v603
  %v3925 = vmul.f32 %v3861, %v603
  %v3926 = vmul.f32 %v3862, %v604
  %v3927 = vmul.f32 %v3863, %v604
  %v3928 = vmul.f32 %v3864, %v605
  %v3929 = vmul.f32 %v3865, %v605
  %v3930 = vmul.f32 %v3866, %v606
  %v3931 = vmul.f32 %v3867, %v606
  %v3932 = vmul.f32 %v3868, %v607
  %v3933 = vmul.f32 %v3869, %v607
  %v3934 = vmul.f32 %v3870, %v608
  %v3935 = vmul.f32 %v3871, %v608
  %v3936 = vmul.f32 %v3872, %v609
  %v3937 = vmul.f32 %v3873, %v609
  %v3938 = vmul.f32 %v3874, %v610
  %v3939 = vmul.f32 %v3875, %v610
  %v3940 = vmul.f32 %v3876, %v611
  %v3941 = vmul.f32 %v3877, %v611
  %v3942 = vpack.c.bf16 %v3880, %v3878
  %v3943 = vpack.c.bf16 %v3881, %v3879
  %v3944 = vpack.c.bf16 %v3884, %v3882
  %v3945 = vpack.c.bf16 %v3885, %v3883
  %v3946 = vpack.c.bf16 %v3888, %v3886
  %v3947 = vpack.c.bf16 %v3889, %v3887
  %v3948 = vpack.c.bf16 %v3892, %v3890
  %v3949 = vpack.c.bf16 %v3893, %v3891
  %v3950 = vpack.c.bf16 %v3896, %v3894
  %v3951 = vpack.c.bf16 %v3897, %v3895
  %v3952 = vpack.c.bf16 %v3900, %v3898
  %v3953 = vpack.c.bf16 %v3901, %v3899
  %v3954 = vpack.c.bf16 %v3904, %v3902
  %v3955 = vpack.c.bf16 %v3905, %v3903
  %v3956 = vpack.c.bf16 %v3908, %v3906
  %v3957 = vpack.c.bf16 %v3909, %v3907
  %v3958 = vpack.c.bf16 %v3912, %v3910
  %v3959 = vpack.c.bf16 %v3913, %v3911
  %v3960 = vpack.c.bf16 %v3916, %v3914
  %v3961 = vpack.c.bf16 %v3917, %v3915
  %v3962 = vpack.c.bf16 %v3920, %v3918
  %v3963 = vpack.c.bf16 %v3921, %v3919
  %v3964 = vpack.c.bf16 %v3924, %v3922
  %v3965 = vpack.c.bf16 %v3925, %v3923
  %v3966 = vpack.c.bf16 %v3928, %v3926
  %v3967 = vpack.c.bf16 %v3929, %v3927
  %v3968 = vpack.c.bf16 %v3932, %v3930
  %v3969 = vpack.c.bf16 %v3933, %v3931
  %v3970 = vpack.c.bf16 %v3936, %v3934
  %v3971 = vpack.c.bf16 %v3937, %v3935
  %v3972 = vpack.c.bf16 %v3940, %v3938
  %v3973 = vpack.c.bf16 %v3941, %v3939
  %s3974 = smul.u32 4, 4
  %s3975 = smul.u32 %s3974, 24
  %s3976 = smul.u32 %s3975, 1
  %s3977 = sshll.u32 %s3976, 4
  %3978 = dma.done [#allocation4], %s3977
  %s3979 = smul.u32 4, 24
  %s3980 = smul.u32 %s3979, 1
  %s3981 = sshll.u32 %s3980, 4
  %3982 = dma.done %s162, %s3981
  %v3983 = vld [vmem:[#allocation2] sm:$0xff]
  %v3984 = vld [vmem:[#allocation2 + $0x8] sm:$0xff]
  %v3985 = vld [vmem:[#allocation2 + $0x10] sm:$0xff]
  %v3986 = vld [vmem:[#allocation2 + $0x18] sm:$0xff]
  %v3987 = vld [vmem:[#allocation2 + $0x20] sm:$0xff]
  %v3988 = vld [vmem:[#allocation2 + $0x28] sm:$0xff]
  %v3989 = vld [vmem:[#allocation2 + $0x30] sm:$0xff]
  %v3990 = vld [vmem:[#allocation2 + $0x38] sm:$0xff]
  %v3991 = vld [vmem:[#allocation2 + $0x40] sm:$0xff]
  %v3992 = vld [vmem:[#allocation2 + $0x48] sm:$0xff]
  %v3993 = vld [vmem:[#allocation2 + $0x50] sm:$0xff]
  %v3994 = vld [vmem:[#allocation2 + $0x58] sm:$0xff]
  %v3996 = vsel %vm920, %v3943, 0
  %v3999 = vsel %vm920, %v3945, 0
  %v4002 = vsel %vm920, %v3947, 0
  %v4005 = vsel %vm920, %v3949, 0
  %v4008 = vsel %vm920, %v3951, 0
  %v4011 = vsel %vm920, %v3953, 0
  %v4014 = vsel %vm920, %v3955, 0
  %v4017 = vsel %vm920, %v3957, 0
  %v4020 = vsel %vm920, %v3959, 0
  %v4023 = vsel %vm920, %v3961, 0
  %v4026 = vsel %vm920, %v3963, 0
  %v4029 = vsel %vm920, %v3965, 0
  %v4032 = vsel %vm920, %v3967, 0
  %v4035 = vsel %vm920, %v3969, 0
  %v4038 = vsel %vm920, %v3971, 0
  %v4041 = vsel %vm920, %v3973, 0
  %4043 = vmatprep.subr.bf16.mxu0 0
  %4044 = vmatpush1.bf16.msra.mxu0 %v3983
  %4045 = vmatprep.subr.bf16.mxu0 0
  %4046 = vmatpush1.bf16.msra.mxu0 %v3984
  %4047 = vmatprep.subr.bf16.mxu0 0
  %4048 = vmatpush1.bf16.msra.mxu0 %v3985
  %4049 = vmatprep.subr.bf16.mxu0 0
  %4050 = vmatpush1.bf16.msra.mxu0 %v3986
  %4051 = vmatprep.subr.bf16.mxu0 0
  %4052 = vmatpush1.bf16.msra.mxu0 %v3987
  %4053 = vmatprep.subr.bf16.mxu0 0
  %4054 = vmatpush1.bf16.msra.mxu0 %v3988
  %4055 = vmatprep.subr.bf16.mxu0 0
  %4056 = vmatpush1.bf16.msra.mxu0 %v3989
  %4057 = vmatprep.subr.bf16.mxu0 0
  %4058 = vmatpush1.bf16.msra.mxu0 %v3990
  %4059 = vmatprep.subr.bf16.mxu0 0
  %4060 = vmatpush1.bf16.msra.mxu0 %v3991
  %4061 = vmatprep.subr.bf16.mxu0 0
  %4062 = vmatpush1.bf16.msra.mxu0 %v3992
  %4063 = vmatprep.subr.bf16.mxu0 0
  %4064 = vmatpush1.bf16.msra.mxu0 %v3993
  %4065 = vmatprep.subr.bf16.mxu0 0
  %4066 = vmatpush1.bf16.msra.mxu0 %v3994
  %4067 = vmatprep.subr.bf16.mxu0 0
  %4068 = vmatpush1.bf16.msra.mxu0 0
  %4069 = vmatprep.subr.bf16.mxu0 0
  %4070 = vmatpush1.bf16.msra.mxu0 0
  %4071 = vmatprep.subr.bf16.mxu0 0
  %4072 = vmatpush1.bf16.msra.mxu0 0
  %4073 = vmatprep.subr.bf16.mxu0 0
  %4074 = vmatpush1.bf16.msra.mxu0 0
  %4075 = vmatprep.mubr.bf16.mxu0 %v3996
  %4076 = vmatmul.mubr.bf16.gmra.mrb[0].mxu0 %v3942
  %v4077 = vpop.f32.mrb[0].mxu0
  %v4078 = vadd.f32 0.0, %v4077
  %v4079 = vpop.f32.mrb[0].mxu0
  %v4080 = vpop.f32.mrb[0].mxu0
  %v4081 = vadd.f32 0.0, %v4080
  %v4082 = vpop.f32.mrb[0].mxu0
  %4083 = vmatprep.mubr.bf16.mxu0 %v3999
  %4084 = vmatmul.mubr.bf16.gmra.mrb[0].mxu0 %v3944
  %v4085 = vpop.f32.mrb[0].mxu0
  %v4086 = vadd.f32 0.0, %v4085
  %v4087 = vpop.f32.mrb[0].mxu0
  %v4088 = vpop.f32.mrb[0].mxu0
  %v4089 = vadd.f32 0.0, %v4088
  %v4090 = vpop.f32.mrb[0].mxu0
  %4091 = vmatprep.mubr.bf16.mxu0 %v4002
  %4092 = vmatmul.mubr.bf16.gmra.mrb[0].mxu0 %v3946
  %v4093 = vpop.f32.mrb[0].mxu0
  %v4094 = vadd.f32 0.0, %v4093
  %v4095 = vpop.f32.mrb[0].mxu0
  %v4096 = vpop.f32.mrb[0].mxu0
  %v4097 = vadd.f32 0.0, %v4096
  %v4098 = vpop.f32.mrb[0].mxu0
  %4099 = vmatprep.mubr.bf16.mxu0 %v4005
  %4100 = vmatmul.mubr.bf16.gmra.mrb[0].mxu0 %v3948
  %v4101 = vpop.f32.mrb[0].mxu0
  %v4102 = vadd.f32 0.0, %v4101
  %v4103 = vpop.f32.mrb[0].mxu0
  %v4104 = vpop.f32.mrb[0].mxu0
  %v4105 = vadd.f32 0.0, %v4104
  %v4106 = vpop.f32.mrb[0].mxu0
  %4107 = vmatprep.mubr.bf16.mxu0 %v4008
  %4108 = vmatmul.mubr.bf16.gmra.mrb[0].mxu0 %v3950
  %v4109 = vpop.f32.mrb[0].mxu0
  %v4110 = vadd.f32 0.0, %v4109
  %v4111 = vpop.f32.mrb[0].mxu0
  %v4112 = vpop.f32.mrb[0].mxu0
  %v4113 = vadd.f32 0.0, %v4112
  %v4114 = vpop.f32.mrb[0].mxu0
  %4115 = vmatprep.mubr.bf16.mxu0 %v4011
  %4116 = vmatmul.mubr.bf16.gmra.mrb[0].mxu0 %v3952
  %v4117 = vpop.f32.mrb[0].mxu0
  %v4118 = vadd.f32 0.0, %v4117
  %v4119 = vpop.f32.mrb[0].mxu0
  %v4120 = vpop.f32.mrb[0].mxu0
  %v4121 = vadd.f32 0.0, %v4120
  %v4122 = vpop.f32.mrb[0].mxu0
  %4123 = vmatprep.mubr.bf16.mxu0 %v4014
  %4124 = vmatmul.mubr.bf16.gmra.mrb[0].mxu0 %v3954
  %v4125 = vpop.f32.mrb[0].mxu0
  %v4126 = vadd.f32 0.0, %v4125
  %v4127 = vpop.f32.mrb[0].mxu0
  %v4128 = vpop.f32.mrb[0].mxu0
  %v4129 = vadd.f32 0.0, %v4128
  %v4130 = vpop.f32.mrb[0].mxu0
  %4131 = vmatprep.mubr.bf16.mxu0 %v4017
  %4132 = vmatmul.mubr.bf16.gmra.mrb[0].mxu0 %v3956
  %v4133 = vpop.f32.mrb[0].mxu0
  %v4134 = vadd.f32 0.0, %v4133
  %v4135 = vpop.f32.mrb[0].mxu0
  %v4136 = vpop.f32.mrb[0].mxu0
  %v4137 = vadd.f32 0.0, %v4136
  %v4138 = vpop.f32.mrb[0].mxu0
  %4139 = vmatprep.mubr.bf16.mxu0 %v4020
  %4140 = vmatmul.mubr.bf16.gmra.mrb[0].mxu0 %v3958
  %v4141 = vpop.f32.mrb[0].mxu0
  %v4142 = vadd.f32 0.0, %v4141
  %v4143 = vpop.f32.mrb[0].mxu0
  %v4144 = vpop.f32.mrb[0].mxu0
  %v4145 = vadd.f32 0.0, %v4144
  %v4146 = vpop.f32.mrb[0].mxu0
  %4147 = vmatprep.mubr.bf16.mxu0 %v4023
  %4148 = vmatmul.mubr.bf16.gmra.mrb[0].mxu0 %v3960
  %v4149 = vpop.f32.mrb[0].mxu0
  %v4150 = vadd.f32 0.0, %v4149
  %v4151 = vpop.f32.mrb[0].mxu0
  %v4152 = vpop.f32.mrb[0].mxu0
  %v4153 = vadd.f32 0.0, %v4152
  %v4154 = vpop.f32.mrb[0].mxu0
  %4155 = vmatprep.mubr.bf16.mxu0 %v4026
  %4156 = vmatmul.mubr.bf16.gmra.mrb[0].mxu0 %v3962
  %v4157 = vpop.f32.mrb[0].mxu0
  %v4158 = vadd.f32 0.0, %v4157
  %v4159 = vpop.f32.mrb[0].mxu0
  %v4160 = vpop.f32.mrb[0].mxu0
  %v4161 = vadd.f32 0.0, %v4160
  %v4162 = vpop.f32.mrb[0].mxu0
  %4163 = vmatprep.mubr.bf16.mxu0 %v4029
  %4164 = vmatmul.mubr.bf16.gmra.mrb[0].mxu0 %v3964
  %v4165 = vpop.f32.mrb[0].mxu0
  %v4166 = vadd.f32 0.0, %v4165
  %v4167 = vpop.f32.mrb[0].mxu0
  %v4168 = vpop.f32.mrb[0].mxu0
  %v4169 = vadd.f32 0.0, %v4168
  %v4170 = vpop.f32.mrb[0].mxu0
  %4171 = vmatprep.mubr.bf16.mxu0 %v4032
  %4172 = vmatmul.mubr.bf16.gmra.mrb[0].mxu0 %v3966
  %v4173 = vpop.f32.mrb[0].mxu0
  %v4174 = vadd.f32 0.0, %v4173
  %v4175 = vpop.f32.mrb[0].mxu0
  %v4176 = vpop.f32.mrb[0].mxu0
  %v4177 = vadd.f32 0.0, %v4176
  %v4178 = vpop.f32.mrb[0].mxu0
  %4179 = vmatprep.mubr.bf16.mxu0 %v4035
  %4180 = vmatmul.mubr.bf16.gmra.mrb[0].mxu0 %v3968
  %v4181 = vpop.f32.mrb[0].mxu0
  %v4182 = vadd.f32 0.0, %v4181
  %v4183 = vpop.f32.mrb[0].mxu0
  %v4184 = vpop.f32.mrb[0].mxu0
  %v4185 = vadd.f32 0.0, %v4184
  %v4186 = vpop.f32.mrb[0].mxu0
  %4187 = vmatprep.mubr.bf16.mxu0 %v4038
  %4188 = vmatmul.mubr.bf16.gmra.mrb[0].mxu0 %v3970
  %v4189 = vpop.f32.mrb[0].mxu0
  %v4190 = vadd.f32 0.0, %v4189
  %v4191 = vpop.f32.mrb[0].mxu0
  %v4192 = vpop.f32.mrb[0].mxu0
  %v4193 = vadd.f32 0.0, %v4192
  %v4194 = vpop.f32.mrb[0].mxu0
  %4195 = vmatprep.mubr.bf16.mxu0 %v4041
  %4196 = vmatmul.mubr.bf16.gmra.mrb[0].mxu0 %v3972
  %v4197 = vpop.f32.mrb[0].mxu0
  %v4198 = vadd.f32 0.0, %v4197
  %v4199 = vpop.f32.mrb[0].mxu0
  %v4200 = vpop.f32.mrb[0].mxu0
  %v4201 = vadd.f32 0.0, %v4200
  %v4202 = vpop.f32.mrb[0].mxu0
  %4203 = vdwg.mxu0
  %4204 = vst.msk [vmem:[%s8] sm:$0xff] %vm920, %v4078
  %4205 = vst.msk [vmem:[%s8 + $0x8] sm:$0xff] %vm920, %v4081
  %4206 = vst.msk [vmem:[%s8 + $0x10] sm:$0xff] %vm920, %v4086
  %4207 = vst.msk [vmem:[%s8 + $0x18] sm:$0xff] %vm920, %v4089
  %4208 = vst.msk [vmem:[%s8 + $0x20] sm:$0xff] %vm920, %v4094
  %4209 = vst.msk [vmem:[%s8 + $0x28] sm:$0xff] %vm920, %v4097
  %4210 = vst.msk [vmem:[%s8 + $0x30] sm:$0xff] %vm920, %v4102
  %4211 = vst.msk [vmem:[%s8 + $0x38] sm:$0xff] %vm920, %v4105
  %4212 = vst.msk [vmem:[%s8 + $0x40] sm:$0xff] %vm920, %v4110
  %4213 = vst.msk [vmem:[%s8 + $0x48] sm:$0xff] %vm920, %v4113
  %4214 = vst.msk [vmem:[%s8 + $0x50] sm:$0xff] %vm920, %v4118
  %4215 = vst.msk [vmem:[%s8 + $0x58] sm:$0xff] %vm920, %v4121
  %4216 = vst.msk [vmem:[%s8 + $0x60] sm:$0xff] %vm920, %v4126
  %4217 = vst.msk [vmem:[%s8 + $0x68] sm:$0xff] %vm920, %v4129
  %4218 = vst.msk [vmem:[%s8 + $0x70] sm:$0xff] %vm920, %v4134
  %4219 = vst.msk [vmem:[%s8 + $0x78] sm:$0xff] %vm920, %v4137
  %4220 = vst.msk [vmem:[%s8 + $0x80] sm:$0xff] %vm920, %v4142
  %4221 = vst.msk [vmem:[%s8 + $0x88] sm:$0xff] %vm920, %v4145
  %4222 = vst.msk [vmem:[%s8 + $0x90] sm:$0xff] %vm920, %v4150
  %4223 = vst.msk [vmem:[%s8 + $0x98] sm:$0xff] %vm920, %v4153
  %4224 = vst.msk [vmem:[%s8 + $0xa0] sm:$0xff] %vm920, %v4158
  %4225 = vst.msk [vmem:[%s8 + $0xa8] sm:$0xff] %vm920, %v4161
  %4226 = vst.msk [vmem:[%s8 + $0xb0] sm:$0xff] %vm920, %v4166
  %4227 = vst.msk [vmem:[%s8 + $0xb8] sm:$0xff] %vm920, %v4169
  %4228 = vst.msk [vmem:[%s8 + $0xc0] sm:$0xff] %vm920, %v4174
  %4229 = vst.msk [vmem:[%s8 + $0xc8] sm:$0xff] %vm920, %v4177
  %4230 = vst.msk [vmem:[%s8 + $0xd0] sm:$0xff] %vm920, %v4182
  %4231 = vst.msk [vmem:[%s8 + $0xd8] sm:$0xff] %vm920, %v4185
  %4232 = vst.msk [vmem:[%s8 + $0xe0] sm:$0xff] %vm920, %v4190
  %4233 = vst.msk [vmem:[%s8 + $0xe8] sm:$0xff] %vm920, %v4193
  %4234 = vst.msk [vmem:[%s8 + $0xf0] sm:$0xff] %vm920, %v4198
  %4235 = vst.msk [vmem:[%s8 + $0xf8] sm:$0xff] %vm920, %v4201
  %v4236 = vld [vmem:[%s8 + $0x11] sm:$0xff]
  %v4237 = vld [vmem:[%s8 + $0x19] sm:$0xff]
  %v4238 = vld [vmem:[%s8 + $0x21] sm:$0xff]
  %v4239 = vld [vmem:[%s8 + $0x29] sm:$0xff]
  %v4240 = vld [vmem:[%s8 + $0x31] sm:$0xff]
  %v4241 = vld [vmem:[%s8 + $0x39] sm:$0xff]
  %v4242 = vld [vmem:[%s8 + $0x41] sm:$0xff]
  %v4243 = vld [vmem:[%s8 + $0x49] sm:$0xff]
  %v4244 = vld [vmem:[%s8 + $0x51] sm:$0xff]
  %v4245 = vld [vmem:[%s8 + $0x59] sm:$0xff]
  %v4246 = vld [vmem:[%s8 + $0x61] sm:$0xff]
  %v4247 = vld [vmem:[%s8 + $0x69] sm:$0xff]
  %v4248 = vld [vmem:[%s8 + $0x71] sm:$0xff]
  %v4249 = vld [vmem:[%s8 + $0x79] sm:$0xff]
  %v4250 = vld [vmem:[%s8 + $0x81] sm:$0xff]
  %v4251 = vld [vmem:[%s8 + $0x89] sm:$0xff]
  %v4252 = vld [vmem:[%s8 + $0x91] sm:$0xff]
  %v4253 = vld [vmem:[%s8 + $0x99] sm:$0xff]
  %v4254 = vld [vmem:[%s8 + $0xa1] sm:$0xff]
  %v4255 = vld [vmem:[%s8 + $0xa9] sm:$0xff]
  %v4256 = vld [vmem:[%s8 + $0xb1] sm:$0xff]
  %v4257 = vld [vmem:[%s8 + $0xb9] sm:$0xff]
  %v4258 = vld [vmem:[%s8 + $0xc1] sm:$0xff]
  %v4259 = vld [vmem:[%s8 + $0xc9] sm:$0xff]
  %v4260 = vld [vmem:[%s8 + $0xd1] sm:$0xff]
  %v4261 = vld [vmem:[%s8 + $0xd9] sm:$0xff]
  %v4262 = vld [vmem:[%s8 + $0xe1] sm:$0xff]
  %v4263 = vld [vmem:[%s8 + $0xe9] sm:$0xff]
  %v4264 = vld [vmem:[%s8 + $0xf1] sm:$0xff]
  %v4265 = vld [vmem:[%s8 + $0xf9] sm:$0x7f]
  %4296 = vrot.lane.b32.xlu0 %v4078, 64
  %v4297 = vpop.permute.xlu0 %4296
  %4298 = vrot.lane.b32.xlu0 %v4081, 64
  %v4299 = vpop.permute.xlu0 %4298
  %4300 = vrot.lane.b32.xlu0 %v4086, 64
  %v4301 = vpop.permute.xlu0 %4300
  %4302 = vrot.lane.b32.xlu0 %v4089, 64
  %v4303 = vpop.permute.xlu0 %4302
  %4304 = vrot.lane.b32.xlu0 %v4094, 64
  %v4305 = vpop.permute.xlu0 %4304
  %4306 = vrot.lane.b32.xlu0 %v4097, 64
  %v4307 = vpop.permute.xlu0 %4306
  %4308 = vrot.lane.b32.xlu0 %v4102, 64
  %v4309 = vpop.permute.xlu0 %4308
  %4310 = vrot.lane.b32.xlu0 %v4105, 64
  %v4311 = vpop.permute.xlu0 %4310
  %4312 = vrot.lane.b32.xlu0 %v4110, 64
  %v4313 = vpop.permute.xlu0 %4312
  %4314 = vrot.lane.b32.xlu0 %v4113, 64
  %v4315 = vpop.permute.xlu0 %4314
  %4316 = vrot.lane.b32.xlu0 %v4118, 64
  %v4317 = vpop.permute.xlu0 %4316
  %4318 = vrot.lane.b32.xlu0 %v4121, 64
  %v4319 = vpop.permute.xlu0 %4318
  %4320 = vrot.lane.b32.xlu0 %v4126, 64
  %v4321 = vpop.permute.xlu0 %4320
  %4322 = vrot.lane.b32.xlu0 %v4129, 64
  %v4323 = vpop.permute.xlu0 %4322
  %4324 = vrot.lane.b32.xlu0 %v4134, 64
  %v4325 = vpop.permute.xlu0 %4324
  %4326 = vrot.lane.b32.xlu0 %v4137, 64
  %v4327 = vpop.permute.xlu0 %4326
  %4328 = vrot.lane.b32.xlu0 %v4142, 64
  %v4329 = vpop.permute.xlu0 %4328
  %4330 = vrot.lane.b32.xlu0 %v4145, 64
  %v4331 = vpop.permute.xlu0 %4330
  %4332 = vrot.lane.b32.xlu0 %v4150, 64
  %v4333 = vpop.permute.xlu0 %4332
  %4334 = vrot.lane.b32.xlu0 %v4153, 64
  %v4335 = vpop.permute.xlu0 %4334
  %4336 = vrot.lane.b32.xlu0 %v4158, 64
  %v4337 = vpop.permute.xlu0 %4336
  %4338 = vrot.lane.b32.xlu0 %v4161, 64
  %v4339 = vpop.permute.xlu0 %4338
  %4340 = vrot.lane.b32.xlu0 %v4166, 64
  %v4341 = vpop.permute.xlu0 %4340
  %4342 = vrot.lane.b32.xlu0 %v4169, 64
  %v4343 = vpop.permute.xlu0 %4342
  %4344 = vrot.lane.b32.xlu0 %v4174, 64
  %v4345 = vpop.permute.xlu0 %4344
  %4346 = vrot.lane.b32.xlu0 %v4177, 64
  %v4347 = vpop.permute.xlu0 %4346
  %4348 = vrot.lane.b32.xlu0 %v4182, 64
  %v4349 = vpop.permute.xlu0 %4348
  %4350 = vrot.lane.b32.xlu0 %v4185, 64
  %v4351 = vpop.permute.xlu0 %4350
  %4352 = vrot.lane.b32.xlu0 %v4190, 64
  %v4353 = vpop.permute.xlu0 %4352
  %4354 = vrot.lane.b32.xlu0 %v4193, 64
  %v4355 = vpop.permute.xlu0 %4354
  %v4386 = vadd.f32 %v4236, %v4297
  %v4387 = vadd.f32 %v4237, %v4299
  %v4388 = vadd.f32 %v4238, %v4301
  %v4389 = vadd.f32 %v4239, %v4303
  %v4390 = vadd.f32 %v4240, %v4305
  %v4391 = vadd.f32 %v4241, %v4307
  %v4392 = vadd.f32 %v4242, %v4309
  %v4393 = vadd.f32 %v4243, %v4311
  %v4394 = vadd.f32 %v4244, %v4313
  %v4395 = vadd.f32 %v4245, %v4315
  %v4396 = vadd.f32 %v4246, %v4317
  %v4397 = vadd.f32 %v4247, %v4319
  %v4398 = vadd.f32 %v4248, %v4321
  %v4399 = vadd.f32 %v4249, %v4323
  %v4400 = vadd.f32 %v4250, %v4325
  %v4401 = vadd.f32 %v4251, %v4327
  %v4402 = vadd.f32 %v4252, %v4329
  %v4403 = vadd.f32 %v4253, %v4331
  %v4404 = vadd.f32 %v4254, %v4333
  %v4405 = vadd.f32 %v4255, %v4335
  %v4406 = vadd.f32 %v4256, %v4337
  %v4407 = vadd.f32 %v4257, %v4339
  %v4408 = vadd.f32 %v4258, %v4341
  %v4409 = vadd.f32 %v4259, %v4343
  %v4410 = vadd.f32 %v4260, %v4345
  %v4411 = vadd.f32 %v4261, %v4347
  %v4412 = vadd.f32 %v4262, %v4349
  %v4413 = vadd.f32 %v4263, %v4351
  %v4414 = vadd.f32 %v4264, %v4353
  %v4415 = vadd.f32 %v4265, %v4355
  %4416 = vst.msk [vmem:[%s8 + $0x11] sm:$0xff] %vm920, %v4386
  %4417 = vst.msk [vmem:[%s8 + $0x19] sm:$0xff] %vm920, %v4387
  %4418 = vst.msk [vmem:[%s8 + $0x21] sm:$0xff] %vm920, %v4388
  %4419 = vst.msk [vmem:[%s8 + $0x29] sm:$0xff] %vm920, %v4389
  %4420 = vst.msk [vmem:[%s8 + $0x31] sm:$0xff] %vm920, %v4390
  %4421 = vst.msk [vmem:[%s8 + $0x39] sm:$0xff] %vm920, %v4391
  %4422 = vst.msk [vmem:[%s8 + $0x41] sm:$0xff] %vm920, %v4392
  %4423 = vst.msk [vmem:[%s8 + $0x49] sm:$0xff] %vm920, %v4393
  %4424 = vst.msk [vmem:[%s8 + $0x51] sm:$0xff] %vm920, %v4394
  %4425 = vst.msk [vmem:[%s8 + $0x59] sm:$0xff] %vm920, %v4395
  %4426 = vst.msk [vmem:[%s8 + $0x61] sm:$0xff] %vm920, %v4396
  %4427 = vst.msk [vmem:[%s8 + $0x69] sm:$0xff] %vm920, %v4397
  %4428 = vst.msk [vmem:[%s8 + $0x71] sm:$0xff] %vm920, %v4398
  %4429 = vst.msk [vmem:[%s8 + $0x79] sm:$0xff] %vm920, %v4399
  %4430 = vst.msk [vmem:[%s8 + $0x81] sm:$0xff] %vm920, %v4400
  %4431 = vst.msk [vmem:[%s8 + $0x89] sm:$0xff] %vm920, %v4401
  %4432 = vst.msk [vmem:[%s8 + $0x91] sm:$0xff] %vm920, %v4402
  %4433 = vst.msk [vmem:[%s8 + $0x99] sm:$0xff] %vm920, %v4403
  %4434 = vst.msk [vmem:[%s8 + $0xa1] sm:$0xff] %vm920, %v4404
  %4435 = vst.msk [vmem:[%s8 + $0xa9] sm:$0xff] %vm920, %v4405
  %4436 = vst.msk [vmem:[%s8 + $0xb1] sm:$0xff] %vm920, %v4406
  %4437 = vst.msk [vmem:[%s8 + $0xb9] sm:$0xff] %vm920, %v4407
  %4438 = vst.msk [vmem:[%s8 + $0xc1] sm:$0xff] %vm920, %v4408
  %4439 = vst.msk [vmem:[%s8 + $0xc9] sm:$0xff] %vm920, %v4409
  %4440 = vst.msk [vmem:[%s8 + $0xd1] sm:$0xff] %vm920, %v4410
  %4441 = vst.msk [vmem:[%s8 + $0xd9] sm:$0xff] %vm920, %v4411
  %4442 = vst.msk [vmem:[%s8 + $0xe1] sm:$0xff] %vm920, %v4412
  %4443 = vst.msk [vmem:[%s8 + $0xe9] sm:$0xff] %vm920, %v4413
  %4444 = vst.msk [vmem:[%s8 + $0xf1] sm:$0xff] %vm920, %v4414
  %vm4445 = vcmask 522240
  %4446 = vst.msk [vmem:[%s8 + $0xf9] sm:$0x7f] %vm4445, %v4415
  %s4447 = scalar_lea.vmem [#allocation2], 96
  %v4448 = vld [vmem:[%s4447] sm:$0xff]
  %v4449 = vld [vmem:[%s4447 + $0x8] sm:$0xff]
  %v4450 = vld [vmem:[%s4447 + $0x10] sm:$0xff]
  %v4451 = vld [vmem:[%s4447 + $0x18] sm:$0xff]
  %v4452 = vld [vmem:[%s4447 + $0x20] sm:$0xff]
  %v4453 = vld [vmem:[%s4447 + $0x28] sm:$0xff]
  %v4454 = vld [vmem:[%s4447 + $0x30] sm:$0xff]
  %v4455 = vld [vmem:[%s4447 + $0x38] sm:$0xff]
  %v4456 = vld [vmem:[%s4447 + $0x40] sm:$0xff]
  %v4457 = vld [vmem:[%s4447 + $0x48] sm:$0xff]
  %v4458 = vld [vmem:[%s4447 + $0x50] sm:$0xff]
  %v4459 = vld [vmem:[%s4447 + $0x58] sm:$0xff]
  %4460 = vmatprep.subr.bf16.mxu0 0
  %4461 = vmatpush1.bf16.msra.mxu0 %v4448
  %4462 = vmatprep.subr.bf16.mxu0 0
  %4463 = vmatpush1.bf16.msra.mxu0 %v4449
  %4464 = vmatprep.subr.bf16.mxu0 0
  %4465 = vmatpush1.bf16.msra.mxu0 %v4450
  %4466 = vmatprep.subr.bf16.mxu0 0
  %4467 = vmatpush1.bf16.msra.mxu0 %v4451
  %4468 = vmatprep.subr.bf16.mxu0 0
  %4469 = vmatpush1.bf16.msra.mxu0 %v4452
  %4470 = vmatprep.subr.bf16.mxu0 0
  %4471 = vmatpush1.bf16.msra.mxu0 %v4453
  %4472 = vmatprep.subr.bf16.mxu0 0
  %4473 = vmatpush1.bf16.msra.mxu0 %v4454
  %4474 = vmatprep.subr.bf16.mxu0 0
  %4475 = vmatpush1.bf16.msra.mxu0 %v4455
  %4476 = vmatprep.subr.bf16.mxu0 0
  %4477 = vmatpush1.bf16.msra.mxu0 %v4456
  %4478 = vmatprep.subr.bf16.mxu0 0
  %4479 = vmatpush1.bf16.msra.mxu0 %v4457
  %4480 = vmatprep.subr.bf16.mxu0 0
  %4481 = vmatpush1.bf16.msra.mxu0 %v4458
  %4482 = vmatprep.subr.bf16.mxu0 0
  %4483 = vmatpush1.bf16.msra.mxu0 %v4459
  %4484 = vmatprep.subr.bf16.mxu0 0
  %4485 = vmatpush1.bf16.msra.mxu0 0
  %4486 = vmatprep.subr.bf16.mxu0 0
  %4487 = vmatpush1.bf16.msra.mxu0 0
  %4488 = vmatprep.subr.bf16.mxu0 0
  %4489 = vmatpush1.bf16.msra.mxu0 0
  %4490 = vmatprep.subr.bf16.mxu0 0
  %4491 = vmatpush1.bf16.msra.mxu0 0
  %4492 = vmatprep.mubr.bf16.mxu0 %v3996
  %4493 = vmatmul.mubr.bf16.gmra.mrb[0].mxu0 %v3942
  %v4494 = vpop.f32.mrb[0].mxu0
  %v4495 = vadd.f32 0.0, %v4494
  %v4496 = vpop.f32.mrb[0].mxu0
  %v4497 = vpop.f32.mrb[0].mxu0
  %v4498 = vadd.f32 0.0, %v4497
  %v4499 = vpop.f32.mrb[0].mxu0
  %4500 = vmatprep.mubr.bf16.mxu0 %v3999
  %4501 = vmatmul.mubr.bf16.gmra.mrb[0].mxu0 %v3944
  %v4502 = vpop.f32.mrb[0].mxu0
  %v4503 = vadd.f32 0.0, %v4502
  %v4504 = vpop.f32.mrb[0].mxu0
  %v4505 = vpop.f32.mrb[0].mxu0
  %v4506 = vadd.f32 0.0, %v4505
  %v4507 = vpop.f32.mrb[0].mxu0
  %4508 = vmatprep.mubr.bf16.mxu0 %v4002
  %4509 = vmatmul.mubr.bf16.gmra.mrb[0].mxu0 %v3946
  %v4510 = vpop.f32.mrb[0].mxu0
  %v4511 = vadd.f32 0.0, %v4510
  %v4512 = vpop.f32.mrb[0].mxu0
  %v4513 = vpop.f32.mrb[0].mxu0
  %v4514 = vadd.f32 0.0, %v4513
  %v4515 = vpop.f32.mrb[0].mxu0
  %4516 = vmatprep.mubr.bf16.mxu0 %v4005
  %4517 = vmatmul.mubr.bf16.gmra.mrb[0].mxu0 %v3948
  %v4518 = vpop.f32.mrb[0].mxu0
  %v4519 = vadd.f32 0.0, %v4518
  %v4520 = vpop.f32.mrb[0].mxu0
  %v4521 = vpop.f32.mrb[0].mxu0
  %v4522 = vadd.f32 0.0, %v4521
  %v4523 = vpop.f32.mrb[0].mxu0
  %4524 = vmatprep.mubr.bf16.mxu0 %v4008
  %4525 = vmatmul.mubr.bf16.gmra.mrb[0].mxu0 %v3950
  %v4526 = vpop.f32.mrb[0].mxu0
  %v4527 = vadd.f32 0.0, %v4526
  %v4528 = vpop.f32.mrb[0].mxu0
  %v4529 = vpop.f32.mrb[0].mxu0
  %v4530 = vadd.f32 0.0, %v4529
  %v4531 = vpop.f32.mrb[0].mxu0
  %4532 = vmatprep.mubr.bf16.mxu0 %v4011
  %4533 = vmatmul.mubr.bf16.gmra.mrb[0].mxu0 %v3952
  %v4534 = vpop.f32.mrb[0].mxu0
  %v4535 = vadd.f32 0.0, %v4534
  %v4536 = vpop.f32.mrb[0].mxu0
  %v4537 = vpop.f32.mrb[0].mxu0
  %v4538 = vadd.f32 0.0, %v4537
  %v4539 = vpop.f32.mrb[0].mxu0
  %4540 = vmatprep.mubr.bf16.mxu0 %v4014
  %4541 = vmatmul.mubr.bf16.gmra.mrb[0].mxu0 %v3954
  %v4542 = vpop.f32.mrb[0].mxu0
  %v4543 = vadd.f32 0.0, %v4542
  %v4544 = vpop.f32.mrb[0].mxu0
  %v4545 = vpop.f32.mrb[0].mxu0
  %v4546 = vadd.f32 0.0, %v4545
  %v4547 = vpop.f32.mrb[0].mxu0
  %4548 = vmatprep.mubr.bf16.mxu0 %v4017
  %4549 = vmatmul.mubr.bf16.gmra.mrb[0].mxu0 %v3956
  %v4550 = vpop.f32.mrb[0].mxu0
  %v4551 = vadd.f32 0.0, %v4550
  %v4552 = vpop.f32.mrb[0].mxu0
  %v4553 = vpop.f32.mrb[0].mxu0
  %v4554 = vadd.f32 0.0, %v4553
  %v4555 = vpop.f32.mrb[0].mxu0
  %4556 = vmatprep.mubr.bf16.mxu0 %v4020
  %4557 = vmatmul.mubr.bf16.gmra.mrb[0].mxu0 %v3958
  %v4558 = vpop.f32.mrb[0].mxu0
  %v4559 = vadd.f32 0.0, %v4558
  %v4560 = vpop.f32.mrb[0].mxu0
  %v4561 = vpop.f32.mrb[0].mxu0
  %v4562 = vadd.f32 0.0, %v4561
  %v4563 = vpop.f32.mrb[0].mxu0
  %4564 = vmatprep.mubr.bf16.mxu0 %v4023
  %4565 = vmatmul.mubr.bf16.gmra.mrb[0].mxu0 %v3960
  %v4566 = vpop.f32.mrb[0].mxu0
  %v4567 = vadd.f32 0.0, %v4566
  %v4568 = vpop.f32.mrb[0].mxu0
  %v4569 = vpop.f32.mrb[0].mxu0
  %v4570 = vadd.f32 0.0, %v4569
  %v4571 = vpop.f32.mrb[0].mxu0
  %4572 = vmatprep.mubr.bf16.mxu0 %v4026
  %4573 = vmatmul.mubr.bf16.gmra.mrb[0].mxu0 %v3962
  %v4574 = vpop.f32.mrb[0].mxu0
  %v4575 = vadd.f32 0.0, %v4574
  %v4576 = vpop.f32.mrb[0].mxu0
  %v4577 = vpop.f32.mrb[0].mxu0
  %v4578 = vadd.f32 0.0, %v4577
  %v4579 = vpop.f32.mrb[0].mxu0
  %4580 = vmatprep.mubr.bf16.mxu0 %v4029
  %4581 = vmatmul.mubr.bf16.gmra.mrb[0].mxu0 %v3964
  %v4582 = vpop.f32.mrb[0].mxu0
  %v4583 = vadd.f32 0.0, %v4582
  %v4584 = vpop.f32.mrb[0].mxu0
  %v4585 = vpop.f32.mrb[0].mxu0
  %v4586 = vadd.f32 0.0, %v4585
  %v4587 = vpop.f32.mrb[0].mxu0
  %4588 = vmatprep.mubr.bf16.mxu0 %v4032
  %4589 = vmatmul.mubr.bf16.gmra.mrb[0].mxu0 %v3966
  %v4590 = vpop.f32.mrb[0].mxu0
  %v4591 = vadd.f32 0.0, %v4590
  %v4592 = vpop.f32.mrb[0].mxu0
  %v4593 = vpop.f32.mrb[0].mxu0
  %v4594 = vadd.f32 0.0, %v4593
  %v4595 = vpop.f32.mrb[0].mxu0
  %4596 = vmatprep.mubr.bf16.mxu0 %v4035
  %4597 = vmatmul.mubr.bf16.gmra.mrb[0].mxu0 %v3968
  %v4598 = vpop.f32.mrb[0].mxu0
  %v4599 = vadd.f32 0.0, %v4598
  %v4600 = vpop.f32.mrb[0].mxu0
  %v4601 = vpop.f32.mrb[0].mxu0
  %v4602 = vadd.f32 0.0, %v4601
  %v4603 = vpop.f32.mrb[0].mxu0
  %4604 = vmatprep.mubr.bf16.mxu0 %v4038
  %4605 = vmatmul.mubr.bf16.gmra.mrb[0].mxu0 %v3970
  %v4606 = vpop.f32.mrb[0].mxu0
  %v4607 = vadd.f32 0.0, %v4606
  %v4608 = vpop.f32.mrb[0].mxu0
  %v4609 = vpop.f32.mrb[0].mxu0
  %v4610 = vadd.f32 0.0, %v4609
  %v4611 = vpop.f32.mrb[0].mxu0
  %4612 = vmatprep.mubr.bf16.mxu0 %v4041
  %4613 = vmatmul.mubr.bf16.gmra.mrb[0].mxu0 %v3972
  %v4614 = vpop.f32.mrb[0].mxu0
  %v4615 = vadd.f32 0.0, %v4614
  %v4616 = vpop.f32.mrb[0].mxu0
  %v4617 = vpop.f32.mrb[0].mxu0
  %v4618 = vpop.f32.mrb[0].mxu0
  %4619 = vdwg.mxu0
  %v4620 = vld [vmem:[%s8 + $0x10] sm:$0xff]
  %v4621 = vld [vmem:[%s8 + $0x18] sm:$0xff]
  %v4622 = vld [vmem:[%s8 + $0x20] sm:$0xff]
  %v4623 = vld [vmem:[%s8 + $0x28] sm:$0xff]
  %v4624 = vld [vmem:[%s8 + $0x30] sm:$0xff]
  %v4625 = vld [vmem:[%s8 + $0x38] sm:$0xff]
  %v4626 = vld [vmem:[%s8 + $0x40] sm:$0xff]
  %v4627 = vld [vmem:[%s8 + $0x48] sm:$0xff]
  %v4628 = vld [vmem:[%s8 + $0x50] sm:$0xff]
  %v4629 = vld [vmem:[%s8 + $0x58] sm:$0xff]
  %v4630 = vld [vmem:[%s8 + $0x60] sm:$0xff]
  %v4631 = vld [vmem:[%s8 + $0x68] sm:$0xff]
  %v4632 = vld [vmem:[%s8 + $0x70] sm:$0xff]
  %v4633 = vld [vmem:[%s8 + $0x78] sm:$0xff]
  %v4634 = vld [vmem:[%s8 + $0x80] sm:$0xff]
  %v4635 = vld [vmem:[%s8 + $0x88] sm:$0xff]
  %v4636 = vld [vmem:[%s8 + $0x90] sm:$0xff]
  %v4637 = vld [vmem:[%s8 + $0x98] sm:$0xff]
  %v4638 = vld [vmem:[%s8 + $0xa0] sm:$0xff]
  %v4639 = vld [vmem:[%s8 + $0xa8] sm:$0xff]
  %v4640 = vld [vmem:[%s8 + $0xb0] sm:$0xff]
  %v4641 = vld [vmem:[%s8 + $0xb8] sm:$0xff]
  %v4642 = vld [vmem:[%s8 + $0xc0] sm:$0xff]
  %v4643 = vld [vmem:[%s8 + $0xc8] sm:$0xff]
  %v4644 = vld [vmem:[%s8 + $0xd0] sm:$0xff]
  %v4645 = vld [vmem:[%s8 + $0xd8] sm:$0xff]
  %v4646 = vld [vmem:[%s8 + $0xe0] sm:$0xff]
  %v4647 = vld [vmem:[%s8 + $0xe8] sm:$0xff]
  %v4648 = vld [vmem:[%s8 + $0xf0] sm:$0xff]
  %v4649 = vld [vmem:[%s8 + $0xf8] sm:$0xff]
  %v4650 = vadd.f32 %v4620, %v4495
  %v4651 = vadd.f32 %v4621, %v4498
  %v4652 = vadd.f32 %v4622, %v4503
  %v4653 = vadd.f32 %v4623, %v4506
  %v4654 = vadd.f32 %v4624, %v4511
  %v4655 = vadd.f32 %v4625, %v4514
  %v4656 = vadd.f32 %v4626, %v4519
  %v4657 = vadd.f32 %v4627, %v4522
  %v4658 = vadd.f32 %v4628, %v4527
  %v4659 = vadd.f32 %v4629, %v4530
  %v4660 = vadd.f32 %v4630, %v4535
  %v4661 = vadd.f32 %v4631, %v4538
  %v4662 = vadd.f32 %v4632, %v4543
  %v4663 = vadd.f32 %v4633, %v4546
  %v4664 = vadd.f32 %v4634, %v4551
  %v4665 = vadd.f32 %v4635, %v4554
  %v4666 = vadd.f32 %v4636, %v4559
  %v4667 = vadd.f32 %v4637, %v4562
  %v4668 = vadd.f32 %v4638, %v4567
  %v4669 = vadd.f32 %v4639, %v4570
  %v4670 = vadd.f32 %v4640, %v4575
  %v4671 = vadd.f32 %v4641, %v4578
  %v4672 = vadd.f32 %v4642, %v4583
  %v4673 = vadd.f32 %v4643, %v4586
  %v4674 = vadd.f32 %v4644, %v4591
  %v4675 = vadd.f32 %v4645, %v4594
  %v4676 = vadd.f32 %v4646, %v4599
  %v4677 = vadd.f32 %v4647, %v4602
  %v4678 = vadd.f32 %v4648, %v4607
  %v4679 = vadd.f32 %v4649, %v4610
  %4680 = vst.msk [vmem:[%s8 + $0x10] sm:$0xff] %vm920, %v4650
  %4681 = vst.msk [vmem:[%s8 + $0x18] sm:$0xff] %vm920, %v4651
  %4682 = vst.msk [vmem:[%s8 + $0x20] sm:$0xff] %vm920, %v4652
  %4683 = vst.msk [vmem:[%s8 + $0x28] sm:$0xff] %vm920, %v4653
  %4684 = vst.msk [vmem:[%s8 + $0x30] sm:$0xff] %vm920, %v4654
  %4685 = vst.msk [vmem:[%s8 + $0x38] sm:$0xff] %vm920, %v4655
  %4686 = vst.msk [vmem:[%s8 + $0x40] sm:$0xff] %vm920, %v4656
  %4687 = vst.msk [vmem:[%s8 + $0x48] sm:$0xff] %vm920, %v4657
  %4688 = vst.msk [vmem:[%s8 + $0x50] sm:$0xff] %vm920, %v4658
  %4689 = vst.msk [vmem:[%s8 + $0x58] sm:$0xff] %vm920, %v4659
  %4690 = vst.msk [vmem:[%s8 + $0x60] sm:$0xff] %vm920, %v4660
  %4691 = vst.msk [vmem:[%s8 + $0x68] sm:$0xff] %vm920, %v4661
  %4692 = vst.msk [vmem:[%s8 + $0x70] sm:$0xff] %vm920, %v4662
  %4693 = vst.msk [vmem:[%s8 + $0x78] sm:$0xff] %vm920, %v4663
  %4694 = vst.msk [vmem:[%s8 + $0x80] sm:$0xff] %vm920, %v4664
  %4695 = vst.msk [vmem:[%s8 + $0x88] sm:$0xff] %vm920, %v4665
  %4696 = vst.msk [vmem:[%s8 + $0x90] sm:$0xff] %vm920, %v4666
  %4697 = vst.msk [vmem:[%s8 + $0x98] sm:$0xff] %vm920, %v4667
  %4698 = vst.msk [vmem:[%s8 + $0xa0] sm:$0xff] %vm920, %v4668
  %4699 = vst.msk [vmem:[%s8 + $0xa8] sm:$0xff] %vm920, %v4669
  %4700 = vst.msk [vmem:[%s8 + $0xb0] sm:$0xff] %vm920, %v4670
  %4701 = vst.msk [vmem:[%s8 + $0xb8] sm:$0xff] %vm920, %v4671
  %4702 = vst.msk [vmem:[%s8 + $0xc0] sm:$0xff] %vm920, %v4672
  %4703 = vst.msk [vmem:[%s8 + $0xc8] sm:$0xff] %vm920, %v4673
  %4704 = vst.msk [vmem:[%s8 + $0xd0] sm:$0xff] %vm920, %v4674
  %4705 = vst.msk [vmem:[%s8 + $0xd8] sm:$0xff] %vm920, %v4675
  %4706 = vst.msk [vmem:[%s8 + $0xe0] sm:$0xff] %vm920, %v4676
  %4707 = vst.msk [vmem:[%s8 + $0xe8] sm:$0xff] %vm920, %v4677
  %4708 = vst.msk [vmem:[%s8 + $0xf0] sm:$0xff] %vm920, %v4678
  %4709 = vst.msk [vmem:[%s8 + $0xf8] sm:$0xff] %vm920, %v4679
  %v4710 = vld [vmem:[%s8 + $0xf] sm:$0xff]
  %v4711 = vld [vmem:[%s8 + $0x17] sm:$0xff]
  %v4712 = vld [vmem:[%s8 + $0x1f] sm:$0xff]
  %v4713 = vld [vmem:[%s8 + $0x27] sm:$0xff]
  %v4714 = vld [vmem:[%s8 + $0x2f] sm:$0xff]
  %v4715 = vld [vmem:[%s8 + $0x37] sm:$0xff]
  %v4716 = vld [vmem:[%s8 + $0x3f] sm:$0xff]
  %v4717 = vld [vmem:[%s8 + $0x47] sm:$0xff]
  %v4718 = vld [vmem:[%s8 + $0x4f] sm:$0xff]
  %v4719 = vld [vmem:[%s8 + $0x57] sm:$0xff]
  %v4720 = vld [vmem:[%s8 + $0x5f] sm:$0xff]
  %v4721 = vld [vmem:[%s8 + $0x67] sm:$0xff]
  %v4722 = vld [vmem:[%s8 + $0x6f] sm:$0xff]
  %v4723 = vld [vmem:[%s8 + $0x77] sm:$0xff]
  %v4724 = vld [vmem:[%s8 + $0x7f] sm:$0xff]
  %v4725 = vld [vmem:[%s8 + $0x87] sm:$0xff]
  %v4726 = vld [vmem:[%s8 + $0x8f] sm:$0xff]
  %v4727 = vld [vmem:[%s8 + $0x97] sm:$0xff]
  %v4728 = vld [vmem:[%s8 + $0x9f] sm:$0xff]
  %v4729 = vld [vmem:[%s8 + $0xa7] sm:$0xff]
  %v4730 = vld [vmem:[%s8 + $0xaf] sm:$0xff]
  %v4731 = vld [vmem:[%s8 + $0xb7] sm:$0xff]
  %v4732 = vld [vmem:[%s8 + $0xbf] sm:$0xff]
  %v4733 = vld [vmem:[%s8 + $0xc7] sm:$0xff]
  %v4734 = vld [vmem:[%s8 + $0xcf] sm:$0xff]
  %v4735 = vld [vmem:[%s8 + $0xd7] sm:$0xff]
  %v4736 = vld [vmem:[%s8 + $0xdf] sm:$0xff]
  %v4737 = vld [vmem:[%s8 + $0xe7] sm:$0xff]
  %v4738 = vld [vmem:[%s8 + $0xef] sm:$0xff]
  %v4739 = vld [vmem:[%s8 + $0xf7] sm:$0xff]
  %v4740 = vld [vmem:[%s8 + $0xff] sm:$0x1]
  %4772 = vrot.lane.b32.xlu0 %v4495, 64
  %v4773 = vpop.permute.xlu0 %4772
  %4774 = vrot.lane.b32.xlu0 %v4498, 64
  %v4775 = vpop.permute.xlu0 %4774
  %4776 = vrot.lane.b32.xlu0 %v4503, 64
  %v4777 = vpop.permute.xlu0 %4776
  %4778 = vrot.lane.b32.xlu0 %v4506, 64
  %v4779 = vpop.permute.xlu0 %4778
  %4780 = vrot.lane.b32.xlu0 %v4511, 64
  %v4781 = vpop.permute.xlu0 %4780
  %4782 = vrot.lane.b32.xlu0 %v4514, 64
  %v4783 = vpop.permute.xlu0 %4782
  %4784 = vrot.lane.b32.xlu0 %v4519, 64
  %v4785 = vpop.permute.xlu0 %4784
  %4786 = vrot.lane.b32.xlu0 %v4522, 64
  %v4787 = vpop.permute.xlu0 %4786
  %4788 = vrot.lane.b32.xlu0 %v4527, 64
  %v4789 = vpop.permute.xlu0 %4788
  %4790 = vrot.lane.b32.xlu0 %v4530, 64
  %v4791 = vpop.permute.xlu0 %4790
  %4792 = vrot.lane.b32.xlu0 %v4535, 64
  %v4793 = vpop.permute.xlu0 %4792
  %4794 = vrot.lane.b32.xlu0 %v4538, 64
  %v4795 = vpop.permute.xlu0 %4794
  %4796 = vrot.lane.b32.xlu0 %v4543, 64
  %v4797 = vpop.permute.xlu0 %4796
  %4798 = vrot.lane.b32.xlu0 %v4546, 64
  %v4799 = vpop.permute.xlu0 %4798
  %4800 = vrot.lane.b32.xlu0 %v4551, 64
  %v4801 = vpop.permute.xlu0 %4800
  %4802 = vrot.lane.b32.xlu0 %v4554, 64
  %v4803 = vpop.permute.xlu0 %4802
  %4804 = vrot.lane.b32.xlu0 %v4559, 64
  %v4805 = vpop.permute.xlu0 %4804
  %4806 = vrot.lane.b32.xlu0 %v4562, 64
  %v4807 = vpop.permute.xlu0 %4806
  %4808 = vrot.lane.b32.xlu0 %v4567, 64
  %v4809 = vpop.permute.xlu0 %4808
  %4810 = vrot.lane.b32.xlu0 %v4570, 64
  %v4811 = vpop.permute.xlu0 %4810
  %4812 = vrot.lane.b32.xlu0 %v4575, 64
  %v4813 = vpop.permute.xlu0 %4812
  %4814 = vrot.lane.b32.xlu0 %v4578, 64
  %v4815 = vpop.permute.xlu0 %4814
  %4816 = vrot.lane.b32.xlu0 %v4583, 64
  %v4817 = vpop.permute.xlu0 %4816
  %4818 = vrot.lane.b32.xlu0 %v4586, 64
  %v4819 = vpop.permute.xlu0 %4818
  %4820 = vrot.lane.b32.xlu0 %v4591, 64
  %v4821 = vpop.permute.xlu0 %4820
  %4822 = vrot.lane.b32.xlu0 %v4594, 64
  %v4823 = vpop.permute.xlu0 %4822
  %4824 = vrot.lane.b32.xlu0 %v4599, 64
  %v4825 = vpop.permute.xlu0 %4824
  %4826 = vrot.lane.b32.xlu0 %v4602, 64
  %v4827 = vpop.permute.xlu0 %4826
  %4828 = vrot.lane.b32.xlu0 %v4607, 64
  %v4829 = vpop.permute.xlu0 %4828
  %4830 = vrot.lane.b32.xlu0 %v4610, 64
  %v4831 = vpop.permute.xlu0 %4830
  %4832 = vrot.lane.b32.xlu0 %v4615, 64
  %v4833 = vpop.permute.xlu0 %4832
  %v4865 = vadd.f32 %v4710, %v4773
  %v4866 = vadd.f32 %v4711, %v4775
  %v4867 = vadd.f32 %v4712, %v4777
  %v4868 = vadd.f32 %v4713, %v4779
  %v4869 = vadd.f32 %v4714, %v4781
  %v4870 = vadd.f32 %v4715, %v4783
  %v4871 = vadd.f32 %v4716, %v4785
  %v4872 = vadd.f32 %v4717, %v4787
  %v4873 = vadd.f32 %v4718, %v4789
  %v4874 = vadd.f32 %v4719, %v4791
  %v4875 = vadd.f32 %v4720, %v4793
  %v4876 = vadd.f32 %v4721, %v4795
  %v4877 = vadd.f32 %v4722, %v4797
  %v4878 = vadd.f32 %v4723, %v4799
  %v4879 = vadd.f32 %v4724, %v4801
  %v4880 = vadd.f32 %v4725, %v4803
  %v4881 = vadd.f32 %v4726, %v4805
  %v4882 = vadd.f32 %v4727, %v4807
  %v4883 = vadd.f32 %v4728, %v4809
  %v4884 = vadd.f32 %v4729, %v4811
  %v4885 = vadd.f32 %v4730, %v4813
  %v4886 = vadd.f32 %v4731, %v4815
  %v4887 = vadd.f32 %v4732, %v4817
  %v4888 = vadd.f32 %v4733, %v4819
  %v4889 = vadd.f32 %v4734, %v4821
  %v4890 = vadd.f32 %v4735, %v4823
  %v4891 = vadd.f32 %v4736, %v4825
  %v4892 = vadd.f32 %v4737, %v4827
  %v4893 = vadd.f32 %v4738, %v4829
  %v4894 = vadd.f32 %v4739, %v4831
  %v4895 = vadd.f32 %v4740, %v4833
  %4896 = vst.msk [vmem:[%s8 + $0xf] sm:$0xff] %vm920, %v4865
  %4897 = vst.msk [vmem:[%s8 + $0x17] sm:$0xff] %vm920, %v4866
  %4898 = vst.msk [vmem:[%s8 + $0x1f] sm:$0xff] %vm920, %v4867
  %4899 = vst.msk [vmem:[%s8 + $0x27] sm:$0xff] %vm920, %v4868
  %4900 = vst.msk [vmem:[%s8 + $0x2f] sm:$0xff] %vm920, %v4869
  %4901 = vst.msk [vmem:[%s8 + $0x37] sm:$0xff] %vm920, %v4870
  %4902 = vst.msk [vmem:[%s8 + $0x3f] sm:$0xff] %vm920, %v4871
  %4903 = vst.msk [vmem:[%s8 + $0x47] sm:$0xff] %vm920, %v4872
  %4904 = vst.msk [vmem:[%s8 + $0x4f] sm:$0xff] %vm920, %v4873
  %4905 = vst.msk [vmem:[%s8 + $0x57] sm:$0xff] %vm920, %v4874
  %4906 = vst.msk [vmem:[%s8 + $0x5f] sm:$0xff] %vm920, %v4875
  %4907 = vst.msk [vmem:[%s8 + $0x67] sm:$0xff] %vm920, %v4876
  %4908 = vst.msk [vmem:[%s8 + $0x6f] sm:$0xff] %vm920, %v4877
  %4909 = vst.msk [vmem:[%s8 + $0x77] sm:$0xff] %vm920, %v4878
  %4910 = vst.msk [vmem:[%s8 + $0x7f] sm:$0xff] %vm920, %v4879
  %4911 = vst.msk [vmem:[%s8 + $0x87] sm:$0xff] %vm920, %v4880
  %4912 = vst.msk [vmem:[%s8 + $0x8f] sm:$0xff] %vm920, %v4881
  %4913 = vst.msk [vmem:[%s8 + $0x97] sm:$0xff] %vm920, %v4882
  %4914 = vst.msk [vmem:[%s8 + $0x9f] sm:$0xff] %vm920, %v4883
  %4915 = vst.msk [vmem:[%s8 + $0xa7] sm:$0xff] %vm920, %v4884
  %4916 = vst.msk [vmem:[%s8 + $0xaf] sm:$0xff] %vm920, %v4885
  %4917 = vst.msk [vmem:[%s8 + $0xb7] sm:$0xff] %vm920, %v4886
  %4918 = vst.msk [vmem:[%s8 + $0xbf] sm:$0xff] %vm920, %v4887
  %4919 = vst.msk [vmem:[%s8 + $0xc7] sm:$0xff] %vm920, %v4888
  %4920 = vst.msk [vmem:[%s8 + $0xcf] sm:$0xff] %vm920, %v4889
  %4921 = vst.msk [vmem:[%s8 + $0xd7] sm:$0xff] %vm920, %v4890
  %4922 = vst.msk [vmem:[%s8 + $0xdf] sm:$0xff] %vm920, %v4891
  %4923 = vst.msk [vmem:[%s8 + $0xe7] sm:$0xff] %vm920, %v4892
  %4924 = vst.msk [vmem:[%s8 + $0xef] sm:$0xff] %vm920, %v4893
  %4925 = vst.msk [vmem:[%s8 + $0xf7] sm:$0xff] %vm920, %v4894
  %vm4926 = vcmask 516096
  %4927 = vst.msk [vmem:[%s8 + $0xff] sm:$0x1] %vm4926, %v4895
  %s4928 = scalar_lea.vmem [#allocation2], 192
  %v4929 = vld [vmem:[%s4928] sm:$0xff]
  %v4930 = vld [vmem:[%s4928 + $0x8] sm:$0xff]
  %v4931 = vld [vmem:[%s4928 + $0x10] sm:$0xff]
  %v4932 = vld [vmem:[%s4928 + $0x18] sm:$0xff]
  %v4933 = vld [vmem:[%s4928 + $0x20] sm:$0xff]
  %v4934 = vld [vmem:[%s4928 + $0x28] sm:$0xff]
  %v4935 = vld [vmem:[%s4928 + $0x30] sm:$0xff]
  %v4936 = vld [vmem:[%s4928 + $0x38] sm:$0xff]
  %v4937 = vld [vmem:[%s4928 + $0x40] sm:$0xff]
  %v4938 = vld [vmem:[%s4928 + $0x48] sm:$0xff]
  %v4939 = vld [vmem:[%s4928 + $0x50] sm:$0xff]
  %v4940 = vld [vmem:[%s4928 + $0x58] sm:$0xff]
  %4941 = vmatprep.subr.bf16.mxu0 0
  %4942 = vmatpush1.bf16.msra.mxu0 %v4929
  %4943 = vmatprep.subr.bf16.mxu0 0
  %4944 = vmatpush1.bf16.msra.mxu0 %v4930
  %4945 = vmatprep.subr.bf16.mxu0 0
  %4946 = vmatpush1.bf16.msra.mxu0 %v4931
  %4947 = vmatprep.subr.bf16.mxu0 0
  %4948 = vmatpush1.bf16.msra.mxu0 %v4932
  %4949 = vmatprep.subr.bf16.mxu0 0
  %4950 = vmatpush1.bf16.msra.mxu0 %v4933
  %4951 = vmatprep.subr.bf16.mxu0 0
  %4952 = vmatpush1.bf16.msra.mxu0 %v4934
  %4953 = vmatprep.subr.bf16.mxu0 0
  %4954 = vmatpush1.bf16.msra.mxu0 %v4935
  %4955 = vmatprep.subr.bf16.mxu0 0
  %4956 = vmatpush1.bf16.msra.mxu0 %v4936
  %4957 = vmatprep.subr.bf16.mxu0 0
  %4958 = vmatpush1.bf16.msra.mxu0 %v4937
  %4959 = vmatprep.subr.bf16.mxu0 0
  %4960 = vmatpush1.bf16.msra.mxu0 %v4938
  %4961 = vmatprep.subr.bf16.mxu0 0
  %4962 = vmatpush1.bf16.msra.mxu0 %v4939
  %4963 = vmatprep.subr.bf16.mxu0 0
  %4964 = vmatpush1.bf16.msra.mxu0 %v4940
  %4965 = vmatprep.subr.bf16.mxu0 0
  %4966 = vmatpush1.bf16.msra.mxu0 0
  %4967 = vmatprep.subr.bf16.mxu0 0
  %4968 = vmatpush1.bf16.msra.mxu0 0
  %4969 = vmatprep.subr.bf16.mxu0 0
  %4970 = vmatpush1.bf16.msra.mxu0 0
  %4971 = vmatprep.subr.bf16.mxu0 0
  %4972 = vmatpush1.bf16.msra.mxu0 0
  %4973 = vmatprep.mubr.bf16.mxu0 %v3996
  %4974 = vmatmul.mubr.bf16.gmra.mrb[0].mxu0 %v3942
  %v4975 = vpop.f32.mrb[0].mxu0
  %v4976 = vadd.f32 0.0, %v4975
  %v4977 = vpop.f32.mrb[0].mxu0
  %v4978 = vpop.f32.mrb[0].mxu0
  %v4979 = vadd.f32 0.0, %v4978
  %v4980 = vpop.f32.mrb[0].mxu0
  %4981 = vmatprep.mubr.bf16.mxu0 %v3999
  %4982 = vmatmul.mubr.bf16.gmra.mrb[0].mxu0 %v3944
  %v4983 = vpop.f32.mrb[0].mxu0
  %v4984 = vadd.f32 0.0, %v4983
  %v4985 = vpop.f32.mrb[0].mxu0
  %v4986 = vpop.f32.mrb[0].mxu0
  %v4987 = vadd.f32 0.0, %v4986
  %v4988 = vpop.f32.mrb[0].mxu0
  %4989 = vmatprep.mubr.bf16.mxu0 %v4002
  %4990 = vmatmul.mubr.bf16.gmra.mrb[0].mxu0 %v3946
  %v4991 = vpop.f32.mrb[0].mxu0
  %v4992 = vadd.f32 0.0, %v4991
  %v4993 = vpop.f32.mrb[0].mxu0
  %v4994 = vpop.f32.mrb[0].mxu0
  %v4995 = vadd.f32 0.0, %v4994
  %v4996 = vpop.f32.mrb[0].mxu0
  %4997 = vmatprep.mubr.bf16.mxu0 %v4005
  %4998 = vmatmul.mubr.bf16.gmra.mrb[0].mxu0 %v3948
  %v4999 = vpop.f32.mrb[0].mxu0
  %v5000 = vadd.f32 0.0, %v4999
  %v5001 = vpop.f32.mrb[0].mxu0
  %v5002 = vpop.f32.mrb[0].mxu0
  %v5003 = vadd.f32 0.0, %v5002
  %v5004 = vpop.f32.mrb[0].mxu0
  %5005 = vmatprep.mubr.bf16.mxu0 %v4008
  %5006 = vmatmul.mubr.bf16.gmra.mrb[0].mxu0 %v3950
  %v5007 = vpop.f32.mrb[0].mxu0
  %v5008 = vadd.f32 0.0, %v5007
  %v5009 = vpop.f32.mrb[0].mxu0
  %v5010 = vpop.f32.mrb[0].mxu0
  %v5011 = vadd.f32 0.0, %v5010
  %v5012 = vpop.f32.mrb[0].mxu0
  %5013 = vmatprep.mubr.bf16.mxu0 %v4011
  %5014 = vmatmul.mubr.bf16.gmra.mrb[0].mxu0 %v3952
  %v5015 = vpop.f32.mrb[0].mxu0
  %v5016 = vadd.f32 0.0, %v5015
  %v5017 = vpop.f32.mrb[0].mxu0
  %v5018 = vpop.f32.mrb[0].mxu0
  %v5019 = vadd.f32 0.0, %v5018
  %v5020 = vpop.f32.mrb[0].mxu0
  %5021 = vmatprep.mubr.bf16.mxu0 %v4014
  %5022 = vmatmul.mubr.bf16.gmra.mrb[0].mxu0 %v3954
  %v5023 = vpop.f32.mrb[0].mxu0
  %v5024 = vadd.f32 0.0, %v5023
  %v5025 = vpop.f32.mrb[0].mxu0
  %v5026 = vpop.f32.mrb[0].mxu0
  %v5027 = vadd.f32 0.0, %v5026
  %v5028 = vpop.f32.mrb[0].mxu0
  %5029 = vmatprep.mubr.bf16.mxu0 %v4017
  %5030 = vmatmul.mubr.bf16.gmra.mrb[0].mxu0 %v3956
  %v5031 = vpop.f32.mrb[0].mxu0
  %v5032 = vadd.f32 0.0, %v5031
  %v5033 = vpop.f32.mrb[0].mxu0
  %v5034 = vpop.f32.mrb[0].mxu0
  %v5035 = vadd.f32 0.0, %v5034
  %v5036 = vpop.f32.mrb[0].mxu0
  %5037 = vmatprep.mubr.bf16.mxu0 %v4020
  %5038 = vmatmul.mubr.bf16.gmra.mrb[0].mxu0 %v3958
  %v5039 = vpop.f32.mrb[0].mxu0
  %v5040 = vadd.f32 0.0, %v5039
  %v5041 = vpop.f32.mrb[0].mxu0
  %v5042 = vpop.f32.mrb[0].mxu0
  %v5043 = vadd.f32 0.0, %v5042
  %v5044 = vpop.f32.mrb[0].mxu0
  %5045 = vmatprep.mubr.bf16.mxu0 %v4023
  %5046 = vmatmul.mubr.bf16.gmra.mrb[0].mxu0 %v3960
  %v5047 = vpop.f32.mrb[0].mxu0
  %v5048 = vadd.f32 0.0, %v5047
  %v5049 = vpop.f32.mrb[0].mxu0
  %v5050 = vpop.f32.mrb[0].mxu0
  %v5051 = vadd.f32 0.0, %v5050
  %v5052 = vpop.f32.mrb[0].mxu0
  %5053 = vmatprep.mubr.bf16.mxu0 %v4026
  %5054 = vmatmul.mubr.bf16.gmra.mrb[0].mxu0 %v3962
  %v5055 = vpop.f32.mrb[0].mxu0
  %v5056 = vadd.f32 0.0, %v5055
  %v5057 = vpop.f32.mrb[0].mxu0
  %v5058 = vpop.f32.mrb[0].mxu0
  %v5059 = vadd.f32 0.0, %v5058
  %v5060 = vpop.f32.mrb[0].mxu0
  %5061 = vmatprep.mubr.bf16.mxu0 %v4029
  %5062 = vmatmul.mubr.bf16.gmra.mrb[0].mxu0 %v3964
  %v5063 = vpop.f32.mrb[0].mxu0
  %v5064 = vadd.f32 0.0, %v5063
  %v5065 = vpop.f32.mrb[0].mxu0
  %v5066 = vpop.f32.mrb[0].mxu0
  %v5067 = vadd.f32 0.0, %v5066
  %v5068 = vpop.f32.mrb[0].mxu0
  %5069 = vmatprep.mubr.bf16.mxu0 %v4032
  %5070 = vmatmul.mubr.bf16.gmra.mrb[0].mxu0 %v3966
  %v5071 = vpop.f32.mrb[0].mxu0
  %v5072 = vadd.f32 0.0, %v5071
  %v5073 = vpop.f32.mrb[0].mxu0
  %v5074 = vpop.f32.mrb[0].mxu0
  %v5075 = vadd.f32 0.0, %v5074
  %v5076 = vpop.f32.mrb[0].mxu0
  %5077 = vmatprep.mubr.bf16.mxu0 %v4035
  %5078 = vmatmul.mubr.bf16.gmra.mrb[0].mxu0 %v3968
  %v5079 = vpop.f32.mrb[0].mxu0
  %v5080 = vadd.f32 0.0, %v5079
  %v5081 = vpop.f32.mrb[0].mxu0
  %v5082 = vpop.f32.mrb[0].mxu0
  %v5083 = vadd.f32 0.0, %v5082
  %v5084 = vpop.f32.mrb[0].mxu0
  %5085 = vmatprep.mubr.bf16.mxu0 %v4038
  %5086 = vmatmul.mubr.bf16.gmra.mrb[0].mxu0 %v3970
  %v5087 = vpop.f32.mrb[0].mxu0
  %v5088 = vadd.f32 0.0, %v5087
  %v5089 = vpop.f32.mrb[0].mxu0
  %v5090 = vpop.f32.mrb[0].mxu0
  %v5091 = vadd.f32 0.0, %v5090
  %v5092 = vpop.f32.mrb[0].mxu0
  %5093 = vmatprep.mubr.bf16.mxu0 %v4041
  %5094 = vmatmul.mubr.bf16.gmra.mrb[0].mxu0 %v3972
  %v5095 = vpop.f32.mrb[0].mxu0
  %v5096 = vadd.f32 0.0, %v5095
  %v5097 = vpop.f32.mrb[0].mxu0
  %v5098 = vpop.f32.mrb[0].mxu0
  %v5099 = vadd.f32 0.0, %v5098
  %v5100 = vpop.f32.mrb[0].mxu0
  %5101 = vdwg.mxu0
  %v5102 = vld [vmem:[%s8 + $0x1] sm:$0xff]
  %v5103 = vld [vmem:[%s8 + $0x9] sm:$0xff]
  %v5104 = vld [vmem:[%s8 + $0x11] sm:$0xff]
  %v5105 = vld [vmem:[%s8 + $0x19] sm:$0xff]
  %v5106 = vld [vmem:[%s8 + $0x21] sm:$0xff]
  %v5107 = vld [vmem:[%s8 + $0x29] sm:$0xff]
  %v5108 = vld [vmem:[%s8 + $0x31] sm:$0xff]
  %v5109 = vld [vmem:[%s8 + $0x39] sm:$0xff]
  %v5110 = vld [vmem:[%s8 + $0x41] sm:$0xff]
  %v5111 = vld [vmem:[%s8 + $0x49] sm:$0xff]
  %v5112 = vld [vmem:[%s8 + $0x51] sm:$0xff]
  %v5113 = vld [vmem:[%s8 + $0x59] sm:$0xff]
  %v5114 = vld [vmem:[%s8 + $0x61] sm:$0xff]
  %v5115 = vld [vmem:[%s8 + $0x69] sm:$0xff]
  %v5116 = vld [vmem:[%s8 + $0x71] sm:$0xff]
  %v5117 = vld [vmem:[%s8 + $0x79] sm:$0xff]
  %v5118 = vld [vmem:[%s8 + $0x81] sm:$0xff]
  %v5119 = vld [vmem:[%s8 + $0x89] sm:$0xff]
  %v5120 = vld [vmem:[%s8 + $0x91] sm:$0xff]
  %v5121 = vld [vmem:[%s8 + $0x99] sm:$0xff]
  %v5122 = vld [vmem:[%s8 + $0xa1] sm:$0xff]
  %v5123 = vld [vmem:[%s8 + $0xa9] sm:$0xff]
  %v5124 = vld [vmem:[%s8 + $0xb1] sm:$0xff]
  %v5125 = vld [vmem:[%s8 + $0xb9] sm:$0xff]
  %v5126 = vld [vmem:[%s8 + $0xc1] sm:$0xff]
  %v5127 = vld [vmem:[%s8 + $0xc9] sm:$0xff]
  %v5128 = vld [vmem:[%s8 + $0xd1] sm:$0xff]
  %v5129 = vld [vmem:[%s8 + $0xd9] sm:$0xff]
  %v5130 = vld [vmem:[%s8 + $0xe1] sm:$0xff]
  %v5131 = vld [vmem:[%s8 + $0xe9] sm:$0xff]
  %v5132 = vld [vmem:[%s8 + $0xf1] sm:$0xff]
  %v5133 = vld [vmem:[%s8 + $0xf9] sm:$0x7f]
  %v5134 = vadd.f32 %v5102, %v4976
  %v5135 = vadd.f32 %v5103, %v4979
  %v5136 = vadd.f32 %v5104, %v4984
  %v5137 = vadd.f32 %v5105, %v4987
  %v5138 = vadd.f32 %v5106, %v4992
  %v5139 = vadd.f32 %v5107, %v4995
  %v5140 = vadd.f32 %v5108, %v5000
  %v5141 = vadd.f32 %v5109, %v5003
  %v5142 = vadd.f32 %v5110, %v5008
  %v5143 = vadd.f32 %v5111, %v5011
  %v5144 = vadd.f32 %v5112, %v5016
  %v5145 = vadd.f32 %v5113, %v5019
  %v5146 = vadd.f32 %v5114, %v5024
  %v5147 = vadd.f32 %v5115, %v5027
  %v5148 = vadd.f32 %v5116, %v5032
  %v5149 = vadd.f32 %v5117, %v5035
  %v5150 = vadd.f32 %v5118, %v5040
  %v5151 = vadd.f32 %v5119, %v5043
  %v5152 = vadd.f32 %v5120, %v5048
  %v5153 = vadd.f32 %v5121, %v5051
  %v5154 = vadd.f32 %v5122, %v5056
  %v5155 = vadd.f32 %v5123, %v5059
  %v5156 = vadd.f32 %v5124, %v5064
  %v5157 = vadd.f32 %v5125, %v5067
  %v5158 = vadd.f32 %v5126, %v5072
  %v5159 = vadd.f32 %v5127, %v5075
  %v5160 = vadd.f32 %v5128, %v5080
  %v5161 = vadd.f32 %v5129, %v5083
  %v5162 = vadd.f32 %v5130, %v5088
  %v5163 = vadd.f32 %v5131, %v5091
  %v5164 = vadd.f32 %v5132, %v5096
  %v5165 = vadd.f32 %v5133, %v5099
  %5166 = vst.msk [vmem:[%s8 + $0x1] sm:$0xff] %vm920, %v5134
  %5167 = vst.msk [vmem:[%s8 + $0x9] sm:$0xff] %vm920, %v5135
  %5168 = vst.msk [vmem:[%s8 + $0x11] sm:$0xff] %vm920, %v5136
  %5169 = vst.msk [vmem:[%s8 + $0x19] sm:$0xff] %vm920, %v5137
  %5170 = vst.msk [vmem:[%s8 + $0x21] sm:$0xff] %vm920, %v5138
  %5171 = vst.msk [vmem:[%s8 + $0x29] sm:$0xff] %vm920, %v5139
  %5172 = vst.msk [vmem:[%s8 + $0x31] sm:$0xff] %vm920, %v5140
  %5173 = vst.msk [vmem:[%s8 + $0x39] sm:$0xff] %vm920, %v5141
  %5174 = vst.msk [vmem:[%s8 + $0x41] sm:$0xff] %vm920, %v5142
  %5175 = vst.msk [vmem:[%s8 + $0x49] sm:$0xff] %vm920, %v5143
  %5176 = vst.msk [vmem:[%s8 + $0x51] sm:$0xff] %vm920, %v5144
  %5177 = vst.msk [vmem:[%s8 + $0x59] sm:$0xff] %vm920, %v5145
  %5178 = vst.msk [vmem:[%s8 + $0x61] sm:$0xff] %vm920, %v5146
  %5179 = vst.msk [vmem:[%s8 + $0x69] sm:$0xff] %vm920, %v5147
  %5180 = vst.msk [vmem:[%s8 + $0x71] sm:$0xff] %vm920, %v5148
  %5181 = vst.msk [vmem:[%s8 + $0x79] sm:$0xff] %vm920, %v5149
  %5182 = vst.msk [vmem:[%s8 + $0x81] sm:$0xff] %vm920, %v5150
  %5183 = vst.msk [vmem:[%s8 + $0x89] sm:$0xff] %vm920, %v5151
  %5184 = vst.msk [vmem:[%s8 + $0x91] sm:$0xff] %vm920, %v5152
  %5185 = vst.msk [vmem:[%s8 + $0x99] sm:$0xff] %vm920, %v5153
  %5186 = vst.msk [vmem:[%s8 + $0xa1] sm:$0xff] %vm920, %v5154
  %5187 = vst.msk [vmem:[%s8 + $0xa9] sm:$0xff] %vm920, %v5155
  %5188 = vst.msk [vmem:[%s8 + $0xb1] sm:$0xff] %vm920, %v5156
  %5189 = vst.msk [vmem:[%s8 + $0xb9] sm:$0xff] %vm920, %v5157
  %5190 = vst.msk [vmem:[%s8 + $0xc1] sm:$0xff] %vm920, %v5158
  %5191 = vst.msk [vmem:[%s8 + $0xc9] sm:$0xff] %vm920, %v5159
  %5192 = vst.msk [vmem:[%s8 + $0xd1] sm:$0xff] %vm920, %v5160
  %5193 = vst.msk [vmem:[%s8 + $0xd9] sm:$0xff] %vm920, %v5161
  %5194 = vst.msk [vmem:[%s8 + $0xe1] sm:$0xff] %vm920, %v5162
  %5195 = vst.msk [vmem:[%s8 + $0xe9] sm:$0xff] %vm920, %v5163
  %5196 = vst.msk [vmem:[%s8 + $0xf1] sm:$0xff] %vm920, %v5164
  %5197 = vst.msk [vmem:[%s8 + $0xf9] sm:$0x7f] %vm4445, %v5165
  %v5198 = vld [vmem:[%s8] sm:$0xff]
  %v5199 = vld [vmem:[%s8 + $0x8] sm:$0xff]
  %v5200 = vld [vmem:[%s8 + $0x10] sm:$0xff]
  %v5201 = vld [vmem:[%s8 + $0x18] sm:$0xff]
  %v5202 = vld [vmem:[%s8 + $0x20] sm:$0xff]
  %v5203 = vld [vmem:[%s8 + $0x28] sm:$0xff]
  %v5204 = vld [vmem:[%s8 + $0x30] sm:$0xff]
  %v5205 = vld [vmem:[%s8 + $0x38] sm:$0xff]
  %v5206 = vld [vmem:[%s8 + $0x40] sm:$0xff]
  %v5207 = vld [vmem:[%s8 + $0x48] sm:$0xff]
  %v5208 = vld [vmem:[%s8 + $0x50] sm:$0xff]
  %v5209 = vld [vmem:[%s8 + $0x58] sm:$0xff]
  %v5210 = vld [vmem:[%s8 + $0x60] sm:$0xff]
  %v5211 = vld [vmem:[%s8 + $0x68] sm:$0xff]
  %v5212 = vld [vmem:[%s8 + $0x70] sm:$0xff]
  %v5213 = vld [vmem:[%s8 + $0x78] sm:$0xff]
  %v5214 = vld [vmem:[%s8 + $0x80] sm:$0xff]
  %v5215 = vld [vmem:[%s8 + $0x88] sm:$0xff]
  %v5216 = vld [vmem:[%s8 + $0x90] sm:$0xff]
  %v5217 = vld [vmem:[%s8 + $0x98] sm:$0xff]
  %v5218 = vld [vmem:[%s8 + $0xa0] sm:$0xff]
  %v5219 = vld [vmem:[%s8 + $0xa8] sm:$0xff]
  %v5220 = vld [vmem:[%s8 + $0xb0] sm:$0xff]
  %v5221 = vld [vmem:[%s8 + $0xb8] sm:$0xff]
  %v5222 = vld [vmem:[%s8 + $0xc0] sm:$0xff]
  %v5223 = vld [vmem:[%s8 + $0xc8] sm:$0xff]
  %v5224 = vld [vmem:[%s8 + $0xd0] sm:$0xff]
  %v5225 = vld [vmem:[%s8 + $0xd8] sm:$0xff]
  %v5226 = vld [vmem:[%s8 + $0xe0] sm:$0xff]
  %v5227 = vld [vmem:[%s8 + $0xe8] sm:$0xff]
  %v5228 = vld [vmem:[%s8 + $0xf0] sm:$0xff]
  %v5229 = vld [vmem:[%s8 + $0xf8] sm:$0x7f]
  %vm5262 = vcmask 1046528
  %v5263 = vrot.slane %v4976, 1
  %v5264 = vrot.slane %v4979, 1
  %v5265 = vsel %vm5262, %v5263, %v5264
  %v5266 = vrot.slane %v4984, 1
  %v5267 = vsel %vm5262, %v5264, %v5266
  %v5268 = vrot.slane %v4987, 1
  %v5269 = vsel %vm5262, %v5266, %v5268
  %v5270 = vrot.slane %v4992, 1
  %v5271 = vsel %vm5262, %v5268, %v5270
  %v5272 = vrot.slane %v4995, 1
  %v5273 = vsel %vm5262, %v5270, %v5272
  %v5274 = vrot.slane %v5000, 1
  %v5275 = vsel %vm5262, %v5272, %v5274
  %v5276 = vrot.slane %v5003, 1
  %v5277 = vsel %vm5262, %v5274, %v5276
  %v5278 = vrot.slane %v5008, 1
  %v5279 = vsel %vm5262, %v5276, %v5278
  %v5280 = vrot.slane %v5011, 1
  %v5281 = vsel %vm5262, %v5278, %v5280
  %v5282 = vrot.slane %v5016, 1
  %v5283 = vsel %vm5262, %v5280, %v5282
  %v5284 = vrot.slane %v5019, 1
  %v5285 = vsel %vm5262, %v5282, %v5284
  %v5286 = vrot.slane %v5024, 1
  %v5287 = vsel %vm5262, %v5284, %v5286
  %v5288 = vrot.slane %v5027, 1
  %v5289 = vsel %vm5262, %v5286, %v5288
  %v5290 = vrot.slane %v5032, 1
  %v5291 = vsel %vm5262, %v5288, %v5290
  %v5292 = vrot.slane %v5035, 1
  %v5293 = vsel %vm5262, %v5290, %v5292
  %v5294 = vrot.slane %v5040, 1
  %v5295 = vsel %vm5262, %v5292, %v5294
  %v5296 = vrot.slane %v5043, 1
  %v5297 = vsel %vm5262, %v5294, %v5296
  %v5298 = vrot.slane %v5048, 1
  %v5299 = vsel %vm5262, %v5296, %v5298
  %v5300 = vrot.slane %v5051, 1
  %v5301 = vsel %vm5262, %v5298, %v5300
  %v5302 = vrot.slane %v5056, 1
  %v5303 = vsel %vm5262, %v5300, %v5302
  %v5304 = vrot.slane %v5059, 1
  %v5305 = vsel %vm5262, %v5302, %v5304
  %v5306 = vrot.slane %v5064, 1
  %v5307 = vsel %vm5262, %v5304, %v5306
  %v5308 = vrot.slane %v5067, 1
  %v5309 = vsel %vm5262, %v5306, %v5308
  %v5310 = vrot.slane %v5072, 1
  %v5311 = vsel %vm5262, %v5308, %v5310
  %v5312 = vrot.slane %v5075, 1
  %v5313 = vsel %vm5262, %v5310, %v5312
  %v5314 = vrot.slane %v5080, 1
  %v5315 = vsel %vm5262, %v5312, %v5314
  %v5316 = vrot.slane %v5083, 1
  %v5317 = vsel %vm5262, %v5314, %v5316
  %v5318 = vrot.slane %v5088, 1
  %v5319 = vsel %vm5262, %v5316, %v5318
  %v5320 = vrot.slane %v5091, 1
  %v5321 = vsel %vm5262, %v5318, %v5320
  %v5322 = vrot.slane %v5096, 1
  %v5323 = vsel %vm5262, %v5320, %v5322
  %v5324 = vrot.slane %v5099, 1
  %v5325 = vsel %vm5262, %v5322, %v5324
  %5326 = vrot.lane.b32.xlu0 %v5265, 64
  %v5327 = vpop.permute.xlu0 %5326
  %5328 = vrot.lane.b32.xlu0 %v5267, 64
  %v5329 = vpop.permute.xlu0 %5328
  %5330 = vrot.lane.b32.xlu0 %v5269, 64
  %v5331 = vpop.permute.xlu0 %5330
  %5332 = vrot.lane.b32.xlu0 %v5271, 64
  %v5333 = vpop.permute.xlu0 %5332
  %5334 = vrot.lane.b32.xlu0 %v5273, 64
  %v5335 = vpop.permute.xlu0 %5334
  %5336 = vrot.lane.b32.xlu0 %v5275, 64
  %v5337 = vpop.permute.xlu0 %5336
  %5338 = vrot.lane.b32.xlu0 %v5277, 64
  %v5339 = vpop.permute.xlu0 %5338
  %5340 = vrot.lane.b32.xlu0 %v5279, 64
  %v5341 = vpop.permute.xlu0 %5340
  %5342 = vrot.lane.b32.xlu0 %v5281, 64
  %v5343 = vpop.permute.xlu0 %5342
  %5344 = vrot.lane.b32.xlu0 %v5283, 64
  %v5345 = vpop.permute.xlu0 %5344
  %5346 = vrot.lane.b32.xlu0 %v5285, 64
  %v5347 = vpop.permute.xlu0 %5346
  %5348 = vrot.lane.b32.xlu0 %v5287, 64
  %v5349 = vpop.permute.xlu0 %5348
  %5350 = vrot.lane.b32.xlu0 %v5289, 64
  %v5351 = vpop.permute.xlu0 %5350
  %5352 = vrot.lane.b32.xlu0 %v5291, 64
  %v5353 = vpop.permute.xlu0 %5352
  %5354 = vrot.lane.b32.xlu0 %v5293, 64
  %v5355 = vpop.permute.xlu0 %5354
  %5356 = vrot.lane.b32.xlu0 %v5295, 64
  %v5357 = vpop.permute.xlu0 %5356
  %5358 = vrot.lane.b32.xlu0 %v5297, 64
  %v5359 = vpop.permute.xlu0 %5358
  %5360 = vrot.lane.b32.xlu0 %v5299, 64
  %v5361 = vpop.permute.xlu0 %5360
  %5362 = vrot.lane.b32.xlu0 %v5301, 64
  %v5363 = vpop.permute.xlu0 %5362
  %5364 = vrot.lane.b32.xlu0 %v5303, 64
  %v5365 = vpop.permute.xlu0 %5364
  %5366 = vrot.lane.b32.xlu0 %v5305, 64
  %v5367 = vpop.permute.xlu0 %5366
  %5368 = vrot.lane.b32.xlu0 %v5307, 64
  %v5369 = vpop.permute.xlu0 %5368
  %5370 = vrot.lane.b32.xlu0 %v5309, 64
  %v5371 = vpop.permute.xlu0 %5370
  %5372 = vrot.lane.b32.xlu0 %v5311, 64
  %v5373 = vpop.permute.xlu0 %5372
  %5374 = vrot.lane.b32.xlu0 %v5313, 64
  %v5375 = vpop.permute.xlu0 %5374
  %5376 = vrot.lane.b32.xlu0 %v5315, 64
  %v5377 = vpop.permute.xlu0 %5376
  %5378 = vrot.lane.b32.xlu0 %v5317, 64
  %v5379 = vpop.permute.xlu0 %5378
  %5380 = vrot.lane.b32.xlu0 %v5319, 64
  %v5381 = vpop.permute.xlu0 %5380
  %5382 = vrot.lane.b32.xlu0 %v5321, 64
  %v5383 = vpop.permute.xlu0 %5382
  %5384 = vrot.lane.b32.xlu0 %v5323, 64
  %v5385 = vpop.permute.xlu0 %5384
  %5386 = vrot.lane.b32.xlu0 %v5325, 64
  %v5387 = vpop.permute.xlu0 %5386
  %5388 = vrot.lane.b32.xlu0 %v5324, 64
  %v5389 = vpop.permute.xlu0 %5388
  %v5422 = vadd.f32 %v5198, %v5327
  %v5423 = vadd.f32 %v5199, %v5329
  %v5424 = vadd.f32 %v5200, %v5331
  %v5425 = vadd.f32 %v5201, %v5333
  %v5426 = vadd.f32 %v5202, %v5335
  %v5427 = vadd.f32 %v5203, %v5337
  %v5428 = vadd.f32 %v5204, %v5339
  %v5429 = vadd.f32 %v5205, %v5341
  %v5430 = vadd.f32 %v5206, %v5343
  %v5431 = vadd.f32 %v5207, %v5345
  %v5432 = vadd.f32 %v5208, %v5347
  %v5433 = vadd.f32 %v5209, %v5349
  %v5434 = vadd.f32 %v5210, %v5351
  %v5435 = vadd.f32 %v5211, %v5353
  %v5436 = vadd.f32 %v5212, %v5355
  %v5437 = vadd.f32 %v5213, %v5357
  %v5438 = vadd.f32 %v5214, %v5359
  %v5439 = vadd.f32 %v5215, %v5361
  %v5440 = vadd.f32 %v5216, %v5363
  %v5441 = vadd.f32 %v5217, %v5365
  %v5442 = vadd.f32 %v5218, %v5367
  %v5443 = vadd.f32 %v5219, %v5369
  %v5444 = vadd.f32 %v5220, %v5371
  %v5445 = vadd.f32 %v5221, %v5373
  %v5446 = vadd.f32 %v5222, %v5375
  %v5447 = vadd.f32 %v5223, %v5377
  %v5448 = vadd.f32 %v5224, %v5379
  %v5449 = vadd.f32 %v5225, %v5381
  %v5450 = vadd.f32 %v5226, %v5383
  %v5451 = vadd.f32 %v5227, %v5385
  %v5452 = vadd.f32 %v5228, %v5387
  %v5453 = vadd.f32 %v5229, %v5389
  %5454 = vst.msk [vmem:[%s8] sm:$0xff] %vm920, %v5422
  %5455 = vst.msk [vmem:[%s8 + $0x8] sm:$0xff] %vm920, %v5423
  %5456 = vst.msk [vmem:[%s8 + $0x10] sm:$0xff] %vm920, %v5424
  %5457 = vst.msk [vmem:[%s8 + $0x18] sm:$0xff] %vm920, %v5425
  %5458 = vst.msk [vmem:[%s8 + $0x20] sm:$0xff] %vm920, %v5426
  %5459 = vst.msk [vmem:[%s8 + $0x28] sm:$0xff] %vm920, %v5427
  %5460 = vst.msk [vmem:[%s8 + $0x30] sm:$0xff] %vm920, %v5428
  %5461 = vst.msk [vmem:[%s8 + $0x38] sm:$0xff] %vm920, %v5429
  %5462 = vst.msk [vmem:[%s8 + $0x40] sm:$0xff] %vm920, %v5430
  %5463 = vst.msk [vmem:[%s8 + $0x48] sm:$0xff] %vm920, %v5431
  %5464 = vst.msk [vmem:[%s8 + $0x50] sm:$0xff] %vm920, %v5432
  %5465 = vst.msk [vmem:[%s8 + $0x58] sm:$0xff] %vm920, %v5433
  %5466 = vst.msk [vmem:[%s8 + $0x60] sm:$0xff] %vm920, %v5434
  %5467 = vst.msk [vmem:[%s8 + $0x68] sm:$0xff] %vm920, %v5435
  %5468 = vst.msk [vmem:[%s8 + $0x70] sm:$0xff] %vm920, %v5436
  %5469 = vst.msk [vmem:[%s8 + $0x78] sm:$0xff] %vm920, %v5437
  %5470 = vst.msk [vmem:[%s8 + $0x80] sm:$0xff] %vm920, %v5438
  %5471 = vst.msk [vmem:[%s8 + $0x88] sm:$0xff] %vm920, %v5439
  %5472 = vst.msk [vmem:[%s8 + $0x90] sm:$0xff] %vm920, %v5440
  %5473 = vst.msk [vmem:[%s8 + $0x98] sm:$0xff] %vm920, %v5441
  %5474 = vst.msk [vmem:[%s8 + $0xa0] sm:$0xff] %vm920, %v5442
  %5475 = vst.msk [vmem:[%s8 + $0xa8] sm:$0xff] %vm920, %v5443
  %5476 = vst.msk [vmem:[%s8 + $0xb0] sm:$0xff] %vm920, %v5444
  %5477 = vst.msk [vmem:[%s8 + $0xb8] sm:$0xff] %vm920, %v5445
  %5478 = vst.msk [vmem:[%s8 + $0xc0] sm:$0xff] %vm920, %v5446
  %5479 = vst.msk [vmem:[%s8 + $0xc8] sm:$0xff] %vm920, %v5447
  %5480 = vst.msk [vmem:[%s8 + $0xd0] sm:$0xff] %vm920, %v5448
  %5481 = vst.msk [vmem:[%s8 + $0xd8] sm:$0xff] %vm920, %v5449
  %5482 = vst.msk [vmem:[%s8 + $0xe0] sm:$0xff] %vm920, %v5450
  %5483 = vst.msk [vmem:[%s8 + $0xe8] sm:$0xff] %vm920, %v5451
  %5484 = vst.msk [vmem:[%s8 + $0xf0] sm:$0xff] %vm920, %v5452
  %5485 = vst.msk [vmem:[%s8 + $0xf8] sm:$0x7f] %vm4445, %v5453
  %s5486 = scalar_lea.vmem [#allocation2], 288
  %v5487 = vld [vmem:[%s5486] sm:$0xff]
  %v5488 = vld [vmem:[%s5486 + $0x8] sm:$0xff]
  %v5489 = vld [vmem:[%s5486 + $0x10] sm:$0xff]
  %v5490 = vld [vmem:[%s5486 + $0x18] sm:$0xff]
  %v5491 = vld [vmem:[%s5486 + $0x20] sm:$0xff]
  %v5492 = vld [vmem:[%s5486 + $0x28] sm:$0xff]
  %v5493 = vld [vmem:[%s5486 + $0x30] sm:$0xff]
  %v5494 = vld [vmem:[%s5486 + $0x38] sm:$0xff]
  %v5495 = vld [vmem:[%s5486 + $0x40] sm:$0xff]
  %v5496 = vld [vmem:[%s5486 + $0x48] sm:$0xff]
  %v5497 = vld [vmem:[%s5486 + $0x50] sm:$0xff]
  %v5498 = vld [vmem:[%s5486 + $0x58] sm:$0xff]
  %5499 = vmatprep.subr.bf16.mxu0 0
  %5500 = vmatpush1.bf16.msra.mxu0 %v5487
  %5501 = vmatprep.subr.bf16.mxu0 0
  %5502 = vmatpush1.bf16.msra.mxu0 %v5488
  %5503 = vmatprep.subr.bf16.mxu0 0
  %5504 = vmatpush1.bf16.msra.mxu0 %v5489
  %5505 = vmatprep.subr.bf16.mxu0 0
  %5506 = vmatpush1.bf16.msra.mxu0 %v5490
  %5507 = vmatprep.subr.bf16.mxu0 0
  %5508 = vmatpush1.bf16.msra.mxu0 %v5491
  %5509 = vmatprep.subr.bf16.mxu0 0
  %5510 = vmatpush1.bf16.msra.mxu0 %v5492
  %5511 = vmatprep.subr.bf16.mxu0 0
  %5512 = vmatpush1.bf16.msra.mxu0 %v5493
  %5513 = vmatprep.subr.bf16.mxu0 0
  %5514 = vmatpush1.bf16.msra.mxu0 %v5494
  %5515 = vmatprep.subr.bf16.mxu0 0
  %5516 = vmatpush1.bf16.msra.mxu0 %v5495
  %5517 = vmatprep.subr.bf16.mxu0 0
  %5518 = vmatpush1.bf16.msra.mxu0 %v5496
  %5519 = vmatprep.subr.bf16.mxu0 0
  %5520 = vmatpush1.bf16.msra.mxu0 %v5497
  %5521 = vmatprep.subr.bf16.mxu0 0
  %5522 = vmatpush1.bf16.msra.mxu0 %v5498
  %5523 = vmatprep.subr.bf16.mxu0 0
  %5524 = vmatpush1.bf16.msra.mxu0 0
  %5525 = vmatprep.subr.bf16.mxu0 0
  %5526 = vmatpush1.bf16.msra.mxu0 0
  %5527 = vmatprep.subr.bf16.mxu0 0
  %5528 = vmatpush1.bf16.msra.mxu0 0
  %5529 = vmatprep.subr.bf16.mxu0 0
  %5530 = vmatpush1.bf16.msra.mxu0 0
  %5531 = vmatprep.mubr.bf16.mxu0 %v3996
  %5532 = vmatmul.mubr.bf16.gmra.mrb[0].mxu0 %v3942
  %v5533 = vpop.f32.mrb[0].mxu0
  %v5534 = vpop.f32.mrb[0].mxu0
  %v5535 = vpop.f32.mrb[0].mxu0
  %v5536 = vadd.f32 0.0, %v5535
  %v5537 = vpop.f32.mrb[0].mxu0
  %5538 = vmatprep.mubr.bf16.mxu0 %v3999
  %5539 = vmatmul.mubr.bf16.gmra.mrb[0].mxu0 %v3944
  %v5540 = vpop.f32.mrb[0].mxu0
  %v5541 = vadd.f32 0.0, %v5540
  %v5542 = vpop.f32.mrb[0].mxu0
  %v5543 = vpop.f32.mrb[0].mxu0
  %v5544 = vadd.f32 0.0, %v5543
  %v5545 = vpop.f32.mrb[0].mxu0
  %5546 = vmatprep.mubr.bf16.mxu0 %v4002
  %5547 = vmatmul.mubr.bf16.gmra.mrb[0].mxu0 %v3946
  %v5548 = vpop.f32.mrb[0].mxu0
  %v5549 = vadd.f32 0.0, %v5548
  %v5550 = vpop.f32.mrb[0].mxu0
  %v5551 = vpop.f32.mrb[0].mxu0
  %v5552 = vadd.f32 0.0, %v5551
  %v5553 = vpop.f32.mrb[0].mxu0
  %5554 = vmatprep.mubr.bf16.mxu0 %v4005
  %5555 = vmatmul.mubr.bf16.gmra.mrb[0].mxu0 %v3948
  %v5556 = vpop.f32.mrb[0].mxu0
  %v5557 = vadd.f32 0.0, %v5556
  %v5558 = vpop.f32.mrb[0].mxu0
  %v5559 = vpop.f32.mrb[0].mxu0
  %v5560 = vadd.f32 0.0, %v5559
  %v5561 = vpop.f32.mrb[0].mxu0
  %5562 = vmatprep.mubr.bf16.mxu0 %v4008
  %5563 = vmatmul.mubr.bf16.gmra.mrb[0].mxu0 %v3950
  %v5564 = vpop.f32.mrb[0].mxu0
  %v5565 = vadd.f32 0.0, %v5564
  %v5566 = vpop.f32.mrb[0].mxu0
  %v5567 = vpop.f32.mrb[0].mxu0
  %v5568 = vadd.f32 0.0, %v5567
  %v5569 = vpop.f32.mrb[0].mxu0
  %5570 = vmatprep.mubr.bf16.mxu0 %v4011
  %5571 = vmatmul.mubr.bf16.gmra.mrb[0].mxu0 %v3952
  %v5572 = vpop.f32.mrb[0].mxu0
  %v5573 = vadd.f32 0.0, %v5572
  %v5574 = vpop.f32.mrb[0].mxu0
  %v5575 = vpop.f32.mrb[0].mxu0
  %v5576 = vadd.f32 0.0, %v5575
  %v5577 = vpop.f32.mrb[0].mxu0
  %5578 = vmatprep.mubr.bf16.mxu0 %v4014
  %5579 = vmatmul.mubr.bf16.gmra.mrb[0].mxu0 %v3954
  %v5580 = vpop.f32.mrb[0].mxu0
  %v5581 = vadd.f32 0.0, %v5580
  %v5582 = vpop.f32.mrb[0].mxu0
  %v5583 = vpop.f32.mrb[0].mxu0
  %v5584 = vadd.f32 0.0, %v5583
  %v5585 = vpop.f32.mrb[0].mxu0
  %5586 = vmatprep.mubr.bf16.mxu0 %v4017
  %5587 = vmatmul.mubr.bf16.gmra.mrb[0].mxu0 %v3956
  %v5588 = vpop.f32.mrb[0].mxu0
  %v5589 = vadd.f32 0.0, %v5588
  %v5590 = vpop.f32.mrb[0].mxu0
  %v5591 = vpop.f32.mrb[0].mxu0
  %v5592 = vadd.f32 0.0, %v5591
  %v5593 = vpop.f32.mrb[0].mxu0
  %5594 = vmatprep.mubr.bf16.mxu0 %v4020
  %5595 = vmatmul.mubr.bf16.gmra.mrb[0].mxu0 %v3958
  %v5596 = vpop.f32.mrb[0].mxu0
  %v5597 = vadd.f32 0.0, %v5596
  %v5598 = vpop.f32.mrb[0].mxu0
  %v5599 = vpop.f32.mrb[0].mxu0
  %v5600 = vadd.f32 0.0, %v5599
  %v5601 = vpop.f32.mrb[0].mxu0
  %5602 = vmatprep.mubr.bf16.mxu0 %v4023
  %5603 = vmatmul.mubr.bf16.gmra.mrb[0].mxu0 %v3960
  %v5604 = vpop.f32.mrb[0].mxu0
  %v5605 = vadd.f32 0.0, %v5604
  %v5606 = vpop.f32.mrb[0].mxu0
  %v5607 = vpop.f32.mrb[0].mxu0
  %v5608 = vadd.f32 0.0, %v5607
  %v5609 = vpop.f32.mrb[0].mxu0
  %5610 = vmatprep.mubr.bf16.mxu0 %v4026
  %5611 = vmatmul.mubr.bf16.gmra.mrb[0].mxu0 %v3962
  %v5612 = vpop.f32.mrb[0].mxu0
  %v5613 = vadd.f32 0.0, %v5612
  %v5614 = vpop.f32.mrb[0].mxu0
  %v5615 = vpop.f32.mrb[0].mxu0
  %v5616 = vadd.f32 0.0, %v5615
  %v5617 = vpop.f32.mrb[0].mxu0
  %5618 = vmatprep.mubr.bf16.mxu0 %v4029
  %5619 = vmatmul.mubr.bf16.gmra.mrb[0].mxu0 %v3964
  %v5620 = vpop.f32.mrb[0].mxu0
  %v5621 = vadd.f32 0.0, %v5620
  %v5622 = vpop.f32.mrb[0].mxu0
  %v5623 = vpop.f32.mrb[0].mxu0
  %v5624 = vadd.f32 0.0, %v5623
  %v5625 = vpop.f32.mrb[0].mxu0
  %5626 = vmatprep.mubr.bf16.mxu0 %v4032
  %5627 = vmatmul.mubr.bf16.gmra.mrb[0].mxu0 %v3966
  %v5628 = vpop.f32.mrb[0].mxu0
  %v5629 = vadd.f32 0.0, %v5628
  %v5630 = vpop.f32.mrb[0].mxu0
  %v5631 = vpop.f32.mrb[0].mxu0
  %v5632 = vadd.f32 0.0, %v5631
  %v5633 = vpop.f32.mrb[0].mxu0
  %5634 = vmatprep.mubr.bf16.mxu0 %v4035
  %5635 = vmatmul.mubr.bf16.gmra.mrb[0].mxu0 %v3968
  %v5636 = vpop.f32.mrb[0].mxu0
  %v5637 = vadd.f32 0.0, %v5636
  %v5638 = vpop.f32.mrb[0].mxu0
  %v5639 = vpop.f32.mrb[0].mxu0
  %v5640 = vadd.f32 0.0, %v5639
  %v5641 = vpop.f32.mrb[0].mxu0
  %5642 = vmatprep.mubr.bf16.mxu0 %v4038
  %5643 = vmatmul.mubr.bf16.gmra.mrb[0].mxu0 %v3970
  %v5644 = vpop.f32.mrb[0].mxu0
  %v5645 = vadd.f32 0.0, %v5644
  %v5646 = vpop.f32.mrb[0].mxu0
  %v5647 = vpop.f32.mrb[0].mxu0
  %v5648 = vadd.f32 0.0, %v5647
  %v5649 = vpop.f32.mrb[0].mxu0
  %5650 = vmatprep.mubr.bf16.mxu0 %v4041
  %5651 = vmatmul.mubr.bf16.gmra.mrb[0].mxu0 %v3972
  %v5652 = vpop.f32.mrb[0].mxu0
  %v5653 = vadd.f32 0.0, %v5652
  %v5654 = vpop.f32.mrb[0].mxu0
  %v5655 = vpop.f32.mrb[0].mxu0
  %v5656 = vadd.f32 0.0, %v5655
  %v5657 = vpop.f32.mrb[0].mxu0
  %5658 = vdwg.mxu0
  %v5659 = vld [vmem:[%s8] sm:$0xff]
  %v5660 = vld [vmem:[%s8 + $0x8] sm:$0xff]
  %v5661 = vld [vmem:[%s8 + $0x10] sm:$0xff]
  %v5662 = vld [vmem:[%s8 + $0x18] sm:$0xff]
  %v5663 = vld [vmem:[%s8 + $0x20] sm:$0xff]
  %v5664 = vld [vmem:[%s8 + $0x28] sm:$0xff]
  %v5665 = vld [vmem:[%s8 + $0x30] sm:$0xff]
  %v5666 = vld [vmem:[%s8 + $0x38] sm:$0xff]
  %v5667 = vld [vmem:[%s8 + $0x40] sm:$0xff]
  %v5668 = vld [vmem:[%s8 + $0x48] sm:$0xff]
  %v5669 = vld [vmem:[%s8 + $0x50] sm:$0xff]
  %v5670 = vld [vmem:[%s8 + $0x58] sm:$0xff]
  %v5671 = vld [vmem:[%s8 + $0x60] sm:$0xff]
  %v5672 = vld [vmem:[%s8 + $0x68] sm:$0xff]
  %v5673 = vld [vmem:[%s8 + $0x70] sm:$0xff]
  %v5674 = vld [vmem:[%s8 + $0x78] sm:$0xff]
  %v5675 = vld [vmem:[%s8 + $0x80] sm:$0xff]
  %v5676 = vld [vmem:[%s8 + $0x88] sm:$0xff]
  %v5677 = vld [vmem:[%s8 + $0x90] sm:$0xff]
  %v5678 = vld [vmem:[%s8 + $0x98] sm:$0xff]
  %v5679 = vld [vmem:[%s8 + $0xa0] sm:$0xff]
  %v5680 = vld [vmem:[%s8 + $0xa8] sm:$0xff]
  %v5681 = vld [vmem:[%s8 + $0xb0] sm:$0xff]
  %v5682 = vld [vmem:[%s8 + $0xb8] sm:$0xff]
  %v5683 = vld [vmem:[%s8 + $0xc0] sm:$0xff]
  %v5684 = vld [vmem:[%s8 + $0xc8] sm:$0xff]
  %v5685 = vld [vmem:[%s8 + $0xd0] sm:$0xff]
  %v5686 = vld [vmem:[%s8 + $0xd8] sm:$0xff]
  %v5687 = vld [vmem:[%s8 + $0xe0] sm:$0xff]
  %v5688 = vld [vmem:[%s8 + $0xe8] sm:$0xff]
  %v5689 = vld [vmem:[%s8 + $0xf0] sm:$0x1]
  %vm5721 = vcmask 1040384
  %v5722 = vrot.slane %v5536, 7
  %v5723 = vrot.slane %v5541, 7
  %v5724 = vsel %vm5721, %v5722, %v5723
  %v5725 = vrot.slane %v5544, 7
  %v5726 = vsel %vm5721, %v5723, %v5725
  %v5727 = vrot.slane %v5549, 7
  %v5728 = vsel %vm5721, %v5725, %v5727
  %v5729 = vrot.slane %v5552, 7
  %v5730 = vsel %vm5721, %v5727, %v5729
  %v5731 = vrot.slane %v5557, 7
  %v5732 = vsel %vm5721, %v5729, %v5731
  %v5733 = vrot.slane %v5560, 7
  %v5734 = vsel %vm5721, %v5731, %v5733
  %v5735 = vrot.slane %v5565, 7
  %v5736 = vsel %vm5721, %v5733, %v5735
  %v5737 = vrot.slane %v5568, 7
  %v5738 = vsel %vm5721, %v5735, %v5737
  %v5739 = vrot.slane %v5573, 7
  %v5740 = vsel %vm5721, %v5737, %v5739
  %v5741 = vrot.slane %v5576, 7
  %v5742 = vsel %vm5721, %v5739, %v5741
  %v5743 = vrot.slane %v5581, 7
  %v5744 = vsel %vm5721, %v5741, %v5743
  %v5745 = vrot.slane %v5584, 7
  %v5746 = vsel %vm5721, %v5743, %v5745
  %v5747 = vrot.slane %v5589, 7
  %v5748 = vsel %vm5721, %v5745, %v5747
  %v5749 = vrot.slane %v5592, 7
  %v5750 = vsel %vm5721, %v5747, %v5749
  %v5751 = vrot.slane %v5597, 7
  %v5752 = vsel %vm5721, %v5749, %v5751
  %v5753 = vrot.slane %v5600, 7
  %v5754 = vsel %vm5721, %v5751, %v5753
  %v5755 = vrot.slane %v5605, 7
  %v5756 = vsel %vm5721, %v5753, %v5755
  %v5757 = vrot.slane %v5608, 7
  %v5758 = vsel %vm5721, %v5755, %v5757
  %v5759 = vrot.slane %v5613, 7
  %v5760 = vsel %vm5721, %v5757, %v5759
  %v5761 = vrot.slane %v5616, 7
  %v5762 = vsel %vm5721, %v5759, %v5761
  %v5763 = vrot.slane %v5621, 7
  %v5764 = vsel %vm5721, %v5761, %v5763
  %v5765 = vrot.slane %v5624, 7
  %v5766 = vsel %vm5721, %v5763, %v5765
  %v5767 = vrot.slane %v5629, 7
  %v5768 = vsel %vm5721, %v5765, %v5767
  %v5769 = vrot.slane %v5632, 7
  %v5770 = vsel %vm5721, %v5767, %v5769
  %v5771 = vrot.slane %v5637, 7
  %v5772 = vsel %vm5721, %v5769, %v5771
  %v5773 = vrot.slane %v5640, 7
  %v5774 = vsel %vm5721, %v5771, %v5773
  %v5775 = vrot.slane %v5645, 7
  %v5776 = vsel %vm5721, %v5773, %v5775
  %v5777 = vrot.slane %v5648, 7
  %v5778 = vsel %vm5721, %v5775, %v5777
  %v5779 = vrot.slane %v5653, 7
  %v5780 = vsel %vm5721, %v5777, %v5779
  %v5781 = vrot.slane %v5656, 7
  %v5782 = vsel %vm5721, %v5779, %v5781
  %v5814 = vadd.f32 %v5659, %v5724
  %v5815 = vadd.f32 %v5660, %v5726
  %v5816 = vadd.f32 %v5661, %v5728
  %v5817 = vadd.f32 %v5662, %v5730
  %v5818 = vadd.f32 %v5663, %v5732
  %v5819 = vadd.f32 %v5664, %v5734
  %v5820 = vadd.f32 %v5665, %v5736
  %v5821 = vadd.f32 %v5666, %v5738
  %v5822 = vadd.f32 %v5667, %v5740
  %v5823 = vadd.f32 %v5668, %v5742
  %v5824 = vadd.f32 %v5669, %v5744
  %v5825 = vadd.f32 %v5670, %v5746
  %v5826 = vadd.f32 %v5671, %v5748
  %v5827 = vadd.f32 %v5672, %v5750
  %v5828 = vadd.f32 %v5673, %v5752
  %v5829 = vadd.f32 %v5674, %v5754
  %v5830 = vadd.f32 %v5675, %v5756
  %v5831 = vadd.f32 %v5676, %v5758
  %v5832 = vadd.f32 %v5677, %v5760
  %v5833 = vadd.f32 %v5678, %v5762
  %v5834 = vadd.f32 %v5679, %v5764
  %v5835 = vadd.f32 %v5680, %v5766
  %v5836 = vadd.f32 %v5681, %v5768
  %v5837 = vadd.f32 %v5682, %v5770
  %v5838 = vadd.f32 %v5683, %v5772
  %v5839 = vadd.f32 %v5684, %v5774
  %v5840 = vadd.f32 %v5685, %v5776
  %v5841 = vadd.f32 %v5686, %v5778
  %v5842 = vadd.f32 %v5687, %v5780
  %v5843 = vadd.f32 %v5688, %v5782
  %v5844 = vadd.f32 %v5689, %v5781
  %5845 = vst.msk [vmem:[%s8] sm:$0xff] %vm920, %v5814
  %5846 = vst.msk [vmem:[%s8 + $0x8] sm:$0xff] %vm920, %v5815
  %5847 = vst.msk [vmem:[%s8 + $0x10] sm:$0xff] %vm920, %v5816
  %5848 = vst.msk [vmem:[%s8 + $0x18] sm:$0xff] %vm920, %v5817
  %5849 = vst.msk [vmem:[%s8 + $0x20] sm:$0xff] %vm920, %v5818
  %5850 = vst.msk [vmem:[%s8 + $0x28] sm:$0xff] %vm920, %v5819
  %5851 = vst.msk [vmem:[%s8 + $0x30] sm:$0xff] %vm920, %v5820
  %5852 = vst.msk [vmem:[%s8 + $0x38] sm:$0xff] %vm920, %v5821
  %5853 = vst.msk [vmem:[%s8 + $0x40] sm:$0xff] %vm920, %v5822
  %5854 = vst.msk [vmem:[%s8 + $0x48] sm:$0xff] %vm920, %v5823
  %5855 = vst.msk [vmem:[%s8 + $0x50] sm:$0xff] %vm920, %v5824
  %5856 = vst.msk [vmem:[%s8 + $0x58] sm:$0xff] %vm920, %v5825
  %5857 = vst.msk [vmem:[%s8 + $0x60] sm:$0xff] %vm920, %v5826
  %5858 = vst.msk [vmem:[%s8 + $0x68] sm:$0xff] %vm920, %v5827
  %5859 = vst.msk [vmem:[%s8 + $0x70] sm:$0xff] %vm920, %v5828
  %5860 = vst.msk [vmem:[%s8 + $0x78] sm:$0xff] %vm920, %v5829
  %5861 = vst.msk [vmem:[%s8 + $0x80] sm:$0xff] %vm920, %v5830
  %5862 = vst.msk [vmem:[%s8 + $0x88] sm:$0xff] %vm920, %v5831
  %5863 = vst.msk [vmem:[%s8 + $0x90] sm:$0xff] %vm920, %v5832
  %5864 = vst.msk [vmem:[%s8 + $0x98] sm:$0xff] %vm920, %v5833
  %5865 = vst.msk [vmem:[%s8 + $0xa0] sm:$0xff] %vm920, %v5834
  %5866 = vst.msk [vmem:[%s8 + $0xa8] sm:$0xff] %vm920, %v5835
  %5867 = vst.msk [vmem:[%s8 + $0xb0] sm:$0xff] %vm920, %v5836
  %5868 = vst.msk [vmem:[%s8 + $0xb8] sm:$0xff] %vm920, %v5837
  %5869 = vst.msk [vmem:[%s8 + $0xc0] sm:$0xff] %vm920, %v5838
  %5870 = vst.msk [vmem:[%s8 + $0xc8] sm:$0xff] %vm920, %v5839
  %5871 = vst.msk [vmem:[%s8 + $0xd0] sm:$0xff] %vm920, %v5840
  %5872 = vst.msk [vmem:[%s8 + $0xd8] sm:$0xff] %vm920, %v5841
  %5873 = vst.msk [vmem:[%s8 + $0xe0] sm:$0xff] %vm920, %v5842
  %5874 = vst.msk [vmem:[%s8 + $0xe8] sm:$0xff] %vm920, %v5843
  %5875 = vst.msk [vmem:[%s8 + $0xf0] sm:$0x1] %vm4926, %v5844
  %v5876 = vld [vmem:[%s8] sm:$0xff]
  %v5877 = vld [vmem:[%s8 + $0x8] sm:$0xff]
  %v5878 = vld [vmem:[%s8 + $0x10] sm:$0xff]
  %v5879 = vld [vmem:[%s8 + $0x18] sm:$0xff]
  %v5880 = vld [vmem:[%s8 + $0x20] sm:$0xff]
  %v5881 = vld [vmem:[%s8 + $0x28] sm:$0xff]
  %v5882 = vld [vmem:[%s8 + $0x30] sm:$0xff]
  %v5883 = vld [vmem:[%s8 + $0x38] sm:$0xff]
  %v5884 = vld [vmem:[%s8 + $0x40] sm:$0xff]
  %v5885 = vld [vmem:[%s8 + $0x48] sm:$0xff]
  %v5886 = vld [vmem:[%s8 + $0x50] sm:$0xff]
  %v5887 = vld [vmem:[%s8 + $0x58] sm:$0xff]
  %v5888 = vld [vmem:[%s8 + $0x60] sm:$0xff]
  %v5889 = vld [vmem:[%s8 + $0x68] sm:$0xff]
  %v5890 = vld [vmem:[%s8 + $0x70] sm:$0xff]
  %v5891 = vld [vmem:[%s8 + $0x78] sm:$0xff]
  %v5892 = vld [vmem:[%s8 + $0x80] sm:$0xff]
  %v5893 = vld [vmem:[%s8 + $0x88] sm:$0xff]
  %v5894 = vld [vmem:[%s8 + $0x90] sm:$0xff]
  %v5895 = vld [vmem:[%s8 + $0x98] sm:$0xff]
  %v5896 = vld [vmem:[%s8 + $0xa0] sm:$0xff]
  %v5897 = vld [vmem:[%s8 + $0xa8] sm:$0xff]
  %v5898 = vld [vmem:[%s8 + $0xb0] sm:$0xff]
  %v5899 = vld [vmem:[%s8 + $0xb8] sm:$0xff]
  %v5900 = vld [vmem:[%s8 + $0xc0] sm:$0xff]
  %v5901 = vld [vmem:[%s8 + $0xc8] sm:$0xff]
  %v5902 = vld [vmem:[%s8 + $0xd0] sm:$0xff]
  %v5903 = vld [vmem:[%s8 + $0xd8] sm:$0xff]
  %v5904 = vld [vmem:[%s8 + $0xe0] sm:$0xff]
  %v5905 = vld [vmem:[%s8 + $0xe8] sm:$0xff]
  %5906 = vrot.lane.b32.xlu0 %v5541, 64
  %v5907 = vpop.permute.xlu0 %5906
  %5908 = vrot.lane.b32.xlu0 %v5544, 64
  %v5909 = vpop.permute.xlu0 %5908
  %5910 = vrot.lane.b32.xlu0 %v5549, 64
  %v5911 = vpop.permute.xlu0 %5910
  %5912 = vrot.lane.b32.xlu0 %v5552, 64
  %v5913 = vpop.permute.xlu0 %5912
  %5914 = vrot.lane.b32.xlu0 %v5557, 64
  %v5915 = vpop.permute.xlu0 %5914
  %5916 = vrot.lane.b32.xlu0 %v5560, 64
  %v5917 = vpop.permute.xlu0 %5916
  %5918 = vrot.lane.b32.xlu0 %v5565, 64
  %v5919 = vpop.permute.xlu0 %5918
  %5920 = vrot.lane.b32.xlu0 %v5568, 64
  %v5921 = vpop.permute.xlu0 %5920
  %5922 = vrot.lane.b32.xlu0 %v5573, 64
  %v5923 = vpop.permute.xlu0 %5922
  %5924 = vrot.lane.b32.xlu0 %v5576, 64
  %v5925 = vpop.permute.xlu0 %5924
  %5926 = vrot.lane.b32.xlu0 %v5581, 64
  %v5927 = vpop.permute.xlu0 %5926
  %5928 = vrot.lane.b32.xlu0 %v5584, 64
  %v5929 = vpop.permute.xlu0 %5928
  %5930 = vrot.lane.b32.xlu0 %v5589, 64
  %v5931 = vpop.permute.xlu0 %5930
  %5932 = vrot.lane.b32.xlu0 %v5592, 64
  %v5933 = vpop.permute.xlu0 %5932
  %5934 = vrot.lane.b32.xlu0 %v5597, 64
  %v5935 = vpop.permute.xlu0 %5934
  %5936 = vrot.lane.b32.xlu0 %v5600, 64
  %v5937 = vpop.permute.xlu0 %5936
  %5938 = vrot.lane.b32.xlu0 %v5605, 64
  %v5939 = vpop.permute.xlu0 %5938
  %5940 = vrot.lane.b32.xlu0 %v5608, 64
  %v5941 = vpop.permute.xlu0 %5940
  %5942 = vrot.lane.b32.xlu0 %v5613, 64
  %v5943 = vpop.permute.xlu0 %5942
  %5944 = vrot.lane.b32.xlu0 %v5616, 64
  %v5945 = vpop.permute.xlu0 %5944
  %5946 = vrot.lane.b32.xlu0 %v5621, 64
  %v5947 = vpop.permute.xlu0 %5946
  %5948 = vrot.lane.b32.xlu0 %v5624, 64
  %v5949 = vpop.permute.xlu0 %5948
  %5950 = vrot.lane.b32.xlu0 %v5629, 64
  %v5951 = vpop.permute.xlu0 %5950
  %5952 = vrot.lane.b32.xlu0 %v5632, 64
  %v5953 = vpop.permute.xlu0 %5952
  %5954 = vrot.lane.b32.xlu0 %v5637, 64
  %v5955 = vpop.permute.xlu0 %5954
  %5956 = vrot.lane.b32.xlu0 %v5640, 64
  %v5957 = vpop.permute.xlu0 %5956
  %5958 = vrot.lane.b32.xlu0 %v5645, 64
  %v5959 = vpop.permute.xlu0 %5958
  %5960 = vrot.lane.b32.xlu0 %v5648, 64
  %v5961 = vpop.permute.xlu0 %5960
  %5962 = vrot.lane.b32.xlu0 %v5653, 64
  %v5963 = vpop.permute.xlu0 %5962
  %5964 = vrot.lane.b32.xlu0 %v5656, 64
  %v5965 = vpop.permute.xlu0 %5964
  %v5996 = vadd.f32 %v5876, %v5907
  %v5997 = vadd.f32 %v5877, %v5909
  %v5998 = vadd.f32 %v5878, %v5911
  %v5999 = vadd.f32 %v5879, %v5913
  %v6000 = vadd.f32 %v5880, %v5915
  %v6001 = vadd.f32 %v5881, %v5917
  %v6002 = vadd.f32 %v5882, %v5919
  %v6003 = vadd.f32 %v5883, %v5921
  %v6004 = vadd.f32 %v5884, %v5923
  %v6005 = vadd.f32 %v5885, %v5925
  %v6006 = vadd.f32 %v5886, %v5927
  %v6007 = vadd.f32 %v5887, %v5929
  %v6008 = vadd.f32 %v5888, %v5931
  %v6009 = vadd.f32 %v5889, %v5933
  %v6010 = vadd.f32 %v5890, %v5935
  %v6011 = vadd.f32 %v5891, %v5937
  %v6012 = vadd.f32 %v5892, %v5939
  %v6013 = vadd.f32 %v5893, %v5941
  %v6014 = vadd.f32 %v5894, %v5943
  %v6015 = vadd.f32 %v5895, %v5945
  %v6016 = vadd.f32 %v5896, %v5947
  %v6017 = vadd.f32 %v5897, %v5949
  %v6018 = vadd.f32 %v5898, %v5951
  %v6019 = vadd.f32 %v5899, %v5953
  %v6020 = vadd.f32 %v5900, %v5955
  %v6021 = vadd.f32 %v5901, %v5957
  %v6022 = vadd.f32 %v5902, %v5959
  %v6023 = vadd.f32 %v5903, %v5961
  %v6024 = vadd.f32 %v5904, %v5963
  %v6025 = vadd.f32 %v5905, %v5965
  %6026 = vst.msk [vmem:[%s8] sm:$0xff] %vm920, %v5996
  %6027 = vst.msk [vmem:[%s8 + $0x8] sm:$0xff] %vm920, %v5997
  %6028 = vst.msk [vmem:[%s8 + $0x10] sm:$0xff] %vm920, %v5998
  %6029 = vst.msk [vmem:[%s8 + $0x18] sm:$0xff] %vm920, %v5999
  %6030 = vst.msk [vmem:[%s8 + $0x20] sm:$0xff] %vm920, %v6000
  %6031 = vst.msk [vmem:[%s8 + $0x28] sm:$0xff] %vm920, %v6001
  %6032 = vst.msk [vmem:[%s8 + $0x30] sm:$0xff] %vm920, %v6002
  %6033 = vst.msk [vmem:[%s8 + $0x38] sm:$0xff] %vm920, %v6003
  %6034 = vst.msk [vmem:[%s8 + $0x40] sm:$0xff] %vm920, %v6004
  %6035 = vst.msk [vmem:[%s8 + $0x48] sm:$0xff] %vm920, %v6005
  %6036 = vst.msk [vmem:[%s8 + $0x50] sm:$0xff] %vm920, %v6006
  %6037 = vst.msk [vmem:[%s8 + $0x58] sm:$0xff] %vm920, %v6007
  %6038 = vst.msk [vmem:[%s8 + $0x60] sm:$0xff] %vm920, %v6008
  %6039 = vst.msk [vmem:[%s8 + $0x68] sm:$0xff] %vm920, %v6009
  %6040 = vst.msk [vmem:[%s8 + $0x70] sm:$0xff] %vm920, %v6010
  %6041 = vst.msk [vmem:[%s8 + $0x78] sm:$0xff] %vm920, %v6011
  %6042 = vst.msk [vmem:[%s8 + $0x80] sm:$0xff] %vm920, %v6012
  %6043 = vst.msk [vmem:[%s8 + $0x88] sm:$0xff] %vm920, %v6013
  %6044 = vst.msk [vmem:[%s8 + $0x90] sm:$0xff] %vm920, %v6014
  %6045 = vst.msk [vmem:[%s8 + $0x98] sm:$0xff] %vm920, %v6015
  %6046 = vst.msk [vmem:[%s8 + $0xa0] sm:$0xff] %vm920, %v6016
  %6047 = vst.msk [vmem:[%s8 + $0xa8] sm:$0xff] %vm920, %v6017
  %6048 = vst.msk [vmem:[%s8 + $0xb0] sm:$0xff] %vm920, %v6018
  %6049 = vst.msk [vmem:[%s8 + $0xb8] sm:$0xff] %vm920, %v6019
  %6050 = vst.msk [vmem:[%s8 + $0xc0] sm:$0xff] %vm920, %v6020
  %6051 = vst.msk [vmem:[%s8 + $0xc8] sm:$0xff] %vm920, %v6021
  %6052 = vst.msk [vmem:[%s8 + $0xd0] sm:$0xff] %vm920, %v6022
  %6053 = vst.msk [vmem:[%s8 + $0xd8] sm:$0xff] %vm920, %v6023
  %6054 = vst.msk [vmem:[%s8 + $0xe0] sm:$0xff] %vm920, %v6024
  %6055 = vst.msk [vmem:[%s8 + $0xe8] sm:$0xff] %vm920, %v6025
  %v6056 = vld [vmem:[#allocation3] sm:$0xff]
  %v6057 = vld [vmem:[#allocation3 + $0x8] sm:$0xff]
  %v6058 = vld [vmem:[#allocation3 + $0x10] sm:$0xff]
  %v6059 = vld [vmem:[#allocation3 + $0x18] sm:$0xff]
  %v6060 = vld [vmem:[#allocation3 + $0x20] sm:$0xff]
  %v6061 = vld [vmem:[#allocation3 + $0x28] sm:$0xff]
  %v6062 = vld [vmem:[#allocation3 + $0x30] sm:$0xff]
  %v6063 = vld [vmem:[#allocation3 + $0x38] sm:$0xff]
  %v6064 = vld [vmem:[#allocation3 + $0x40] sm:$0xff]
  %v6065 = vld [vmem:[#allocation3 + $0x48] sm:$0xff]
  %v6066 = vld [vmem:[#allocation3 + $0x50] sm:$0xff]
  %v6067 = vld [vmem:[#allocation3 + $0x58] sm:$0xff]
  %6068 = vmatprep.subr.bf16.mxu0 0
  %6069 = vmatpush1.bf16.msra.mxu0 %v6056
  %6070 = vmatprep.subr.bf16.mxu0 0
  %6071 = vmatpush1.bf16.msra.mxu0 %v6057
  %6072 = vmatprep.subr.bf16.mxu0 0
  %6073 = vmatpush1.bf16.msra.mxu0 %v6058
  %6074 = vmatprep.subr.bf16.mxu0 0
  %6075 = vmatpush1.bf16.msra.mxu0 %v6059
  %6076 = vmatprep.subr.bf16.mxu0 0
  %6077 = vmatpush1.bf16.msra.mxu0 %v6060
  %6078 = vmatprep.subr.bf16.mxu0 0
  %6079 = vmatpush1.bf16.msra.mxu0 %v6061
  %6080 = vmatprep.subr.bf16.mxu0 0
  %6081 = vmatpush1.bf16.msra.mxu0 %v6062
  %6082 = vmatprep.subr.bf16.mxu0 0
  %6083 = vmatpush1.bf16.msra.mxu0 %v6063
  %6084 = vmatprep.subr.bf16.mxu0 0
  %6085 = vmatpush1.bf16.msra.mxu0 %v6064
  %6086 = vmatprep.subr.bf16.mxu0 0
  %6087 = vmatpush1.bf16.msra.mxu0 %v6065
  %6088 = vmatprep.subr.bf16.mxu0 0
  %6089 = vmatpush1.bf16.msra.mxu0 %v6066
  %6090 = vmatprep.subr.bf16.mxu0 0
  %6091 = vmatpush1.bf16.msra.mxu0 %v6067
  %6092 = vmatprep.subr.bf16.mxu0 0
  %6093 = vmatpush1.bf16.msra.mxu0 0
  %6094 = vmatprep.subr.bf16.mxu0 0
  %6095 = vmatpush1.bf16.msra.mxu0 0
  %6096 = vmatprep.subr.bf16.mxu0 0
  %6097 = vmatpush1.bf16.msra.mxu0 0
  %6098 = vmatprep.subr.bf16.mxu0 0
  %6099 = vmatpush1.bf16.msra.mxu0 0
  %6100 = vmatprep.mubr.bf16.mxu0 %v3996
  %6101 = vmatmul.mubr.bf16.gmra.mrb[0].mxu0 %v3942
  %v6102 = vpop.f32.mrb[0].mxu0
  %v6103 = vpop.f32.mrb[0].mxu0
  %v6104 = vpop.f32.mrb[0].mxu0
  %v6105 = vpop.f32.mrb[0].mxu0
  %6106 = vmatprep.mubr.bf16.mxu0 %v3999
  %6107 = vmatmul.mubr.bf16.gmra.mrb[0].mxu0 %v3944
  %v6108 = vpop.f32.mrb[0].mxu0
  %v6109 = vadd.f32 0.0, %v6108
  %v6110 = vpop.f32.mrb[0].mxu0
  %v6111 = vpop.f32.mrb[0].mxu0
  %v6112 = vadd.f32 0.0, %v6111
  %v6113 = vpop.f32.mrb[0].mxu0
  %6114 = vmatprep.mubr.bf16.mxu0 %v4002
  %6115 = vmatmul.mubr.bf16.gmra.mrb[0].mxu0 %v3946
  %v6116 = vpop.f32.mrb[0].mxu0
  %v6117 = vadd.f32 0.0, %v6116
  %v6118 = vpop.f32.mrb[0].mxu0
  %v6119 = vpop.f32.mrb[0].mxu0
  %v6120 = vadd.f32 0.0, %v6119
  %v6121 = vpop.f32.mrb[0].mxu0
  %6122 = vmatprep.mubr.bf16.mxu0 %v4005
  %6123 = vmatmul.mubr.bf16.gmra.mrb[0].mxu0 %v3948
  %v6124 = vpop.f32.mrb[0].mxu0
  %v6125 = vadd.f32 0.0, %v6124
  %v6126 = vpop.f32.mrb[0].mxu0
  %v6127 = vpop.f32.mrb[0].mxu0
  %v6128 = vadd.f32 0.0, %v6127
  %v6129 = vpop.f32.mrb[0].mxu0
  %6130 = vmatprep.mubr.bf16.mxu0 %v4008
  %6131 = vmatmul.mubr.bf16.gmra.mrb[0].mxu0 %v3950
  %v6132 = vpop.f32.mrb[0].mxu0
  %v6133 = vadd.f32 0.0, %v6132
  %v6134 = vpop.f32.mrb[0].mxu0
  %v6135 = vpop.f32.mrb[0].mxu0
  %v6136 = vadd.f32 0.0, %v6135
  %v6137 = vpop.f32.mrb[0].mxu0
  %6138 = vmatprep.mubr.bf16.mxu0 %v4011
  %6139 = vmatmul.mubr.bf16.gmra.mrb[0].mxu0 %v3952
  %v6140 = vpop.f32.mrb[0].mxu0
  %v6141 = vadd.f32 0.0, %v6140
  %v6142 = vpop.f32.mrb[0].mxu0
  %v6143 = vpop.f32.mrb[0].mxu0
  %v6144 = vadd.f32 0.0, %v6143
  %v6145 = vpop.f32.mrb[0].mxu0
  %6146 = vmatprep.mubr.bf16.mxu0 %v4014
  %6147 = vmatmul.mubr.bf16.gmra.mrb[0].mxu0 %v3954
  %v6148 = vpop.f32.mrb[0].mxu0
  %v6149 = vadd.f32 0.0, %v6148
  %v6150 = vpop.f32.mrb[0].mxu0
  %v6151 = vpop.f32.mrb[0].mxu0
  %v6152 = vadd.f32 0.0, %v6151
  %v6153 = vpop.f32.mrb[0].mxu0
  %6154 = vmatprep.mubr.bf16.mxu0 %v4017
  %6155 = vmatmul.mubr.bf16.gmra.mrb[0].mxu0 %v3956
  %v6156 = vpop.f32.mrb[0].mxu0
  %v6157 = vadd.f32 0.0, %v6156
  %v6158 = vpop.f32.mrb[0].mxu0
  %v6159 = vpop.f32.mrb[0].mxu0
  %v6160 = vadd.f32 0.0, %v6159
  %v6161 = vpop.f32.mrb[0].mxu0
  %6162 = vmatprep.mubr.bf16.mxu0 %v4020
  %6163 = vmatmul.mubr.bf16.gmra.mrb[0].mxu0 %v3958
  %v6164 = vpop.f32.mrb[0].mxu0
  %v6165 = vadd.f32 0.0, %v6164
  %v6166 = vpop.f32.mrb[0].mxu0
  %v6167 = vpop.f32.mrb[0].mxu0
  %v6168 = vadd.f32 0.0, %v6167
  %v6169 = vpop.f32.mrb[0].mxu0
  %6170 = vmatprep.mubr.bf16.mxu0 %v4023
  %6171 = vmatmul.mubr.bf16.gmra.mrb[0].mxu0 %v3960
  %v6172 = vpop.f32.mrb[0].mxu0
  %v6173 = vadd.f32 0.0, %v6172
  %v6174 = vpop.f32.mrb[0].mxu0
  %v6175 = vpop.f32.mrb[0].mxu0
  %v6176 = vadd.f32 0.0, %v6175
  %v6177 = vpop.f32.mrb[0].mxu0
  %6178 = vmatprep.mubr.bf16.mxu0 %v4026
  %6179 = vmatmul.mubr.bf16.gmra.mrb[0].mxu0 %v3962
  %v6180 = vpop.f32.mrb[0].mxu0
  %v6181 = vadd.f32 0.0, %v6180
  %v6182 = vpop.f32.mrb[0].mxu0
  %v6183 = vpop.f32.mrb[0].mxu0
  %v6184 = vadd.f32 0.0, %v6183
  %v6185 = vpop.f32.mrb[0].mxu0
  %6186 = vmatprep.mubr.bf16.mxu0 %v4029
  %6187 = vmatmul.mubr.bf16.gmra.mrb[0].mxu0 %v3964
  %v6188 = vpop.f32.mrb[0].mxu0
  %v6189 = vadd.f32 0.0, %v6188
  %v6190 = vpop.f32.mrb[0].mxu0
  %v6191 = vpop.f32.mrb[0].mxu0
  %v6192 = vadd.f32 0.0, %v6191
  %v6193 = vpop.f32.mrb[0].mxu0
  %6194 = vmatprep.mubr.bf16.mxu0 %v4032
  %6195 = vmatmul.mubr.bf16.gmra.mrb[0].mxu0 %v3966
  %v6196 = vpop.f32.mrb[0].mxu0
  %v6197 = vadd.f32 0.0, %v6196
  %v6198 = vpop.f32.mrb[0].mxu0
  %v6199 = vpop.f32.mrb[0].mxu0
  %v6200 = vadd.f32 0.0, %v6199
  %v6201 = vpop.f32.mrb[0].mxu0
  %6202 = vmatprep.mubr.bf16.mxu0 %v4035
  %6203 = vmatmul.mubr.bf16.gmra.mrb[0].mxu0 %v3968
  %v6204 = vpop.f32.mrb[0].mxu0
  %v6205 = vadd.f32 0.0, %v6204
  %v6206 = vpop.f32.mrb[0].mxu0
  %v6207 = vpop.f32.mrb[0].mxu0
  %v6208 = vadd.f32 0.0, %v6207
  %v6209 = vpop.f32.mrb[0].mxu0
  %6210 = vmatprep.mubr.bf16.mxu0 %v4038
  %6211 = vmatmul.mubr.bf16.gmra.mrb[0].mxu0 %v3970
  %v6212 = vpop.f32.mrb[0].mxu0
  %v6213 = vadd.f32 0.0, %v6212
  %v6214 = vpop.f32.mrb[0].mxu0
  %v6215 = vpop.f32.mrb[0].mxu0
  %v6216 = vadd.f32 0.0, %v6215
  %v6217 = vpop.f32.mrb[0].mxu0
  %6218 = vmatprep.mubr.bf16.mxu0 %v4041
  %6219 = vmatmul.mubr.bf16.gmra.mrb[0].mxu0 %v3972
  %v6220 = vpop.f32.mrb[0].mxu0
  %v6221 = vadd.f32 0.0, %v6220
  %v6222 = vpop.f32.mrb[0].mxu0
  %v6223 = vpop.f32.mrb[0].mxu0
  %v6224 = vadd.f32 0.0, %v6223
  %v6225 = vpop.f32.mrb[0].mxu0
  %6226 = vdwg.mxu0
  %v6227 = vld [vmem:[%s8] sm:$0xff]
  %v6228 = vld [vmem:[%s8 + $0x8] sm:$0xff]
  %v6229 = vld [vmem:[%s8 + $0x10] sm:$0xff]
  %v6230 = vld [vmem:[%s8 + $0x18] sm:$0xff]
  %v6231 = vld [vmem:[%s8 + $0x20] sm:$0xff]
  %v6232 = vld [vmem:[%s8 + $0x28] sm:$0xff]
  %v6233 = vld [vmem:[%s8 + $0x30] sm:$0xff]
  %v6234 = vld [vmem:[%s8 + $0x38] sm:$0xff]
  %v6235 = vld [vmem:[%s8 + $0x40] sm:$0xff]
  %v6236 = vld [vmem:[%s8 + $0x48] sm:$0xff]
  %v6237 = vld [vmem:[%s8 + $0x50] sm:$0xff]
  %v6238 = vld [vmem:[%s8 + $0x58] sm:$0xff]
  %v6239 = vld [vmem:[%s8 + $0x60] sm:$0xff]
  %v6240 = vld [vmem:[%s8 + $0x68] sm:$0xff]
  %v6241 = vld [vmem:[%s8 + $0x70] sm:$0xff]
  %v6242 = vld [vmem:[%s8 + $0x78] sm:$0xff]
  %v6243 = vld [vmem:[%s8 + $0x80] sm:$0xff]
  %v6244 = vld [vmem:[%s8 + $0x88] sm:$0xff]
  %v6245 = vld [vmem:[%s8 + $0x90] sm:$0xff]
  %v6246 = vld [vmem:[%s8 + $0x98] sm:$0xff]
  %v6247 = vld [vmem:[%s8 + $0xa0] sm:$0xff]
  %v6248 = vld [vmem:[%s8 + $0xa8] sm:$0xff]
  %v6249 = vld [vmem:[%s8 + $0xb0] sm:$0xff]
  %v6250 = vld [vmem:[%s8 + $0xb8] sm:$0xff]
  %v6251 = vld [vmem:[%s8 + $0xc0] sm:$0xff]
  %v6252 = vld [vmem:[%s8 + $0xc8] sm:$0xff]
  %v6253 = vld [vmem:[%s8 + $0xd0] sm:$0xff]
  %v6254 = vld [vmem:[%s8 + $0xd8] sm:$0xff]
  %v6255 = vld [vmem:[%s8 + $0xe0] sm:$0xff]
  %v6256 = vld [vmem:[%s8 + $0xe8] sm:$0x7f]
  %v6287 = vrot.slane %v6109, 1
  %v6288 = vrot.slane %v6112, 1
  %v6289 = vsel %vm5262, %v6287, %v6288
  %v6290 = vrot.slane %v6117, 1
  %v6291 = vsel %vm5262, %v6288, %v6290
  %v6292 = vrot.slane %v6120, 1
  %v6293 = vsel %vm5262, %v6290, %v6292
  %v6294 = vrot.slane %v6125, 1
  %v6295 = vsel %vm5262, %v6292, %v6294
  %v6296 = vrot.slane %v6128, 1
  %v6297 = vsel %vm5262, %v6294, %v6296
  %v6298 = vrot.slane %v6133, 1
  %v6299 = vsel %vm5262, %v6296, %v6298
  %v6300 = vrot.slane %v6136, 1
  %v6301 = vsel %vm5262, %v6298, %v6300
  %v6302 = vrot.slane %v6141, 1
  %v6303 = vsel %vm5262, %v6300, %v6302
  %v6304 = vrot.slane %v6144, 1
  %v6305 = vsel %vm5262, %v6302, %v6304
  %v6306 = vrot.slane %v6149, 1
  %v6307 = vsel %vm5262, %v6304, %v6306
  %v6308 = vrot.slane %v6152, 1
  %v6309 = vsel %vm5262, %v6306, %v6308
  %v6310 = vrot.slane %v6157, 1
  %v6311 = vsel %vm5262, %v6308, %v6310
  %v6312 = vrot.slane %v6160, 1
  %v6313 = vsel %vm5262, %v6310, %v6312
  %v6314 = vrot.slane %v6165, 1
  %v6315 = vsel %vm5262, %v6312, %v6314
  %v6316 = vrot.slane %v6168, 1
  %v6317 = vsel %vm5262, %v6314, %v6316
  %v6318 = vrot.slane %v6173, 1
  %v6319 = vsel %vm5262, %v6316, %v6318
  %v6320 = vrot.slane %v6176, 1
  %v6321 = vsel %vm5262, %v6318, %v6320
  %v6322 = vrot.slane %v6181, 1
  %v6323 = vsel %vm5262, %v6320, %v6322
  %v6324 = vrot.slane %v6184, 1
  %v6325 = vsel %vm5262, %v6322, %v6324
  %v6326 = vrot.slane %v6189, 1
  %v6327 = vsel %vm5262, %v6324, %v6326
  %v6328 = vrot.slane %v6192, 1
  %v6329 = vsel %vm5262, %v6326, %v6328
  %v6330 = vrot.slane %v6197, 1
  %v6331 = vsel %vm5262, %v6328, %v6330
  %v6332 = vrot.slane %v6200, 1
  %v6333 = vsel %vm5262, %v6330, %v6332
  %v6334 = vrot.slane %v6205, 1
  %v6335 = vsel %vm5262, %v6332, %v6334
  %v6336 = vrot.slane %v6208, 1
  %v6337 = vsel %vm5262, %v6334, %v6336
  %v6338 = vrot.slane %v6213, 1
  %v6339 = vsel %vm5262, %v6336, %v6338
  %v6340 = vrot.slane %v6216, 1
  %v6341 = vsel %vm5262, %v6338, %v6340
  %v6342 = vrot.slane %v6221, 1
  %v6343 = vsel %vm5262, %v6340, %v6342
  %v6344 = vrot.slane %v6224, 1
  %v6345 = vsel %vm5262, %v6342, %v6344
  %v6376 = vadd.f32 %v6227, %v6289
  %v6377 = vadd.f32 %v6228, %v6291
  %v6378 = vadd.f32 %v6229, %v6293
  %v6379 = vadd.f32 %v6230, %v6295
  %v6380 = vadd.f32 %v6231, %v6297
  %v6381 = vadd.f32 %v6232, %v6299
  %v6382 = vadd.f32 %v6233, %v6301
  %v6383 = vadd.f32 %v6234, %v6303
  %v6384 = vadd.f32 %v6235, %v6305
  %v6385 = vadd.f32 %v6236, %v6307
  %v6386 = vadd.f32 %v6237, %v6309
  %v6387 = vadd.f32 %v6238, %v6311
  %v6388 = vadd.f32 %v6239, %v6313
  %v6389 = vadd.f32 %v6240, %v6315
  %v6390 = vadd.f32 %v6241, %v6317
  %v6391 = vadd.f32 %v6242, %v6319
  %v6392 = vadd.f32 %v6243, %v6321
  %v6393 = vadd.f32 %v6244, %v6323
  %v6394 = vadd.f32 %v6245, %v6325
  %v6395 = vadd.f32 %v6246, %v6327
  %v6396 = vadd.f32 %v6247, %v6329
  %v6397 = vadd.f32 %v6248, %v6331
  %v6398 = vadd.f32 %v6249, %v6333
  %v6399 = vadd.f32 %v6250, %v6335
  %v6400 = vadd.f32 %v6251, %v6337
  %v6401 = vadd.f32 %v6252, %v6339
  %v6402 = vadd.f32 %v6253, %v6341
  %v6403 = vadd.f32 %v6254, %v6343
  %v6404 = vadd.f32 %v6255, %v6345
  %v6405 = vadd.f32 %v6256, %v6344
  %6406 = vst.msk [vmem:[%s8] sm:$0xff] %vm920, %v6376
  %6407 = vst.msk [vmem:[%s8 + $0x8] sm:$0xff] %vm920, %v6377
  %6408 = vst.msk [vmem:[%s8 + $0x10] sm:$0xff] %vm920, %v6378
  %6409 = vst.msk [vmem:[%s8 + $0x18] sm:$0xff] %vm920, %v6379
  %6410 = vst.msk [vmem:[%s8 + $0x20] sm:$0xff] %vm920, %v6380
  %6411 = vst.msk [vmem:[%s8 + $0x28] sm:$0xff] %vm920, %v6381
  %6412 = vst.msk [vmem:[%s8 + $0x30] sm:$0xff] %vm920, %v6382
  %6413 = vst.msk [vmem:[%s8 + $0x38] sm:$0xff] %vm920, %v6383
  %6414 = vst.msk [vmem:[%s8 + $0x40] sm:$0xff] %vm920, %v6384
  %6415 = vst.msk [vmem:[%s8 + $0x48] sm:$0xff] %vm920, %v6385
  %6416 = vst.msk [vmem:[%s8 + $0x50] sm:$0xff] %vm920, %v6386
  %6417 = vst.msk [vmem:[%s8 + $0x58] sm:$0xff] %vm920, %v6387
  %6418 = vst.msk [vmem:[%s8 + $0x60] sm:$0xff] %vm920, %v6388
  %6419 = vst.msk [vmem:[%s8 + $0x68] sm:$0xff] %vm920, %v6389
  %6420 = vst.msk [vmem:[%s8 + $0x70] sm:$0xff] %vm920, %v6390
  %6421 = vst.msk [vmem:[%s8 + $0x78] sm:$0xff] %vm920, %v6391
  %6422 = vst.msk [vmem:[%s8 + $0x80] sm:$0xff] %vm920, %v6392
  %6423 = vst.msk [vmem:[%s8 + $0x88] sm:$0xff] %vm920, %v6393
  %6424 = vst.msk [vmem:[%s8 + $0x90] sm:$0xff] %vm920, %v6394
  %6425 = vst.msk [vmem:[%s8 + $0x98] sm:$0xff] %vm920, %v6395
  %6426 = vst.msk [vmem:[%s8 + $0xa0] sm:$0xff] %vm920, %v6396
  %6427 = vst.msk [vmem:[%s8 + $0xa8] sm:$0xff] %vm920, %v6397
  %6428 = vst.msk [vmem:[%s8 + $0xb0] sm:$0xff] %vm920, %v6398
  %6429 = vst.msk [vmem:[%s8 + $0xb8] sm:$0xff] %vm920, %v6399
  %6430 = vst.msk [vmem:[%s8 + $0xc0] sm:$0xff] %vm920, %v6400
  %6431 = vst.msk [vmem:[%s8 + $0xc8] sm:$0xff] %vm920, %v6401
  %6432 = vst.msk [vmem:[%s8 + $0xd0] sm:$0xff] %vm920, %v6402
  %6433 = vst.msk [vmem:[%s8 + $0xd8] sm:$0xff] %vm920, %v6403
  %6434 = vst.msk [vmem:[%s8 + $0xe0] sm:$0xff] %vm920, %v6404
  %6435 = vst.msk [vmem:[%s8 + $0xe8] sm:$0x7f] %vm4445, %v6405
  // Predicated region
  $region94: #{model_forward.1} parent=0 // pred_check
    _
  $region95: #{model_forward.1} parent=0 // pred_check_branch
    %6437 = sbr.rel (0) target = $region97
  $region96: #{model_forward.1} parent=0 // pred_region
    _
  $region97: #{model_forward.1} parent=0 // pred_fallthru
    _
  // Predicated region
  $region98: #{model_forward.1} parent=0 // pred_check
    _
  $region99: #{model_forward.1} parent=0 // pred_check_branch
    %6439 = sbr.rel (0) target = $region101
  $region100: #{model_forward.1} parent=0 // pred_region
    _
  $region101: #{model_forward.1} parent=0 // pred_fallthru
    _
  %6440 = vsyncmov [#allocation4]
  %s6441 = vpop.sfrf %6440
  %p6442 = scmp.eq.s32.totalorder %s6441, 0
  %p6443 = pneg %p6442
  %6445 = shalt.err (%p6443)
  %s6446 = scalar_lea.sflag [#allocation4], 1
  %6447 = vsyncmov %s6446
  %s6448 = vpop.sfrf %6447
  %p6449 = scmp.eq.s32.totalorder %s6448, 0
  %p6450 = pneg %p6449
  %6452 = shalt.err (%p6450)

</llo_original>
